<compile_context>
chip_gen: v5e
topology: v5e:2x2
jax: 0.10.0
libtpu: 0.0.40
codegen_flags: <defaults>
</compile_context>

<pallas_src>
import functools

import numpy as np
import jax
import jax.numpy as jnp
from jax import lax
from jax.experimental import pallas as pl
from jax.experimental.pallas import tpu as pltpu

_LANE = 128
_SUBLANE = 8
_VMEM_LIMIT = 48 * 1024 * 1024          # safe on v5e/v6e (128 MiB) and v7x (64 MiB)

# Static geometry of the fused conv stack (flattened rows keep width Ws = 10):
_M1 = 100                               # conv2 s2d input rows   (10 x 10)
_M2 = 89                                # conv2 output rows      (9*10 + 9)
_M3 = 67                                # conv3 output rows      (6*10 + 7)
_CONV2_OFFS = (0, 1, 10, 11)            # 2x2 taps, row offsets a*10 + b
_CONV3_OFFS = tuple(kh * 10 + kw for kh in range(3) for kw in range(3))


def _round_up(x, m):
    return (x + m - 1) // m * m


# ----------------------------------------------------------------------------
# Pallas kernels
# ----------------------------------------------------------------------------
def _cnn_stack_kernel(x_ref, w1_ref, b1_ref, w2_ref, b2_ref, w3_ref, b3_ref,
                      o_ref, h1_ref, h2_ref, *, block_b):
    """Fused conv1+conv2+conv3 (+bias+ReLU) for `block_b` images.

    x_ref : (B, 4, 100, K1p) bf16   4 sub-lattice s2d(8) images
    w1_ref: (4, K1p, 128)    bf16   per-sub-lattice 1x1-conv weights (placed)
    w2_ref: (4, 128, 64)     bf16   conv2 taps (s2d(2) channel layout)
    w3_ref: (9, 64, 64)      bf16   conv3 taps
    b*_ref: (1, C)           f32
    o_ref : (B, 67, 64)      bf16   conv3 output, rows m = h*10 + w
    h1/h2 : VMEM scratch intermediates (per image, rewritten each iteration)
    """
    f32 = jnp.float32
    for b in range(block_b):
        # conv1 (8x8 s4): 4 sub-lattice matmuls; the accumulated (100, 128)
        # result is already conv2's space-to-depth(2) input.
        a1 = jnp.dot(x_ref[b, 0], w1_ref[0], preferred_element_type=f32)
        for s in range(1, 4):
            a1 = a1 + jnp.dot(x_ref[b, s], w1_ref[s],
                              preferred_element_type=f32)
        h1 = jnp.maximum(a1 + b1_ref[...], 0.0)
        h1_ref[...] = h1.astype(h1_ref.dtype)                 # (100, 128)

        # conv2 (4x4 s2) == 2x2-tap stride-1 conv on the 10x10x128 image.
        a2 = None
        for t, off in enumerate(_CONV2_OFFS):
            d = jnp.dot(h1_ref[pl.ds(off, _M2), :], w2_ref[t],
                        preferred_element_type=f32)
            a2 = d if a2 is None else a2 + d
        h2 = jnp.maximum(a2 + b2_ref[...], 0.0)
        h2_ref[...] = h2.astype(h2_ref.dtype)                 # (89, 64)

        # conv3 (3x3 s1): 9 taps on the 9x9x64 image (rows still Ws = 10).
        a3 = None
        for t, off in enumerate(_CONV3_OFFS):
            d = jnp.dot(h2_ref[pl.ds(off, _M3), :], w3_ref[t],
                        preferred_element_type=f32)
            a3 = d if a3 is None else a3 + d
        o = jnp.maximum(a3 + b3_ref[...], 0.0)
        o_ref[b] = o.astype(o_ref.dtype)                      # (67, 64)


def _matmul_bias_kernel(x_ref, w_ref, b_ref, o_ref, *, apply_relu):
    acc = jnp.dot(x_ref[...], w_ref[...], preferred_element_type=jnp.float32)
    acc = acc + b_ref[...]
    if apply_relu:
        acc = jnp.maximum(acc, 0.0)
    o_ref[...] = acc.astype(o_ref.dtype)


# ----------------------------------------------------------------------------
# pallas_call wrappers
# ----------------------------------------------------------------------------
def conv_stack(xs, prep, *, block_b):
    """xs: (N, 4, 100, K1p) bf16 -> (N, 67, 64) bf16 (N divisible by block_b)."""
    n, _, m1, k1p = xs.shape
    assert m1 == _M1 and n % block_b == 0
    kernel = functools.partial(_cnn_stack_kernel, block_b=block_b)
    return pl.pallas_call(
        kernel,
        out_shape=jax.ShapeDtypeStruct((n, _M3, 64), jnp.bfloat16),
        grid=(n // block_b,),
        in_specs=[
            pl.BlockSpec((block_b, 4, _M1, k1p), lambda i: (i, 0, 0, 0)),
            pl.BlockSpec((4, k1p, 128), lambda i: (0, 0, 0)),   # w1 (resident)
            pl.BlockSpec((1, 128), lambda i: (0, 0)),           # b1
            pl.BlockSpec((4, 128, 64), lambda i: (0, 0, 0)),    # w2
            pl.BlockSpec((1, 64), lambda i: (0, 0)),            # b2
            pl.BlockSpec((9, 64, 64), lambda i: (0, 0, 0)),     # w3
            pl.BlockSpec((1, 64), lambda i: (0, 0)),            # b3
        ],
        out_specs=pl.BlockSpec((block_b, _M3, 64), lambda i: (i, 0, 0)),
        scratch_shapes=[pltpu.VMEM((_M1, 128), jnp.bfloat16),
                        pltpu.VMEM((_M2, 64), jnp.bfloat16)],
        compiler_params=pltpu.CompilerParams(
            dimension_semantics=("parallel",),
            vmem_limit_bytes=_VMEM_LIMIT),
    )(xs, prep["w1"], prep["b1"], prep["w2"], prep["b2"],
      prep["w3"], prep["b3"])


def matmul_bias(x, w, b2d, *, apply_relu=False, target_tile_m=256):
    """(M, K) bf16 @ (K, N) bf16 + b -> (M, N) f32; adaptive M tiling."""
    m, k = x.shape
    k2, nout = w.shape
    assert k == k2 and nout % _LANE == 0
    m8 = _round_up(max(m, _SUBLANE), _SUBLANE)
    n_tiles = max(1, -(-m8 // target_tile_m))
    if n_tiles == 1 and m8 >= 2 * _SUBLANE:
        n_tiles = 2                               # let the grid span both TCs
    tm = _round_up(-(-m8 // n_tiles), _SUBLANE)
    mp = tm * n_tiles
    if mp != m:
        x = jnp.pad(x, ((0, mp - m), (0, 0)))
    out = pl.pallas_call(
        functools.partial(_matmul_bias_kernel, apply_relu=apply_relu),
        out_shape=jax.ShapeDtypeStruct((mp, nout), jnp.float32),
        grid=(n_tiles,),
        in_specs=[
            pl.BlockSpec((tm, k), lambda i: (i, 0)),      # M-tiled activations
            pl.BlockSpec((k, nout), lambda i: (0, 0)),    # resident weight
            pl.BlockSpec((1, nout), lambda i: (0, 0)),
        ],
        out_specs=pl.BlockSpec((tm, nout), lambda i: (i, 0)),
        compiler_params=pltpu.CompilerParams(
            dimension_semantics=("parallel",),
            vmem_limit_bytes=_VMEM_LIMIT),
    )(x.astype(jnp.bfloat16), w, b2d)
    return out[:m]


# ----------------------------------------------------------------------------
# Plain-JAX input glue (one image-sized relayout; no per-layer glue remains)
# ----------------------------------------------------------------------------
def _choose_block_b(n):
    if n >= 16:
        return 8
    return max(1, -(-n // 2))       # exactly two grid steps for 2 <= n < 16


def _prep_input(obs_nchw):
    """(N, C, H, W) -> (N, 4, 100, K1p) bf16: 4 sub-lattice s2d(8) images.

    Sub-lattice s=(rh, rw) holds the conv1 receptive fields whose output lands
    at (2*h2+rh, 2*w2+rw); since kernel==stride==8 on each sub-lattice, conv1
    becomes 4 plain matmuls inside the fused kernel.
    """
    n, cin, h, w = obs_nchw.shape
    x = jnp.transpose(obs_nchw.astype(jnp.float32), (0, 2, 3, 1))   # NHWC
    if (h, w) != (84, 84):
        # TODO(synk): torchvision Resize antialiases when DOWNscaling; this
        # bilinear resize only matches for upscale / same-size inputs.
        x = jax.image.resize(x, (n, 84, 84, cin), method="bilinear")
    k1 = 64 * cin
    k1p = _round_up(k1, _LANE)
    subs = []
    for rh in range(2):
        for rw in range(2):
            sub = x[:, 4 * rh:4 * rh + 80, 4 * rw:4 * rw + 80, :]   # (N,80,80,C)
            sub = sub.reshape(n, 10, 8, 10, 8, cin).transpose(0, 1, 3, 2, 4, 5)
            subs.append(sub.reshape(n, _M1, k1))
    xs = jnp.stack(subs, axis=1).astype(jnp.bfloat16)               # (N,4,100,k1)
    if k1p != k1:
        xs = jnp.pad(xs, ((0, 0), (0, 0), (0, 0), (0, k1p - k1)))
    return xs


# ----------------------------------------------------------------------------
# Full forward (matches the PyTorch module semantics)
# ----------------------------------------------------------------------------
def cnn_forward(obs_nchw, prep, *, features_dim=512):
    n = obs_nchw.shape[0]
    xs = _prep_input(obs_nchw)                       # (N, 4, 100, K1p) bf16
    bb = _choose_block_b(n)
    n_pad = _round_up(n, bb)
    if n_pad != n:
        xs = jnp.pad(xs, ((0, n_pad - n), (0, 0), (0, 0), (0, 0)))
    o3 = conv_stack(xs, prep, block_b=bb)            # (N_pad, 67, 64) bf16
    xl = o3.reshape(n_pad, _M3 * 64)                 # contiguous collapse
    y = matmul_bias(xl, prep["wl"], prep["bl"], apply_relu=False)
    return y[:n, :features_dim]


# ----------------------------------------------------------------------------
# One-time parameter re-layout (PyTorch shapes -> kernel layouts)
# ----------------------------------------------------------------------------
def _prep_w1(w1, k1_pad):
    """(32, Cin, 8, 8) -> (4, K1p, 128); output cols placed at s*32 + co."""
    cout, cin, kh, kw = w1.shape
    w = jnp.transpose(w1, (2, 3, 1, 0)).reshape(kh * kw * cin, cout)
    w = jnp.pad(w, ((0, k1_pad - kh * kw * cin), (0, 0)))
    out = jnp.zeros((4, k1_pad, 4 * cout), w.dtype)
    for s in range(4):
        out = out.at[s, :, s * cout:(s + 1) * cout].set(w)
    return out.astype(jnp.bfloat16)


def _prep_w2(w2):
    """(64, 32, 4, 4) -> (4, 128, 64): tap (a,b), in-ch (rh*2+rw)*32 + ci."""
    cout, cin = w2.shape[0], w2.shape[1]
    w = w2.reshape(cout, cin, 2, 2, 2, 2)            # (co, ci, a, rh, b, rw)
    w = jnp.transpose(w, (2, 4, 3, 5, 1, 0))         # (a, b, rh, rw, ci, co)
    return w.reshape(4, 4 * cin, cout).astype(jnp.bfloat16)


def _prep_w3(w3):
    """(64, 64, 3, 3) -> (9, 64, 64): tap index kh*3 + kw."""
    cout, cin, kh, kw = w3.shape
    w = jnp.transpose(w3, (2, 3, 1, 0)).reshape(kh * kw, cin, cout)
    return w.astype(jnp.bfloat16)


def _prep_wl(wl, f_pad):
    """(F, 3136 = 64*7*7 NCHW-flat) -> (67*64, Fp) in the kernel's row layout.

    Kernel K index = (h*10 + w)*64 + c for h,w in 0..6; rows with w in 7..9
    (garbage conv3 rows) get exactly-zero weights.
    """
    f = wl.shape[0]
    assert wl.shape[1] == 64 * 7 * 7
    w = wl.reshape(f, 64, 7, 7)
    w = jnp.transpose(w, (2, 3, 1, 0))                       # (h, w, c, F)
    w = jnp.pad(w, ((0, 0), (0, 3), (0, 0), (0, f_pad - f)))  # w: 7 -> 10
    w = w.reshape(7 * 10, 64, f_pad)[:_M3]                    # (67, 64, Fp)
    return w.reshape(_M3 * 64, f_pad).astype(jnp.bfloat16)


def prepare_params(params):
    """One-time re-layout of PyTorch-shaped parameters for the kernels."""
    w1, b1 = params["w1"], params["b1"]
    cin = w1.shape[1]
    features_dim = params["wl"].shape[0]
    k1p = _round_up(64 * cin, _LANE)
    f_pad = _round_up(features_dim, _LANE)
    # Fold obs normalization (obs - 128) / 128 into conv1 (resize is linear).
    w1f = w1 / 128.0
    b1f = b1 - w1.sum(axis=(1, 2, 3))
    return {
        "w1": _prep_w1(w1f, k1p),
        "b1": jnp.tile(b1f, 4).reshape(1, 128).astype(jnp.float32),
        "w2": _prep_w2(params["w2"]),
        "b2": params["b2"].reshape(1, 64).astype(jnp.float32),
        "w3": _prep_w3(params["w3"]),
        "b3": params["b3"].reshape(1, 64).astype(jnp.float32),
        "wl": _prep_wl(params["wl"], f_pad),
        "bl": jnp.pad(params["bl"], (0, f_pad - features_dim))
                 .reshape(1, f_pad).astype(jnp.float32),
    }


# ----------------------------------------------------------------------------
# Deterministic init (PyTorch weight shapes), pure-JAX reference, smoke test
# ----------------------------------------------------------------------------
def init_params(key, n_input_channels, features_dim=512):
    ks = jax.random.split(key, 8)
    f32 = jnp.float32
    return {
        "w1": 0.05 * jax.random.normal(ks[0], (32, n_input_channels, 8, 8), f32),
        "b1": 0.05 * jax.random.normal(ks[1], (32,), f32),
        "w2": 0.05 * jax.random.normal(ks[2], (64, 32, 4, 4), f32),
        "b2": 0.05 * jax.random.normal(ks[3], (64,), f32),
        "w3": 0.05 * jax.random.normal(ks[4], (64, 64, 3, 3), f32),
        "b3": 0.05 * jax.random.normal(ks[5], (64,), f32),
        "wl": 0.02 * jax.random.normal(ks[6], (features_dim, 64 * 7 * 7), f32),
        "bl": 0.02 * jax.random.normal(ks[7], (features_dim,), f32),
    }


def _reference_forward(obs_nchw, params):
    """f32 XLA reference of the PyTorch module (same resize path)."""
    n, cin, h, w = obs_nchw.shape
    x = jnp.transpose(obs_nchw.astype(jnp.float32), (0, 2, 3, 1))
    if (h, w) != (84, 84):
        x = jax.image.resize(x, (n, 84, 84, cin), method="bilinear")
    x = (x - 128.0) / 128.0
    dn = ("NHWC", "OIHW", "NHWC")
    x = jax.nn.relu(lax.conv_general_dilated(x, params["w1"], (4, 4), "VALID",
                                             dimension_numbers=dn) + params["b1"])
    x = jax.nn.relu(lax.conv_general_dilated(x, params["w2"], (2, 2), "VALID",
                                             dimension_numbers=dn) + params["b2"])
    x = jax.nn.relu(lax.conv_general_dilated(x, params["w3"], (1, 1), "VALID",
                                             dimension_numbers=dn) + params["b3"])
    x = jnp.transpose(x, (0, 3, 1, 2)).reshape(n, -1)     # NCHW flatten
    return x @ params["wl"].T + params["bl"]


if __name__ == "__main__":
    key = jax.random.PRNGKey(0)
    k_obs, k_par = jax.random.split(key)

    batch, n_in, h, w = 2, 4, 16, 16
    features_dim = 512

    obs = jax.random.randint(k_obs, (batch, n_in, h, w), 0, 256).astype(jnp.float32)
    params = init_params(k_par, n_in, features_dim)
    prep = prepare_params(params)          # one-time weight re-layout

    # Guard against the known fragility: linear-weight rows for invalid
    # (w >= 7) conv3 positions must be exactly zero.
    wl3 = np.asarray(prep["wl"], dtype=np.float32).reshape(_M3, 64, -1)
    assert not np.any(wl3[(np.arange(_M3) % 10) >= 7]), "pad rows must be zero"

    fwd = jax.jit(functools.partial(cnn_forward, features_dim=features_dim))
    out = jax.block_until_ready(fwd(obs, prep))

    assert out.shape == (batch, features_dim), out.shape
    assert out.dtype == jnp.float32
    assert bool(jnp.all(jnp.isfinite(out)))

    ref = jax.block_until_ready(_reference_forward(obs, params))
    np.testing.assert_allclose(np.asarray(out), np.asarray(ref),
                               rtol=0.05, atol=0.08)
    print("KERNEL_OK")
</pallas_src>

<mosaic_0001>
module attributes {stable_mosaic.version = 11 : i64} {
  func.func @_cnn_stack_kernel(%arg0: i32, %arg1: memref<1x4x100x256xbf16, #tpu.memory_space<vmem>>, %arg2: memref<4x256x128xbf16, #tpu.memory_space<vmem>>, %arg3: memref<1x128xf32, #tpu.memory_space<vmem>>, %arg4: memref<4x128x64xbf16, #tpu.memory_space<vmem>>, %arg5: memref<1x64xf32, #tpu.memory_space<vmem>>, %arg6: memref<9x64x64xbf16, #tpu.memory_space<vmem>>, %arg7: memref<1x64xf32, #tpu.memory_space<vmem>>, %arg8: memref<1x67x64xbf16, #tpu.memory_space<vmem>>, %arg9: memref<100x128xbf16, #tpu.memory_space<vmem>>, %arg10: memref<89x64xbf16, #tpu.memory_space<vmem>>) attributes {dimension_semantics = [#tpu.dimension_semantics<parallel>], iteration_bounds = array<i64: 2>, scalar_prefetch = 0 : i64, scratch_operands = 2 : i64, tpu.core_type = #tpu.core_type<tc>, window_params = [{transform_indices = @transform_0, window_bounds = array<i64: 1, 4, 100, 256>}, {pipeline_mode = #tpu.pipeline_mode<synchronous>, transform_indices = @transform_1, window_bounds = array<i64: 4, 256, 128>}, {pipeline_mode = #tpu.pipeline_mode<synchronous>, transform_indices = @transform_2, window_bounds = array<i64: 1, 128>}, {pipeline_mode = #tpu.pipeline_mode<synchronous>, transform_indices = @transform_3, window_bounds = array<i64: 4, 128, 64>}, {pipeline_mode = #tpu.pipeline_mode<synchronous>, transform_indices = @transform_4, window_bounds = array<i64: 1, 64>}, {pipeline_mode = #tpu.pipeline_mode<synchronous>, transform_indices = @transform_5, window_bounds = array<i64: 9, 64, 64>}, {pipeline_mode = #tpu.pipeline_mode<synchronous>, transform_indices = @transform_6, window_bounds = array<i64: 1, 64>}, {transform_indices = @transform_7, window_bounds = array<i64: 1, 67, 64>}]} {
    %c0 = arith.constant 0 : index
    %c0_0 = arith.constant 0 : index
    %c0_1 = arith.constant 0 : index
    %c0_2 = arith.constant 0 : index
    %0 = vector.load %arg1[%c0, %c0_0, %c0_1, %c0_2] : memref<1x4x100x256xbf16, #tpu.memory_space<vmem>>, vector<1x1x100x256xbf16>
    %1 = vector.shape_cast %0 : vector<1x1x100x256xbf16> to vector<100x256xbf16>
    %c0_3 = arith.constant 0 : index
    %c0_4 = arith.constant 0 : index
    %c0_5 = arith.constant 0 : index
    %2 = vector.load %arg2[%c0_3, %c0_4, %c0_5] : memref<4x256x128xbf16, #tpu.memory_space<vmem>>, vector<1x256x128xbf16>
    %3 = vector.shape_cast %2 : vector<1x256x128xbf16> to vector<256x128xbf16>
    %cst = arith.constant dense<0.000000e+00> : vector<100x128xf32>
    %4 = tpu.matmul %1, %3, %cst {dimension_numbers = #tpu.dot_dimension_numbers<[1], [0], [0], [1], [0, 0, 1, 1], [], []>} : vector<100x256xbf16>, vector<256x128xbf16>, vector<100x128xf32> -> vector<100x128xf32>
    %c0_6 = arith.constant 0 : index
    %c1 = arith.constant 1 : index
    %c0_7 = arith.constant 0 : index
    %c0_8 = arith.constant 0 : index
    %5 = vector.load %arg1[%c0_6, %c1, %c0_7, %c0_8] : memref<1x4x100x256xbf16, #tpu.memory_space<vmem>>, vector<1x1x100x256xbf16>
    %6 = vector.shape_cast %5 : vector<1x1x100x256xbf16> to vector<100x256xbf16>
    %c1_9 = arith.constant 1 : index
    %c0_10 = arith.constant 0 : index
    %c0_11 = arith.constant 0 : index
    %7 = vector.load %arg2[%c1_9, %c0_10, %c0_11] : memref<4x256x128xbf16, #tpu.memory_space<vmem>>, vector<1x256x128xbf16>
    %8 = vector.shape_cast %7 : vector<1x256x128xbf16> to vector<256x128xbf16>
    %cst_12 = arith.constant dense<0.000000e+00> : vector<100x128xf32>
    %9 = tpu.matmul %6, %8, %cst_12 {dimension_numbers = #tpu.dot_dimension_numbers<[1], [0], [0], [1], [0, 0, 1, 1], [], []>} : vector<100x256xbf16>, vector<256x128xbf16>, vector<100x128xf32> -> vector<100x128xf32>
    %10 = arith.addf %4, %9 : vector<100x128xf32>
    %c0_13 = arith.constant 0 : index
    %c2 = arith.constant 2 : index
    %c0_14 = arith.constant 0 : index
    %c0_15 = arith.constant 0 : index
    %11 = vector.load %arg1[%c0_13, %c2, %c0_14, %c0_15] : memref<1x4x100x256xbf16, #tpu.memory_space<vmem>>, vector<1x1x100x256xbf16>
    %12 = vector.shape_cast %11 : vector<1x1x100x256xbf16> to vector<100x256xbf16>
    %c2_16 = arith.constant 2 : index
    %c0_17 = arith.constant 0 : index
    %c0_18 = arith.constant 0 : index
    %13 = vector.load %arg2[%c2_16, %c0_17, %c0_18] : memref<4x256x128xbf16, #tpu.memory_space<vmem>>, vector<1x256x128xbf16>
    %14 = vector.shape_cast %13 : vector<1x256x128xbf16> to vector<256x128xbf16>
    %cst_19 = arith.constant dense<0.000000e+00> : vector<100x128xf32>
    %15 = tpu.matmul %12, %14, %cst_19 {dimension_numbers = #tpu.dot_dimension_numbers<[1], [0], [0], [1], [0, 0, 1, 1], [], []>} : vector<100x256xbf16>, vector<256x128xbf16>, vector<100x128xf32> -> vector<100x128xf32>
    %16 = arith.addf %10, %15 : vector<100x128xf32>
    %c0_20 = arith.constant 0 : index
    %c3 = arith.constant 3 : index
    %c0_21 = arith.constant 0 : index
    %c0_22 = arith.constant 0 : index
    %17 = vector.load %arg1[%c0_20, %c3, %c0_21, %c0_22] : memref<1x4x100x256xbf16, #tpu.memory_space<vmem>>, vector<1x1x100x256xbf16>
    %18 = vector.shape_cast %17 : vector<1x1x100x256xbf16> to vector<100x256xbf16>
    %c3_23 = arith.constant 3 : index
    %c0_24 = arith.constant 0 : index
    %c0_25 = arith.constant 0 : index
    %19 = vector.load %arg2[%c3_23, %c0_24, %c0_25] : memref<4x256x128xbf16, #tpu.memory_space<vmem>>, vector<1x256x128xbf16>
    %20 = vector.shape_cast %19 : vector<1x256x128xbf16> to vector<256x128xbf16>
    %cst_26 = arith.constant dense<0.000000e+00> : vector<100x128xf32>
    %21 = tpu.matmul %18, %20, %cst_26 {dimension_numbers = #tpu.dot_dimension_numbers<[1], [0], [0], [1], [0, 0, 1, 1], [], []>} : vector<100x256xbf16>, vector<256x128xbf16>, vector<100x128xf32> -> vector<100x128xf32>
    %22 = arith.addf %16, %21 : vector<100x128xf32>
    %c0_27 = arith.constant 0 : index
    %c0_28 = arith.constant 0 : index
    %23 = vector.load %arg3[%c0_27, %c0_28] : memref<1x128xf32, #tpu.memory_space<vmem>>, vector<1x128xf32>
    %24 = vector.broadcast %23 : vector<1x128xf32> to vector<100x128xf32>
    %25 = arith.addf %22, %24 : vector<100x128xf32>
    %cst_29 = arith.constant 0.000000e+00 : f32
    %26 = vector.broadcast %cst_29 : f32 to vector<100x128xf32>
    %27 = arith.maximumf %25, %26 : vector<100x128xf32>
    %28 = arith.truncf %27 : vector<100x128xf32> to vector<100x128xbf16>
    %c0_30 = arith.constant 0 : index
    %c0_31 = arith.constant 0 : index
    %29 = vector.load %arg9[%c0_30, %c0_31] : memref<100x128xbf16, #tpu.memory_space<vmem>>, vector<100x128xbf16>
    tpu.vector_store %arg9[%c0_30, %c0_31], %28 {strides = array<i32>} : memref<100x128xbf16, #tpu.memory_space<vmem>>, vector<100x128xbf16>,
    %c0_32 = arith.constant 0 : index
    %c0_33 = arith.constant 0 : index
    %30 = vector.load %arg9[%c0_32, %c0_33] : memref<100x128xbf16, #tpu.memory_space<vmem>>, vector<89x128xbf16>
    %c0_34 = arith.constant 0 : index
    %c0_35 = arith.constant 0 : index
    %c0_36 = arith.constant 0 : index
    %31 = vector.load %arg4[%c0_34, %c0_35, %c0_36] : memref<4x128x64xbf16, #tpu.memory_space<vmem>>, vector<1x128x64xbf16>
    %32 = vector.shape_cast %31 : vector<1x128x64xbf16> to vector<128x64xbf16>
    %cst_37 = arith.constant dense<0.000000e+00> : vector<89x64xf32>
    %33 = tpu.matmul %30, %32, %cst_37 {dimension_numbers = #tpu.dot_dimension_numbers<[1], [0], [0], [1], [0, 0, 1, 1], [], []>} : vector<89x128xbf16>, vector<128x64xbf16>, vector<89x64xf32> -> vector<89x64xf32>
    %c1_38 = arith.constant 1 : index
    %c0_39 = arith.constant 0 : index
    %34 = vector.load %arg9[%c1_38, %c0_39] : memref<100x128xbf16, #tpu.memory_space<vmem>>, vector<89x128xbf16>
    %c1_40 = arith.constant 1 : index
    %c0_41 = arith.constant 0 : index
    %c0_42 = arith.constant 0 : index
    %35 = vector.load %arg4[%c1_40, %c0_41, %c0_42] : memref<4x128x64xbf16, #tpu.memory_space<vmem>>, vector<1x128x64xbf16>
    %36 = vector.shape_cast %35 : vector<1x128x64xbf16> to vector<128x64xbf16>
    %cst_43 = arith.constant dense<0.000000e+00> : vector<89x64xf32>
    %37 = tpu.matmul %34, %36, %cst_43 {dimension_numbers = #tpu.dot_dimension_numbers<[1], [0], [0], [1], [0, 0, 1, 1], [], []>} : vector<89x128xbf16>, vector<128x64xbf16>, vector<89x64xf32> -> vector<89x64xf32>
    %38 = arith.addf %33, %37 : vector<89x64xf32>
    %c10 = arith.constant 10 : index
    %c0_44 = arith.constant 0 : index
    %39 = vector.load %arg9[%c10, %c0_44] : memref<100x128xbf16, #tpu.memory_space<vmem>>, vector<89x128xbf16>
    %c2_45 = arith.constant 2 : index
    %c0_46 = arith.constant 0 : index
    %c0_47 = arith.constant 0 : index
    %40 = vector.load %arg4[%c2_45, %c0_46, %c0_47] : memref<4x128x64xbf16, #tpu.memory_space<vmem>>, vector<1x128x64xbf16>
    %41 = vector.shape_cast %40 : vector<1x128x64xbf16> to vector<128x64xbf16>
    %cst_48 = arith.constant dense<0.000000e+00> : vector<89x64xf32>
    %42 = tpu.matmul %39, %41, %cst_48 {dimension_numbers = #tpu.dot_dimension_numbers<[1], [0], [0], [1], [0, 0, 1, 1], [], []>} : vector<89x128xbf16>, vector<128x64xbf16>, vector<89x64xf32> -> vector<89x64xf32>
    %43 = arith.addf %38, %42 : vector<89x64xf32>
    %c11 = arith.constant 11 : index
    %c0_49 = arith.constant 0 : index
    %44 = vector.load %arg9[%c11, %c0_49] : memref<100x128xbf16, #tpu.memory_space<vmem>>, vector<89x128xbf16>
    %c3_50 = arith.constant 3 : index
    %c0_51 = arith.constant 0 : index
    %c0_52 = arith.constant 0 : index
    %45 = vector.load %arg4[%c3_50, %c0_51, %c0_52] : memref<4x128x64xbf16, #tpu.memory_space<vmem>>, vector<1x128x64xbf16>
    %46 = vector.shape_cast %45 : vector<1x128x64xbf16> to vector<128x64xbf16>
    %cst_53 = arith.constant dense<0.000000e+00> : vector<89x64xf32>
    %47 = tpu.matmul %44, %46, %cst_53 {dimension_numbers = #tpu.dot_dimension_numbers<[1], [0], [0], [1], [0, 0, 1, 1], [], []>} : vector<89x128xbf16>, vector<128x64xbf16>, vector<89x64xf32> -> vector<89x64xf32>
    %48 = arith.addf %43, %47 : vector<89x64xf32>
    %c0_54 = arith.constant 0 : index
    %c0_55 = arith.constant 0 : index
    %49 = vector.load %arg5[%c0_54, %c0_55] : memref<1x64xf32, #tpu.memory_space<vmem>>, vector<1x64xf32>
    %50 = vector.broadcast %49 : vector<1x64xf32> to vector<89x64xf32>
    %51 = arith.addf %48, %50 : vector<89x64xf32>
    %cst_56 = arith.constant 0.000000e+00 : f32
    %52 = vector.broadcast %cst_56 : f32 to vector<89x64xf32>
    %53 = arith.maximumf %51, %52 : vector<89x64xf32>
    %54 = arith.truncf %53 : vector<89x64xf32> to vector<89x64xbf16>
    %c0_57 = arith.constant 0 : index
    %c0_58 = arith.constant 0 : index
    %55 = vector.load %arg10[%c0_57, %c0_58] : memref<89x64xbf16, #tpu.memory_space<vmem>>, vector<89x64xbf16>
    tpu.vector_store %arg10[%c0_57, %c0_58], %54 {strides = array<i32>} : memref<89x64xbf16, #tpu.memory_space<vmem>>, vector<89x64xbf16>,
    %c0_59 = arith.constant 0 : index
    %c0_60 = arith.constant 0 : index
    %56 = vector.load %arg10[%c0_59, %c0_60] : memref<89x64xbf16, #tpu.memory_space<vmem>>, vector<67x64xbf16>
    %c0_61 = arith.constant 0 : index
    %c0_62 = arith.constant 0 : index
    %c0_63 = arith.constant 0 : index
    %57 = vector.load %arg6[%c0_61, %c0_62, %c0_63] : memref<9x64x64xbf16, #tpu.memory_space<vmem>>, vector<1x64x64xbf16>
    %58 = vector.shape_cast %57 : vector<1x64x64xbf16> to vector<64x64xbf16>
    %cst_64 = arith.constant dense<0.000000e+00> : vector<67x64xf32>
    %59 = tpu.matmul %56, %58, %cst_64 {dimension_numbers = #tpu.dot_dimension_numbers<[1], [0], [0], [1], [0, 0, 1, 1], [], []>} : vector<67x64xbf16>, vector<64x64xbf16>, vector<67x64xf32> -> vector<67x64xf32>
    %c1_65 = arith.constant 1 : index
    %c0_66 = arith.constant 0 : index
    %60 = vector.load %arg10[%c1_65, %c0_66] : memref<89x64xbf16, #tpu.memory_space<vmem>>, vector<67x64xbf16>
    %c1_67 = arith.constant 1 : index
    %c0_68 = arith.constant 0 : index
    %c0_69 = arith.constant 0 : index
    %61 = vector.load %arg6[%c1_67, %c0_68, %c0_69] : memref<9x64x64xbf16, #tpu.memory_space<vmem>>, vector<1x64x64xbf16>
    %62 = vector.shape_cast %61 : vector<1x64x64xbf16> to vector<64x64xbf16>
    %cst_70 = arith.constant dense<0.000000e+00> : vector<67x64xf32>
    %63 = tpu.matmul %60, %62, %cst_70 {dimension_numbers = #tpu.dot_dimension_numbers<[1], [0], [0], [1], [0, 0, 1, 1], [], []>} : vector<67x64xbf16>, vector<64x64xbf16>, vector<67x64xf32> -> vector<67x64xf32>
    %64 = arith.addf %59, %63 : vector<67x64xf32>
    %c2_71 = arith.constant 2 : index
    %c0_72 = arith.constant 0 : index
    %65 = vector.load %arg10[%c2_71, %c0_72] : memref<89x64xbf16, #tpu.memory_space<vmem>>, vector<67x64xbf16>
    %c2_73 = arith.constant 2 : index
    %c0_74 = arith.constant 0 : index
    %c0_75 = arith.constant 0 : index
    %66 = vector.load %arg6[%c2_73, %c0_74, %c0_75] : memref<9x64x64xbf16, #tpu.memory_space<vmem>>, vector<1x64x64xbf16>
    %67 = vector.shape_cast %66 : vector<1x64x64xbf16> to vector<64x64xbf16>
    %cst_76 = arith.constant dense<0.000000e+00> : vector<67x64xf32>
    %68 = tpu.matmul %65, %67, %cst_76 {dimension_numbers = #tpu.dot_dimension_numbers<[1], [0], [0], [1], [0, 0, 1, 1], [], []>} : vector<67x64xbf16>, vector<64x64xbf16>, vector<67x64xf32> -> vector<67x64xf32>
    %69 = arith.addf %64, %68 : vector<67x64xf32>
    %c10_77 = arith.constant 10 : index
    %c0_78 = arith.constant 0 : index
    %70 = vector.load %arg10[%c10_77, %c0_78] : memref<89x64xbf16, #tpu.memory_space<vmem>>, vector<67x64xbf16>
    %c3_79 = arith.constant 3 : index
    %c0_80 = arith.constant 0 : index
    %c0_81 = arith.constant 0 : index
    %71 = vector.load %arg6[%c3_79, %c0_80, %c0_81] : memref<9x64x64xbf16, #tpu.memory_space<vmem>>, vector<1x64x64xbf16>
    %72 = vector.shape_cast %71 : vector<1x64x64xbf16> to vector<64x64xbf16>
    %cst_82 = arith.constant dense<0.000000e+00> : vector<67x64xf32>
    %73 = tpu.matmul %70, %72, %cst_82 {dimension_numbers = #tpu.dot_dimension_numbers<[1], [0], [0], [1], [0, 0, 1, 1], [], []>} : vector<67x64xbf16>, vector<64x64xbf16>, vector<67x64xf32> -> vector<67x64xf32>
    %74 = arith.addf %69, %73 : vector<67x64xf32>
    %c11_83 = arith.constant 11 : index
    %c0_84 = arith.constant 0 : index
    %75 = vector.load %arg10[%c11_83, %c0_84] : memref<89x64xbf16, #tpu.memory_space<vmem>>, vector<67x64xbf16>
    %c4 = arith.constant 4 : index
    %c0_85 = arith.constant 0 : index
    %c0_86 = arith.constant 0 : index
    %76 = vector.load %arg6[%c4, %c0_85, %c0_86] : memref<9x64x64xbf16, #tpu.memory_space<vmem>>, vector<1x64x64xbf16>
    %77 = vector.shape_cast %76 : vector<1x64x64xbf16> to vector<64x64xbf16>
    %cst_87 = arith.constant dense<0.000000e+00> : vector<67x64xf32>
    %78 = tpu.matmul %75, %77, %cst_87 {dimension_numbers = #tpu.dot_dimension_numbers<[1], [0], [0], [1], [0, 0, 1, 1], [], []>} : vector<67x64xbf16>, vector<64x64xbf16>, vector<67x64xf32> -> vector<67x64xf32>
    %79 = arith.addf %74, %78 : vector<67x64xf32>
    %c12 = arith.constant 12 : index
    %c0_88 = arith.constant 0 : index
    %80 = vector.load %arg10[%c12, %c0_88] : memref<89x64xbf16, #tpu.memory_space<vmem>>, vector<67x64xbf16>
    %c5 = arith.constant 5 : index
    %c0_89 = arith.constant 0 : index
    %c0_90 = arith.constant 0 : index
    %81 = vector.load %arg6[%c5, %c0_89, %c0_90] : memref<9x64x64xbf16, #tpu.memory_space<vmem>>, vector<1x64x64xbf16>
    %82 = vector.shape_cast %81 : vector<1x64x64xbf16> to vector<64x64xbf16>
    %cst_91 = arith.constant dense<0.000000e+00> : vector<67x64xf32>
    %83 = tpu.matmul %80, %82, %cst_91 {dimension_numbers = #tpu.dot_dimension_numbers<[1], [0], [0], [1], [0, 0, 1, 1], [], []>} : vector<67x64xbf16>, vector<64x64xbf16>, vector<67x64xf32> -> vector<67x64xf32>
    %84 = arith.addf %79, %83 : vector<67x64xf32>
    %c20 = arith.constant 20 : index
    %c0_92 = arith.constant 0 : index
    %85 = vector.load %arg10[%c20, %c0_92] : memref<89x64xbf16, #tpu.memory_space<vmem>>, vector<67x64xbf16>
    %c6 = arith.constant 6 : index
    %c0_93 = arith.constant 0 : index
    %c0_94 = arith.constant 0 : index
    %86 = vector.load %arg6[%c6, %c0_93, %c0_94] : memref<9x64x64xbf16, #tpu.memory_space<vmem>>, vector<1x64x64xbf16>
    %87 = vector.shape_cast %86 : vector<1x64x64xbf16> to vector<64x64xbf16>
    %cst_95 = arith.constant dense<0.000000e+00> : vector<67x64xf32>
    %88 = tpu.matmul %85, %87, %cst_95 {dimension_numbers = #tpu.dot_dimension_numbers<[1], [0], [0], [1], [0, 0, 1, 1], [], []>} : vector<67x64xbf16>, vector<64x64xbf16>, vector<67x64xf32> -> vector<67x64xf32>
    %89 = arith.addf %84, %88 : vector<67x64xf32>
    %c21 = arith.constant 21 : index
    %c0_96 = arith.constant 0 : index
    %90 = vector.load %arg10[%c21, %c0_96] : memref<89x64xbf16, #tpu.memory_space<vmem>>, vector<67x64xbf16>
    %c7 = arith.constant 7 : index
    %c0_97 = arith.constant 0 : index
    %c0_98 = arith.constant 0 : index
    %91 = vector.load %arg6[%c7, %c0_97, %c0_98] : memref<9x64x64xbf16, #tpu.memory_space<vmem>>, vector<1x64x64xbf16>
    %92 = vector.shape_cast %91 : vector<1x64x64xbf16> to vector<64x64xbf16>
    %cst_99 = arith.constant dense<0.000000e+00> : vector<67x64xf32>
    %93 = tpu.matmul %90, %92, %cst_99 {dimension_numbers = #tpu.dot_dimension_numbers<[1], [0], [0], [1], [0, 0, 1, 1], [], []>} : vector<67x64xbf16>, vector<64x64xbf16>, vector<67x64xf32> -> vector<67x64xf32>
    %94 = arith.addf %89, %93 : vector<67x64xf32>
    %c22 = arith.constant 22 : index
    %c0_100 = arith.constant 0 : index
    %95 = vector.load %arg10[%c22, %c0_100] : memref<89x64xbf16, #tpu.memory_space<vmem>>, vector<67x64xbf16>
    %c8 = arith.constant 8 : index
    %c0_101 = arith.constant 0 : index
    %c0_102 = arith.constant 0 : index
    %96 = vector.load %arg6[%c8, %c0_101, %c0_102] : memref<9x64x64xbf16, #tpu.memory_space<vmem>>, vector<1x64x64xbf16>
    %97 = vector.shape_cast %96 : vector<1x64x64xbf16> to vector<64x64xbf16>
    %cst_103 = arith.constant dense<0.000000e+00> : vector<67x64xf32>
    %98 = tpu.matmul %95, %97, %cst_103 {dimension_numbers = #tpu.dot_dimension_numbers<[1], [0], [0], [1], [0, 0, 1, 1], [], []>} : vector<67x64xbf16>, vector<64x64xbf16>, vector<67x64xf32> -> vector<67x64xf32>
    %99 = arith.addf %94, %98 : vector<67x64xf32>
    %c0_104 = arith.constant 0 : index
    %c0_105 = arith.constant 0 : index
    %100 = vector.load %arg7[%c0_104, %c0_105] : memref<1x64xf32, #tpu.memory_space<vmem>>, vector<1x64xf32>
    %101 = vector.broadcast %100 : vector<1x64xf32> to vector<67x64xf32>
    %102 = arith.addf %99, %101 : vector<67x64xf32>
    %cst_106 = arith.constant 0.000000e+00 : f32
    %103 = vector.broadcast %cst_106 : f32 to vector<67x64xf32>
    %104 = arith.maximumf %102, %103 : vector<67x64xf32>
    %105 = arith.truncf %104 : vector<67x64xf32> to vector<67x64xbf16>
    %c0_107 = arith.constant 0 : index
    %c0_108 = arith.constant 0 : index
    %c0_109 = arith.constant 0 : index
    %106 = vector.load %arg8[%c0_107, %c0_108, %c0_109] : memref<1x67x64xbf16, #tpu.memory_space<vmem>>, vector<1x67x64xbf16>
    %107 = vector.shape_cast %106 : vector<1x67x64xbf16> to vector<67x64xbf16>
    %108 = vector.shape_cast %105 : vector<67x64xbf16> to vector<1x67x64xbf16>
    tpu.vector_store %arg8[%c0_107, %c0_108, %c0_109], %108 {strides = array<i32>} : memref<1x67x64xbf16, #tpu.memory_space<vmem>>, vector<1x67x64xbf16>,
    return
  }
  func.func @transform_0(%arg0: i32) -> (i32, i32, i32, i32) {
    %c0_i32 = arith.constant 0 : i32
    %c0_i32_0 = arith.constant 0 : i32
    %c0_i32_1 = arith.constant 0 : i32
    %c0_i32_2 = arith.constant 0 : i32
    return %arg0, %c0_i32, %c0_i32_0, %c0_i32_1 : i32, i32, i32, i32
  }
  func.func @transform_1(%arg0: i32) -> (i32, i32, i32) {
    %c0_i32 = arith.constant 0 : i32
    %c0_i32_0 = arith.constant 0 : i32
    %c0_i32_1 = arith.constant 0 : i32
    %c0_i32_2 = arith.constant 0 : i32
    return %c0_i32, %c0_i32_0, %c0_i32_1 : i32, i32, i32
  }
  func.func @transform_2(%arg0: i32) -> (i32, i32) {
    %c0_i32 = arith.constant 0 : i32
    %c0_i32_0 = arith.constant 0 : i32
    %c0_i32_1 = arith.constant 0 : i32
    return %c0_i32, %c0_i32_0 : i32, i32
  }
  func.func @transform_3(%arg0: i32) -> (i32, i32, i32) {
    %c0_i32 = arith.constant 0 : i32
    %c0_i32_0 = arith.constant 0 : i32
    %c0_i32_1 = arith.constant 0 : i32
    %c0_i32_2 = arith.constant 0 : i32
    return %c0_i32, %c0_i32_0, %c0_i32_1 : i32, i32, i32
  }
  func.func @transform_4(%arg0: i32) -> (i32, i32) {
    %c0_i32 = arith.constant 0 : i32
    %c0_i32_0 = arith.constant 0 : i32
    %c0_i32_1 = arith.constant 0 : i32
    return %c0_i32, %c0_i32_0 : i32, i32
  }
  func.func @transform_5(%arg0: i32) -> (i32, i32, i32) {
    %c0_i32 = arith.constant 0 : i32
    %c0_i32_0 = arith.constant 0 : i32
    %c0_i32_1 = arith.constant 0 : i32
    %c0_i32_2 = arith.constant 0 : i32
    return %c0_i32, %c0_i32_0, %c0_i32_1 : i32, i32, i32
  }
  func.func @transform_6(%arg0: i32) -> (i32, i32) {
    %c0_i32 = arith.constant 0 : i32
    %c0_i32_0 = arith.constant 0 : i32
    %c0_i32_1 = arith.constant 0 : i32
    return %c0_i32, %c0_i32_0 : i32, i32
  }
  func.func @transform_7(%arg0: i32) -> (i32, i32, i32) {
    %c0_i32 = arith.constant 0 : i32
    %c0_i32_0 = arith.constant 0 : i32
    %c0_i32_1 = arith.constant 0 : i32
    return %arg0, %c0_i32, %c0_i32_0 : i32, i32, i32
  }
}

module attributes {stable_mosaic.version = 11 : i64} {
  func.func @_matmul_bias_kernel(%arg0: i32, %arg1: memref<8x4288xbf16, #tpu.memory_space<vmem>>, %arg2: memref<4288x512xbf16, #tpu.memory_space<vmem>>, %arg3: memref<1x512xf32, #tpu.memory_space<vmem>>, %arg4: memref<8x512xf32, #tpu.memory_space<vmem>>) attributes {dimension_semantics = [#tpu.dimension_semantics<parallel>], iteration_bounds = array<i64: 1>, scalar_prefetch = 0 : i64, scratch_operands = 0 : i64, tpu.core_type = #tpu.core_type<tc>, window_params = [{transform_indices = @transform_0, window_bounds = array<i64: 8, 4288>}, {pipeline_mode = #tpu.pipeline_mode<synchronous>, transform_indices = @transform_1, window_bounds = array<i64: 4288, 512>}, {pipeline_mode = #tpu.pipeline_mode<synchronous>, transform_indices = @transform_2, window_bounds = array<i64: 1, 512>}, {transform_indices = @transform_3, window_bounds = array<i64: 8, 512>}]} {
    %c0 = arith.constant 0 : index
    %c0_0 = arith.constant 0 : index
    %0 = vector.load %arg1[%c0, %c0_0] : memref<8x4288xbf16, #tpu.memory_space<vmem>>, vector<8x4288xbf16>
    %c0_1 = arith.constant 0 : index
    %c0_2 = arith.constant 0 : index
    %1 = vector.load %arg2[%c0_1, %c0_2] : memref<4288x512xbf16, #tpu.memory_space<vmem>>, vector<4288x512xbf16>
    %cst = arith.constant dense<0.000000e+00> : vector<8x512xf32>
    %2 = tpu.matmul %0, %1, %cst {dimension_numbers = #tpu.dot_dimension_numbers<[1], [0], [0], [1], [0, 0, 1, 1], [], []>} : vector<8x4288xbf16>, vector<4288x512xbf16>, vector<8x512xf32> -> vector<8x512xf32>
    %c0_3 = arith.constant 0 : index
    %c0_4 = arith.constant 0 : index
    %3 = vector.load %arg3[%c0_3, %c0_4] : memref<1x512xf32, #tpu.memory_space<vmem>>, vector<1x512xf32>
    %4 = vector.broadcast %3 : vector<1x512xf32> to vector<8x512xf32>
    %5 = arith.addf %2, %4 : vector<8x512xf32>
    %c0_5 = arith.constant 0 : index
    %c0_6 = arith.constant 0 : index
    %6 = vector.load %arg4[%c0_5, %c0_6] : memref<8x512xf32, #tpu.memory_space<vmem>>, vector<8x512xf32>
    tpu.vector_store %arg4[%c0_5, %c0_6], %5 {strides = array<i32>} : memref<8x512xf32, #tpu.memory_space<vmem>>, vector<8x512xf32>,
    return
  }
  func.func @transform_0(%arg0: i32) -> (i32, i32) {
    %c0_i32 = arith.constant 0 : i32
    %c0_i32_0 = arith.constant 0 : i32
    return %arg0, %c0_i32 : i32, i32
  }
  func.func @transform_1(%arg0: i32) -> (i32, i32) {
    %c0_i32 = arith.constant 0 : i32
    %c0_i32_0 = arith.constant 0 : i32
    %c0_i32_1 = arith.constant 0 : i32
    return %c0_i32, %c0_i32_0 : i32, i32
  }
  func.func @transform_2(%arg0: i32) -> (i32, i32) {
    %c0_i32 = arith.constant 0 : i32
    %c0_i32_0 = arith.constant 0 : i32
    %c0_i32_1 = arith.constant 0 : i32
    return %c0_i32, %c0_i32_0 : i32, i32
  }
  func.func @transform_3(%arg0: i32) -> (i32, i32) {
    %c0_i32 = arith.constant 0 : i32
    %c0_i32_0 = arith.constant 0 : i32
    return %arg0, %c0_i32 : i32, i32
  }
}

</mosaic_0001>

<llo_original>
// kernel: cnn_forward.2
$region0: #{cnn_forward.2}
  #allocation0 [shape = 'u32[]', space=smem, size = 0x4, offset = 0x4, fixed_abs, tag = 'smem constant byte address 0x4 - core index']
  #allocation1 [shape = 'u32[72,128]{1,0:T(1,128)}', space=vmem, size = 0x9000, scoped, tag = 'internal scratch']
  #allocation2 [shape = 'bf16[100,128]{1,0:T(8,128)(2,1)}', space=vmem, size = 0x6800, scoped, tag = 'scratch operand']
  #allocation3 [shape = 'bf16[89,64]{1,0:T(8,128)(2,1)}', space=vmem, size = 0x6000, scoped, tag = 'scratch operand']
  %s0 = inlined_call_operand.vmem [shape: bf16[2,4,100,256], index: 0, kind: input, shape index: {}]
  %s1 = inlined_call_operand.vmem [shape: bf16[4,256,128], index: 1, kind: input, shape index: {}]
  %s2 = inlined_call_operand.vmem [shape: f32[1,128], index: 2, kind: input, shape index: {}]
  %s3 = inlined_call_operand.vmem [shape: bf16[4,128,64], index: 3, kind: input, shape index: {}]
  %s4 = inlined_call_operand.vmem [shape: f32[1,64], index: 4, kind: input, shape index: {}]
  %s5 = inlined_call_operand.vmem [shape: bf16[9,64,64], index: 5, kind: input, shape index: {}]
  %s6 = inlined_call_operand.vmem [shape: f32[1,64], index: 6, kind: input, shape index: {}]
  %s7 = inlined_call_operand.vmem [shape: bf16[2,67,64], index: 7, kind: output, shape index: {}]
  %s8 = sld [smem:[#allocation0]]
  $region61: #{cnn_forward.2} parent=0
    _
  %s10 = ssub.s32 1, %s8
  %s11 = scalar_select 0, %s10, %s8
  loop: start=0, step=1, limit=4
  $region2: #{cnn_forward.2} parent=0 // loop_pre_header
    _
  $region3: #{cnn_forward.2} parent=0 // loop_header
    %s13 = sphi 0, %s17
    %p14 = scmp.ge.s32.totalorder %s13, 4
    %s23 = sphi 0, %s25
    %s26 = sphi 0, %s23
    %s27 = sphi 0, %s26
    %s43 = sphi 0, %s27
    %s47 = sphi 0, %s47
    %s49 = sphi 0, %s47
    %s50 = sphi 0, %s49
    %s64 = sphi 0, %s50
    %s68 = sphi 0, %s68
    %s70 = sphi 0, %s68
    %s71 = sphi 0, %s70
    %s85 = sphi 0, %s71
    %s89 = sphi 0, %s89
    %s91 = sphi 0, %s89
    %s92 = sphi 0, %s91
    %s106 = sphi 0, %s92
    %s110 = sphi 0, %s110
    %s112 = sphi 0, %s110
    %s113 = sphi 0, %s112
    %s127 = sphi 0, %s113
    %s131 = sphi 0, %s131
    %s133 = sphi 0, %s131
    %s134 = sphi 0, %s133
    %s148 = sphi 0, %s134
    %s152 = sphi 0, %s152
    %s154 = sphi 0, %s152
    %s155 = sphi 0, %s154
    %s169 = sphi 0, %s155
    %s175 = sphi 0, %s177
    %s178 = sphi 0, %s175
    %s179 = sphi 0, %s178
    %s195 = sphi 0, %s179
  $region4: #{cnn_forward.2} parent=0 // loop_header_branch
    %16 = sbr.rel (%p14) target = $region8
  $region5: #{cnn_forward.2} parent=0 // loop_body
    %s18 = ssub.s32 %s13, 1
    %s19 = ssub.s32 %s13, 2
    %s20 = sadd.s32 %s13, 1
    %s21 = ssub.s32 %s13, %s20
    %p22 = scmp.eq.s32.totalorder %s21, 0
    %s24 = sadd.s32 %s23, 1
    %s25 = scalar_select %p22, %s23, %s24
    %p28 = pneg %p22
    %p29 = scmp.eq.s32.totalorder %s13, 1
    %p30 = por %p28, %p29
    %p31 = scmp.ne.s32.totalorder %s23, %s26
    %p32 = scmp.eq.s32.totalorder %s13, 0
    %p33 = por %p31, %p32
    %p34 = scmp.ne.s32.totalorder %s23, %s26
    %p35 = scmp.eq.s32.totalorder %s18, 1
    %p36 = por %p34, %p35
    %p37 = scmp.ne.s32.totalorder %s26, %s27
    %p38 = scmp.eq.s32.totalorder %s18, 0
    %p39 = por %p37, %p38
    %p40 = scmp.ne.s32.totalorder %s26, %s27
    %p41 = scmp.eq.s32.totalorder %s19, 1
    %p42 = por %p40, %p41
    %p44 = scmp.ne.s32.totalorder %s27, %s43
    %p45 = scmp.eq.s32.totalorder %s19, 0
    %p46 = por %p44, %p45
    %s48 = sadd.s32 %s47, 1
    %p51 = scmp.eq.s32.totalorder %s13, 1
    %p52 = scmp.ne.s32.totalorder %s47, %s49
    %p53 = scmp.eq.s32.totalorder %s13, 0
    %p54 = por %p52, %p53
    %p55 = scmp.ne.s32.totalorder %s47, %s49
    %p56 = scmp.eq.s32.totalorder %s18, 1
    %p57 = por %p55, %p56
    %p58 = scmp.ne.s32.totalorder %s49, %s50
    %p59 = scmp.eq.s32.totalorder %s18, 0
    %p60 = por %p58, %p59
    %p61 = scmp.ne.s32.totalorder %s49, %s50
    %p62 = scmp.eq.s32.totalorder %s19, 1
    %p63 = por %p61, %p62
    %p65 = scmp.ne.s32.totalorder %s50, %s64
    %p66 = scmp.eq.s32.totalorder %s19, 0
    %p67 = por %p65, %p66
    %s69 = sadd.s32 %s68, 1
    %p72 = scmp.eq.s32.totalorder %s13, 1
    %p73 = scmp.ne.s32.totalorder %s68, %s70
    %p74 = scmp.eq.s32.totalorder %s13, 0
    %p75 = por %p73, %p74
    %p76 = scmp.ne.s32.totalorder %s68, %s70
    %p77 = scmp.eq.s32.totalorder %s18, 1
    %p78 = por %p76, %p77
    %p79 = scmp.ne.s32.totalorder %s70, %s71
    %p80 = scmp.eq.s32.totalorder %s18, 0
    %p81 = por %p79, %p80
    %p82 = scmp.ne.s32.totalorder %s70, %s71
    %p83 = scmp.eq.s32.totalorder %s19, 1
    %p84 = por %p82, %p83
    %p86 = scmp.ne.s32.totalorder %s71, %s85
    %p87 = scmp.eq.s32.totalorder %s19, 0
    %p88 = por %p86, %p87
    %s90 = sadd.s32 %s89, 1
    %p93 = scmp.eq.s32.totalorder %s13, 1
    %p94 = scmp.ne.s32.totalorder %s89, %s91
    %p95 = scmp.eq.s32.totalorder %s13, 0
    %p96 = por %p94, %p95
    %p97 = scmp.ne.s32.totalorder %s89, %s91
    %p98 = scmp.eq.s32.totalorder %s18, 1
    %p99 = por %p97, %p98
    %p100 = scmp.ne.s32.totalorder %s91, %s92
    %p101 = scmp.eq.s32.totalorder %s18, 0
    %p102 = por %p100, %p101
    %p103 = scmp.ne.s32.totalorder %s91, %s92
    %p104 = scmp.eq.s32.totalorder %s19, 1
    %p105 = por %p103, %p104
    %p107 = scmp.ne.s32.totalorder %s92, %s106
    %p108 = scmp.eq.s32.totalorder %s19, 0
    %p109 = por %p107, %p108
    %s111 = sadd.s32 %s110, 1
    %p114 = scmp.eq.s32.totalorder %s13, 1
    %p115 = scmp.ne.s32.totalorder %s110, %s112
    %p116 = scmp.eq.s32.totalorder %s13, 0
    %p117 = por %p115, %p116
    %p118 = scmp.ne.s32.totalorder %s110, %s112
    %p119 = scmp.eq.s32.totalorder %s18, 1
    %p120 = por %p118, %p119
    %p121 = scmp.ne.s32.totalorder %s112, %s113
    %p122 = scmp.eq.s32.totalorder %s18, 0
    %p123 = por %p121, %p122
    %p124 = scmp.ne.s32.totalorder %s112, %s113
    %p125 = scmp.eq.s32.totalorder %s19, 1
    %p126 = por %p124, %p125
    %p128 = scmp.ne.s32.totalorder %s113, %s127
    %p129 = scmp.eq.s32.totalorder %s19, 0
    %p130 = por %p128, %p129
    %s132 = sadd.s32 %s131, 1
    %p135 = scmp.eq.s32.totalorder %s13, 1
    %p136 = scmp.ne.s32.totalorder %s131, %s133
    %p137 = scmp.eq.s32.totalorder %s13, 0
    %p138 = por %p136, %p137
    %p139 = scmp.ne.s32.totalorder %s131, %s133
    %p140 = scmp.eq.s32.totalorder %s18, 1
    %p141 = por %p139, %p140
    %p142 = scmp.ne.s32.totalorder %s133, %s134
    %p143 = scmp.eq.s32.totalorder %s18, 0
    %p144 = por %p142, %p143
    %p145 = scmp.ne.s32.totalorder %s133, %s134
    %p146 = scmp.eq.s32.totalorder %s19, 1
    %p147 = por %p145, %p146
    %p149 = scmp.ne.s32.totalorder %s134, %s148
    %p150 = scmp.eq.s32.totalorder %s19, 0
    %p151 = por %p149, %p150
    %s153 = sadd.s32 %s152, 1
    %p156 = scmp.eq.s32.totalorder %s13, 1
    %p157 = scmp.ne.s32.totalorder %s152, %s154
    %p158 = scmp.eq.s32.totalorder %s13, 0
    %p159 = por %p157, %p158
    %p160 = scmp.ne.s32.totalorder %s152, %s154
    %p161 = scmp.eq.s32.totalorder %s18, 1
    %p162 = por %p160, %p161
    %p163 = scmp.ne.s32.totalorder %s154, %s155
    %p164 = scmp.eq.s32.totalorder %s18, 0
    %p165 = por %p163, %p164
    %p166 = scmp.ne.s32.totalorder %s154, %s155
    %p167 = scmp.eq.s32.totalorder %s19, 1
    %p168 = por %p166, %p167
    %p170 = scmp.ne.s32.totalorder %s155, %s169
    %p171 = scmp.eq.s32.totalorder %s19, 0
    %p172 = por %p170, %p171
    %s173 = ssub.s32 %s13, %s20
    %p174 = scmp.eq.s32.totalorder %s173, 0
    %s176 = sadd.s32 %s175, 1
    %s177 = scalar_select %p174, %s175, %s176
    %p180 = pneg %p174
    %p181 = scmp.eq.s32.totalorder %s13, 1
    %p182 = por %p180, %p181
    %p183 = scmp.ne.s32.totalorder %s175, %s178
    %p184 = scmp.eq.s32.totalorder %s13, 0
    %p185 = por %p183, %p184
    %p186 = scmp.ne.s32.totalorder %s175, %s178
    %p187 = scmp.eq.s32.totalorder %s18, 1
    %p188 = por %p186, %p187
    %p189 = scmp.ne.s32.totalorder %s178, %s179
    %p190 = scmp.eq.s32.totalorder %s18, 0
    %p191 = por %p189, %p190
    %p192 = scmp.ne.s32.totalorder %s178, %s179
    %p193 = scmp.eq.s32.totalorder %s19, 1
    %p194 = por %p192, %p193
    %p196 = scmp.ne.s32.totalorder %s179, %s195
    %p197 = scmp.eq.s32.totalorder %s19, 0
    %p198 = por %p196, %p197
    %p199 = scmp.le.s32.totalorder 1, %s13
    %p200 = scmp.lt.s32.totalorder %s13, 3
    %p201 = pnand %p199, %p200
    %p202 = pneg %p201
    // Predicated region
    $region9: #{cnn_forward.2} parent=5 // pred_check
      _
    $region10: #{cnn_forward.2} parent=5 // pred_check_branch
      %204 = sbr.rel (%p201) target = $region12
    $region11: #{cnn_forward.2} parent=5 // pred_region
      %s205 = ssub.s32 %s13, 1
      // Predicated region
      $region13: #{cnn_forward.2} parent=11 // pred_check
        %p206 = pneg %p60
      $region14: #{cnn_forward.2} parent=11 // pred_check_branch
        %208 = sbr.rel (%p206) target = $region16
      $region15: #{cnn_forward.2} parent=11 // pred_region
        _
      $region16: #{cnn_forward.2} parent=11 // pred_fallthru
        _
      // Predicated region
      $region17: #{cnn_forward.2} parent=11 // pred_check
        %p209 = pneg %p81
      $region18: #{cnn_forward.2} parent=11 // pred_check_branch
        %211 = sbr.rel (%p209) target = $region20
      $region19: #{cnn_forward.2} parent=11 // pred_region
        _
      $region20: #{cnn_forward.2} parent=11 // pred_fallthru
        _
      // Predicated region
      $region21: #{cnn_forward.2} parent=11 // pred_check
        %p212 = pneg %p102
      $region22: #{cnn_forward.2} parent=11 // pred_check_branch
        %214 = sbr.rel (%p212) target = $region24
      $region23: #{cnn_forward.2} parent=11 // pred_region
        _
      $region24: #{cnn_forward.2} parent=11 // pred_fallthru
        _
      // Predicated region
      $region25: #{cnn_forward.2} parent=11 // pred_check
        %p215 = pneg %p123
      $region26: #{cnn_forward.2} parent=11 // pred_check_branch
        %217 = sbr.rel (%p215) target = $region28
      $region27: #{cnn_forward.2} parent=11 // pred_region
        _
      $region28: #{cnn_forward.2} parent=11 // pred_fallthru
        _
      // Predicated region
      $region29: #{cnn_forward.2} parent=11 // pred_check
        %p218 = pneg %p144
      $region30: #{cnn_forward.2} parent=11 // pred_check_branch
        %220 = sbr.rel (%p218) target = $region32
      $region31: #{cnn_forward.2} parent=11 // pred_region
        _
      $region32: #{cnn_forward.2} parent=11 // pred_fallthru
        _
      // Predicated region
      $region33: #{cnn_forward.2} parent=11 // pred_check
        %p221 = pneg %p165
      $region34: #{cnn_forward.2} parent=11 // pred_check_branch
        %223 = sbr.rel (%p221) target = $region36
      $region35: #{cnn_forward.2} parent=11 // pred_region
        _
      $region36: #{cnn_forward.2} parent=11 // pred_fallthru
        _
    $region12: #{cnn_forward.2} parent=5 // pred_fallthru
      _
    %p224 = scmp.lt.s32.totalorder %s13, 2
    // Predicated region
    $region37: #{cnn_forward.2} parent=5 // pred_check
      %p225 = pneg %p224
    $region38: #{cnn_forward.2} parent=5 // pred_check_branch
      %227 = sbr.rel (%p225) target = $region40
    $region39: #{cnn_forward.2} parent=5 // pred_region
      // Predicated region
      $region41: #{cnn_forward.2} parent=39 // pred_check
        %p228 = pneg %p33
      $region42: #{cnn_forward.2} parent=39 // pred_check_branch
        %230 = sbr.rel (%p228) target = $region44
      $region43: #{cnn_forward.2} parent=39 // pred_region
        %p231 = scmp.lt.s32.totalorder %s13, 1
        %s232 = scalar_select %p231, %s13, 1
        %s233 = smul.addr %s232, 104
        %s234 = smul.addr %s233, 4
        %s235 = scalar_lea.vmem %s0, %s234
      $region44: #{cnn_forward.2} parent=39 // pred_fallthru
        _
    $region40: #{cnn_forward.2} parent=5 // pred_fallthru
      _
    %p236 = scmp.le.s32.totalorder 1, %s13
    %p237 = scmp.lt.s32.totalorder %s13, 3
    %p238 = pnand %p236, %p237
    %p239 = pneg %p238
    // Predicated region
    $region45: #{cnn_forward.2} parent=5 // pred_check
      _
    $region46: #{cnn_forward.2} parent=5 // pred_check_branch
      %241 = sbr.rel (%p238) target = $region48
    $region47: #{cnn_forward.2} parent=5 // pred_region
      %s242 = ssub.s32 %s13, 1
      %p243 = scmp.lt.s32.totalorder %s18, 1
      %s244 = scalar_select %p243, %s18, 1
      %s245 = smul.addr %s244, 104
      %s246 = smul.addr %s245, 4
      %s247 = scalar_lea.vmem %s0, %s246
      %p248 = pneg %p39
      %p249 = pneg %p36
      %p250 = pneg %p60
      %p251 = pneg %p57
      %p252 = pneg %p81
      %p253 = pneg %p78
      %p254 = pneg %p102
      %p255 = pneg %p99
      %p256 = pneg %p123
      %p257 = pneg %p120
      %p258 = pneg %p144
      %p259 = pneg %p141
      %p260 = pneg %p165
      %p261 = pneg %p162
      %p262 = pneg %p191
      %p263 = pneg %p188
      %p264 = scmp.lt.s32.totalorder %s18, 1
      %s265 = scalar_select %p264, %s18, 1
      %s266 = smul.addr %s265, 9
      %s267 = smul.addr %s266, 4
      %s268 = scalar_lea.vmem %s7, %s267
      %p269 = scmp.lt.s32.totalorder %s18, 1
      %s270 = scalar_select %p269, %s18, 1
      %s271 = smul.addr %s270, 104
      %s272 = smul.addr %s271, 4
      %s273 = scalar_lea.vmem %s0, %s272
      %p274 = scmp.lt.s32.totalorder %s18, 1
      %s275 = scalar_select %p274, %s18, 1
      %s276 = smul.addr %s275, 9
      %s277 = smul.addr %s276, 4
      %s278 = scalar_lea.vmem %s7, %s277
      %v280 = vld [vmem:[%s273] sm:$0xff]
      %v281 = vld [vmem:[%s273 + $0x8] sm:$0xff]
      %v282 = vld [vmem:[%s273 + $0x10] sm:$0xff]
      %v283 = vld [vmem:[%s273 + $0x18] sm:$0xff]
      %v284 = vld [vmem:[%s273 + $0x20] sm:$0xff]
      %v285 = vld [vmem:[%s273 + $0x28] sm:$0xff]
      %v286 = vld [vmem:[%s273 + $0x30] sm:$0xff]
      %v287 = vld [vmem:[%s273 + $0x38] sm:$0xff]
      %v288 = vld [vmem:[%s273 + $0x40] sm:$0xff]
      %v289 = vld [vmem:[%s273 + $0x48] sm:$0xff]
      %v290 = vld [vmem:[%s273 + $0x50] sm:$0xff]
      %v291 = vld [vmem:[%s273 + $0x58] sm:$0xff]
      %v292 = vld [vmem:[%s273 + $0x60] sm:$0x33]
      %v293 = vld [vmem:[%s1] sm:$0xf]
      %v294 = vld [vmem:[%s1 + $0x4] sm:$0xf]
      %v295 = vld [vmem:[%s1 + $0x8] sm:$0xf]
      %v296 = vld [vmem:[%s1 + $0xc] sm:$0xf]
      %v297 = vld [vmem:[%s1 + $0x10] sm:$0xf]
      %v298 = vld [vmem:[%s1 + $0x14] sm:$0xf]
      %v299 = vld [vmem:[%s1 + $0x18] sm:$0xf]
      %v300 = vld [vmem:[%s1 + $0x1c] sm:$0xf]
      %v301 = vld [vmem:[%s1 + $0x20] sm:$0xf]
      %v302 = vld [vmem:[%s1 + $0x24] sm:$0xf]
      %v303 = vld [vmem:[%s1 + $0x28] sm:$0xf]
      %v304 = vld [vmem:[%s1 + $0x2c] sm:$0xf]
      %v305 = vld [vmem:[%s1 + $0x30] sm:$0xf]
      %v306 = vld [vmem:[%s1 + $0x34] sm:$0xf]
      %v307 = vld [vmem:[%s1 + $0x38] sm:$0xf]
      %v308 = vld [vmem:[%s1 + $0x3c] sm:$0xf]
      %v309 = vld [vmem:[%s1 + $0x40] sm:$0xf]
      %v310 = vld [vmem:[%s1 + $0x44] sm:$0xf]
      %v311 = vld [vmem:[%s1 + $0x48] sm:$0xf]
      %v312 = vld [vmem:[%s1 + $0x4c] sm:$0xf]
      %v313 = vld [vmem:[%s1 + $0x50] sm:$0xf]
      %v314 = vld [vmem:[%s1 + $0x54] sm:$0xf]
      %v315 = vld [vmem:[%s1 + $0x58] sm:$0xf]
      %v316 = vld [vmem:[%s1 + $0x5c] sm:$0xf]
      %v317 = vld [vmem:[%s1 + $0x60] sm:$0xf]
      %v318 = vld [vmem:[%s1 + $0x64] sm:$0xf]
      %v319 = vld [vmem:[%s1 + $0x68] sm:$0xf]
      %v320 = vld [vmem:[%s1 + $0x6c] sm:$0xf]
      %v321 = vld [vmem:[%s1 + $0x70] sm:$0xf]
      %v322 = vld [vmem:[%s1 + $0x74] sm:$0xf]
      %v323 = vld [vmem:[%s1 + $0x78] sm:$0xf]
      %v324 = vld [vmem:[%s1 + $0x7c] sm:$0xf]
      %s325 = scalar_lea.vmem %s273, 104
      %v326 = vld [vmem:[%s325] sm:$0xff]
      %v327 = vld [vmem:[%s325 + $0x8] sm:$0xff]
      %v328 = vld [vmem:[%s325 + $0x10] sm:$0xff]
      %v329 = vld [vmem:[%s325 + $0x18] sm:$0xff]
      %v330 = vld [vmem:[%s325 + $0x20] sm:$0xff]
      %v331 = vld [vmem:[%s325 + $0x28] sm:$0xff]
      %v332 = vld [vmem:[%s325 + $0x30] sm:$0xff]
      %v333 = vld [vmem:[%s325 + $0x38] sm:$0xff]
      %v334 = vld [vmem:[%s325 + $0x40] sm:$0xff]
      %v335 = vld [vmem:[%s325 + $0x48] sm:$0xff]
      %v336 = vld [vmem:[%s325 + $0x50] sm:$0xff]
      %v337 = vld [vmem:[%s325 + $0x58] sm:$0xff]
      %v338 = vld [vmem:[%s325 + $0x60] sm:$0x33]
      %s339 = scalar_lea.vmem %s1, 128
      %v340 = vld [vmem:[%s339] sm:$0xf]
      %v341 = vld [vmem:[%s339 + $0x4] sm:$0xf]
      %v342 = vld [vmem:[%s339 + $0x8] sm:$0xf]
      %v343 = vld [vmem:[%s339 + $0xc] sm:$0xf]
      %v344 = vld [vmem:[%s339 + $0x10] sm:$0xf]
      %v345 = vld [vmem:[%s339 + $0x14] sm:$0xf]
      %v346 = vld [vmem:[%s339 + $0x18] sm:$0xf]
      %v347 = vld [vmem:[%s339 + $0x1c] sm:$0xf]
      %v348 = vld [vmem:[%s339 + $0x20] sm:$0xf]
      %v349 = vld [vmem:[%s339 + $0x24] sm:$0xf]
      %v350 = vld [vmem:[%s339 + $0x28] sm:$0xf]
      %v351 = vld [vmem:[%s339 + $0x2c] sm:$0xf]
      %v352 = vld [vmem:[%s339 + $0x30] sm:$0xf]
      %v353 = vld [vmem:[%s339 + $0x34] sm:$0xf]
      %v354 = vld [vmem:[%s339 + $0x38] sm:$0xf]
      %v355 = vld [vmem:[%s339 + $0x3c] sm:$0xf]
      %v356 = vld [vmem:[%s339 + $0x40] sm:$0xf]
      %v357 = vld [vmem:[%s339 + $0x44] sm:$0xf]
      %v358 = vld [vmem:[%s339 + $0x48] sm:$0xf]
      %v359 = vld [vmem:[%s339 + $0x4c] sm:$0xf]
      %v360 = vld [vmem:[%s339 + $0x50] sm:$0xf]
      %v361 = vld [vmem:[%s339 + $0x54] sm:$0xf]
      %v362 = vld [vmem:[%s339 + $0x58] sm:$0xf]
      %v363 = vld [vmem:[%s339 + $0x5c] sm:$0xf]
      %v364 = vld [vmem:[%s339 + $0x60] sm:$0xf]
      %v365 = vld [vmem:[%s339 + $0x64] sm:$0xf]
      %v366 = vld [vmem:[%s339 + $0x68] sm:$0xf]
      %v367 = vld [vmem:[%s339 + $0x6c] sm:$0xf]
      %v368 = vld [vmem:[%s339 + $0x70] sm:$0xf]
      %v369 = vld [vmem:[%s339 + $0x74] sm:$0xf]
      %v370 = vld [vmem:[%s339 + $0x78] sm:$0xf]
      %v371 = vld [vmem:[%s339 + $0x7c] sm:$0xf]
      %v385 = vunpack.c.l.b16 %v326
      %v386 = vunpack.c.h.b16 %v326
      %v387 = vunpack.c.l.b16 %v327
      %v388 = vunpack.c.h.b16 %v327
      %v389 = vunpack.c.l.b16 %v328
      %v390 = vunpack.c.h.b16 %v328
      %v391 = vunpack.c.l.b16 %v329
      %v392 = vunpack.c.h.b16 %v329
      %v393 = vunpack.c.l.b16 %v330
      %v394 = vunpack.c.h.b16 %v330
      %v395 = vunpack.c.l.b16 %v331
      %v396 = vunpack.c.h.b16 %v331
      %v397 = vunpack.c.l.b16 %v332
      %v398 = vunpack.c.h.b16 %v332
      %v399 = vunpack.c.l.b16 %v333
      %v400 = vunpack.c.h.b16 %v333
      %v401 = vunpack.c.l.b16 %v334
      %v402 = vunpack.c.h.b16 %v334
      %v403 = vunpack.c.l.b16 %v335
      %v404 = vunpack.c.h.b16 %v335
      %v405 = vunpack.c.l.b16 %v336
      %v406 = vunpack.c.h.b16 %v336
      %v407 = vunpack.c.l.b16 %v337
      %v408 = vunpack.c.h.b16 %v337
      %v409 = vunpack.c.l.b16 %v338
      %v410 = vunpack.c.h.b16 %v338
      %v411 = vpack.c.b16 %v387, %v385
      %v412 = vpack.c.b16 %v388, %v386
      %v413 = vpack.c.b16 %v391, %v389
      %v414 = vpack.c.b16 %v392, %v390
      %v415 = vpack.c.b16 %v395, %v393
      %v416 = vpack.c.b16 %v396, %v394
      %v417 = vpack.c.b16 %v399, %v397
      %v418 = vpack.c.b16 %v400, %v398
      %v419 = vpack.c.b16 %v403, %v401
      %v420 = vpack.c.b16 %v404, %v402
      %v421 = vpack.c.b16 %v407, %v405
      %v422 = vpack.c.b16 %v408, %v406
      %v423 = vpack.c.b16 %v409, %v409
      %v424 = vpack.c.b16 %v410, %v410
      %v471 = vunpack.c.l.b16 %v340
      %v472 = vunpack.c.l.b16 %v341
      %v473 = vunpack.c.l.b16 %v342
      %v474 = vunpack.c.l.b16 %v343
      %v475 = vunpack.c.l.b16 %v344
      %v476 = vunpack.c.l.b16 %v345
      %v477 = vunpack.c.l.b16 %v346
      %v478 = vunpack.c.l.b16 %v347
      %v479 = vunpack.c.l.b16 %v348
      %v480 = vunpack.c.l.b16 %v349
      %v481 = vunpack.c.l.b16 %v350
      %v482 = vunpack.c.l.b16 %v351
      %v483 = vunpack.c.l.b16 %v352
      %v484 = vunpack.c.l.b16 %v353
      %v485 = vunpack.c.l.b16 %v354
      %v486 = vunpack.c.l.b16 %v355
      %v487 = vunpack.c.l.b16 %v356
      %v488 = vunpack.c.l.b16 %v357
      %v489 = vunpack.c.l.b16 %v358
      %v490 = vunpack.c.l.b16 %v359
      %v491 = vunpack.c.l.b16 %v360
      %v492 = vunpack.c.l.b16 %v361
      %v493 = vunpack.c.l.b16 %v362
      %v494 = vunpack.c.l.b16 %v363
      %v495 = vunpack.c.l.b16 %v364
      %v496 = vunpack.c.l.b16 %v365
      %v497 = vunpack.c.l.b16 %v366
      %v498 = vunpack.c.l.b16 %v367
      %v499 = vunpack.c.l.b16 %v368
      %v500 = vunpack.c.l.b16 %v369
      %v501 = vunpack.c.l.b16 %v370
      %v502 = vunpack.c.l.b16 %v371
      %v503 = vpack.c.b16 %v472, %v471
      %v504 = vpack.c.b16 %v474, %v473
      %v505 = vpack.c.b16 %v476, %v475
      %v506 = vpack.c.b16 %v478, %v477
      %v507 = vpack.c.b16 %v480, %v479
      %v508 = vpack.c.b16 %v482, %v481
      %v509 = vpack.c.b16 %v484, %v483
      %v510 = vpack.c.b16 %v486, %v485
      %v511 = vpack.c.b16 %v488, %v487
      %v512 = vpack.c.b16 %v490, %v489
      %v513 = vpack.c.b16 %v492, %v491
      %v514 = vpack.c.b16 %v494, %v493
      %v515 = vpack.c.b16 %v496, %v495
      %v516 = vpack.c.b16 %v498, %v497
      %v517 = vpack.c.b16 %v500, %v499
      %v518 = vpack.c.b16 %v502, %v501
      %535 = vmatpush.bf16.msra.mxu0 %v510
      %536 = vmatpush.bf16.msra.mxu0 %v509
      %537 = vmatpush.bf16.msra.mxu0 %v508
      %538 = vmatpush.bf16.msra.mxu0 %v507
      %539 = vmatpush.bf16.msra.mxu0 %v506
      %540 = vmatpush.bf16.msra.mxu0 %v505
      %541 = vmatpush.bf16.msra.mxu0 %v504
      %542 = vmatpush.bf16.msra.mxu0 %v503
      %543 = vmatmul.bf16.gmra.mxu0 %v411
      %v544 = vpop.f32.mrf.mxu0
      %v545 = vadd.f32 0.0, %v544
      %v546 = vpop.f32.mrf.mxu0
      %v547 = vadd.f32 0.0, %v546
      %548 = vmatmul.bf16.gmra.mxu0 %v413
      %v549 = vpop.f32.mrf.mxu0
      %v550 = vadd.f32 0.0, %v549
      %v551 = vpop.f32.mrf.mxu0
      %v552 = vadd.f32 0.0, %v551
      %553 = vmatmul.bf16.gmra.mxu0 %v415
      %v554 = vpop.f32.mrf.mxu0
      %v555 = vadd.f32 0.0, %v554
      %v556 = vpop.f32.mrf.mxu0
      %v557 = vadd.f32 0.0, %v556
      %558 = vmatmul.bf16.gmra.mxu0 %v417
      %v559 = vpop.f32.mrf.mxu0
      %v560 = vadd.f32 0.0, %v559
      %v561 = vpop.f32.mrf.mxu0
      %v562 = vadd.f32 0.0, %v561
      %563 = vmatmul.bf16.gmra.mxu0 %v419
      %v564 = vpop.f32.mrf.mxu0
      %v565 = vadd.f32 0.0, %v564
      %v566 = vpop.f32.mrf.mxu0
      %v567 = vadd.f32 0.0, %v566
      %568 = vmatmul.bf16.gmra.mxu0 %v421
      %v569 = vpop.f32.mrf.mxu0
      %v570 = vadd.f32 0.0, %v569
      %v571 = vpop.f32.mrf.mxu0
      %v572 = vadd.f32 0.0, %v571
      %573 = vmatmul.bf16.gmra.mxu0 %v423
      %v574 = vpop.f32.mrf.mxu0
      %v575 = vadd.f32 0.0, %v574
      %v576 = vpop.f32.mrf.mxu0
      %577 = vdwg.mxu0
      %578 = vmatpush.bf16.msra.mxu0 %v518
      %579 = vmatpush.bf16.msra.mxu0 %v517
      %580 = vmatpush.bf16.msra.mxu0 %v516
      %581 = vmatpush.bf16.msra.mxu0 %v515
      %582 = vmatpush.bf16.msra.mxu0 %v514
      %583 = vmatpush.bf16.msra.mxu0 %v513
      %584 = vmatpush.bf16.msra.mxu0 %v512
      %585 = vmatpush.bf16.msra.mxu0 %v511
      %586 = vmatmul.bf16.gmra.mxu0 %v412
      %v587 = vpop.f32.mrf.mxu0
      %v588 = vadd.f32 %v545, %v587
      %v589 = vpop.f32.mrf.mxu0
      %v590 = vadd.f32 %v547, %v589
      %591 = vmatmul.bf16.gmra.mxu0 %v414
      %v592 = vpop.f32.mrf.mxu0
      %v593 = vadd.f32 %v550, %v592
      %v594 = vpop.f32.mrf.mxu0
      %v595 = vadd.f32 %v552, %v594
      %596 = vmatmul.bf16.gmra.mxu0 %v416
      %v597 = vpop.f32.mrf.mxu0
      %v598 = vadd.f32 %v555, %v597
      %v599 = vpop.f32.mrf.mxu0
      %v600 = vadd.f32 %v557, %v599
      %601 = vmatmul.bf16.gmra.mxu0 %v418
      %v602 = vpop.f32.mrf.mxu0
      %v603 = vadd.f32 %v560, %v602
      %v604 = vpop.f32.mrf.mxu0
      %v605 = vadd.f32 %v562, %v604
      %606 = vmatmul.bf16.gmra.mxu0 %v420
      %v607 = vpop.f32.mrf.mxu0
      %v608 = vadd.f32 %v565, %v607
      %v609 = vpop.f32.mrf.mxu0
      %v610 = vadd.f32 %v567, %v609
      %611 = vmatmul.bf16.gmra.mxu0 %v422
      %v612 = vpop.f32.mrf.mxu0
      %v613 = vadd.f32 %v570, %v612
      %v614 = vpop.f32.mrf.mxu0
      %v615 = vadd.f32 %v572, %v614
      %616 = vmatmul.bf16.gmra.mxu0 %v424
      %v617 = vpop.f32.mrf.mxu0
      %v618 = vadd.f32 %v575, %v617
      %v619 = vpop.f32.mrf.mxu0
      %620 = vdwg.mxu0
      %v634 = vunpack.c.l.b16 %v280
      %v635 = vunpack.c.h.b16 %v280
      %v636 = vunpack.c.l.b16 %v281
      %v637 = vunpack.c.h.b16 %v281
      %v638 = vunpack.c.l.b16 %v282
      %v639 = vunpack.c.h.b16 %v282
      %v640 = vunpack.c.l.b16 %v283
      %v641 = vunpack.c.h.b16 %v283
      %v642 = vunpack.c.l.b16 %v284
      %v643 = vunpack.c.h.b16 %v284
      %v644 = vunpack.c.l.b16 %v285
      %v645 = vunpack.c.h.b16 %v285
      %v646 = vunpack.c.l.b16 %v286
      %v647 = vunpack.c.h.b16 %v286
      %v648 = vunpack.c.l.b16 %v287
      %v649 = vunpack.c.h.b16 %v287
      %v650 = vunpack.c.l.b16 %v288
      %v651 = vunpack.c.h.b16 %v288
      %v652 = vunpack.c.l.b16 %v289
      %v653 = vunpack.c.h.b16 %v289
      %v654 = vunpack.c.l.b16 %v290
      %v655 = vunpack.c.h.b16 %v290
      %v656 = vunpack.c.l.b16 %v291
      %v657 = vunpack.c.h.b16 %v291
      %v658 = vunpack.c.l.b16 %v292
      %v659 = vunpack.c.h.b16 %v292
      %v660 = vpack.c.b16 %v636, %v634
      %v661 = vpack.c.b16 %v637, %v635
      %v662 = vpack.c.b16 %v640, %v638
      %v663 = vpack.c.b16 %v641, %v639
      %v664 = vpack.c.b16 %v644, %v642
      %v665 = vpack.c.b16 %v645, %v643
      %v666 = vpack.c.b16 %v648, %v646
      %v667 = vpack.c.b16 %v649, %v647
      %v668 = vpack.c.b16 %v652, %v650
      %v669 = vpack.c.b16 %v653, %v651
      %v670 = vpack.c.b16 %v656, %v654
      %v671 = vpack.c.b16 %v657, %v655
      %v672 = vpack.c.b16 %v658, %v658
      %v673 = vpack.c.b16 %v659, %v659
      %v720 = vunpack.c.l.b16 %v293
      %v721 = vunpack.c.l.b16 %v294
      %v722 = vunpack.c.l.b16 %v295
      %v723 = vunpack.c.l.b16 %v296
      %v724 = vunpack.c.l.b16 %v297
      %v725 = vunpack.c.l.b16 %v298
      %v726 = vunpack.c.l.b16 %v299
      %v727 = vunpack.c.l.b16 %v300
      %v728 = vunpack.c.l.b16 %v301
      %v729 = vunpack.c.l.b16 %v302
      %v730 = vunpack.c.l.b16 %v303
      %v731 = vunpack.c.l.b16 %v304
      %v732 = vunpack.c.l.b16 %v305
      %v733 = vunpack.c.l.b16 %v306
      %v734 = vunpack.c.l.b16 %v307
      %v735 = vunpack.c.l.b16 %v308
      %v736 = vunpack.c.l.b16 %v309
      %v737 = vunpack.c.l.b16 %v310
      %v738 = vunpack.c.l.b16 %v311
      %v739 = vunpack.c.l.b16 %v312
      %v740 = vunpack.c.l.b16 %v313
      %v741 = vunpack.c.l.b16 %v314
      %v742 = vunpack.c.l.b16 %v315
      %v743 = vunpack.c.l.b16 %v316
      %v744 = vunpack.c.l.b16 %v317
      %v745 = vunpack.c.l.b16 %v318
      %v746 = vunpack.c.l.b16 %v319
      %v747 = vunpack.c.l.b16 %v320
      %v748 = vunpack.c.l.b16 %v321
      %v749 = vunpack.c.l.b16 %v322
      %v750 = vunpack.c.l.b16 %v323
      %v751 = vunpack.c.l.b16 %v324
      %v752 = vpack.c.b16 %v721, %v720
      %v753 = vpack.c.b16 %v723, %v722
      %v754 = vpack.c.b16 %v725, %v724
      %v755 = vpack.c.b16 %v727, %v726
      %v756 = vpack.c.b16 %v729, %v728
      %v757 = vpack.c.b16 %v731, %v730
      %v758 = vpack.c.b16 %v733, %v732
      %v759 = vpack.c.b16 %v735, %v734
      %v760 = vpack.c.b16 %v737, %v736
      %v761 = vpack.c.b16 %v739, %v738
      %v762 = vpack.c.b16 %v741, %v740
      %v763 = vpack.c.b16 %v743, %v742
      %v764 = vpack.c.b16 %v745, %v744
      %v765 = vpack.c.b16 %v747, %v746
      %v766 = vpack.c.b16 %v749, %v748
      %v767 = vpack.c.b16 %v751, %v750
      %784 = vmatpush.bf16.msra.mxu0 %v759
      %785 = vmatpush.bf16.msra.mxu0 %v758
      %786 = vmatpush.bf16.msra.mxu0 %v757
      %787 = vmatpush.bf16.msra.mxu0 %v756
      %788 = vmatpush.bf16.msra.mxu0 %v755
      %789 = vmatpush.bf16.msra.mxu0 %v754
      %790 = vmatpush.bf16.msra.mxu0 %v753
      %791 = vmatpush.bf16.msra.mxu0 %v752
      %792 = vmatmul.bf16.gmra.mxu0 %v660
      %v793 = vpop.f32.mrf.mxu0
      %v794 = vadd.f32 %v588, %v793
      %v795 = vpop.f32.mrf.mxu0
      %v796 = vadd.f32 %v590, %v795
      %797 = vmatmul.bf16.gmra.mxu0 %v662
      %v798 = vpop.f32.mrf.mxu0
      %v799 = vadd.f32 %v593, %v798
      %v800 = vpop.f32.mrf.mxu0
      %v801 = vadd.f32 %v595, %v800
      %802 = vmatmul.bf16.gmra.mxu0 %v664
      %v803 = vpop.f32.mrf.mxu0
      %v804 = vadd.f32 %v598, %v803
      %v805 = vpop.f32.mrf.mxu0
      %v806 = vadd.f32 %v600, %v805
      %807 = vmatmul.bf16.gmra.mxu0 %v666
      %v808 = vpop.f32.mrf.mxu0
      %v809 = vadd.f32 %v603, %v808
      %v810 = vpop.f32.mrf.mxu0
      %v811 = vadd.f32 %v605, %v810
      %812 = vmatmul.bf16.gmra.mxu0 %v668
      %v813 = vpop.f32.mrf.mxu0
      %v814 = vadd.f32 %v608, %v813
      %v815 = vpop.f32.mrf.mxu0
      %v816 = vadd.f32 %v610, %v815
      %817 = vmatmul.bf16.gmra.mxu0 %v670
      %v818 = vpop.f32.mrf.mxu0
      %v819 = vadd.f32 %v613, %v818
      %v820 = vpop.f32.mrf.mxu0
      %v821 = vadd.f32 %v615, %v820
      %822 = vmatmul.bf16.gmra.mxu0 %v672
      %v823 = vpop.f32.mrf.mxu0
      %v824 = vadd.f32 %v618, %v823
      %v825 = vpop.f32.mrf.mxu0
      %826 = vdwg.mxu0
      %827 = vmatpush.bf16.msra.mxu0 %v767
      %828 = vmatpush.bf16.msra.mxu0 %v766
      %829 = vmatpush.bf16.msra.mxu0 %v765
      %830 = vmatpush.bf16.msra.mxu0 %v764
      %831 = vmatpush.bf16.msra.mxu0 %v763
      %832 = vmatpush.bf16.msra.mxu0 %v762
      %833 = vmatpush.bf16.msra.mxu0 %v761
      %834 = vmatpush.bf16.msra.mxu0 %v760
      %835 = vmatmul.bf16.gmra.mxu0 %v661
      %v836 = vpop.f32.mrf.mxu0
      %v837 = vadd.f32 %v794, %v836
      %v838 = vpop.f32.mrf.mxu0
      %v839 = vadd.f32 %v796, %v838
      %840 = vmatmul.bf16.gmra.mxu0 %v663
      %v841 = vpop.f32.mrf.mxu0
      %v842 = vadd.f32 %v799, %v841
      %v843 = vpop.f32.mrf.mxu0
      %v844 = vadd.f32 %v801, %v843
      %845 = vmatmul.bf16.gmra.mxu0 %v665
      %v846 = vpop.f32.mrf.mxu0
      %v847 = vadd.f32 %v804, %v846
      %v848 = vpop.f32.mrf.mxu0
      %v849 = vadd.f32 %v806, %v848
      %850 = vmatmul.bf16.gmra.mxu0 %v667
      %v851 = vpop.f32.mrf.mxu0
      %v852 = vadd.f32 %v809, %v851
      %v853 = vpop.f32.mrf.mxu0
      %v854 = vadd.f32 %v811, %v853
      %855 = vmatmul.bf16.gmra.mxu0 %v669
      %v856 = vpop.f32.mrf.mxu0
      %v857 = vadd.f32 %v814, %v856
      %v858 = vpop.f32.mrf.mxu0
      %v859 = vadd.f32 %v816, %v858
      %860 = vmatmul.bf16.gmra.mxu0 %v671
      %v861 = vpop.f32.mrf.mxu0
      %v862 = vadd.f32 %v819, %v861
      %v863 = vpop.f32.mrf.mxu0
      %v864 = vadd.f32 %v821, %v863
      %865 = vmatmul.bf16.gmra.mxu0 %v673
      %v866 = vpop.f32.mrf.mxu0
      %v867 = vadd.f32 %v824, %v866
      %v868 = vpop.f32.mrf.mxu0
      %869 = vdwg.mxu0
      %s870 = scalar_lea.vmem %s273, 208
      %v871 = vld [vmem:[%s870] sm:$0xff]
      %v872 = vld [vmem:[%s870 + $0x8] sm:$0xff]
      %v873 = vld [vmem:[%s870 + $0x10] sm:$0xff]
      %v874 = vld [vmem:[%s870 + $0x18] sm:$0xff]
      %v875 = vld [vmem:[%s870 + $0x20] sm:$0xff]
      %v876 = vld [vmem:[%s870 + $0x28] sm:$0xff]
      %v877 = vld [vmem:[%s870 + $0x30] sm:$0xff]
      %v878 = vld [vmem:[%s870 + $0x38] sm:$0xff]
      %v879 = vld [vmem:[%s870 + $0x40] sm:$0xff]
      %v880 = vld [vmem:[%s870 + $0x48] sm:$0xff]
      %v881 = vld [vmem:[%s870 + $0x50] sm:$0xff]
      %v882 = vld [vmem:[%s870 + $0x58] sm:$0xff]
      %v883 = vld [vmem:[%s870 + $0x60] sm:$0x33]
      %s884 = scalar_lea.vmem %s1, 256
      %v885 = vld [vmem:[%s884] sm:$0xf]
      %v886 = vld [vmem:[%s884 + $0x4] sm:$0xf]
      %v887 = vld [vmem:[%s884 + $0x8] sm:$0xf]
      %v888 = vld [vmem:[%s884 + $0xc] sm:$0xf]
      %v889 = vld [vmem:[%s884 + $0x10] sm:$0xf]
      %v890 = vld [vmem:[%s884 + $0x14] sm:$0xf]
      %v891 = vld [vmem:[%s884 + $0x18] sm:$0xf]
      %v892 = vld [vmem:[%s884 + $0x1c] sm:$0xf]
      %v893 = vld [vmem:[%s884 + $0x20] sm:$0xf]
      %v894 = vld [vmem:[%s884 + $0x24] sm:$0xf]
      %v895 = vld [vmem:[%s884 + $0x28] sm:$0xf]
      %v896 = vld [vmem:[%s884 + $0x2c] sm:$0xf]
      %v897 = vld [vmem:[%s884 + $0x30] sm:$0xf]
      %v898 = vld [vmem:[%s884 + $0x34] sm:$0xf]
      %v899 = vld [vmem:[%s884 + $0x38] sm:$0xf]
      %v900 = vld [vmem:[%s884 + $0x3c] sm:$0xf]
      %v901 = vld [vmem:[%s884 + $0x40] sm:$0xf]
      %v902 = vld [vmem:[%s884 + $0x44] sm:$0xf]
      %v903 = vld [vmem:[%s884 + $0x48] sm:$0xf]
      %v904 = vld [vmem:[%s884 + $0x4c] sm:$0xf]
      %v905 = vld [vmem:[%s884 + $0x50] sm:$0xf]
      %v906 = vld [vmem:[%s884 + $0x54] sm:$0xf]
      %v907 = vld [vmem:[%s884 + $0x58] sm:$0xf]
      %v908 = vld [vmem:[%s884 + $0x5c] sm:$0xf]
      %v909 = vld [vmem:[%s884 + $0x60] sm:$0xf]
      %v910 = vld [vmem:[%s884 + $0x64] sm:$0xf]
      %v911 = vld [vmem:[%s884 + $0x68] sm:$0xf]
      %v912 = vld [vmem:[%s884 + $0x6c] sm:$0xf]
      %v913 = vld [vmem:[%s884 + $0x70] sm:$0xf]
      %v914 = vld [vmem:[%s884 + $0x74] sm:$0xf]
      %v915 = vld [vmem:[%s884 + $0x78] sm:$0xf]
      %v916 = vld [vmem:[%s884 + $0x7c] sm:$0xf]
      %v930 = vunpack.c.l.b16 %v871
      %v931 = vunpack.c.h.b16 %v871
      %v932 = vunpack.c.l.b16 %v872
      %v933 = vunpack.c.h.b16 %v872
      %v934 = vunpack.c.l.b16 %v873
      %v935 = vunpack.c.h.b16 %v873
      %v936 = vunpack.c.l.b16 %v874
      %v937 = vunpack.c.h.b16 %v874
      %v938 = vunpack.c.l.b16 %v875
      %v939 = vunpack.c.h.b16 %v875
      %v940 = vunpack.c.l.b16 %v876
      %v941 = vunpack.c.h.b16 %v876
      %v942 = vunpack.c.l.b16 %v877
      %v943 = vunpack.c.h.b16 %v877
      %v944 = vunpack.c.l.b16 %v878
      %v945 = vunpack.c.h.b16 %v878
      %v946 = vunpack.c.l.b16 %v879
      %v947 = vunpack.c.h.b16 %v879
      %v948 = vunpack.c.l.b16 %v880
      %v949 = vunpack.c.h.b16 %v880
      %v950 = vunpack.c.l.b16 %v881
      %v951 = vunpack.c.h.b16 %v881
      %v952 = vunpack.c.l.b16 %v882
      %v953 = vunpack.c.h.b16 %v882
      %v954 = vunpack.c.l.b16 %v883
      %v955 = vunpack.c.h.b16 %v883
      %v956 = vpack.c.b16 %v932, %v930
      %v957 = vpack.c.b16 %v933, %v931
      %v958 = vpack.c.b16 %v936, %v934
      %v959 = vpack.c.b16 %v937, %v935
      %v960 = vpack.c.b16 %v940, %v938
      %v961 = vpack.c.b16 %v941, %v939
      %v962 = vpack.c.b16 %v944, %v942
      %v963 = vpack.c.b16 %v945, %v943
      %v964 = vpack.c.b16 %v948, %v946
      %v965 = vpack.c.b16 %v949, %v947
      %v966 = vpack.c.b16 %v952, %v950
      %v967 = vpack.c.b16 %v953, %v951
      %v968 = vpack.c.b16 %v954, %v954
      %v969 = vpack.c.b16 %v955, %v955
      %v1016 = vunpack.c.l.b16 %v885
      %v1017 = vunpack.c.l.b16 %v886
      %v1018 = vunpack.c.l.b16 %v887
      %v1019 = vunpack.c.l.b16 %v888
      %v1020 = vunpack.c.l.b16 %v889
      %v1021 = vunpack.c.l.b16 %v890
      %v1022 = vunpack.c.l.b16 %v891
      %v1023 = vunpack.c.l.b16 %v892
      %v1024 = vunpack.c.l.b16 %v893
      %v1025 = vunpack.c.l.b16 %v894
      %v1026 = vunpack.c.l.b16 %v895
      %v1027 = vunpack.c.l.b16 %v896
      %v1028 = vunpack.c.l.b16 %v897
      %v1029 = vunpack.c.l.b16 %v898
      %v1030 = vunpack.c.l.b16 %v899
      %v1031 = vunpack.c.l.b16 %v900
      %v1032 = vunpack.c.l.b16 %v901
      %v1033 = vunpack.c.l.b16 %v902
      %v1034 = vunpack.c.l.b16 %v903
      %v1035 = vunpack.c.l.b16 %v904
      %v1036 = vunpack.c.l.b16 %v905
      %v1037 = vunpack.c.l.b16 %v906
      %v1038 = vunpack.c.l.b16 %v907
      %v1039 = vunpack.c.l.b16 %v908
      %v1040 = vunpack.c.l.b16 %v909
      %v1041 = vunpack.c.l.b16 %v910
      %v1042 = vunpack.c.l.b16 %v911
      %v1043 = vunpack.c.l.b16 %v912
      %v1044 = vunpack.c.l.b16 %v913
      %v1045 = vunpack.c.l.b16 %v914
      %v1046 = vunpack.c.l.b16 %v915
      %v1047 = vunpack.c.l.b16 %v916
      %v1048 = vpack.c.b16 %v1017, %v1016
      %v1049 = vpack.c.b16 %v1019, %v1018
      %v1050 = vpack.c.b16 %v1021, %v1020
      %v1051 = vpack.c.b16 %v1023, %v1022
      %v1052 = vpack.c.b16 %v1025, %v1024
      %v1053 = vpack.c.b16 %v1027, %v1026
      %v1054 = vpack.c.b16 %v1029, %v1028
      %v1055 = vpack.c.b16 %v1031, %v1030
      %v1056 = vpack.c.b16 %v1033, %v1032
      %v1057 = vpack.c.b16 %v1035, %v1034
      %v1058 = vpack.c.b16 %v1037, %v1036
      %v1059 = vpack.c.b16 %v1039, %v1038
      %v1060 = vpack.c.b16 %v1041, %v1040
      %v1061 = vpack.c.b16 %v1043, %v1042
      %v1062 = vpack.c.b16 %v1045, %v1044
      %v1063 = vpack.c.b16 %v1047, %v1046
      %1080 = vmatpush.bf16.msra.mxu0 %v1055
      %1081 = vmatpush.bf16.msra.mxu0 %v1054
      %1082 = vmatpush.bf16.msra.mxu0 %v1053
      %1083 = vmatpush.bf16.msra.mxu0 %v1052
      %1084 = vmatpush.bf16.msra.mxu0 %v1051
      %1085 = vmatpush.bf16.msra.mxu0 %v1050
      %1086 = vmatpush.bf16.msra.mxu0 %v1049
      %1087 = vmatpush.bf16.msra.mxu0 %v1048
      %1088 = vmatmul.bf16.gmra.mxu0 %v956
      %v1089 = vpop.f32.mrf.mxu0
      %v1090 = vadd.f32 0.0, %v1089
      %v1091 = vpop.f32.mrf.mxu0
      %v1092 = vadd.f32 0.0, %v1091
      %1093 = vmatmul.bf16.gmra.mxu0 %v958
      %v1094 = vpop.f32.mrf.mxu0
      %v1095 = vadd.f32 0.0, %v1094
      %v1096 = vpop.f32.mrf.mxu0
      %v1097 = vadd.f32 0.0, %v1096
      %1098 = vmatmul.bf16.gmra.mxu0 %v960
      %v1099 = vpop.f32.mrf.mxu0
      %v1100 = vadd.f32 0.0, %v1099
      %v1101 = vpop.f32.mrf.mxu0
      %v1102 = vadd.f32 0.0, %v1101
      %1103 = vmatmul.bf16.gmra.mxu0 %v962
      %v1104 = vpop.f32.mrf.mxu0
      %v1105 = vadd.f32 0.0, %v1104
      %v1106 = vpop.f32.mrf.mxu0
      %v1107 = vadd.f32 0.0, %v1106
      %1108 = vmatmul.bf16.gmra.mxu0 %v964
      %v1109 = vpop.f32.mrf.mxu0
      %v1110 = vadd.f32 0.0, %v1109
      %v1111 = vpop.f32.mrf.mxu0
      %v1112 = vadd.f32 0.0, %v1111
      %1113 = vmatmul.bf16.gmra.mxu0 %v966
      %v1114 = vpop.f32.mrf.mxu0
      %v1115 = vadd.f32 0.0, %v1114
      %v1116 = vpop.f32.mrf.mxu0
      %v1117 = vadd.f32 0.0, %v1116
      %1118 = vmatmul.bf16.gmra.mxu0 %v968
      %v1119 = vpop.f32.mrf.mxu0
      %v1120 = vadd.f32 0.0, %v1119
      %v1121 = vpop.f32.mrf.mxu0
      %1122 = vdwg.mxu0
      %1123 = vmatpush.bf16.msra.mxu0 %v1063
      %1124 = vmatpush.bf16.msra.mxu0 %v1062
      %1125 = vmatpush.bf16.msra.mxu0 %v1061
      %1126 = vmatpush.bf16.msra.mxu0 %v1060
      %1127 = vmatpush.bf16.msra.mxu0 %v1059
      %1128 = vmatpush.bf16.msra.mxu0 %v1058
      %1129 = vmatpush.bf16.msra.mxu0 %v1057
      %1130 = vmatpush.bf16.msra.mxu0 %v1056
      %1131 = vmatmul.bf16.gmra.mxu0 %v957
      %v1132 = vpop.f32.mrf.mxu0
      %v1133 = vadd.f32 %v1090, %v1132
      %v1134 = vpop.f32.mrf.mxu0
      %v1135 = vadd.f32 %v1092, %v1134
      %1136 = vmatmul.bf16.gmra.mxu0 %v959
      %v1137 = vpop.f32.mrf.mxu0
      %v1138 = vadd.f32 %v1095, %v1137
      %v1139 = vpop.f32.mrf.mxu0
      %v1140 = vadd.f32 %v1097, %v1139
      %1141 = vmatmul.bf16.gmra.mxu0 %v961
      %v1142 = vpop.f32.mrf.mxu0
      %v1143 = vadd.f32 %v1100, %v1142
      %v1144 = vpop.f32.mrf.mxu0
      %v1145 = vadd.f32 %v1102, %v1144
      %1146 = vmatmul.bf16.gmra.mxu0 %v963
      %v1147 = vpop.f32.mrf.mxu0
      %v1148 = vadd.f32 %v1105, %v1147
      %v1149 = vpop.f32.mrf.mxu0
      %v1150 = vadd.f32 %v1107, %v1149
      %1151 = vmatmul.bf16.gmra.mxu0 %v965
      %v1152 = vpop.f32.mrf.mxu0
      %v1153 = vadd.f32 %v1110, %v1152
      %v1154 = vpop.f32.mrf.mxu0
      %v1155 = vadd.f32 %v1112, %v1154
      %1156 = vmatmul.bf16.gmra.mxu0 %v967
      %v1157 = vpop.f32.mrf.mxu0
      %v1158 = vadd.f32 %v1115, %v1157
      %v1159 = vpop.f32.mrf.mxu0
      %v1160 = vadd.f32 %v1117, %v1159
      %1161 = vmatmul.bf16.gmra.mxu0 %v969
      %v1162 = vpop.f32.mrf.mxu0
      %v1163 = vadd.f32 %v1120, %v1162
      %v1164 = vpop.f32.mrf.mxu0
      %1165 = vdwg.mxu0
      %v1166 = vadd.f32 %v837, %v1133
      %v1167 = vadd.f32 %v839, %v1135
      %v1168 = vadd.f32 %v842, %v1138
      %v1169 = vadd.f32 %v844, %v1140
      %v1170 = vadd.f32 %v847, %v1143
      %v1171 = vadd.f32 %v849, %v1145
      %v1172 = vadd.f32 %v852, %v1148
      %v1173 = vadd.f32 %v854, %v1150
      %v1174 = vadd.f32 %v857, %v1153
      %v1175 = vadd.f32 %v859, %v1155
      %v1176 = vadd.f32 %v862, %v1158
      %v1177 = vadd.f32 %v864, %v1160
      %v1178 = vadd.f32 %v867, %v1163
      %s1179 = scalar_lea.vmem %s273, 312
      %v1180 = vld [vmem:[%s1179] sm:$0xff]
      %v1181 = vld [vmem:[%s1179 + $0x8] sm:$0xff]
      %v1182 = vld [vmem:[%s1179 + $0x10] sm:$0xff]
      %v1183 = vld [vmem:[%s1179 + $0x18] sm:$0xff]
      %v1184 = vld [vmem:[%s1179 + $0x20] sm:$0xff]
      %v1185 = vld [vmem:[%s1179 + $0x28] sm:$0xff]
      %v1186 = vld [vmem:[%s1179 + $0x30] sm:$0xff]
      %v1187 = vld [vmem:[%s1179 + $0x38] sm:$0xff]
      %v1188 = vld [vmem:[%s1179 + $0x40] sm:$0xff]
      %v1189 = vld [vmem:[%s1179 + $0x48] sm:$0xff]
      %v1190 = vld [vmem:[%s1179 + $0x50] sm:$0xff]
      %v1191 = vld [vmem:[%s1179 + $0x58] sm:$0xff]
      %v1192 = vld [vmem:[%s1179 + $0x60] sm:$0x33]
      %s1193 = scalar_lea.vmem %s1, 384
      %v1194 = vld [vmem:[%s1193] sm:$0xf]
      %v1195 = vld [vmem:[%s1193 + $0x4] sm:$0xf]
      %v1196 = vld [vmem:[%s1193 + $0x8] sm:$0xf]
      %v1197 = vld [vmem:[%s1193 + $0xc] sm:$0xf]
      %v1198 = vld [vmem:[%s1193 + $0x10] sm:$0xf]
      %v1199 = vld [vmem:[%s1193 + $0x14] sm:$0xf]
      %v1200 = vld [vmem:[%s1193 + $0x18] sm:$0xf]
      %v1201 = vld [vmem:[%s1193 + $0x1c] sm:$0xf]
      %v1202 = vld [vmem:[%s1193 + $0x20] sm:$0xf]
      %v1203 = vld [vmem:[%s1193 + $0x24] sm:$0xf]
      %v1204 = vld [vmem:[%s1193 + $0x28] sm:$0xf]
      %v1205 = vld [vmem:[%s1193 + $0x2c] sm:$0xf]
      %v1206 = vld [vmem:[%s1193 + $0x30] sm:$0xf]
      %v1207 = vld [vmem:[%s1193 + $0x34] sm:$0xf]
      %v1208 = vld [vmem:[%s1193 + $0x38] sm:$0xf]
      %v1209 = vld [vmem:[%s1193 + $0x3c] sm:$0xf]
      %v1210 = vld [vmem:[%s1193 + $0x40] sm:$0xf]
      %v1211 = vld [vmem:[%s1193 + $0x44] sm:$0xf]
      %v1212 = vld [vmem:[%s1193 + $0x48] sm:$0xf]
      %v1213 = vld [vmem:[%s1193 + $0x4c] sm:$0xf]
      %v1214 = vld [vmem:[%s1193 + $0x50] sm:$0xf]
      %v1215 = vld [vmem:[%s1193 + $0x54] sm:$0xf]
      %v1216 = vld [vmem:[%s1193 + $0x58] sm:$0xf]
      %v1217 = vld [vmem:[%s1193 + $0x5c] sm:$0xf]
      %v1218 = vld [vmem:[%s1193 + $0x60] sm:$0xf]
      %v1219 = vld [vmem:[%s1193 + $0x64] sm:$0xf]
      %v1220 = vld [vmem:[%s1193 + $0x68] sm:$0xf]
      %v1221 = vld [vmem:[%s1193 + $0x6c] sm:$0xf]
      %v1222 = vld [vmem:[%s1193 + $0x70] sm:$0xf]
      %v1223 = vld [vmem:[%s1193 + $0x74] sm:$0xf]
      %v1224 = vld [vmem:[%s1193 + $0x78] sm:$0xf]
      %v1225 = vld [vmem:[%s1193 + $0x7c] sm:$0xf]
      %v1239 = vunpack.c.l.b16 %v1180
      %v1240 = vunpack.c.h.b16 %v1180
      %v1241 = vunpack.c.l.b16 %v1181
      %v1242 = vunpack.c.h.b16 %v1181
      %v1243 = vunpack.c.l.b16 %v1182
      %v1244 = vunpack.c.h.b16 %v1182
      %v1245 = vunpack.c.l.b16 %v1183
      %v1246 = vunpack.c.h.b16 %v1183
      %v1247 = vunpack.c.l.b16 %v1184
      %v1248 = vunpack.c.h.b16 %v1184
      %v1249 = vunpack.c.l.b16 %v1185
      %v1250 = vunpack.c.h.b16 %v1185
      %v1251 = vunpack.c.l.b16 %v1186
      %v1252 = vunpack.c.h.b16 %v1186
      %v1253 = vunpack.c.l.b16 %v1187
      %v1254 = vunpack.c.h.b16 %v1187
      %v1255 = vunpack.c.l.b16 %v1188
      %v1256 = vunpack.c.h.b16 %v1188
      %v1257 = vunpack.c.l.b16 %v1189
      %v1258 = vunpack.c.h.b16 %v1189
      %v1259 = vunpack.c.l.b16 %v1190
      %v1260 = vunpack.c.h.b16 %v1190
      %v1261 = vunpack.c.l.b16 %v1191
      %v1262 = vunpack.c.h.b16 %v1191
      %v1263 = vunpack.c.l.b16 %v1192
      %v1264 = vunpack.c.h.b16 %v1192
      %v1265 = vpack.c.b16 %v1241, %v1239
      %v1266 = vpack.c.b16 %v1242, %v1240
      %v1267 = vpack.c.b16 %v1245, %v1243
      %v1268 = vpack.c.b16 %v1246, %v1244
      %v1269 = vpack.c.b16 %v1249, %v1247
      %v1270 = vpack.c.b16 %v1250, %v1248
      %v1271 = vpack.c.b16 %v1253, %v1251
      %v1272 = vpack.c.b16 %v1254, %v1252
      %v1273 = vpack.c.b16 %v1257, %v1255
      %v1274 = vpack.c.b16 %v1258, %v1256
      %v1275 = vpack.c.b16 %v1261, %v1259
      %v1276 = vpack.c.b16 %v1262, %v1260
      %v1277 = vpack.c.b16 %v1263, %v1263
      %v1278 = vpack.c.b16 %v1264, %v1264
      %v1325 = vunpack.c.l.b16 %v1194
      %v1326 = vunpack.c.l.b16 %v1195
      %v1327 = vunpack.c.l.b16 %v1196
      %v1328 = vunpack.c.l.b16 %v1197
      %v1329 = vunpack.c.l.b16 %v1198
      %v1330 = vunpack.c.l.b16 %v1199
      %v1331 = vunpack.c.l.b16 %v1200
      %v1332 = vunpack.c.l.b16 %v1201
      %v1333 = vunpack.c.l.b16 %v1202
      %v1334 = vunpack.c.l.b16 %v1203
      %v1335 = vunpack.c.l.b16 %v1204
      %v1336 = vunpack.c.l.b16 %v1205
      %v1337 = vunpack.c.l.b16 %v1206
      %v1338 = vunpack.c.l.b16 %v1207
      %v1339 = vunpack.c.l.b16 %v1208
      %v1340 = vunpack.c.l.b16 %v1209
      %v1341 = vunpack.c.l.b16 %v1210
      %v1342 = vunpack.c.l.b16 %v1211
      %v1343 = vunpack.c.l.b16 %v1212
      %v1344 = vunpack.c.l.b16 %v1213
      %v1345 = vunpack.c.l.b16 %v1214
      %v1346 = vunpack.c.l.b16 %v1215
      %v1347 = vunpack.c.l.b16 %v1216
      %v1348 = vunpack.c.l.b16 %v1217
      %v1349 = vunpack.c.l.b16 %v1218
      %v1350 = vunpack.c.l.b16 %v1219
      %v1351 = vunpack.c.l.b16 %v1220
      %v1352 = vunpack.c.l.b16 %v1221
      %v1353 = vunpack.c.l.b16 %v1222
      %v1354 = vunpack.c.l.b16 %v1223
      %v1355 = vunpack.c.l.b16 %v1224
      %v1356 = vunpack.c.l.b16 %v1225
      %v1357 = vpack.c.b16 %v1326, %v1325
      %v1358 = vpack.c.b16 %v1328, %v1327
      %v1359 = vpack.c.b16 %v1330, %v1329
      %v1360 = vpack.c.b16 %v1332, %v1331
      %v1361 = vpack.c.b16 %v1334, %v1333
      %v1362 = vpack.c.b16 %v1336, %v1335
      %v1363 = vpack.c.b16 %v1338, %v1337
      %v1364 = vpack.c.b16 %v1340, %v1339
      %v1365 = vpack.c.b16 %v1342, %v1341
      %v1366 = vpack.c.b16 %v1344, %v1343
      %v1367 = vpack.c.b16 %v1346, %v1345
      %v1368 = vpack.c.b16 %v1348, %v1347
      %v1369 = vpack.c.b16 %v1350, %v1349
      %v1370 = vpack.c.b16 %v1352, %v1351
      %v1371 = vpack.c.b16 %v1354, %v1353
      %v1372 = vpack.c.b16 %v1356, %v1355
      %1389 = vmatpush.bf16.msra.mxu0 %v1364
      %1390 = vmatpush.bf16.msra.mxu0 %v1363
      %1391 = vmatpush.bf16.msra.mxu0 %v1362
      %1392 = vmatpush.bf16.msra.mxu0 %v1361
      %1393 = vmatpush.bf16.msra.mxu0 %v1360
      %1394 = vmatpush.bf16.msra.mxu0 %v1359
      %1395 = vmatpush.bf16.msra.mxu0 %v1358
      %1396 = vmatpush.bf16.msra.mxu0 %v1357
      %1397 = vmatmul.bf16.gmra.mxu0 %v1265
      %v1398 = vpop.f32.mrf.mxu0
      %v1399 = vadd.f32 0.0, %v1398
      %v1400 = vpop.f32.mrf.mxu0
      %v1401 = vadd.f32 0.0, %v1400
      %1402 = vmatmul.bf16.gmra.mxu0 %v1267
      %v1403 = vpop.f32.mrf.mxu0
      %v1404 = vadd.f32 0.0, %v1403
      %v1405 = vpop.f32.mrf.mxu0
      %v1406 = vadd.f32 0.0, %v1405
      %1407 = vmatmul.bf16.gmra.mxu0 %v1269
      %v1408 = vpop.f32.mrf.mxu0
      %v1409 = vadd.f32 0.0, %v1408
      %v1410 = vpop.f32.mrf.mxu0
      %v1411 = vadd.f32 0.0, %v1410
      %1412 = vmatmul.bf16.gmra.mxu0 %v1271
      %v1413 = vpop.f32.mrf.mxu0
      %v1414 = vadd.f32 0.0, %v1413
      %v1415 = vpop.f32.mrf.mxu0
      %v1416 = vadd.f32 0.0, %v1415
      %1417 = vmatmul.bf16.gmra.mxu0 %v1273
      %v1418 = vpop.f32.mrf.mxu0
      %v1419 = vadd.f32 0.0, %v1418
      %v1420 = vpop.f32.mrf.mxu0
      %v1421 = vadd.f32 0.0, %v1420
      %1422 = vmatmul.bf16.gmra.mxu0 %v1275
      %v1423 = vpop.f32.mrf.mxu0
      %v1424 = vadd.f32 0.0, %v1423
      %v1425 = vpop.f32.mrf.mxu0
      %v1426 = vadd.f32 0.0, %v1425
      %1427 = vmatmul.bf16.gmra.mxu0 %v1277
      %v1428 = vpop.f32.mrf.mxu0
      %v1429 = vadd.f32 0.0, %v1428
      %v1430 = vpop.f32.mrf.mxu0
      %1431 = vdwg.mxu0
      %1432 = vmatpush.bf16.msra.mxu0 %v1372
      %1433 = vmatpush.bf16.msra.mxu0 %v1371
      %1434 = vmatpush.bf16.msra.mxu0 %v1370
      %1435 = vmatpush.bf16.msra.mxu0 %v1369
      %1436 = vmatpush.bf16.msra.mxu0 %v1368
      %1437 = vmatpush.bf16.msra.mxu0 %v1367
      %1438 = vmatpush.bf16.msra.mxu0 %v1366
      %1439 = vmatpush.bf16.msra.mxu0 %v1365
      %1440 = vmatmul.bf16.gmra.mxu0 %v1266
      %v1441 = vpop.f32.mrf.mxu0
      %v1442 = vadd.f32 %v1399, %v1441
      %v1443 = vpop.f32.mrf.mxu0
      %v1444 = vadd.f32 %v1401, %v1443
      %1445 = vmatmul.bf16.gmra.mxu0 %v1268
      %v1446 = vpop.f32.mrf.mxu0
      %v1447 = vadd.f32 %v1404, %v1446
      %v1448 = vpop.f32.mrf.mxu0
      %v1449 = vadd.f32 %v1406, %v1448
      %1450 = vmatmul.bf16.gmra.mxu0 %v1270
      %v1451 = vpop.f32.mrf.mxu0
      %v1452 = vadd.f32 %v1409, %v1451
      %v1453 = vpop.f32.mrf.mxu0
      %v1454 = vadd.f32 %v1411, %v1453
      %1455 = vmatmul.bf16.gmra.mxu0 %v1272
      %v1456 = vpop.f32.mrf.mxu0
      %v1457 = vadd.f32 %v1414, %v1456
      %v1458 = vpop.f32.mrf.mxu0
      %v1459 = vadd.f32 %v1416, %v1458
      %1460 = vmatmul.bf16.gmra.mxu0 %v1274
      %v1461 = vpop.f32.mrf.mxu0
      %v1462 = vadd.f32 %v1419, %v1461
      %v1463 = vpop.f32.mrf.mxu0
      %v1464 = vadd.f32 %v1421, %v1463
      %1465 = vmatmul.bf16.gmra.mxu0 %v1276
      %v1466 = vpop.f32.mrf.mxu0
      %v1467 = vadd.f32 %v1424, %v1466
      %v1468 = vpop.f32.mrf.mxu0
      %v1469 = vadd.f32 %v1426, %v1468
      %1470 = vmatmul.bf16.gmra.mxu0 %v1278
      %v1471 = vpop.f32.mrf.mxu0
      %v1472 = vadd.f32 %v1429, %v1471
      %v1473 = vpop.f32.mrf.mxu0
      %1474 = vdwg.mxu0
      %v1475 = vadd.f32 %v1166, %v1442
      %v1476 = vadd.f32 %v1167, %v1444
      %v1477 = vadd.f32 %v1168, %v1447
      %v1478 = vadd.f32 %v1169, %v1449
      %v1479 = vadd.f32 %v1170, %v1452
      %v1480 = vadd.f32 %v1171, %v1454
      %v1481 = vadd.f32 %v1172, %v1457
      %v1482 = vadd.f32 %v1173, %v1459
      %v1483 = vadd.f32 %v1174, %v1462
      %v1484 = vadd.f32 %v1175, %v1464
      %v1485 = vadd.f32 %v1176, %v1467
      %v1486 = vadd.f32 %v1177, %v1469
      %v1487 = vadd.f32 %v1178, %v1472
      %v1488 = vld [vmem:[%s2] sm:$0x1]
      %v1490 = vperm.slane %v1488, 0
      %v1492 = vadd.f32 %v1475, %v1490
      %v1493 = vadd.f32 %v1476, %v1490
      %v1494 = vadd.f32 %v1477, %v1490
      %v1495 = vadd.f32 %v1478, %v1490
      %v1496 = vadd.f32 %v1479, %v1490
      %v1497 = vadd.f32 %v1480, %v1490
      %v1498 = vadd.f32 %v1481, %v1490
      %v1499 = vadd.f32 %v1482, %v1490
      %v1500 = vadd.f32 %v1483, %v1490
      %v1501 = vadd.f32 %v1484, %v1490
      %v1502 = vadd.f32 %v1485, %v1490
      %v1503 = vadd.f32 %v1486, %v1490
      %v1504 = vadd.f32 %v1487, %v1490
      %v1505 = vmax.f32 %v1492, 0.0
      %v1506 = vmax.f32 %v1493, 0.0
      %v1507 = vmax.f32 %v1494, 0.0
      %v1508 = vmax.f32 %v1495, 0.0
      %v1509 = vmax.f32 %v1496, 0.0
      %v1510 = vmax.f32 %v1497, 0.0
      %v1511 = vmax.f32 %v1498, 0.0
      %v1512 = vmax.f32 %v1499, 0.0
      %v1513 = vmax.f32 %v1500, 0.0
      %v1514 = vmax.f32 %v1501, 0.0
      %v1515 = vmax.f32 %v1502, 0.0
      %v1516 = vmax.f32 %v1503, 0.0
      %v1517 = vmax.f32 %v1504, 0.0
      %v1518 = vpack.c.bf16 %v1505, %v1505
      %v1519 = vpack.c.bf16 %v1506, %v1506
      %v1520 = vpack.c.bf16 %v1507, %v1507
      %v1521 = vpack.c.bf16 %v1508, %v1508
      %v1522 = vpack.c.bf16 %v1509, %v1509
      %v1523 = vpack.c.bf16 %v1510, %v1510
      %v1524 = vpack.c.bf16 %v1511, %v1511
      %v1525 = vpack.c.bf16 %v1512, %v1512
      %v1526 = vpack.c.bf16 %v1513, %v1513
      %v1527 = vpack.c.bf16 %v1514, %v1514
      %v1528 = vpack.c.bf16 %v1515, %v1515
      %v1529 = vpack.c.bf16 %v1516, %v1516
      %v1530 = vpack.c.bf16 %v1517, %v1517
      %1531 = vst [vmem:[#allocation2] sm:$0xf] %v1518
      %1532 = vst [vmem:[#allocation2 + $0x4] sm:$0xf] %v1519
      %1533 = vst [vmem:[#allocation2 + $0x8] sm:$0xf] %v1520
      %1534 = vst [vmem:[#allocation2 + $0xc] sm:$0xf] %v1521
      %1535 = vst [vmem:[#allocation2 + $0x10] sm:$0xf] %v1522
      %1536 = vst [vmem:[#allocation2 + $0x14] sm:$0xf] %v1523
      %1537 = vst [vmem:[#allocation2 + $0x18] sm:$0xf] %v1524
      %1538 = vst [vmem:[#allocation2 + $0x1c] sm:$0xf] %v1525
      %1539 = vst [vmem:[#allocation2 + $0x20] sm:$0xf] %v1526
      %1540 = vst [vmem:[#allocation2 + $0x24] sm:$0xf] %v1527
      %1541 = vst [vmem:[#allocation2 + $0x28] sm:$0xf] %v1528
      %1542 = vst [vmem:[#allocation2 + $0x2c] sm:$0xf] %v1529
      %1543 = vst [vmem:[#allocation2 + $0x30] sm:$0x3] %v1530
      %v1544 = vld [vmem:[#allocation2] sm:$0xf]
      %v1545 = vld [vmem:[#allocation2 + $0x4] sm:$0xf]
      %v1546 = vld [vmem:[#allocation2 + $0x8] sm:$0xf]
      %v1547 = vld [vmem:[#allocation2 + $0xc] sm:$0xf]
      %v1548 = vld [vmem:[#allocation2 + $0x10] sm:$0xf]
      %v1549 = vld [vmem:[#allocation2 + $0x14] sm:$0xf]
      %v1550 = vld [vmem:[#allocation2 + $0x18] sm:$0xf]
      %v1551 = vld [vmem:[#allocation2 + $0x1c] sm:$0xf]
      %v1552 = vld [vmem:[#allocation2 + $0x20] sm:$0xf]
      %v1553 = vld [vmem:[#allocation2 + $0x24] sm:$0xf]
      %v1554 = vld [vmem:[#allocation2 + $0x28] sm:$0xf]
      %v1555 = vld [vmem:[#allocation2 + $0x2c] sm:$0x1]
      %v1556 = vld [vmem:[%s3] sm:$0xf]
      %v1557 = vld [vmem:[%s3 + $0x4] sm:$0xf]
      %v1558 = vld [vmem:[%s3 + $0x8] sm:$0xf]
      %v1559 = vld [vmem:[%s3 + $0xc] sm:$0xf]
      %v1560 = vld [vmem:[%s3 + $0x10] sm:$0xf]
      %v1561 = vld [vmem:[%s3 + $0x14] sm:$0xf]
      %v1562 = vld [vmem:[%s3 + $0x18] sm:$0xf]
      %v1563 = vld [vmem:[%s3 + $0x1c] sm:$0xf]
      %v1564 = vld [vmem:[%s3 + $0x20] sm:$0xf]
      %v1565 = vld [vmem:[%s3 + $0x24] sm:$0xf]
      %v1566 = vld [vmem:[%s3 + $0x28] sm:$0xf]
      %v1567 = vld [vmem:[%s3 + $0x2c] sm:$0xf]
      %v1568 = vld [vmem:[%s3 + $0x30] sm:$0xf]
      %v1569 = vld [vmem:[%s3 + $0x34] sm:$0xf]
      %v1570 = vld [vmem:[%s3 + $0x38] sm:$0xf]
      %v1571 = vld [vmem:[%s3 + $0x3c] sm:$0xf]
      %s1572 = scalar_lea.vmem %s3, 64
      %v1573 = vld [vmem:[%s1572] sm:$0xf]
      %v1574 = vld [vmem:[%s1572 + $0x4] sm:$0xf]
      %v1575 = vld [vmem:[%s1572 + $0x8] sm:$0xf]
      %v1576 = vld [vmem:[%s1572 + $0xc] sm:$0xf]
      %v1577 = vld [vmem:[%s1572 + $0x10] sm:$0xf]
      %v1578 = vld [vmem:[%s1572 + $0x14] sm:$0xf]
      %v1579 = vld [vmem:[%s1572 + $0x18] sm:$0xf]
      %v1580 = vld [vmem:[%s1572 + $0x1c] sm:$0xf]
      %v1581 = vld [vmem:[%s1572 + $0x20] sm:$0xf]
      %v1582 = vld [vmem:[%s1572 + $0x24] sm:$0xf]
      %v1583 = vld [vmem:[%s1572 + $0x28] sm:$0xf]
      %v1584 = vld [vmem:[%s1572 + $0x2c] sm:$0xf]
      %v1585 = vld [vmem:[%s1572 + $0x30] sm:$0xf]
      %v1586 = vld [vmem:[%s1572 + $0x34] sm:$0xf]
      %v1587 = vld [vmem:[%s1572 + $0x38] sm:$0xf]
      %v1588 = vld [vmem:[%s1572 + $0x3c] sm:$0xf]
      %v1601 = vunpack.c.l.b16 %v1544
      %v1602 = vunpack.c.l.b16 %v1545
      %v1603 = vunpack.c.l.b16 %v1546
      %v1604 = vunpack.c.l.b16 %v1547
      %v1605 = vunpack.c.l.b16 %v1548
      %v1606 = vunpack.c.l.b16 %v1549
      %v1607 = vunpack.c.l.b16 %v1550
      %v1608 = vunpack.c.l.b16 %v1551
      %v1609 = vunpack.c.l.b16 %v1552
      %v1610 = vunpack.c.l.b16 %v1553
      %v1611 = vunpack.c.l.b16 %v1554
      %v1612 = vunpack.c.l.b16 %v1555
      %v1613 = vpack.c.b16 %v1602, %v1601
      %v1614 = vpack.c.b16 %v1604, %v1603
      %v1615 = vpack.c.b16 %v1606, %v1605
      %v1616 = vpack.c.b16 %v1608, %v1607
      %v1617 = vpack.c.b16 %v1610, %v1609
      %v1618 = vpack.c.b16 %v1612, %v1611
      %vm1619 = vsmask.f32 7424
      %v1621 = vshrl.u32 %v1613, 16
      %v1623 = vshll.u32 %v1613, 16
      %v1625 = vrot.slane %v1623, 1
      %v1626 = vor.u32 %v1621, %v1625
      %v1628 = vshll.u32 %v1614, 16
      %v1630 = vrot.slane %v1628, 1
      %v1631 = vsel %vm1619, %v1626, %v1630
      %v1632 = vshrl.u32 %v1614, 16
      %v1634 = vor.u32 %v1632, %v1630
      %v1636 = vshll.u32 %v1615, 16
      %v1638 = vrot.slane %v1636, 1
      %v1639 = vsel %vm1619, %v1634, %v1638
      %v1640 = vshrl.u32 %v1615, 16
      %v1642 = vor.u32 %v1640, %v1638
      %v1644 = vshll.u32 %v1616, 16
      %v1646 = vrot.slane %v1644, 1
      %v1647 = vsel %vm1619, %v1642, %v1646
      %v1648 = vshrl.u32 %v1616, 16
      %v1650 = vor.u32 %v1648, %v1646
      %v1652 = vshll.u32 %v1617, 16
      %v1654 = vrot.slane %v1652, 1
      %v1655 = vsel %vm1619, %v1650, %v1654
      %v1656 = vshrl.u32 %v1617, 16
      %v1658 = vor.u32 %v1656, %v1654
      %v1660 = vshll.u32 %v1618, 16
      %v1662 = vrot.slane %v1660, 1
      %v1663 = vsel %vm1619, %v1658, %v1662
      %v1664 = vshrl.u32 %v1618, 16
      %v1666 = vor.u32 %v1664, %v1662
      %v1689 = vunpack.c.l.b16 %v1573
      %v1690 = vunpack.c.l.b16 %v1574
      %v1691 = vunpack.c.l.b16 %v1575
      %v1692 = vunpack.c.l.b16 %v1576
      %v1693 = vunpack.c.l.b16 %v1577
      %v1694 = vunpack.c.l.b16 %v1578
      %v1695 = vunpack.c.l.b16 %v1579
      %v1696 = vunpack.c.l.b16 %v1580
      %v1697 = vunpack.c.l.b16 %v1581
      %v1698 = vunpack.c.l.b16 %v1582
      %v1699 = vunpack.c.l.b16 %v1583
      %v1700 = vunpack.c.l.b16 %v1584
      %v1701 = vunpack.c.l.b16 %v1585
      %v1702 = vunpack.c.l.b16 %v1586
      %v1703 = vunpack.c.l.b16 %v1587
      %v1704 = vunpack.c.l.b16 %v1588
      %v1705 = vpack.c.b16 %v1690, %v1689
      %v1706 = vpack.c.b16 %v1692, %v1691
      %v1707 = vpack.c.b16 %v1694, %v1693
      %v1708 = vpack.c.b16 %v1696, %v1695
      %v1709 = vpack.c.b16 %v1698, %v1697
      %v1710 = vpack.c.b16 %v1700, %v1699
      %v1711 = vpack.c.b16 %v1702, %v1701
      %v1712 = vpack.c.b16 %v1704, %v1703
      %1721 = vmatpush.bf16.msra.mxu0 %v1712
      %1722 = vmatpush.bf16.msra.mxu0 %v1711
      %1723 = vmatpush.bf16.msra.mxu0 %v1710
      %1724 = vmatpush.bf16.msra.mxu0 %v1709
      %1725 = vmatpush.bf16.msra.mxu0 %v1708
      %1726 = vmatpush.bf16.msra.mxu0 %v1707
      %1727 = vmatpush.bf16.msra.mxu0 %v1706
      %1728 = vmatpush.bf16.msra.mxu0 %v1705
      %1729 = vmatmul.bf16.gmra.mxu0 %v1631
      %v1730 = vpop.f32.mrf.mxu0
      %v1731 = vadd.f32 0.0, %v1730
      %v1732 = vpop.f32.mrf.mxu0
      %v1733 = vadd.f32 0.0, %v1732
      %1734 = vmatmul.bf16.gmra.mxu0 %v1639
      %v1735 = vpop.f32.mrf.mxu0
      %v1736 = vadd.f32 0.0, %v1735
      %v1737 = vpop.f32.mrf.mxu0
      %v1738 = vadd.f32 0.0, %v1737
      %1739 = vmatmul.bf16.gmra.mxu0 %v1647
      %v1740 = vpop.f32.mrf.mxu0
      %v1741 = vadd.f32 0.0, %v1740
      %v1742 = vpop.f32.mrf.mxu0
      %v1743 = vadd.f32 0.0, %v1742
      %1744 = vmatmul.bf16.gmra.mxu0 %v1655
      %v1745 = vpop.f32.mrf.mxu0
      %v1746 = vadd.f32 0.0, %v1745
      %v1747 = vpop.f32.mrf.mxu0
      %v1748 = vadd.f32 0.0, %v1747
      %1749 = vmatmul.bf16.gmra.mxu0 %v1663
      %v1750 = vpop.f32.mrf.mxu0
      %v1751 = vadd.f32 0.0, %v1750
      %v1752 = vpop.f32.mrf.mxu0
      %v1753 = vadd.f32 0.0, %v1752
      %1754 = vmatmul.bf16.gmra.mxu0 %v1666
      %v1755 = vpop.f32.mrf.mxu0
      %v1756 = vadd.f32 0.0, %v1755
      %v1757 = vpop.f32.mrf.mxu0
      %v1758 = vadd.f32 0.0, %v1757
      %1759 = vdwg.mxu0
      %v1782 = vunpack.c.l.b16 %v1556
      %v1783 = vunpack.c.l.b16 %v1557
      %v1784 = vunpack.c.l.b16 %v1558
      %v1785 = vunpack.c.l.b16 %v1559
      %v1786 = vunpack.c.l.b16 %v1560
      %v1787 = vunpack.c.l.b16 %v1561
      %v1788 = vunpack.c.l.b16 %v1562
      %v1789 = vunpack.c.l.b16 %v1563
      %v1790 = vunpack.c.l.b16 %v1564
      %v1791 = vunpack.c.l.b16 %v1565
      %v1792 = vunpack.c.l.b16 %v1566
      %v1793 = vunpack.c.l.b16 %v1567
      %v1794 = vunpack.c.l.b16 %v1568
      %v1795 = vunpack.c.l.b16 %v1569
      %v1796 = vunpack.c.l.b16 %v1570
      %v1797 = vunpack.c.l.b16 %v1571
      %v1798 = vpack.c.b16 %v1783, %v1782
      %v1799 = vpack.c.b16 %v1785, %v1784
      %v1800 = vpack.c.b16 %v1787, %v1786
      %v1801 = vpack.c.b16 %v1789, %v1788
      %v1802 = vpack.c.b16 %v1791, %v1790
      %v1803 = vpack.c.b16 %v1793, %v1792
      %v1804 = vpack.c.b16 %v1795, %v1794
      %v1805 = vpack.c.b16 %v1797, %v1796
      %1814 = vmatpush.bf16.msra.mxu0 %v1805
      %1815 = vmatpush.bf16.msra.mxu0 %v1804
      %1816 = vmatpush.bf16.msra.mxu0 %v1803
      %1817 = vmatpush.bf16.msra.mxu0 %v1802
      %1818 = vmatpush.bf16.msra.mxu0 %v1801
      %1819 = vmatpush.bf16.msra.mxu0 %v1800
      %1820 = vmatpush.bf16.msra.mxu0 %v1799
      %1821 = vmatpush.bf16.msra.mxu0 %v1798
      %1822 = vmatmul.bf16.gmra.mxu0 %v1613
      %v1823 = vpop.f32.mrf.mxu0
      %v1824 = vadd.f32 %v1731, %v1823
      %v1825 = vpop.f32.mrf.mxu0
      %v1826 = vadd.f32 %v1733, %v1825
      %1827 = vmatmul.bf16.gmra.mxu0 %v1614
      %v1828 = vpop.f32.mrf.mxu0
      %v1829 = vadd.f32 %v1736, %v1828
      %v1830 = vpop.f32.mrf.mxu0
      %v1831 = vadd.f32 %v1738, %v1830
      %1832 = vmatmul.bf16.gmra.mxu0 %v1615
      %v1833 = vpop.f32.mrf.mxu0
      %v1834 = vadd.f32 %v1741, %v1833
      %v1835 = vpop.f32.mrf.mxu0
      %v1836 = vadd.f32 %v1743, %v1835
      %1837 = vmatmul.bf16.gmra.mxu0 %v1616
      %v1838 = vpop.f32.mrf.mxu0
      %v1839 = vadd.f32 %v1746, %v1838
      %v1840 = vpop.f32.mrf.mxu0
      %v1841 = vadd.f32 %v1748, %v1840
      %1842 = vmatmul.bf16.gmra.mxu0 %v1617
      %v1843 = vpop.f32.mrf.mxu0
      %v1844 = vadd.f32 %v1751, %v1843
      %v1845 = vpop.f32.mrf.mxu0
      %v1846 = vadd.f32 %v1753, %v1845
      %1847 = vmatmul.bf16.gmra.mxu0 %v1618
      %v1848 = vpop.f32.mrf.mxu0
      %v1849 = vadd.f32 %v1756, %v1848
      %v1850 = vpop.f32.mrf.mxu0
      %v1851 = vadd.f32 %v1758, %v1850
      %1852 = vdwg.mxu0
      %v1853 = vld [vmem:[#allocation2 + $0x4] sm:$0xe]
      %v1854 = vld [vmem:[#allocation2 + $0x8] sm:$0xf]
      %v1855 = vld [vmem:[#allocation2 + $0xc] sm:$0xf]
      %v1856 = vld [vmem:[#allocation2 + $0x10] sm:$0xf]
      %v1857 = vld [vmem:[#allocation2 + $0x14] sm:$0xf]
      %v1858 = vld [vmem:[#allocation2 + $0x18] sm:$0xf]
      %v1859 = vld [vmem:[#allocation2 + $0x1c] sm:$0xf]
      %v1860 = vld [vmem:[#allocation2 + $0x20] sm:$0xf]
      %v1861 = vld [vmem:[#allocation2 + $0x24] sm:$0xf]
      %v1862 = vld [vmem:[#allocation2 + $0x28] sm:$0xf]
      %v1863 = vld [vmem:[#allocation2 + $0x2c] sm:$0xf]
      %v1864 = vld [vmem:[#allocation2 + $0x30] sm:$0x3]
      %s1865 = scalar_lea.vmem %s3, 128
      %v1866 = vld [vmem:[%s1865] sm:$0xf]
      %v1867 = vld [vmem:[%s1865 + $0x4] sm:$0xf]
      %v1868 = vld [vmem:[%s1865 + $0x8] sm:$0xf]
      %v1869 = vld [vmem:[%s1865 + $0xc] sm:$0xf]
      %v1870 = vld [vmem:[%s1865 + $0x10] sm:$0xf]
      %v1871 = vld [vmem:[%s1865 + $0x14] sm:$0xf]
      %v1872 = vld [vmem:[%s1865 + $0x18] sm:$0xf]
      %v1873 = vld [vmem:[%s1865 + $0x1c] sm:$0xf]
      %v1874 = vld [vmem:[%s1865 + $0x20] sm:$0xf]
      %v1875 = vld [vmem:[%s1865 + $0x24] sm:$0xf]
      %v1876 = vld [vmem:[%s1865 + $0x28] sm:$0xf]
      %v1877 = vld [vmem:[%s1865 + $0x2c] sm:$0xf]
      %v1878 = vld [vmem:[%s1865 + $0x30] sm:$0xf]
      %v1879 = vld [vmem:[%s1865 + $0x34] sm:$0xf]
      %v1880 = vld [vmem:[%s1865 + $0x38] sm:$0xf]
      %v1881 = vld [vmem:[%s1865 + $0x3c] sm:$0xf]
      %v1894 = vunpack.c.l.b16 %v1853
      %v1895 = vunpack.c.l.b16 %v1854
      %v1896 = vunpack.c.l.b16 %v1855
      %v1897 = vunpack.c.l.b16 %v1856
      %v1898 = vunpack.c.l.b16 %v1857
      %v1899 = vunpack.c.l.b16 %v1858
      %v1900 = vunpack.c.l.b16 %v1859
      %v1901 = vunpack.c.l.b16 %v1860
      %v1902 = vunpack.c.l.b16 %v1861
      %v1903 = vunpack.c.l.b16 %v1862
      %v1904 = vunpack.c.l.b16 %v1863
      %v1905 = vunpack.c.l.b16 %v1864
      %v1906 = vpack.c.b16 %v1895, %v1894
      %v1907 = vpack.c.b16 %v1897, %v1896
      %v1908 = vpack.c.b16 %v1899, %v1898
      %v1909 = vpack.c.b16 %v1901, %v1900
      %v1910 = vpack.c.b16 %v1903, %v1902
      %v1911 = vpack.c.b16 %v1905, %v1904
      %vm1912 = vcmask 1046528
      %v1913 = vrot.slane %v1906, 1
      %v1914 = vrot.slane %v1907, 1
      %v1915 = vsel %vm1912, %v1913, %v1914
      %v1916 = vrot.slane %v1908, 1
      %v1917 = vsel %vm1912, %v1914, %v1916
      %v1918 = vrot.slane %v1909, 1
      %v1919 = vsel %vm1912, %v1916, %v1918
      %v1920 = vrot.slane %v1910, 1
      %v1921 = vsel %vm1912, %v1918, %v1920
      %v1922 = vrot.slane %v1911, 1
      %v1923 = vsel %vm1912, %v1920, %v1922
      %v1946 = vunpack.c.l.b16 %v1866
      %v1947 = vunpack.c.l.b16 %v1867
      %v1948 = vunpack.c.l.b16 %v1868
      %v1949 = vunpack.c.l.b16 %v1869
      %v1950 = vunpack.c.l.b16 %v1870
      %v1951 = vunpack.c.l.b16 %v1871
      %v1952 = vunpack.c.l.b16 %v1872
      %v1953 = vunpack.c.l.b16 %v1873
      %v1954 = vunpack.c.l.b16 %v1874
      %v1955 = vunpack.c.l.b16 %v1875
      %v1956 = vunpack.c.l.b16 %v1876
      %v1957 = vunpack.c.l.b16 %v1877
      %v1958 = vunpack.c.l.b16 %v1878
      %v1959 = vunpack.c.l.b16 %v1879
      %v1960 = vunpack.c.l.b16 %v1880
      %v1961 = vunpack.c.l.b16 %v1881
      %v1962 = vpack.c.b16 %v1947, %v1946
      %v1963 = vpack.c.b16 %v1949, %v1948
      %v1964 = vpack.c.b16 %v1951, %v1950
      %v1965 = vpack.c.b16 %v1953, %v1952
      %v1966 = vpack.c.b16 %v1955, %v1954
      %v1967 = vpack.c.b16 %v1957, %v1956
      %v1968 = vpack.c.b16 %v1959, %v1958
      %v1969 = vpack.c.b16 %v1961, %v1960
      %1978 = vmatpush.bf16.msra.mxu0 %v1969
      %1979 = vmatpush.bf16.msra.mxu0 %v1968
      %1980 = vmatpush.bf16.msra.mxu0 %v1967
      %1981 = vmatpush.bf16.msra.mxu0 %v1966
      %1982 = vmatpush.bf16.msra.mxu0 %v1965
      %1983 = vmatpush.bf16.msra.mxu0 %v1964
      %1984 = vmatpush.bf16.msra.mxu0 %v1963
      %1985 = vmatpush.bf16.msra.mxu0 %v1962
      %1986 = vmatmul.bf16.gmra.mxu0 %v1915
      %v1987 = vpop.f32.mrf.mxu0
      %v1988 = vadd.f32 0.0, %v1987
      %v1989 = vpop.f32.mrf.mxu0
      %v1990 = vadd.f32 0.0, %v1989
      %1991 = vmatmul.bf16.gmra.mxu0 %v1917
      %v1992 = vpop.f32.mrf.mxu0
      %v1993 = vadd.f32 0.0, %v1992
      %v1994 = vpop.f32.mrf.mxu0
      %v1995 = vadd.f32 0.0, %v1994
      %1996 = vmatmul.bf16.gmra.mxu0 %v1919
      %v1997 = vpop.f32.mrf.mxu0
      %v1998 = vadd.f32 0.0, %v1997
      %v1999 = vpop.f32.mrf.mxu0
      %v2000 = vadd.f32 0.0, %v1999
      %2001 = vmatmul.bf16.gmra.mxu0 %v1921
      %v2002 = vpop.f32.mrf.mxu0
      %v2003 = vadd.f32 0.0, %v2002
      %v2004 = vpop.f32.mrf.mxu0
      %v2005 = vadd.f32 0.0, %v2004
      %2006 = vmatmul.bf16.gmra.mxu0 %v1923
      %v2007 = vpop.f32.mrf.mxu0
      %v2008 = vadd.f32 0.0, %v2007
      %v2009 = vpop.f32.mrf.mxu0
      %v2010 = vadd.f32 0.0, %v2009
      %2011 = vmatmul.bf16.gmra.mxu0 %v1922
      %v2012 = vpop.f32.mrf.mxu0
      %v2013 = vadd.f32 0.0, %v2012
      %v2014 = vpop.f32.mrf.mxu0
      %v2015 = vadd.f32 0.0, %v2014
      %2016 = vdwg.mxu0
      %v2017 = vadd.f32 %v1824, %v1988
      %v2018 = vadd.f32 %v1826, %v1990
      %v2019 = vadd.f32 %v1829, %v1993
      %v2020 = vadd.f32 %v1831, %v1995
      %v2021 = vadd.f32 %v1834, %v1998
      %v2022 = vadd.f32 %v1836, %v2000
      %v2023 = vadd.f32 %v1839, %v2003
      %v2024 = vadd.f32 %v1841, %v2005
      %v2025 = vadd.f32 %v1844, %v2008
      %v2026 = vadd.f32 %v1846, %v2010
      %v2027 = vadd.f32 %v1849, %v2013
      %v2028 = vadd.f32 %v1851, %v2015
      %s2029 = scalar_lea.vmem %s3, 192
      %v2030 = vld [vmem:[%s2029] sm:$0xf]
      %v2031 = vld [vmem:[%s2029 + $0x4] sm:$0xf]
      %v2032 = vld [vmem:[%s2029 + $0x8] sm:$0xf]
      %v2033 = vld [vmem:[%s2029 + $0xc] sm:$0xf]
      %v2034 = vld [vmem:[%s2029 + $0x10] sm:$0xf]
      %v2035 = vld [vmem:[%s2029 + $0x14] sm:$0xf]
      %v2036 = vld [vmem:[%s2029 + $0x18] sm:$0xf]
      %v2037 = vld [vmem:[%s2029 + $0x1c] sm:$0xf]
      %v2038 = vld [vmem:[%s2029 + $0x20] sm:$0xf]
      %v2039 = vld [vmem:[%s2029 + $0x24] sm:$0xf]
      %v2040 = vld [vmem:[%s2029 + $0x28] sm:$0xf]
      %v2041 = vld [vmem:[%s2029 + $0x2c] sm:$0xf]
      %v2042 = vld [vmem:[%s2029 + $0x30] sm:$0xf]
      %v2043 = vld [vmem:[%s2029 + $0x34] sm:$0xf]
      %v2044 = vld [vmem:[%s2029 + $0x38] sm:$0xf]
      %v2045 = vld [vmem:[%s2029 + $0x3c] sm:$0xf]
      %vm2046 = vsmask.f32 6400
      %v2048 = vshrl.u32 %v1906, 16
      %v2050 = vrot.slane %v2048, 1
      %v2051 = vshll.u32 %v1906, 16
      %v2053 = vrot.slane %v2051, 2
      %v2054 = vor.u32 %v2050, %v2053
      %v2056 = vshrl.u32 %v1907, 16
      %v2058 = vrot.slane %v2056, 1
      %v2059 = vshll.u32 %v1907, 16
      %v2061 = vrot.slane %v2059, 2
      %v2062 = vor.u32 %v2058, %v2061
      %v2063 = vsel %vm2046, %v2054, %v2062
      %v2065 = vshrl.u32 %v1908, 16
      %v2067 = vrot.slane %v2065, 1
      %v2068 = vshll.u32 %v1908, 16
      %v2070 = vrot.slane %v2068, 2
      %v2071 = vor.u32 %v2067, %v2070
      %v2072 = vsel %vm2046, %v2062, %v2071
      %v2074 = vshrl.u32 %v1909, 16
      %v2076 = vrot.slane %v2074, 1
      %v2077 = vshll.u32 %v1909, 16
      %v2079 = vrot.slane %v2077, 2
      %v2080 = vor.u32 %v2076, %v2079
      %v2081 = vsel %vm2046, %v2071, %v2080
      %v2083 = vshrl.u32 %v1910, 16
      %v2085 = vrot.slane %v2083, 1
      %v2086 = vshll.u32 %v1910, 16
      %v2088 = vrot.slane %v2086, 2
      %v2089 = vor.u32 %v2085, %v2088
      %v2090 = vsel %vm2046, %v2080, %v2089
      %v2092 = vshrl.u32 %v1911, 16
      %v2094 = vrot.slane %v2092, 1
      %v2095 = vshll.u32 %v1911, 16
      %v2097 = vrot.slane %v2095, 2
      %v2098 = vor.u32 %v2094, %v2097
      %v2099 = vsel %vm2046, %v2089, %v2098
      %v2122 = vunpack.c.l.b16 %v2030
      %v2123 = vunpack.c.l.b16 %v2031
      %v2124 = vunpack.c.l.b16 %v2032
      %v2125 = vunpack.c.l.b16 %v2033
      %v2126 = vunpack.c.l.b16 %v2034
      %v2127 = vunpack.c.l.b16 %v2035
      %v2128 = vunpack.c.l.b16 %v2036
      %v2129 = vunpack.c.l.b16 %v2037
      %v2130 = vunpack.c.l.b16 %v2038
      %v2131 = vunpack.c.l.b16 %v2039
      %v2132 = vunpack.c.l.b16 %v2040
      %v2133 = vunpack.c.l.b16 %v2041
      %v2134 = vunpack.c.l.b16 %v2042
      %v2135 = vunpack.c.l.b16 %v2043
      %v2136 = vunpack.c.l.b16 %v2044
      %v2137 = vunpack.c.l.b16 %v2045
      %v2138 = vpack.c.b16 %v2123, %v2122
      %v2139 = vpack.c.b16 %v2125, %v2124
      %v2140 = vpack.c.b16 %v2127, %v2126
      %v2141 = vpack.c.b16 %v2129, %v2128
      %v2142 = vpack.c.b16 %v2131, %v2130
      %v2143 = vpack.c.b16 %v2133, %v2132
      %v2144 = vpack.c.b16 %v2135, %v2134
      %v2145 = vpack.c.b16 %v2137, %v2136
      %2154 = vmatpush.bf16.msra.mxu0 %v2145
      %2155 = vmatpush.bf16.msra.mxu0 %v2144
      %2156 = vmatpush.bf16.msra.mxu0 %v2143
      %2157 = vmatpush.bf16.msra.mxu0 %v2142
      %2158 = vmatpush.bf16.msra.mxu0 %v2141
      %2159 = vmatpush.bf16.msra.mxu0 %v2140
      %2160 = vmatpush.bf16.msra.mxu0 %v2139
      %2161 = vmatpush.bf16.msra.mxu0 %v2138
      %2162 = vmatmul.bf16.gmra.mxu0 %v2063
      %v2163 = vpop.f32.mrf.mxu0
      %v2164 = vadd.f32 0.0, %v2163
      %v2165 = vpop.f32.mrf.mxu0
      %v2166 = vadd.f32 0.0, %v2165
      %2167 = vmatmul.bf16.gmra.mxu0 %v2072
      %v2168 = vpop.f32.mrf.mxu0
      %v2169 = vadd.f32 0.0, %v2168
      %v2170 = vpop.f32.mrf.mxu0
      %v2171 = vadd.f32 0.0, %v2170
      %2172 = vmatmul.bf16.gmra.mxu0 %v2081
      %v2173 = vpop.f32.mrf.mxu0
      %v2174 = vadd.f32 0.0, %v2173
      %v2175 = vpop.f32.mrf.mxu0
      %v2176 = vadd.f32 0.0, %v2175
      %2177 = vmatmul.bf16.gmra.mxu0 %v2090
      %v2178 = vpop.f32.mrf.mxu0
      %v2179 = vadd.f32 0.0, %v2178
      %v2180 = vpop.f32.mrf.mxu0
      %v2181 = vadd.f32 0.0, %v2180
      %2182 = vmatmul.bf16.gmra.mxu0 %v2099
      %v2183 = vpop.f32.mrf.mxu0
      %v2184 = vadd.f32 0.0, %v2183
      %v2185 = vpop.f32.mrf.mxu0
      %v2186 = vadd.f32 0.0, %v2185
      %2187 = vmatmul.bf16.gmra.mxu0 %v2098
      %v2188 = vpop.f32.mrf.mxu0
      %v2189 = vadd.f32 0.0, %v2188
      %v2190 = vpop.f32.mrf.mxu0
      %v2191 = vadd.f32 0.0, %v2190
      %2192 = vdwg.mxu0
      %v2193 = vadd.f32 %v2017, %v2164
      %v2194 = vadd.f32 %v2018, %v2166
      %v2195 = vadd.f32 %v2019, %v2169
      %v2196 = vadd.f32 %v2020, %v2171
      %v2197 = vadd.f32 %v2021, %v2174
      %v2198 = vadd.f32 %v2022, %v2176
      %v2199 = vadd.f32 %v2023, %v2179
      %v2200 = vadd.f32 %v2024, %v2181
      %v2201 = vadd.f32 %v2025, %v2184
      %v2202 = vadd.f32 %v2026, %v2186
      %v2203 = vadd.f32 %v2027, %v2189
      %v2204 = vadd.f32 %v2028, %v2191
      %v2205 = vld [vmem:[%s4] sm:$0x1]
      %v2207 = vperm.slane %v2205, 0
      %v2209 = vadd.f32 %v2193, %v2207
      %v2210 = vadd.f32 %v2194, %v2207
      %v2211 = vadd.f32 %v2195, %v2207
      %v2212 = vadd.f32 %v2196, %v2207
      %v2213 = vadd.f32 %v2197, %v2207
      %v2214 = vadd.f32 %v2198, %v2207
      %v2215 = vadd.f32 %v2199, %v2207
      %v2216 = vadd.f32 %v2200, %v2207
      %v2217 = vadd.f32 %v2201, %v2207
      %v2218 = vadd.f32 %v2202, %v2207
      %v2219 = vadd.f32 %v2203, %v2207
      %v2220 = vadd.f32 %v2204, %v2207
      %v2221 = vmax.f32 %v2209, 0.0
      %v2222 = vmax.f32 %v2210, 0.0
      %v2223 = vmax.f32 %v2211, 0.0
      %v2224 = vmax.f32 %v2212, 0.0
      %v2225 = vmax.f32 %v2213, 0.0
      %v2226 = vmax.f32 %v2214, 0.0
      %v2227 = vmax.f32 %v2215, 0.0
      %v2228 = vmax.f32 %v2216, 0.0
      %v2229 = vmax.f32 %v2217, 0.0
      %v2230 = vmax.f32 %v2218, 0.0
      %v2231 = vmax.f32 %v2219, 0.0
      %v2232 = vmax.f32 %v2220, 0.0
      %v2233 = vpack.c.bf16 %v2221, %v2221
      %v2234 = vpack.c.bf16 %v2222, %v2222
      %v2235 = vpack.c.bf16 %v2223, %v2223
      %v2236 = vpack.c.bf16 %v2224, %v2224
      %v2237 = vpack.c.bf16 %v2225, %v2225
      %v2238 = vpack.c.bf16 %v2226, %v2226
      %v2239 = vpack.c.bf16 %v2227, %v2227
      %v2240 = vpack.c.bf16 %v2228, %v2228
      %v2241 = vpack.c.bf16 %v2229, %v2229
      %v2242 = vpack.c.bf16 %v2230, %v2230
      %v2243 = vpack.c.bf16 %v2231, %v2231
      %v2244 = vpack.c.bf16 %v2232, %v2232
      %vm2245 = vcmask 519168
      %2246 = vst.msk [vmem:[#allocation3] sm:$0xf] %vm2245, %v2233
      %2247 = vst.msk [vmem:[#allocation3 + $0x4] sm:$0xf] %vm2245, %v2234
      %2248 = vst.msk [vmem:[#allocation3 + $0x8] sm:$0xf] %vm2245, %v2235
      %2249 = vst.msk [vmem:[#allocation3 + $0xc] sm:$0xf] %vm2245, %v2236
      %2250 = vst.msk [vmem:[#allocation3 + $0x10] sm:$0xf] %vm2245, %v2237
      %2251 = vst.msk [vmem:[#allocation3 + $0x14] sm:$0xf] %vm2245, %v2238
      %2252 = vst.msk [vmem:[#allocation3 + $0x18] sm:$0xf] %vm2245, %v2239
      %2253 = vst.msk [vmem:[#allocation3 + $0x1c] sm:$0xf] %vm2245, %v2240
      %2254 = vst.msk [vmem:[#allocation3 + $0x20] sm:$0xf] %vm2245, %v2241
      %2255 = vst.msk [vmem:[#allocation3 + $0x24] sm:$0xf] %vm2245, %v2242
      %2256 = vst.msk [vmem:[#allocation3 + $0x28] sm:$0xf] %vm2245, %v2243
      %vm2257 = vcmask 516096
      %vm2258 = vsmask.f32 256
      %vm2259 = vmand %vm2257, %vm2258
      %v2260 = vld [vmem:[#allocation3 + $0x2c] sm:$0x1]
      %v2261 = vsel %vm2259, %v2244, %v2260
      %2262 = vst [vmem:[#allocation3 + $0x2c] sm:$0x1] %v2261
      %v2263 = vld [vmem:[#allocation3] sm:$0xf]
      %v2264 = vld [vmem:[#allocation3 + $0x4] sm:$0xf]
      %v2265 = vld [vmem:[#allocation3 + $0x8] sm:$0xf]
      %v2266 = vld [vmem:[#allocation3 + $0xc] sm:$0xf]
      %v2267 = vld [vmem:[#allocation3 + $0x10] sm:$0xf]
      %v2268 = vld [vmem:[#allocation3 + $0x14] sm:$0xf]
      %v2269 = vld [vmem:[#allocation3 + $0x18] sm:$0xf]
      %v2270 = vld [vmem:[#allocation3 + $0x1c] sm:$0xf]
      %v2271 = vld [vmem:[#allocation3 + $0x20] sm:$0x3]
      %v2272 = vld [vmem:[%s5] sm:$0xf]
      %v2273 = vld [vmem:[%s5 + $0x4] sm:$0xf]
      %v2274 = vld [vmem:[%s5 + $0x8] sm:$0xf]
      %v2275 = vld [vmem:[%s5 + $0xc] sm:$0xf]
      %v2276 = vld [vmem:[%s5 + $0x10] sm:$0xf]
      %v2277 = vld [vmem:[%s5 + $0x14] sm:$0xf]
      %v2278 = vld [vmem:[%s5 + $0x18] sm:$0xf]
      %v2279 = vld [vmem:[%s5 + $0x1c] sm:$0xf]
      %s2280 = scalar_lea.vmem %s5, 32
      %v2281 = vld [vmem:[%s2280] sm:$0xf]
      %v2282 = vld [vmem:[%s2280 + $0x4] sm:$0xf]
      %v2283 = vld [vmem:[%s2280 + $0x8] sm:$0xf]
      %v2284 = vld [vmem:[%s2280 + $0xc] sm:$0xf]
      %v2285 = vld [vmem:[%s2280 + $0x10] sm:$0xf]
      %v2286 = vld [vmem:[%s2280 + $0x14] sm:$0xf]
      %v2287 = vld [vmem:[%s2280 + $0x18] sm:$0xf]
      %v2288 = vld [vmem:[%s2280 + $0x1c] sm:$0xf]
      %v2298 = vunpack.c.l.b16 %v2263
      %v2299 = vunpack.c.l.b16 %v2264
      %v2300 = vunpack.c.l.b16 %v2265
      %v2301 = vunpack.c.l.b16 %v2266
      %v2302 = vunpack.c.l.b16 %v2267
      %v2303 = vunpack.c.l.b16 %v2268
      %v2304 = vunpack.c.l.b16 %v2269
      %v2305 = vunpack.c.l.b16 %v2270
      %v2306 = vunpack.c.l.b16 %v2271
      %v2307 = vpack.c.b16 %v2299, %v2298
      %v2308 = vpack.c.b16 %v2301, %v2300
      %v2309 = vpack.c.b16 %v2303, %v2302
      %v2310 = vpack.c.b16 %v2305, %v2304
      %v2311 = vpack.c.b16 %v2306, %v2306
      %v2313 = vshrl.u32 %v2307, 16
      %v2315 = vshll.u32 %v2307, 16
      %v2317 = vrot.slane %v2315, 1
      %v2318 = vor.u32 %v2313, %v2317
      %v2320 = vshll.u32 %v2308, 16
      %v2322 = vrot.slane %v2320, 1
      %v2323 = vsel %vm1619, %v2318, %v2322
      %v2324 = vshrl.u32 %v2308, 16
      %v2326 = vor.u32 %v2324, %v2322
      %v2328 = vshll.u32 %v2309, 16
      %v2330 = vrot.slane %v2328, 1
      %v2331 = vsel %vm1619, %v2326, %v2330
      %v2332 = vshrl.u32 %v2309, 16
      %v2334 = vor.u32 %v2332, %v2330
      %v2336 = vshll.u32 %v2310, 16
      %v2338 = vrot.slane %v2336, 1
      %v2339 = vsel %vm1619, %v2334, %v2338
      %v2340 = vshrl.u32 %v2310, 16
      %v2342 = vor.u32 %v2340, %v2338
      %v2344 = vshll.u32 %v2311, 16
      %v2346 = vrot.slane %v2344, 1
      %v2347 = vsel %vm1619, %v2342, %v2346
      %v2348 = vshrl.u32 %v2311, 16
      %v2350 = vor.u32 %v2348, %v2346
      %v2359 = vunpack.c.l.b16 %v2281
      %v2360 = vunpack.c.l.b16 %v2282
      %v2361 = vunpack.c.l.b16 %v2283
      %v2362 = vunpack.c.l.b16 %v2284
      %v2363 = vunpack.c.l.b16 %v2285
      %v2364 = vunpack.c.l.b16 %v2286
      %v2365 = vunpack.c.l.b16 %v2287
      %v2366 = vunpack.c.l.b16 %v2288
      %v2367 = vpack.c.b16 %v2360, %v2359
      %v2368 = vpack.c.b16 %v2362, %v2361
      %v2369 = vpack.c.b16 %v2364, %v2363
      %v2370 = vpack.c.b16 %v2366, %v2365
      %vm2375 = vcmask 523264
      %v2377 = vsel %vm2375, %v2323, 0
      %v2380 = vsel %vm2375, %v2331, 0
      %v2383 = vsel %vm2375, %v2339, 0
      %v2386 = vsel %vm2375, %v2347, 0
      %v2389 = vsel %vm2375, %v2350, 0
      %2391 = vmatpush.bf16.msra.mxu0 0
      %2392 = vmatpush.bf16.msra.mxu0 0
      %2393 = vmatpush.bf16.msra.mxu0 0
      %2394 = vmatpush.bf16.msra.mxu0 0
      %2395 = vmatpush.bf16.msra.mxu0 %v2370
      %2396 = vmatpush.bf16.msra.mxu0 %v2369
      %2397 = vmatpush.bf16.msra.mxu0 %v2368
      %2398 = vmatpush.bf16.msra.mxu0 %v2367
      %2399 = vmatmul.bf16.gmra.mxu0 %v2377
      %v2400 = vpop.f32.mrf.mxu0
      %v2401 = vadd.f32 0.0, %v2400
      %v2402 = vpop.f32.mrf.mxu0
      %v2403 = vadd.f32 0.0, %v2402
      %2404 = vmatmul.bf16.gmra.mxu0 %v2380
      %v2405 = vpop.f32.mrf.mxu0
      %v2406 = vadd.f32 0.0, %v2405
      %v2407 = vpop.f32.mrf.mxu0
      %v2408 = vadd.f32 0.0, %v2407
      %2409 = vmatmul.bf16.gmra.mxu0 %v2383
      %v2410 = vpop.f32.mrf.mxu0
      %v2411 = vadd.f32 0.0, %v2410
      %v2412 = vpop.f32.mrf.mxu0
      %v2413 = vadd.f32 0.0, %v2412
      %2414 = vmatmul.bf16.gmra.mxu0 %v2386
      %v2415 = vpop.f32.mrf.mxu0
      %v2416 = vadd.f32 0.0, %v2415
      %v2417 = vpop.f32.mrf.mxu0
      %v2418 = vadd.f32 0.0, %v2417
      %2419 = vmatmul.bf16.gmra.mxu0 %v2389
      %v2420 = vpop.f32.mrf.mxu0
      %v2421 = vadd.f32 0.0, %v2420
      %v2422 = vpop.f32.mrf.mxu0
      %2423 = vdwg.mxu0
      %v2432 = vunpack.c.l.b16 %v2272
      %v2433 = vunpack.c.l.b16 %v2273
      %v2434 = vunpack.c.l.b16 %v2274
      %v2435 = vunpack.c.l.b16 %v2275
      %v2436 = vunpack.c.l.b16 %v2276
      %v2437 = vunpack.c.l.b16 %v2277
      %v2438 = vunpack.c.l.b16 %v2278
      %v2439 = vunpack.c.l.b16 %v2279
      %v2440 = vpack.c.b16 %v2433, %v2432
      %v2441 = vpack.c.b16 %v2435, %v2434
      %v2442 = vpack.c.b16 %v2437, %v2436
      %v2443 = vpack.c.b16 %v2439, %v2438
      %v2448 = vsel %vm2375, %v2307, 0
      %v2450 = vsel %vm2375, %v2308, 0
      %v2452 = vsel %vm2375, %v2309, 0
      %v2454 = vsel %vm2375, %v2310, 0
      %v2456 = vsel %vm2375, %v2311, 0
      %2458 = vmatpush.bf16.msra.mxu0 0
      %2459 = vmatpush.bf16.msra.mxu0 0
      %2460 = vmatpush.bf16.msra.mxu0 0
      %2461 = vmatpush.bf16.msra.mxu0 0
      %2462 = vmatpush.bf16.msra.mxu0 %v2443
      %2463 = vmatpush.bf16.msra.mxu0 %v2442
      %2464 = vmatpush.bf16.msra.mxu0 %v2441
      %2465 = vmatpush.bf16.msra.mxu0 %v2440
      %2466 = vmatmul.bf16.gmra.mxu0 %v2448
      %v2467 = vpop.f32.mrf.mxu0
      %v2468 = vadd.f32 %v2401, %v2467
      %v2469 = vpop.f32.mrf.mxu0
      %v2470 = vadd.f32 %v2403, %v2469
      %2471 = vmatmul.bf16.gmra.mxu0 %v2450
      %v2472 = vpop.f32.mrf.mxu0
      %v2473 = vadd.f32 %v2406, %v2472
      %v2474 = vpop.f32.mrf.mxu0
      %v2475 = vadd.f32 %v2408, %v2474
      %2476 = vmatmul.bf16.gmra.mxu0 %v2452
      %v2477 = vpop.f32.mrf.mxu0
      %v2478 = vadd.f32 %v2411, %v2477
      %v2479 = vpop.f32.mrf.mxu0
      %v2480 = vadd.f32 %v2413, %v2479
      %2481 = vmatmul.bf16.gmra.mxu0 %v2454
      %v2482 = vpop.f32.mrf.mxu0
      %v2483 = vadd.f32 %v2416, %v2482
      %v2484 = vpop.f32.mrf.mxu0
      %v2485 = vadd.f32 %v2418, %v2484
      %2486 = vmatmul.bf16.gmra.mxu0 %v2456
      %v2487 = vpop.f32.mrf.mxu0
      %v2488 = vadd.f32 %v2421, %v2487
      %v2489 = vpop.f32.mrf.mxu0
      %2490 = vdwg.mxu0
      %v2491 = vld [vmem:[#allocation3] sm:$0xe]
      %v2492 = vld [vmem:[#allocation3 + $0x20] sm:$0x7]
      %s2493 = scalar_lea.vmem %s5, 64
      %v2494 = vld [vmem:[%s2493] sm:$0xf]
      %v2495 = vld [vmem:[%s2493 + $0x4] sm:$0xf]
      %v2496 = vld [vmem:[%s2493 + $0x8] sm:$0xf]
      %v2497 = vld [vmem:[%s2493 + $0xc] sm:$0xf]
      %v2498 = vld [vmem:[%s2493 + $0x10] sm:$0xf]
      %v2499 = vld [vmem:[%s2493 + $0x14] sm:$0xf]
      %v2500 = vld [vmem:[%s2493 + $0x18] sm:$0xf]
      %v2501 = vld [vmem:[%s2493 + $0x1c] sm:$0xf]
      %v2504 = vunpack.c.l.b16 %v2491
      %v2505 = vunpack.c.l.b16 %v2492
      %v2506 = vpack.c.b16 %v2299, %v2504
      %v2507 = vpack.c.b16 %v2505, %v2505
      %v2508 = vrot.slane %v2506, 1
      %v2509 = vrot.slane %v2308, 1
      %v2510 = vsel %vm1912, %v2508, %v2509
      %v2511 = vrot.slane %v2309, 1
      %v2512 = vsel %vm1912, %v2509, %v2511
      %v2513 = vrot.slane %v2310, 1
      %v2514 = vsel %vm1912, %v2511, %v2513
      %v2515 = vrot.slane %v2507, 1
      %v2516 = vsel %vm1912, %v2513, %v2515
      %v2525 = vunpack.c.l.b16 %v2494
      %v2526 = vunpack.c.l.b16 %v2495
      %v2527 = vunpack.c.l.b16 %v2496
      %v2528 = vunpack.c.l.b16 %v2497
      %v2529 = vunpack.c.l.b16 %v2498
      %v2530 = vunpack.c.l.b16 %v2499
      %v2531 = vunpack.c.l.b16 %v2500
      %v2532 = vunpack.c.l.b16 %v2501
      %v2533 = vpack.c.b16 %v2526, %v2525
      %v2534 = vpack.c.b16 %v2528, %v2527
      %v2535 = vpack.c.b16 %v2530, %v2529
      %v2536 = vpack.c.b16 %v2532, %v2531
      %v2542 = vsel %vm2375, %v2510, 0
      %v2545 = vsel %vm2375, %v2512, 0
      %v2548 = vsel %vm2375, %v2514, 0
      %v2551 = vsel %vm2375, %v2516, 0
      %v2554 = vsel %vm2375, %v2515, 0
      %2556 = vmatpush.bf16.msra.mxu0 0
      %2557 = vmatpush.bf16.msra.mxu0 0
      %2558 = vmatpush.bf16.msra.mxu0 0
      %2559 = vmatpush.bf16.msra.mxu0 0
      %2560 = vmatpush.bf16.msra.mxu0 %v2536
      %2561 = vmatpush.bf16.msra.mxu0 %v2535
      %2562 = vmatpush.bf16.msra.mxu0 %v2534
      %2563 = vmatpush.bf16.msra.mxu0 %v2533
      %2564 = vmatmul.bf16.gmra.mxu0 %v2542
      %v2565 = vpop.f32.mrf.mxu0
      %v2566 = vadd.f32 0.0, %v2565
      %v2567 = vpop.f32.mrf.mxu0
      %v2568 = vadd.f32 0.0, %v2567
      %2569 = vmatmul.bf16.gmra.mxu0 %v2545
      %v2570 = vpop.f32.mrf.mxu0
      %v2571 = vadd.f32 0.0, %v2570
      %v2572 = vpop.f32.mrf.mxu0
      %v2573 = vadd.f32 0.0, %v2572
      %2574 = vmatmul.bf16.gmra.mxu0 %v2548
      %v2575 = vpop.f32.mrf.mxu0
      %v2576 = vadd.f32 0.0, %v2575
      %v2577 = vpop.f32.mrf.mxu0
      %v2578 = vadd.f32 0.0, %v2577
      %2579 = vmatmul.bf16.gmra.mxu0 %v2551
      %v2580 = vpop.f32.mrf.mxu0
      %v2581 = vadd.f32 0.0, %v2580
      %v2582 = vpop.f32.mrf.mxu0
      %v2583 = vadd.f32 0.0, %v2582
      %2584 = vmatmul.bf16.gmra.mxu0 %v2554
      %v2585 = vpop.f32.mrf.mxu0
      %v2586 = vadd.f32 0.0, %v2585
      %v2587 = vpop.f32.mrf.mxu0
      %2588 = vdwg.mxu0
      %v2589 = vadd.f32 %v2468, %v2566
      %v2590 = vadd.f32 %v2470, %v2568
      %v2591 = vadd.f32 %v2473, %v2571
      %v2592 = vadd.f32 %v2475, %v2573
      %v2593 = vadd.f32 %v2478, %v2576
      %v2594 = vadd.f32 %v2480, %v2578
      %v2595 = vadd.f32 %v2483, %v2581
      %v2596 = vadd.f32 %v2485, %v2583
      %v2597 = vadd.f32 %v2488, %v2586
      %v2598 = vld [vmem:[#allocation3 + $0x4] sm:$0xe]
      %v2599 = vld [vmem:[#allocation3 + $0x8] sm:$0xf]
      %v2600 = vld [vmem:[#allocation3 + $0xc] sm:$0xf]
      %v2601 = vld [vmem:[#allocation3 + $0x10] sm:$0xf]
      %v2602 = vld [vmem:[#allocation3 + $0x14] sm:$0xf]
      %v2603 = vld [vmem:[#allocation3 + $0x18] sm:$0xf]
      %v2604 = vld [vmem:[#allocation3 + $0x1c] sm:$0xf]
      %v2605 = vld [vmem:[#allocation3 + $0x20] sm:$0xf]
      %v2606 = vld [vmem:[#allocation3 + $0x24] sm:$0x7]
      %s2607 = scalar_lea.vmem %s5, 96
      %v2608 = vld [vmem:[%s2607] sm:$0xf]
      %v2609 = vld [vmem:[%s2607 + $0x4] sm:$0xf]
      %v2610 = vld [vmem:[%s2607 + $0x8] sm:$0xf]
      %v2611 = vld [vmem:[%s2607 + $0xc] sm:$0xf]
      %v2612 = vld [vmem:[%s2607 + $0x10] sm:$0xf]
      %v2613 = vld [vmem:[%s2607 + $0x14] sm:$0xf]
      %v2614 = vld [vmem:[%s2607 + $0x18] sm:$0xf]
      %v2615 = vld [vmem:[%s2607 + $0x1c] sm:$0xf]
      %v2625 = vunpack.c.l.b16 %v2598
      %v2626 = vunpack.c.l.b16 %v2599
      %v2627 = vunpack.c.l.b16 %v2600
      %v2628 = vunpack.c.l.b16 %v2601
      %v2629 = vunpack.c.l.b16 %v2602
      %v2630 = vunpack.c.l.b16 %v2603
      %v2631 = vunpack.c.l.b16 %v2604
      %v2632 = vunpack.c.l.b16 %v2605
      %v2633 = vunpack.c.l.b16 %v2606
      %v2634 = vpack.c.b16 %v2626, %v2625
      %v2635 = vpack.c.b16 %v2628, %v2627
      %v2636 = vpack.c.b16 %v2630, %v2629
      %v2637 = vpack.c.b16 %v2632, %v2631
      %v2638 = vpack.c.b16 %v2633, %v2633
      %v2639 = vrot.slane %v2634, 1
      %v2640 = vrot.slane %v2635, 1
      %v2641 = vsel %vm1912, %v2639, %v2640
      %v2642 = vrot.slane %v2636, 1
      %v2643 = vsel %vm1912, %v2640, %v2642
      %v2644 = vrot.slane %v2637, 1
      %v2645 = vsel %vm1912, %v2642, %v2644
      %v2646 = vrot.slane %v2638, 1
      %v2647 = vsel %vm1912, %v2644, %v2646
      %v2656 = vunpack.c.l.b16 %v2608
      %v2657 = vunpack.c.l.b16 %v2609
      %v2658 = vunpack.c.l.b16 %v2610
      %v2659 = vunpack.c.l.b16 %v2611
      %v2660 = vunpack.c.l.b16 %v2612
      %v2661 = vunpack.c.l.b16 %v2613
      %v2662 = vunpack.c.l.b16 %v2614
      %v2663 = vunpack.c.l.b16 %v2615
      %v2664 = vpack.c.b16 %v2657, %v2656
      %v2665 = vpack.c.b16 %v2659, %v2658
      %v2666 = vpack.c.b16 %v2661, %v2660
      %v2667 = vpack.c.b16 %v2663, %v2662
      %v2673 = vsel %vm2375, %v2641, 0
      %v2676 = vsel %vm2375, %v2643, 0
      %v2679 = vsel %vm2375, %v2645, 0
      %v2682 = vsel %vm2375, %v2647, 0
      %v2685 = vsel %vm2375, %v2646, 0
      %2687 = vmatpush.bf16.msra.mxu0 0
      %2688 = vmatpush.bf16.msra.mxu0 0
      %2689 = vmatpush.bf16.msra.mxu0 0
      %2690 = vmatpush.bf16.msra.mxu0 0
      %2691 = vmatpush.bf16.msra.mxu0 %v2667
      %2692 = vmatpush.bf16.msra.mxu0 %v2666
      %2693 = vmatpush.bf16.msra.mxu0 %v2665
      %2694 = vmatpush.bf16.msra.mxu0 %v2664
      %2695 = vmatmul.bf16.gmra.mxu0 %v2673
      %v2696 = vpop.f32.mrf.mxu0
      %v2697 = vadd.f32 0.0, %v2696
      %v2698 = vpop.f32.mrf.mxu0
      %v2699 = vadd.f32 0.0, %v2698
      %2700 = vmatmul.bf16.gmra.mxu0 %v2676
      %v2701 = vpop.f32.mrf.mxu0
      %v2702 = vadd.f32 0.0, %v2701
      %v2703 = vpop.f32.mrf.mxu0
      %v2704 = vadd.f32 0.0, %v2703
      %2705 = vmatmul.bf16.gmra.mxu0 %v2679
      %v2706 = vpop.f32.mrf.mxu0
      %v2707 = vadd.f32 0.0, %v2706
      %v2708 = vpop.f32.mrf.mxu0
      %v2709 = vadd.f32 0.0, %v2708
      %2710 = vmatmul.bf16.gmra.mxu0 %v2682
      %v2711 = vpop.f32.mrf.mxu0
      %v2712 = vadd.f32 0.0, %v2711
      %v2713 = vpop.f32.mrf.mxu0
      %v2714 = vadd.f32 0.0, %v2713
      %2715 = vmatmul.bf16.gmra.mxu0 %v2685
      %v2716 = vpop.f32.mrf.mxu0
      %v2717 = vadd.f32 0.0, %v2716
      %v2718 = vpop.f32.mrf.mxu0
      %2719 = vdwg.mxu0
      %v2720 = vadd.f32 %v2589, %v2697
      %v2721 = vadd.f32 %v2590, %v2699
      %v2722 = vadd.f32 %v2591, %v2702
      %v2723 = vadd.f32 %v2592, %v2704
      %v2724 = vadd.f32 %v2593, %v2707
      %v2725 = vadd.f32 %v2594, %v2709
      %v2726 = vadd.f32 %v2595, %v2712
      %v2727 = vadd.f32 %v2596, %v2714
      %v2728 = vadd.f32 %v2597, %v2717
      %s2729 = scalar_lea.vmem %s5, 128
      %v2730 = vld [vmem:[%s2729] sm:$0xf]
      %v2731 = vld [vmem:[%s2729 + $0x4] sm:$0xf]
      %v2732 = vld [vmem:[%s2729 + $0x8] sm:$0xf]
      %v2733 = vld [vmem:[%s2729 + $0xc] sm:$0xf]
      %v2734 = vld [vmem:[%s2729 + $0x10] sm:$0xf]
      %v2735 = vld [vmem:[%s2729 + $0x14] sm:$0xf]
      %v2736 = vld [vmem:[%s2729 + $0x18] sm:$0xf]
      %v2737 = vld [vmem:[%s2729 + $0x1c] sm:$0xf]
      %v2739 = vshrl.u32 %v2634, 16
      %v2741 = vrot.slane %v2739, 1
      %v2742 = vshll.u32 %v2634, 16
      %v2744 = vrot.slane %v2742, 2
      %v2745 = vor.u32 %v2741, %v2744
      %v2747 = vshrl.u32 %v2635, 16
      %v2749 = vrot.slane %v2747, 1
      %v2750 = vshll.u32 %v2635, 16
      %v2752 = vrot.slane %v2750, 2
      %v2753 = vor.u32 %v2749, %v2752
      %v2754 = vsel %vm2046, %v2745, %v2753
      %v2756 = vshrl.u32 %v2636, 16
      %v2758 = vrot.slane %v2756, 1
      %v2759 = vshll.u32 %v2636, 16
      %v2761 = vrot.slane %v2759, 2
      %v2762 = vor.u32 %v2758, %v2761
      %v2763 = vsel %vm2046, %v2753, %v2762
      %v2765 = vshrl.u32 %v2637, 16
      %v2767 = vrot.slane %v2765, 1
      %v2768 = vshll.u32 %v2637, 16
      %v2770 = vrot.slane %v2768, 2
      %v2771 = vor.u32 %v2767, %v2770
      %v2772 = vsel %vm2046, %v2762, %v2771
      %v2774 = vshrl.u32 %v2638, 16
      %v2776 = vrot.slane %v2774, 1
      %v2777 = vshll.u32 %v2638, 16
      %v2779 = vrot.slane %v2777, 2
      %v2780 = vor.u32 %v2776, %v2779
      %v2781 = vsel %vm2046, %v2771, %v2780
      %v2790 = vunpack.c.l.b16 %v2730
      %v2791 = vunpack.c.l.b16 %v2731
      %v2792 = vunpack.c.l.b16 %v2732
      %v2793 = vunpack.c.l.b16 %v2733
      %v2794 = vunpack.c.l.b16 %v2734
      %v2795 = vunpack.c.l.b16 %v2735
      %v2796 = vunpack.c.l.b16 %v2736
      %v2797 = vunpack.c.l.b16 %v2737
      %v2798 = vpack.c.b16 %v2791, %v2790
      %v2799 = vpack.c.b16 %v2793, %v2792
      %v2800 = vpack.c.b16 %v2795, %v2794
      %v2801 = vpack.c.b16 %v2797, %v2796
      %v2807 = vsel %vm2375, %v2754, 0
      %v2810 = vsel %vm2375, %v2763, 0
      %v2813 = vsel %vm2375, %v2772, 0
      %v2816 = vsel %vm2375, %v2781, 0
      %v2819 = vsel %vm2375, %v2780, 0
      %2821 = vmatpush.bf16.msra.mxu0 0
      %2822 = vmatpush.bf16.msra.mxu0 0
      %2823 = vmatpush.bf16.msra.mxu0 0
      %2824 = vmatpush.bf16.msra.mxu0 0
      %2825 = vmatpush.bf16.msra.mxu0 %v2801
      %2826 = vmatpush.bf16.msra.mxu0 %v2800
      %2827 = vmatpush.bf16.msra.mxu0 %v2799
      %2828 = vmatpush.bf16.msra.mxu0 %v2798
      %2829 = vmatmul.bf16.gmra.mxu0 %v2807
      %v2830 = vpop.f32.mrf.mxu0
      %v2831 = vadd.f32 0.0, %v2830
      %v2832 = vpop.f32.mrf.mxu0
      %v2833 = vadd.f32 0.0, %v2832
      %2834 = vmatmul.bf16.gmra.mxu0 %v2810
      %v2835 = vpop.f32.mrf.mxu0
      %v2836 = vadd.f32 0.0, %v2835
      %v2837 = vpop.f32.mrf.mxu0
      %v2838 = vadd.f32 0.0, %v2837
      %2839 = vmatmul.bf16.gmra.mxu0 %v2813
      %v2840 = vpop.f32.mrf.mxu0
      %v2841 = vadd.f32 0.0, %v2840
      %v2842 = vpop.f32.mrf.mxu0
      %v2843 = vadd.f32 0.0, %v2842
      %2844 = vmatmul.bf16.gmra.mxu0 %v2816
      %v2845 = vpop.f32.mrf.mxu0
      %v2846 = vadd.f32 0.0, %v2845
      %v2847 = vpop.f32.mrf.mxu0
      %v2848 = vadd.f32 0.0, %v2847
      %2849 = vmatmul.bf16.gmra.mxu0 %v2819
      %v2850 = vpop.f32.mrf.mxu0
      %v2851 = vadd.f32 0.0, %v2850
      %v2852 = vpop.f32.mrf.mxu0
      %2853 = vdwg.mxu0
      %v2854 = vadd.f32 %v2720, %v2831
      %v2855 = vadd.f32 %v2721, %v2833
      %v2856 = vadd.f32 %v2722, %v2836
      %v2857 = vadd.f32 %v2723, %v2838
      %v2858 = vadd.f32 %v2724, %v2841
      %v2859 = vadd.f32 %v2725, %v2843
      %v2860 = vadd.f32 %v2726, %v2846
      %v2861 = vadd.f32 %v2727, %v2848
      %v2862 = vadd.f32 %v2728, %v2851
      %v2863 = vld [vmem:[#allocation3 + $0x4] sm:$0xc]
      %v2864 = vld [vmem:[#allocation3 + $0x24] sm:$0xf]
      %s2865 = scalar_lea.vmem %s5, 160
      %v2866 = vld [vmem:[%s2865] sm:$0xf]
      %v2867 = vld [vmem:[%s2865 + $0x4] sm:$0xf]
      %v2868 = vld [vmem:[%s2865 + $0x8] sm:$0xf]
      %v2869 = vld [vmem:[%s2865 + $0xc] sm:$0xf]
      %v2870 = vld [vmem:[%s2865 + $0x10] sm:$0xf]
      %v2871 = vld [vmem:[%s2865 + $0x14] sm:$0xf]
      %v2872 = vld [vmem:[%s2865 + $0x18] sm:$0xf]
      %v2873 = vld [vmem:[%s2865 + $0x1c] sm:$0xf]
      %v2876 = vunpack.c.l.b16 %v2863
      %v2877 = vunpack.c.l.b16 %v2864
      %v2878 = vpack.c.b16 %v2626, %v2876
      %v2879 = vpack.c.b16 %v2877, %v2877
      %vm2880 = vcmask 1045504
      %v2881 = vrot.slane %v2878, 2
      %v2882 = vrot.slane %v2635, 2
      %v2883 = vsel %vm2880, %v2881, %v2882
      %v2884 = vrot.slane %v2636, 2
      %v2885 = vsel %vm2880, %v2882, %v2884
      %v2886 = vrot.slane %v2637, 2
      %v2887 = vsel %vm2880, %v2884, %v2886
      %v2888 = vrot.slane %v2879, 2
      %v2889 = vsel %vm2880, %v2886, %v2888
      %v2898 = vunpack.c.l.b16 %v2866
      %v2899 = vunpack.c.l.b16 %v2867
      %v2900 = vunpack.c.l.b16 %v2868
      %v2901 = vunpack.c.l.b16 %v2869
      %v2902 = vunpack.c.l.b16 %v2870
      %v2903 = vunpack.c.l.b16 %v2871
      %v2904 = vunpack.c.l.b16 %v2872
      %v2905 = vunpack.c.l.b16 %v2873
      %v2906 = vpack.c.b16 %v2899, %v2898
      %v2907 = vpack.c.b16 %v2901, %v2900
      %v2908 = vpack.c.b16 %v2903, %v2902
      %v2909 = vpack.c.b16 %v2905, %v2904
      %v2915 = vsel %vm2375, %v2883, 0
      %v2918 = vsel %vm2375, %v2885, 0
      %v2921 = vsel %vm2375, %v2887, 0
      %v2924 = vsel %vm2375, %v2889, 0
      %v2927 = vsel %vm2375, %v2888, 0
      %2929 = vmatpush.bf16.msra.mxu0 0
      %2930 = vmatpush.bf16.msra.mxu0 0
      %2931 = vmatpush.bf16.msra.mxu0 0
      %2932 = vmatpush.bf16.msra.mxu0 0
      %2933 = vmatpush.bf16.msra.mxu0 %v2909
      %2934 = vmatpush.bf16.msra.mxu0 %v2908
      %2935 = vmatpush.bf16.msra.mxu0 %v2907
      %2936 = vmatpush.bf16.msra.mxu0 %v2906
      %2937 = vmatmul.bf16.gmra.mxu0 %v2915
      %v2938 = vpop.f32.mrf.mxu0
      %v2939 = vadd.f32 0.0, %v2938
      %v2940 = vpop.f32.mrf.mxu0
      %v2941 = vadd.f32 0.0, %v2940
      %2942 = vmatmul.bf16.gmra.mxu0 %v2918
      %v2943 = vpop.f32.mrf.mxu0
      %v2944 = vadd.f32 0.0, %v2943
      %v2945 = vpop.f32.mrf.mxu0
      %v2946 = vadd.f32 0.0, %v2945
      %2947 = vmatmul.bf16.gmra.mxu0 %v2921
      %v2948 = vpop.f32.mrf.mxu0
      %v2949 = vadd.f32 0.0, %v2948
      %v2950 = vpop.f32.mrf.mxu0
      %v2951 = vadd.f32 0.0, %v2950
      %2952 = vmatmul.bf16.gmra.mxu0 %v2924
      %v2953 = vpop.f32.mrf.mxu0
      %v2954 = vadd.f32 0.0, %v2953
      %v2955 = vpop.f32.mrf.mxu0
      %v2956 = vadd.f32 0.0, %v2955
      %2957 = vmatmul.bf16.gmra.mxu0 %v2927
      %v2958 = vpop.f32.mrf.mxu0
      %v2959 = vadd.f32 0.0, %v2958
      %v2960 = vpop.f32.mrf.mxu0
      %2961 = vdwg.mxu0
      %v2962 = vadd.f32 %v2854, %v2939
      %v2963 = vadd.f32 %v2855, %v2941
      %v2964 = vadd.f32 %v2856, %v2944
      %v2965 = vadd.f32 %v2857, %v2946
      %v2966 = vadd.f32 %v2858, %v2949
      %v2967 = vadd.f32 %v2859, %v2951
      %v2968 = vadd.f32 %v2860, %v2954
      %v2969 = vadd.f32 %v2861, %v2956
      %v2970 = vadd.f32 %v2862, %v2959
      %v2971 = vld [vmem:[#allocation3 + $0x8] sm:$0xc]
      %v2972 = vld [vmem:[#allocation3 + $0xc] sm:$0xf]
      %v2973 = vld [vmem:[#allocation3 + $0x10] sm:$0xf]
      %v2974 = vld [vmem:[#allocation3 + $0x14] sm:$0xf]
      %v2975 = vld [vmem:[#allocation3 + $0x18] sm:$0xf]
      %v2976 = vld [vmem:[#allocation3 + $0x1c] sm:$0xf]
      %v2977 = vld [vmem:[#allocation3 + $0x20] sm:$0xf]
      %v2978 = vld [vmem:[#allocation3 + $0x24] sm:$0xf]
      %v2979 = vld [vmem:[#allocation3 + $0x28] sm:$0xf]
      %s2980 = scalar_lea.vmem %s5, 192
      %v2981 = vld [vmem:[%s2980] sm:$0xf]
      %v2982 = vld [vmem:[%s2980 + $0x4] sm:$0xf]
      %v2983 = vld [vmem:[%s2980 + $0x8] sm:$0xf]
      %v2984 = vld [vmem:[%s2980 + $0xc] sm:$0xf]
      %v2985 = vld [vmem:[%s2980 + $0x10] sm:$0xf]
      %v2986 = vld [vmem:[%s2980 + $0x14] sm:$0xf]
      %v2987 = vld [vmem:[%s2980 + $0x18] sm:$0xf]
      %v2988 = vld [vmem:[%s2980 + $0x1c] sm:$0xf]
      %v2998 = vunpack.c.l.b16 %v2971
      %v2999 = vunpack.c.l.b16 %v2972
      %v3000 = vunpack.c.l.b16 %v2973
      %v3001 = vunpack.c.l.b16 %v2974
      %v3002 = vunpack.c.l.b16 %v2975
      %v3003 = vunpack.c.l.b16 %v2976
      %v3004 = vunpack.c.l.b16 %v2977
      %v3005 = vunpack.c.l.b16 %v2978
      %v3006 = vunpack.c.l.b16 %v2979
      %v3007 = vpack.c.b16 %v2999, %v2998
      %v3008 = vpack.c.b16 %v3001, %v3000
      %v3009 = vpack.c.b16 %v3003, %v3002
      %v3010 = vpack.c.b16 %v3005, %v3004
      %v3011 = vpack.c.b16 %v3006, %v3006
      %v3012 = vrot.slane %v3007, 2
      %v3013 = vrot.slane %v3008, 2
      %v3014 = vsel %vm2880, %v3012, %v3013
      %v3015 = vrot.slane %v3009, 2
      %v3016 = vsel %vm2880, %v3013, %v3015
      %v3017 = vrot.slane %v3010, 2
      %v3018 = vsel %vm2880, %v3015, %v3017
      %v3019 = vrot.slane %v3011, 2
      %v3020 = vsel %vm2880, %v3017, %v3019
      %v3029 = vunpack.c.l.b16 %v2981
      %v3030 = vunpack.c.l.b16 %v2982
      %v3031 = vunpack.c.l.b16 %v2983
      %v3032 = vunpack.c.l.b16 %v2984
      %v3033 = vunpack.c.l.b16 %v2985
      %v3034 = vunpack.c.l.b16 %v2986
      %v3035 = vunpack.c.l.b16 %v2987
      %v3036 = vunpack.c.l.b16 %v2988
      %v3037 = vpack.c.b16 %v3030, %v3029
      %v3038 = vpack.c.b16 %v3032, %v3031
      %v3039 = vpack.c.b16 %v3034, %v3033
      %v3040 = vpack.c.b16 %v3036, %v3035
      %v3046 = vsel %vm2375, %v3014, 0
      %v3049 = vsel %vm2375, %v3016, 0
      %v3052 = vsel %vm2375, %v3018, 0
      %v3055 = vsel %vm2375, %v3020, 0
      %v3058 = vsel %vm2375, %v3019, 0
      %3060 = vmatpush.bf16.msra.mxu0 0
      %3061 = vmatpush.bf16.msra.mxu0 0
      %3062 = vmatpush.bf16.msra.mxu0 0
      %3063 = vmatpush.bf16.msra.mxu0 0
      %3064 = vmatpush.bf16.msra.mxu0 %v3040
      %3065 = vmatpush.bf16.msra.mxu0 %v3039
      %3066 = vmatpush.bf16.msra.mxu0 %v3038
      %3067 = vmatpush.bf16.msra.mxu0 %v3037
      %3068 = vmatmul.bf16.gmra.mxu0 %v3046
      %v3069 = vpop.f32.mrf.mxu0
      %v3070 = vadd.f32 0.0, %v3069
      %v3071 = vpop.f32.mrf.mxu0
      %v3072 = vadd.f32 0.0, %v3071
      %3073 = vmatmul.bf16.gmra.mxu0 %v3049
      %v3074 = vpop.f32.mrf.mxu0
      %v3075 = vadd.f32 0.0, %v3074
      %v3076 = vpop.f32.mrf.mxu0
      %v3077 = vadd.f32 0.0, %v3076
      %3078 = vmatmul.bf16.gmra.mxu0 %v3052
      %v3079 = vpop.f32.mrf.mxu0
      %v3080 = vadd.f32 0.0, %v3079
      %v3081 = vpop.f32.mrf.mxu0
      %v3082 = vadd.f32 0.0, %v3081
      %3083 = vmatmul.bf16.gmra.mxu0 %v3055
      %v3084 = vpop.f32.mrf.mxu0
      %v3085 = vadd.f32 0.0, %v3084
      %v3086 = vpop.f32.mrf.mxu0
      %v3087 = vadd.f32 0.0, %v3086
      %3088 = vmatmul.bf16.gmra.mxu0 %v3058
      %v3089 = vpop.f32.mrf.mxu0
      %v3090 = vadd.f32 0.0, %v3089
      %v3091 = vpop.f32.mrf.mxu0
      %3092 = vdwg.mxu0
      %v3093 = vadd.f32 %v2962, %v3070
      %v3094 = vadd.f32 %v2963, %v3072
      %v3095 = vadd.f32 %v2964, %v3075
      %v3096 = vadd.f32 %v2965, %v3077
      %v3097 = vadd.f32 %v2966, %v3080
      %v3098 = vadd.f32 %v2967, %v3082
      %v3099 = vadd.f32 %v2968, %v3085
      %v3100 = vadd.f32 %v2969, %v3087
      %v3101 = vadd.f32 %v2970, %v3090
      %s3102 = scalar_lea.vmem %s5, 224
      %v3103 = vld [vmem:[%s3102] sm:$0xf]
      %v3104 = vld [vmem:[%s3102 + $0x4] sm:$0xf]
      %v3105 = vld [vmem:[%s3102 + $0x8] sm:$0xf]
      %v3106 = vld [vmem:[%s3102 + $0xc] sm:$0xf]
      %v3107 = vld [vmem:[%s3102 + $0x10] sm:$0xf]
      %v3108 = vld [vmem:[%s3102 + $0x14] sm:$0xf]
      %v3109 = vld [vmem:[%s3102 + $0x18] sm:$0xf]
      %v3110 = vld [vmem:[%s3102 + $0x1c] sm:$0xf]
      %vm3111 = vsmask.f32 5376
      %v3113 = vshrl.u32 %v3007, 16
      %v3115 = vrot.slane %v3113, 2
      %v3116 = vshll.u32 %v3007, 16
      %v3118 = vrot.slane %v3116, 3
      %v3119 = vor.u32 %v3115, %v3118
      %v3121 = vshrl.u32 %v3008, 16
      %v3123 = vrot.slane %v3121, 2
      %v3124 = vshll.u32 %v3008, 16
      %v3126 = vrot.slane %v3124, 3
      %v3127 = vor.u32 %v3123, %v3126
      %v3128 = vsel %vm3111, %v3119, %v3127
      %v3130 = vshrl.u32 %v3009, 16
      %v3132 = vrot.slane %v3130, 2
      %v3133 = vshll.u32 %v3009, 16
      %v3135 = vrot.slane %v3133, 3
      %v3136 = vor.u32 %v3132, %v3135
      %v3137 = vsel %vm3111, %v3127, %v3136
      %v3139 = vshrl.u32 %v3010, 16
      %v3141 = vrot.slane %v3139, 2
      %v3142 = vshll.u32 %v3010, 16
      %v3144 = vrot.slane %v3142, 3
      %v3145 = vor.u32 %v3141, %v3144
      %v3146 = vsel %vm3111, %v3136, %v3145
      %v3148 = vshrl.u32 %v3011, 16
      %v3150 = vrot.slane %v3148, 2
      %v3151 = vshll.u32 %v3011, 16
      %v3153 = vrot.slane %v3151, 3
      %v3154 = vor.u32 %v3150, %v3153
      %v3155 = vsel %vm3111, %v3145, %v3154
      %v3164 = vunpack.c.l.b16 %v3103
      %v3165 = vunpack.c.l.b16 %v3104
      %v3166 = vunpack.c.l.b16 %v3105
      %v3167 = vunpack.c.l.b16 %v3106
      %v3168 = vunpack.c.l.b16 %v3107
      %v3169 = vunpack.c.l.b16 %v3108
      %v3170 = vunpack.c.l.b16 %v3109
      %v3171 = vunpack.c.l.b16 %v3110
      %v3172 = vpack.c.b16 %v3165, %v3164
      %v3173 = vpack.c.b16 %v3167, %v3166
      %v3174 = vpack.c.b16 %v3169, %v3168
      %v3175 = vpack.c.b16 %v3171, %v3170
      %v3181 = vsel %vm2375, %v3128, 0
      %v3184 = vsel %vm2375, %v3137, 0
      %v3187 = vsel %vm2375, %v3146, 0
      %v3190 = vsel %vm2375, %v3155, 0
      %v3193 = vsel %vm2375, %v3154, 0
      %3195 = vmatpush.bf16.msra.mxu0 0
      %3196 = vmatpush.bf16.msra.mxu0 0
      %3197 = vmatpush.bf16.msra.mxu0 0
      %3198 = vmatpush.bf16.msra.mxu0 0
      %3199 = vmatpush.bf16.msra.mxu0 %v3175
      %3200 = vmatpush.bf16.msra.mxu0 %v3174
      %3201 = vmatpush.bf16.msra.mxu0 %v3173
      %3202 = vmatpush.bf16.msra.mxu0 %v3172
      %3203 = vmatmul.bf16.gmra.mxu0 %v3181
      %v3204 = vpop.f32.mrf.mxu0
      %v3205 = vadd.f32 0.0, %v3204
      %v3206 = vpop.f32.mrf.mxu0
      %v3207 = vadd.f32 0.0, %v3206
      %3208 = vmatmul.bf16.gmra.mxu0 %v3184
      %v3209 = vpop.f32.mrf.mxu0
      %v3210 = vadd.f32 0.0, %v3209
      %v3211 = vpop.f32.mrf.mxu0
      %v3212 = vadd.f32 0.0, %v3211
      %3213 = vmatmul.bf16.gmra.mxu0 %v3187
      %v3214 = vpop.f32.mrf.mxu0
      %v3215 = vadd.f32 0.0, %v3214
      %v3216 = vpop.f32.mrf.mxu0
      %v3217 = vadd.f32 0.0, %v3216
      %3218 = vmatmul.bf16.gmra.mxu0 %v3190
      %v3219 = vpop.f32.mrf.mxu0
      %v3220 = vadd.f32 0.0, %v3219
      %v3221 = vpop.f32.mrf.mxu0
      %v3222 = vadd.f32 0.0, %v3221
      %3223 = vmatmul.bf16.gmra.mxu0 %v3193
      %v3224 = vpop.f32.mrf.mxu0
      %v3225 = vadd.f32 0.0, %v3224
      %v3226 = vpop.f32.mrf.mxu0
      %3227 = vdwg.mxu0
      %v3228 = vadd.f32 %v3093, %v3205
      %v3229 = vadd.f32 %v3094, %v3207
      %v3230 = vadd.f32 %v3095, %v3210
      %v3231 = vadd.f32 %v3096, %v3212
      %v3232 = vadd.f32 %v3097, %v3215
      %v3233 = vadd.f32 %v3098, %v3217
      %v3234 = vadd.f32 %v3099, %v3220
      %v3235 = vadd.f32 %v3100, %v3222
      %v3236 = vadd.f32 %v3101, %v3225
      %v3237 = vld [vmem:[#allocation3 + $0x8] sm:$0x8]
      %v3238 = vld [vmem:[#allocation3 + $0xc] sm:$0xf]
      %v3239 = vld [vmem:[#allocation3 + $0x10] sm:$0xf]
      %v3240 = vld [vmem:[#allocation3 + $0x14] sm:$0xf]
      %v3241 = vld [vmem:[#allocation3 + $0x18] sm:$0xf]
      %v3242 = vld [vmem:[#allocation3 + $0x1c] sm:$0xf]
      %v3243 = vld [vmem:[#allocation3 + $0x20] sm:$0xf]
      %v3244 = vld [vmem:[#allocation3 + $0x24] sm:$0xf]
      %v3245 = vld [vmem:[#allocation3 + $0x28] sm:$0xf]
      %v3246 = vld [vmem:[#allocation3 + $0x2c] sm:$0x1]
      %s3247 = scalar_lea.vmem %s5, 256
      %v3248 = vld [vmem:[%s3247] sm:$0xf]
      %v3249 = vld [vmem:[%s3247 + $0x4] sm:$0xf]
      %v3250 = vld [vmem:[%s3247 + $0x8] sm:$0xf]
      %v3251 = vld [vmem:[%s3247 + $0xc] sm:$0xf]
      %v3252 = vld [vmem:[%s3247 + $0x10] sm:$0xf]
      %v3253 = vld [vmem:[%s3247 + $0x14] sm:$0xf]
      %v3254 = vld [vmem:[%s3247 + $0x18] sm:$0xf]
      %v3255 = vld [vmem:[%s3247 + $0x1c] sm:$0xf]
      %v3266 = vunpack.c.l.b16 %v3237
      %v3267 = vunpack.c.l.b16 %v3238
      %v3268 = vunpack.c.l.b16 %v3239
      %v3269 = vunpack.c.l.b16 %v3240
      %v3270 = vunpack.c.l.b16 %v3241
      %v3271 = vunpack.c.l.b16 %v3242
      %v3272 = vunpack.c.l.b16 %v3243
      %v3273 = vunpack.c.l.b16 %v3244
      %v3274 = vunpack.c.l.b16 %v3245
      %v3275 = vunpack.c.l.b16 %v3246
      %v3276 = vpack.c.b16 %v3267, %v3266
      %v3277 = vpack.c.b16 %v3269, %v3268
      %v3278 = vpack.c.b16 %v3271, %v3270
      %v3279 = vpack.c.b16 %v3273, %v3272
      %v3280 = vpack.c.b16 %v3275, %v3274
      %vm3281 = vcmask 1044480
      %v3282 = vrot.slane %v3276, 3
      %v3283 = vrot.slane %v3277, 3
      %v3284 = vsel %vm3281, %v3282, %v3283
      %v3285 = vrot.slane %v3278, 3
      %v3286 = vsel %vm3281, %v3283, %v3285
      %v3287 = vrot.slane %v3279, 3
      %v3288 = vsel %vm3281, %v3285, %v3287
      %v3289 = vrot.slane %v3280, 3
      %v3290 = vsel %vm3281, %v3287, %v3289
      %v3299 = vunpack.c.l.b16 %v3248
      %v3300 = vunpack.c.l.b16 %v3249
      %v3301 = vunpack.c.l.b16 %v3250
      %v3302 = vunpack.c.l.b16 %v3251
      %v3303 = vunpack.c.l.b16 %v3252
      %v3304 = vunpack.c.l.b16 %v3253
      %v3305 = vunpack.c.l.b16 %v3254
      %v3306 = vunpack.c.l.b16 %v3255
      %v3307 = vpack.c.b16 %v3300, %v3299
      %v3308 = vpack.c.b16 %v3302, %v3301
      %v3309 = vpack.c.b16 %v3304, %v3303
      %v3310 = vpack.c.b16 %v3306, %v3305
      %v3316 = vsel %vm2375, %v3284, 0
      %v3319 = vsel %vm2375, %v3286, 0
      %v3322 = vsel %vm2375, %v3288, 0
      %v3325 = vsel %vm2375, %v3290, 0
      %v3328 = vsel %vm2375, %v3289, 0
      %3330 = vmatpush.bf16.msra.mxu0 0
      %3331 = vmatpush.bf16.msra.mxu0 0
      %3332 = vmatpush.bf16.msra.mxu0 0
      %3333 = vmatpush.bf16.msra.mxu0 0
      %3334 = vmatpush.bf16.msra.mxu0 %v3310
      %3335 = vmatpush.bf16.msra.mxu0 %v3309
      %3336 = vmatpush.bf16.msra.mxu0 %v3308
      %3337 = vmatpush.bf16.msra.mxu0 %v3307
      %3338 = vmatmul.bf16.gmra.mxu0 %v3316
      %v3339 = vpop.f32.mrf.mxu0
      %v3340 = vadd.f32 0.0, %v3339
      %v3341 = vpop.f32.mrf.mxu0
      %v3342 = vadd.f32 0.0, %v3341
      %3343 = vmatmul.bf16.gmra.mxu0 %v3319
      %v3344 = vpop.f32.mrf.mxu0
      %v3345 = vadd.f32 0.0, %v3344
      %v3346 = vpop.f32.mrf.mxu0
      %v3347 = vadd.f32 0.0, %v3346
      %3348 = vmatmul.bf16.gmra.mxu0 %v3322
      %v3349 = vpop.f32.mrf.mxu0
      %v3350 = vadd.f32 0.0, %v3349
      %v3351 = vpop.f32.mrf.mxu0
      %v3352 = vadd.f32 0.0, %v3351
      %3353 = vmatmul.bf16.gmra.mxu0 %v3325
      %v3354 = vpop.f32.mrf.mxu0
      %v3355 = vadd.f32 0.0, %v3354
      %v3356 = vpop.f32.mrf.mxu0
      %v3357 = vadd.f32 0.0, %v3356
      %3358 = vmatmul.bf16.gmra.mxu0 %v3328
      %v3359 = vpop.f32.mrf.mxu0
      %v3360 = vadd.f32 0.0, %v3359
      %v3361 = vpop.f32.mrf.mxu0
      %3362 = vdwg.mxu0
      %v3363 = vadd.f32 %v3228, %v3340
      %v3364 = vadd.f32 %v3229, %v3342
      %v3365 = vadd.f32 %v3230, %v3345
      %v3366 = vadd.f32 %v3231, %v3347
      %v3367 = vadd.f32 %v3232, %v3350
      %v3368 = vadd.f32 %v3233, %v3352
      %v3369 = vadd.f32 %v3234, %v3355
      %v3370 = vadd.f32 %v3235, %v3357
      %v3371 = vadd.f32 %v3236, %v3360
      %v3372 = vld [vmem:[%s6] sm:$0x1]
      %v3374 = vperm.slane %v3372, 0
      %v3376 = vadd.f32 %v3363, %v3374
      %v3377 = vadd.f32 %v3364, %v3374
      %v3378 = vadd.f32 %v3365, %v3374
      %v3379 = vadd.f32 %v3366, %v3374
      %v3380 = vadd.f32 %v3367, %v3374
      %v3381 = vadd.f32 %v3368, %v3374
      %v3382 = vadd.f32 %v3369, %v3374
      %v3383 = vadd.f32 %v3370, %v3374
      %v3384 = vadd.f32 %v3371, %v3374
      %v3385 = vmax.f32 %v3376, 0.0
      %v3386 = vmax.f32 %v3377, 0.0
      %v3387 = vmax.f32 %v3378, 0.0
      %v3388 = vmax.f32 %v3379, 0.0
      %v3389 = vmax.f32 %v3380, 0.0
      %v3390 = vmax.f32 %v3381, 0.0
      %v3391 = vmax.f32 %v3382, 0.0
      %v3392 = vmax.f32 %v3383, 0.0
      %v3393 = vmax.f32 %v3384, 0.0
      %v3394 = vpack.c.bf16 %v3385, %v3385
      %v3395 = vpack.c.bf16 %v3386, %v3386
      %v3396 = vpack.c.bf16 %v3387, %v3387
      %v3397 = vpack.c.bf16 %v3388, %v3388
      %v3398 = vpack.c.bf16 %v3389, %v3389
      %v3399 = vpack.c.bf16 %v3390, %v3390
      %v3400 = vpack.c.bf16 %v3391, %v3391
      %v3401 = vpack.c.bf16 %v3392, %v3392
      %v3402 = vpack.c.bf16 %v3393, %v3393
      %3403 = vst.msk [vmem:[%s278] sm:$0xf] %vm2245, %v3394
      %3404 = vst.msk [vmem:[%s278 + $0x4] sm:$0xf] %vm2245, %v3395
      %3405 = vst.msk [vmem:[%s278 + $0x8] sm:$0xf] %vm2245, %v3396
      %3406 = vst.msk [vmem:[%s278 + $0xc] sm:$0xf] %vm2245, %v3397
      %3407 = vst.msk [vmem:[%s278 + $0x10] sm:$0xf] %vm2245, %v3398
      %3408 = vst.msk [vmem:[%s278 + $0x14] sm:$0xf] %vm2245, %v3399
      %3409 = vst.msk [vmem:[%s278 + $0x18] sm:$0xf] %vm2245, %v3400
      %3410 = vst.msk [vmem:[%s278 + $0x1c] sm:$0xf] %vm2245, %v3401
      %vm3411 = vcmask 517120
      %vm3412 = vsmask.f32 1280
      %vm3413 = vmand %vm3411, %vm3412
      %v3414 = vld [vmem:[%s278 + $0x20] sm:$0x3]
      %v3415 = vsel %vm3413, %v3402, %v3414
      %3416 = vst [vmem:[%s278 + $0x20] sm:$0x3] %v3415
      %p3417 = scmp.lt.s32.totalorder %s18, 1
      %s3418 = scalar_select %p3417, %s18, 1
      %s3419 = smul.addr %s3418, 9
      %s3420 = smul.addr %s3419, 4
      %s3421 = scalar_lea.vmem %s7, %s3420
      // Predicated region
      $region49: #{cnn_forward.2} parent=47 // pred_check
        %p3422 = pneg %p188
      $region50: #{cnn_forward.2} parent=47 // pred_check_branch
        %3424 = sbr.rel (%p3422) target = $region52
      $region51: #{cnn_forward.2} parent=47 // pred_region
        _
      $region52: #{cnn_forward.2} parent=47 // pred_fallthru
        _
    $region48: #{cnn_forward.2} parent=5 // pred_fallthru
      _
    %p3425 = scmp.le.s32.totalorder 2, %s13
    // Predicated region
    $region53: #{cnn_forward.2} parent=5 // pred_check
      %p3426 = pneg %p3425
    $region54: #{cnn_forward.2} parent=5 // pred_check_branch
      %3428 = sbr.rel (%p3426) target = $region56
    $region55: #{cnn_forward.2} parent=5 // pred_region
      %s3429 = ssub.s32 %s13, 2
      // Predicated region
      $region57: #{cnn_forward.2} parent=55 // pred_check
        %p3430 = pneg %p194
      $region58: #{cnn_forward.2} parent=55 // pred_check_branch
        %3432 = sbr.rel (%p3430) target = $region60
      $region59: #{cnn_forward.2} parent=55 // pred_region
        %p3433 = scmp.lt.s32.totalorder %s19, 1
        %s3434 = scalar_select %p3433, %s19, 1
        %s3435 = smul.addr %s3434, 9
        %s3436 = smul.addr %s3435, 4
        %s3437 = scalar_lea.vmem %s7, %s3436
      $region60: #{cnn_forward.2} parent=55 // pred_fallthru
        _
    $region56: #{cnn_forward.2} parent=5 // pred_fallthru
      _
  $region6: #{cnn_forward.2} parent=0 // loop_footer
    %s17 = sadd.s32 1, %s13
  $region7: #{cnn_forward.2} parent=0 // loop_footer_branch
    %12 = sbr.rel target = $region3
  $region8: #{cnn_forward.2} parent=0 // loop_exit
    _

// kernel: cnn_forward.3
$region0: #{cnn_forward.3}
  #allocation0 [shape = 'u32[]', space=smem, size = 0x4, offset = 0x4, fixed_abs, tag = 'smem constant byte address 0x4 - core index']
  #allocation1 [shape = 'u32[72,128]{1,0:T(1,128)}', space=vmem, size = 0x9000, scoped, tag = 'internal scratch']
  %s0 = inlined_call_operand.vmem [shape: bf16[8,4288], index: 0, kind: input, shape index: {}]
  %s1 = inlined_call_operand.vmem [shape: bf16[4288,512], index: 1, kind: input, shape index: {}]
  %s2 = inlined_call_operand.vmem [shape: f32[1,512], index: 2, kind: input, shape index: {}]
  %s3 = inlined_call_operand.vmem [shape: f32[8,512], index: 3, kind: output, shape index: {}]
  %s4 = sld [smem:[#allocation0]]
  $region22: #{cnn_forward.3} parent=0
    _
  %s6 = ssub.s32 1, %s4
  %s7 = scalar_select 0, %s6, %s4
  // Predicated region
  $region2: #{cnn_forward.3} parent=0 // pred_check
    _
  $region3: #{cnn_forward.3} parent=0 // pred_check_branch
    %9 = sbr.rel (0) target = $region5
  $region4: #{cnn_forward.3} parent=0 // pred_region
    _
  $region5: #{cnn_forward.3} parent=0 // pred_fallthru
    _
  // Predicated region
  $region6: #{cnn_forward.3} parent=0 // pred_check
    _
  $region7: #{cnn_forward.3} parent=0 // pred_check_branch
    %11 = sbr.rel (0) target = $region9
  $region8: #{cnn_forward.3} parent=0 // pred_region
    _
  $region9: #{cnn_forward.3} parent=0 // pred_fallthru
    _
  // Predicated region
  $region10: #{cnn_forward.3} parent=0 // pred_check
    _
  $region11: #{cnn_forward.3} parent=0 // pred_check_branch
    %13 = sbr.rel (0) target = $region13
  $region12: #{cnn_forward.3} parent=0 // pred_region
    _
  $region13: #{cnn_forward.3} parent=0 // pred_fallthru
    _
  %v15 = vld [vmem:[%s0] sm:$0xff]
  %v16 = vld [vmem:[%s0 + $0x8] sm:$0xff]
  %v17 = vld [vmem:[%s0 + $0x10] sm:$0xff]
  %v18 = vld [vmem:[%s0 + $0x18] sm:$0xff]
  %v19 = vld [vmem:[%s0 + $0x20] sm:$0xff]
  %v20 = vld [vmem:[%s0 + $0x28] sm:$0xff]
  %v21 = vld [vmem:[%s0 + $0x30] sm:$0xff]
  %v22 = vld [vmem:[%s0 + $0x38] sm:$0xff]
  %v23 = vld [vmem:[%s0 + $0x40] sm:$0xff]
  %v24 = vld [vmem:[%s0 + $0x48] sm:$0xff]
  %v25 = vld [vmem:[%s0 + $0x50] sm:$0xff]
  %v26 = vld [vmem:[%s0 + $0x58] sm:$0xff]
  %v27 = vld [vmem:[%s0 + $0x60] sm:$0xff]
  %v28 = vld [vmem:[%s0 + $0x68] sm:$0xff]
  %v29 = vld [vmem:[%s0 + $0x70] sm:$0xff]
  %v30 = vld [vmem:[%s0 + $0x78] sm:$0xff]
  %v31 = vld [vmem:[%s0 + $0x80] sm:$0xff]
  %v32 = vld [vmem:[%s1] sm:$0xff]
  %v33 = vld [vmem:[%s1 + $0x8] sm:$0xff]
  %v34 = vld [vmem:[%s1 + $0x10] sm:$0xff]
  %v35 = vld [vmem:[%s1 + $0x18] sm:$0xff]
  %v36 = vld [vmem:[%s1 + $0x20] sm:$0xff]
  %v37 = vld [vmem:[%s1 + $0x28] sm:$0xff]
  %v38 = vld [vmem:[%s1 + $0x30] sm:$0xff]
  %v39 = vld [vmem:[%s1 + $0x38] sm:$0xff]
  %v40 = vld [vmem:[%s1 + $0x40] sm:$0xff]
  %v41 = vld [vmem:[%s1 + $0x48] sm:$0xff]
  %v42 = vld [vmem:[%s1 + $0x50] sm:$0xff]
  %v43 = vld [vmem:[%s1 + $0x58] sm:$0xff]
  %v44 = vld [vmem:[%s1 + $0x60] sm:$0xff]
  %v45 = vld [vmem:[%s1 + $0x68] sm:$0xff]
  %v46 = vld [vmem:[%s1 + $0x70] sm:$0xff]
  %v47 = vld [vmem:[%s1 + $0x78] sm:$0xff]
  %v48 = vld [vmem:[%s1 + $0x80] sm:$0xff]
  %v49 = vld [vmem:[%s1 + $0x88] sm:$0xff]
  %v50 = vld [vmem:[%s1 + $0x90] sm:$0xff]
  %v51 = vld [vmem:[%s1 + $0x98] sm:$0xff]
  %v52 = vld [vmem:[%s1 + $0xa0] sm:$0xff]
  %v53 = vld [vmem:[%s1 + $0xa8] sm:$0xff]
  %v54 = vld [vmem:[%s1 + $0xb0] sm:$0xff]
  %v55 = vld [vmem:[%s1 + $0xb8] sm:$0xff]
  %v56 = vld [vmem:[%s1 + $0xc0] sm:$0xff]
  %v57 = vld [vmem:[%s1 + $0xc8] sm:$0xff]
  %v58 = vld [vmem:[%s1 + $0xd0] sm:$0xff]
  %v59 = vld [vmem:[%s1 + $0xd8] sm:$0xff]
  %v60 = vld [vmem:[%s1 + $0xe0] sm:$0xff]
  %v61 = vld [vmem:[%s1 + $0xe8] sm:$0xff]
  %v62 = vld [vmem:[%s1 + $0xf0] sm:$0xff]
  %v63 = vld [vmem:[%s1 + $0xf8] sm:$0xff]
  %v64 = vld [vmem:[%s1 + $0x100] sm:$0xff]
  %v65 = vld [vmem:[%s1 + $0x108] sm:$0xff]
  %v66 = vld [vmem:[%s1 + $0x110] sm:$0xff]
  %v67 = vld [vmem:[%s1 + $0x118] sm:$0xff]
  %v68 = vld [vmem:[%s1 + $0x120] sm:$0xff]
  %v69 = vld [vmem:[%s1 + $0x128] sm:$0xff]
  %v70 = vld [vmem:[%s1 + $0x130] sm:$0xff]
  %v71 = vld [vmem:[%s1 + $0x138] sm:$0xff]
  %v72 = vld [vmem:[%s1 + $0x140] sm:$0xff]
  %v73 = vld [vmem:[%s1 + $0x148] sm:$0xff]
  %v74 = vld [vmem:[%s1 + $0x150] sm:$0xff]
  %v75 = vld [vmem:[%s1 + $0x158] sm:$0xff]
  %v76 = vld [vmem:[%s1 + $0x160] sm:$0xff]
  %v77 = vld [vmem:[%s1 + $0x168] sm:$0xff]
  %v78 = vld [vmem:[%s1 + $0x170] sm:$0xff]
  %v79 = vld [vmem:[%s1 + $0x178] sm:$0xff]
  %v80 = vld [vmem:[%s1 + $0x180] sm:$0xff]
  %v81 = vld [vmem:[%s1 + $0x188] sm:$0xff]
  %v82 = vld [vmem:[%s1 + $0x190] sm:$0xff]
  %v83 = vld [vmem:[%s1 + $0x198] sm:$0xff]
  %v84 = vld [vmem:[%s1 + $0x1a0] sm:$0xff]
  %v85 = vld [vmem:[%s1 + $0x1a8] sm:$0xff]
  %v86 = vld [vmem:[%s1 + $0x1b0] sm:$0xff]
  %v87 = vld [vmem:[%s1 + $0x1b8] sm:$0xff]
  %v88 = vld [vmem:[%s1 + $0x1c0] sm:$0xff]
  %v89 = vld [vmem:[%s1 + $0x1c8] sm:$0xff]
  %v90 = vld [vmem:[%s1 + $0x1d0] sm:$0xff]
  %v91 = vld [vmem:[%s1 + $0x1d8] sm:$0xff]
  %v92 = vld [vmem:[%s1 + $0x1e0] sm:$0xff]
  %v93 = vld [vmem:[%s1 + $0x1e8] sm:$0xff]
  %v94 = vld [vmem:[%s1 + $0x1f0] sm:$0xff]
  %v95 = vld [vmem:[%s1 + $0x1f8] sm:$0xff]
  %v96 = vld [vmem:[%s1 + $0x200] sm:$0xff]
  %v97 = vld [vmem:[%s1 + $0x208] sm:$0xff]
  %v98 = vld [vmem:[%s1 + $0x210] sm:$0xff]
  %v99 = vld [vmem:[%s1 + $0x218] sm:$0xff]
  %v100 = vld [vmem:[%s1 + $0x220] sm:$0xff]
  %v101 = vld [vmem:[%s1 + $0x228] sm:$0xff]
  %v102 = vld [vmem:[%s1 + $0x230] sm:$0xff]
  %v103 = vld [vmem:[%s1 + $0x238] sm:$0xff]
  %v104 = vld [vmem:[%s1 + $0x240] sm:$0xff]
  %v105 = vld [vmem:[%s1 + $0x248] sm:$0xff]
  %v106 = vld [vmem:[%s1 + $0x250] sm:$0xff]
  %v107 = vld [vmem:[%s1 + $0x258] sm:$0xff]
  %v108 = vld [vmem:[%s1 + $0x260] sm:$0xff]
  %v109 = vld [vmem:[%s1 + $0x268] sm:$0xff]
  %v110 = vld [vmem:[%s1 + $0x270] sm:$0xff]
  %v111 = vld [vmem:[%s1 + $0x278] sm:$0xff]
  %v112 = vld [vmem:[%s1 + $0x280] sm:$0xff]
  %v113 = vld [vmem:[%s1 + $0x288] sm:$0xff]
  %v114 = vld [vmem:[%s1 + $0x290] sm:$0xff]
  %v115 = vld [vmem:[%s1 + $0x298] sm:$0xff]
  %v116 = vld [vmem:[%s1 + $0x2a0] sm:$0xff]
  %v117 = vld [vmem:[%s1 + $0x2a8] sm:$0xff]
  %v118 = vld [vmem:[%s1 + $0x2b0] sm:$0xff]
  %v119 = vld [vmem:[%s1 + $0x2b8] sm:$0xff]
  %v120 = vld [vmem:[%s1 + $0x2c0] sm:$0xff]
  %v121 = vld [vmem:[%s1 + $0x2c8] sm:$0xff]
  %v122 = vld [vmem:[%s1 + $0x2d0] sm:$0xff]
  %v123 = vld [vmem:[%s1 + $0x2d8] sm:$0xff]
  %v124 = vld [vmem:[%s1 + $0x2e0] sm:$0xff]
  %v125 = vld [vmem:[%s1 + $0x2e8] sm:$0xff]
  %v126 = vld [vmem:[%s1 + $0x2f0] sm:$0xff]
  %v127 = vld [vmem:[%s1 + $0x2f8] sm:$0xff]
  %v128 = vld [vmem:[%s1 + $0x300] sm:$0xff]
  %v129 = vld [vmem:[%s1 + $0x308] sm:$0xff]
  %v130 = vld [vmem:[%s1 + $0x310] sm:$0xff]
  %v131 = vld [vmem:[%s1 + $0x318] sm:$0xff]
  %v132 = vld [vmem:[%s1 + $0x320] sm:$0xff]
  %v133 = vld [vmem:[%s1 + $0x328] sm:$0xff]
  %v134 = vld [vmem:[%s1 + $0x330] sm:$0xff]
  %v135 = vld [vmem:[%s1 + $0x338] sm:$0xff]
  %v136 = vld [vmem:[%s1 + $0x340] sm:$0xff]
  %v137 = vld [vmem:[%s1 + $0x348] sm:$0xff]
  %v138 = vld [vmem:[%s1 + $0x350] sm:$0xff]
  %v139 = vld [vmem:[%s1 + $0x358] sm:$0xff]
  %v140 = vld [vmem:[%s1 + $0x360] sm:$0xff]
  %v141 = vld [vmem:[%s1 + $0x368] sm:$0xff]
  %v142 = vld [vmem:[%s1 + $0x370] sm:$0xff]
  %v143 = vld [vmem:[%s1 + $0x378] sm:$0xff]
  %v144 = vld [vmem:[%s1 + $0x380] sm:$0xff]
  %v145 = vld [vmem:[%s1 + $0x388] sm:$0xff]
  %v146 = vld [vmem:[%s1 + $0x390] sm:$0xff]
  %v147 = vld [vmem:[%s1 + $0x398] sm:$0xff]
  %v148 = vld [vmem:[%s1 + $0x3a0] sm:$0xff]
  %v149 = vld [vmem:[%s1 + $0x3a8] sm:$0xff]
  %v150 = vld [vmem:[%s1 + $0x3b0] sm:$0xff]
  %v151 = vld [vmem:[%s1 + $0x3b8] sm:$0xff]
  %v152 = vld [vmem:[%s1 + $0x3c0] sm:$0xff]
  %v153 = vld [vmem:[%s1 + $0x3c8] sm:$0xff]
  %v154 = vld [vmem:[%s1 + $0x3d0] sm:$0xff]
  %v155 = vld [vmem:[%s1 + $0x3d8] sm:$0xff]
  %v156 = vld [vmem:[%s1 + $0x3e0] sm:$0xff]
  %v157 = vld [vmem:[%s1 + $0x3e8] sm:$0xff]
  %v158 = vld [vmem:[%s1 + $0x3f0] sm:$0xff]
  %v159 = vld [vmem:[%s1 + $0x3f8] sm:$0xff]
  %v160 = vld [vmem:[%s1 + $0x400] sm:$0xff]
  %v161 = vld [vmem:[%s1 + $0x408] sm:$0xff]
  %v162 = vld [vmem:[%s1 + $0x410] sm:$0xff]
  %v163 = vld [vmem:[%s1 + $0x418] sm:$0xff]
  %v164 = vld [vmem:[%s1 + $0x420] sm:$0xff]
  %v165 = vld [vmem:[%s1 + $0x428] sm:$0xff]
  %v166 = vld [vmem:[%s1 + $0x430] sm:$0xff]
  %v167 = vld [vmem:[%s1 + $0x438] sm:$0xff]
  %v168 = vld [vmem:[%s1 + $0x440] sm:$0xff]
  %v169 = vld [vmem:[%s1 + $0x448] sm:$0xff]
  %v170 = vld [vmem:[%s1 + $0x450] sm:$0xff]
  %v171 = vld [vmem:[%s1 + $0x458] sm:$0xff]
  %v172 = vld [vmem:[%s1 + $0x460] sm:$0xff]
  %v173 = vld [vmem:[%s1 + $0x468] sm:$0xff]
  %v174 = vld [vmem:[%s1 + $0x470] sm:$0xff]
  %v175 = vld [vmem:[%s1 + $0x478] sm:$0xff]
  %v176 = vld [vmem:[%s1 + $0x480] sm:$0xff]
  %v177 = vld [vmem:[%s1 + $0x488] sm:$0xff]
  %v178 = vld [vmem:[%s1 + $0x490] sm:$0xff]
  %v179 = vld [vmem:[%s1 + $0x498] sm:$0xff]
  %v180 = vld [vmem:[%s1 + $0x4a0] sm:$0xff]
  %v181 = vld [vmem:[%s1 + $0x4a8] sm:$0xff]
  %v182 = vld [vmem:[%s1 + $0x4b0] sm:$0xff]
  %v183 = vld [vmem:[%s1 + $0x4b8] sm:$0xff]
  %v184 = vld [vmem:[%s1 + $0x4c0] sm:$0xff]
  %v185 = vld [vmem:[%s1 + $0x4c8] sm:$0xff]
  %v186 = vld [vmem:[%s1 + $0x4d0] sm:$0xff]
  %v187 = vld [vmem:[%s1 + $0x4d8] sm:$0xff]
  %v188 = vld [vmem:[%s1 + $0x4e0] sm:$0xff]
  %v189 = vld [vmem:[%s1 + $0x4e8] sm:$0xff]
  %v190 = vld [vmem:[%s1 + $0x4f0] sm:$0xff]
  %v191 = vld [vmem:[%s1 + $0x4f8] sm:$0xff]
  %v192 = vld [vmem:[%s1 + $0x500] sm:$0xff]
  %v193 = vld [vmem:[%s1 + $0x508] sm:$0xff]
  %v194 = vld [vmem:[%s1 + $0x510] sm:$0xff]
  %v195 = vld [vmem:[%s1 + $0x518] sm:$0xff]
  %v196 = vld [vmem:[%s1 + $0x520] sm:$0xff]
  %v197 = vld [vmem:[%s1 + $0x528] sm:$0xff]
  %v198 = vld [vmem:[%s1 + $0x530] sm:$0xff]
  %v199 = vld [vmem:[%s1 + $0x538] sm:$0xff]
  %v200 = vld [vmem:[%s1 + $0x540] sm:$0xff]
  %v201 = vld [vmem:[%s1 + $0x548] sm:$0xff]
  %v202 = vld [vmem:[%s1 + $0x550] sm:$0xff]
  %v203 = vld [vmem:[%s1 + $0x558] sm:$0xff]
  %v204 = vld [vmem:[%s1 + $0x560] sm:$0xff]
  %v205 = vld [vmem:[%s1 + $0x568] sm:$0xff]
  %v206 = vld [vmem:[%s1 + $0x570] sm:$0xff]
  %v207 = vld [vmem:[%s1 + $0x578] sm:$0xff]
  %v208 = vld [vmem:[%s1 + $0x580] sm:$0xff]
  %v209 = vld [vmem:[%s1 + $0x588] sm:$0xff]
  %v210 = vld [vmem:[%s1 + $0x590] sm:$0xff]
  %v211 = vld [vmem:[%s1 + $0x598] sm:$0xff]
  %v212 = vld [vmem:[%s1 + $0x5a0] sm:$0xff]
  %v213 = vld [vmem:[%s1 + $0x5a8] sm:$0xff]
  %v214 = vld [vmem:[%s1 + $0x5b0] sm:$0xff]
  %v215 = vld [vmem:[%s1 + $0x5b8] sm:$0xff]
  %v216 = vld [vmem:[%s1 + $0x5c0] sm:$0xff]
  %v217 = vld [vmem:[%s1 + $0x5c8] sm:$0xff]
  %v218 = vld [vmem:[%s1 + $0x5d0] sm:$0xff]
  %v219 = vld [vmem:[%s1 + $0x5d8] sm:$0xff]
  %v220 = vld [vmem:[%s1 + $0x5e0] sm:$0xff]
  %v221 = vld [vmem:[%s1 + $0x5e8] sm:$0xff]
  %v222 = vld [vmem:[%s1 + $0x5f0] sm:$0xff]
  %v223 = vld [vmem:[%s1 + $0x5f8] sm:$0xff]
  %v224 = vld [vmem:[%s1 + $0x600] sm:$0xff]
  %v225 = vld [vmem:[%s1 + $0x608] sm:$0xff]
  %v226 = vld [vmem:[%s1 + $0x610] sm:$0xff]
  %v227 = vld [vmem:[%s1 + $0x618] sm:$0xff]
  %v228 = vld [vmem:[%s1 + $0x620] sm:$0xff]
  %v229 = vld [vmem:[%s1 + $0x628] sm:$0xff]
  %v230 = vld [vmem:[%s1 + $0x630] sm:$0xff]
  %v231 = vld [vmem:[%s1 + $0x638] sm:$0xff]
  %v232 = vld [vmem:[%s1 + $0x640] sm:$0xff]
  %v233 = vld [vmem:[%s1 + $0x648] sm:$0xff]
  %v234 = vld [vmem:[%s1 + $0x650] sm:$0xff]
  %v235 = vld [vmem:[%s1 + $0x658] sm:$0xff]
  %v236 = vld [vmem:[%s1 + $0x660] sm:$0xff]
  %v237 = vld [vmem:[%s1 + $0x668] sm:$0xff]
  %v238 = vld [vmem:[%s1 + $0x670] sm:$0xff]
  %v239 = vld [vmem:[%s1 + $0x678] sm:$0xff]
  %v240 = vld [vmem:[%s1 + $0x680] sm:$0xff]
  %v241 = vld [vmem:[%s1 + $0x688] sm:$0xff]
  %v242 = vld [vmem:[%s1 + $0x690] sm:$0xff]
  %v243 = vld [vmem:[%s1 + $0x698] sm:$0xff]
  %v244 = vld [vmem:[%s1 + $0x6a0] sm:$0xff]
  %v245 = vld [vmem:[%s1 + $0x6a8] sm:$0xff]
  %v246 = vld [vmem:[%s1 + $0x6b0] sm:$0xff]
  %v247 = vld [vmem:[%s1 + $0x6b8] sm:$0xff]
  %v248 = vld [vmem:[%s1 + $0x6c0] sm:$0xff]
  %v249 = vld [vmem:[%s1 + $0x6c8] sm:$0xff]
  %v250 = vld [vmem:[%s1 + $0x6d0] sm:$0xff]
  %v251 = vld [vmem:[%s1 + $0x6d8] sm:$0xff]
  %v252 = vld [vmem:[%s1 + $0x6e0] sm:$0xff]
  %v253 = vld [vmem:[%s1 + $0x6e8] sm:$0xff]
  %v254 = vld [vmem:[%s1 + $0x6f0] sm:$0xff]
  %v255 = vld [vmem:[%s1 + $0x6f8] sm:$0xff]
  %v256 = vld [vmem:[%s1 + $0x700] sm:$0xff]
  %v257 = vld [vmem:[%s1 + $0x708] sm:$0xff]
  %v258 = vld [vmem:[%s1 + $0x710] sm:$0xff]
  %v259 = vld [vmem:[%s1 + $0x718] sm:$0xff]
  %v260 = vld [vmem:[%s1 + $0x720] sm:$0xff]
  %v261 = vld [vmem:[%s1 + $0x728] sm:$0xff]
  %v262 = vld [vmem:[%s1 + $0x730] sm:$0xff]
  %v263 = vld [vmem:[%s1 + $0x738] sm:$0xff]
  %v264 = vld [vmem:[%s1 + $0x740] sm:$0xff]
  %v265 = vld [vmem:[%s1 + $0x748] sm:$0xff]
  %v266 = vld [vmem:[%s1 + $0x750] sm:$0xff]
  %v267 = vld [vmem:[%s1 + $0x758] sm:$0xff]
  %v268 = vld [vmem:[%s1 + $0x760] sm:$0xff]
  %v269 = vld [vmem:[%s1 + $0x768] sm:$0xff]
  %v270 = vld [vmem:[%s1 + $0x770] sm:$0xff]
  %v271 = vld [vmem:[%s1 + $0x778] sm:$0xff]
  %v272 = vld [vmem:[%s1 + $0x780] sm:$0xff]
  %v273 = vld [vmem:[%s1 + $0x788] sm:$0xff]
  %v274 = vld [vmem:[%s1 + $0x790] sm:$0xff]
  %v275 = vld [vmem:[%s1 + $0x798] sm:$0xff]
  %v276 = vld [vmem:[%s1 + $0x7a0] sm:$0xff]
  %v277 = vld [vmem:[%s1 + $0x7a8] sm:$0xff]
  %v278 = vld [vmem:[%s1 + $0x7b0] sm:$0xff]
  %v279 = vld [vmem:[%s1 + $0x7b8] sm:$0xff]
  %v280 = vld [vmem:[%s1 + $0x7c0] sm:$0xff]
  %v281 = vld [vmem:[%s1 + $0x7c8] sm:$0xff]
  %v282 = vld [vmem:[%s1 + $0x7d0] sm:$0xff]
  %v283 = vld [vmem:[%s1 + $0x7d8] sm:$0xff]
  %v284 = vld [vmem:[%s1 + $0x7e0] sm:$0xff]
  %v285 = vld [vmem:[%s1 + $0x7e8] sm:$0xff]
  %v286 = vld [vmem:[%s1 + $0x7f0] sm:$0xff]
  %v287 = vld [vmem:[%s1 + $0x7f8] sm:$0xff]
  %v288 = vld [vmem:[%s1 + $0x800] sm:$0xff]
  %v289 = vld [vmem:[%s1 + $0x808] sm:$0xff]
  %v290 = vld [vmem:[%s1 + $0x810] sm:$0xff]
  %v291 = vld [vmem:[%s1 + $0x818] sm:$0xff]
  %v292 = vld [vmem:[%s1 + $0x820] sm:$0xff]
  %v293 = vld [vmem:[%s1 + $0x828] sm:$0xff]
  %v294 = vld [vmem:[%s1 + $0x830] sm:$0xff]
  %v295 = vld [vmem:[%s1 + $0x838] sm:$0xff]
  %v296 = vld [vmem:[%s1 + $0x840] sm:$0xff]
  %v297 = vld [vmem:[%s1 + $0x848] sm:$0xff]
  %v298 = vld [vmem:[%s1 + $0x850] sm:$0xff]
  %v299 = vld [vmem:[%s1 + $0x858] sm:$0xff]
  %v300 = vld [vmem:[%s1 + $0x860] sm:$0xff]
  %v301 = vld [vmem:[%s1 + $0x868] sm:$0xff]
  %v302 = vld [vmem:[%s1 + $0x870] sm:$0xff]
  %v303 = vld [vmem:[%s1 + $0x878] sm:$0xff]
  %v304 = vld [vmem:[%s1 + $0x880] sm:$0xff]
  %v305 = vld [vmem:[%s1 + $0x888] sm:$0xff]
  %v306 = vld [vmem:[%s1 + $0x890] sm:$0xff]
  %v307 = vld [vmem:[%s1 + $0x898] sm:$0xff]
  %v308 = vld [vmem:[%s1 + $0x8a0] sm:$0xff]
  %v309 = vld [vmem:[%s1 + $0x8a8] sm:$0xff]
  %v310 = vld [vmem:[%s1 + $0x8b0] sm:$0xff]
  %v311 = vld [vmem:[%s1 + $0x8b8] sm:$0xff]
  %v312 = vld [vmem:[%s1 + $0x8c0] sm:$0xff]
  %v313 = vld [vmem:[%s1 + $0x8c8] sm:$0xff]
  %v314 = vld [vmem:[%s1 + $0x8d0] sm:$0xff]
  %v315 = vld [vmem:[%s1 + $0x8d8] sm:$0xff]
  %v316 = vld [vmem:[%s1 + $0x8e0] sm:$0xff]
  %v317 = vld [vmem:[%s1 + $0x8e8] sm:$0xff]
  %v318 = vld [vmem:[%s1 + $0x8f0] sm:$0xff]
  %v319 = vld [vmem:[%s1 + $0x8f8] sm:$0xff]
  %v320 = vld [vmem:[%s1 + $0x900] sm:$0xff]
  %v321 = vld [vmem:[%s1 + $0x908] sm:$0xff]
  %v322 = vld [vmem:[%s1 + $0x910] sm:$0xff]
  %v323 = vld [vmem:[%s1 + $0x918] sm:$0xff]
  %v324 = vld [vmem:[%s1 + $0x920] sm:$0xff]
  %v325 = vld [vmem:[%s1 + $0x928] sm:$0xff]
  %v326 = vld [vmem:[%s1 + $0x930] sm:$0xff]
  %v327 = vld [vmem:[%s1 + $0x938] sm:$0xff]
  %v328 = vld [vmem:[%s1 + $0x940] sm:$0xff]
  %v329 = vld [vmem:[%s1 + $0x948] sm:$0xff]
  %v330 = vld [vmem:[%s1 + $0x950] sm:$0xff]
  %v331 = vld [vmem:[%s1 + $0x958] sm:$0xff]
  %v332 = vld [vmem:[%s1 + $0x960] sm:$0xff]
  %v333 = vld [vmem:[%s1 + $0x968] sm:$0xff]
  %v334 = vld [vmem:[%s1 + $0x970] sm:$0xff]
  %v335 = vld [vmem:[%s1 + $0x978] sm:$0xff]
  %v336 = vld [vmem:[%s1 + $0x980] sm:$0xff]
  %v337 = vld [vmem:[%s1 + $0x988] sm:$0xff]
  %v338 = vld [vmem:[%s1 + $0x990] sm:$0xff]
  %v339 = vld [vmem:[%s1 + $0x998] sm:$0xff]
  %v340 = vld [vmem:[%s1 + $0x9a0] sm:$0xff]
  %v341 = vld [vmem:[%s1 + $0x9a8] sm:$0xff]
  %v342 = vld [vmem:[%s1 + $0x9b0] sm:$0xff]
  %v343 = vld [vmem:[%s1 + $0x9b8] sm:$0xff]
  %v344 = vld [vmem:[%s1 + $0x9c0] sm:$0xff]
  %v345 = vld [vmem:[%s1 + $0x9c8] sm:$0xff]
  %v346 = vld [vmem:[%s1 + $0x9d0] sm:$0xff]
  %v347 = vld [vmem:[%s1 + $0x9d8] sm:$0xff]
  %v348 = vld [vmem:[%s1 + $0x9e0] sm:$0xff]
  %v349 = vld [vmem:[%s1 + $0x9e8] sm:$0xff]
  %v350 = vld [vmem:[%s1 + $0x9f0] sm:$0xff]
  %v351 = vld [vmem:[%s1 + $0x9f8] sm:$0xff]
  %v352 = vld [vmem:[%s1 + $0xa00] sm:$0xff]
  %v353 = vld [vmem:[%s1 + $0xa08] sm:$0xff]
  %v354 = vld [vmem:[%s1 + $0xa10] sm:$0xff]
  %v355 = vld [vmem:[%s1 + $0xa18] sm:$0xff]
  %v356 = vld [vmem:[%s1 + $0xa20] sm:$0xff]
  %v357 = vld [vmem:[%s1 + $0xa28] sm:$0xff]
  %v358 = vld [vmem:[%s1 + $0xa30] sm:$0xff]
  %v359 = vld [vmem:[%s1 + $0xa38] sm:$0xff]
  %v360 = vld [vmem:[%s1 + $0xa40] sm:$0xff]
  %v361 = vld [vmem:[%s1 + $0xa48] sm:$0xff]
  %v362 = vld [vmem:[%s1 + $0xa50] sm:$0xff]
  %v363 = vld [vmem:[%s1 + $0xa58] sm:$0xff]
  %v364 = vld [vmem:[%s1 + $0xa60] sm:$0xff]
  %v365 = vld [vmem:[%s1 + $0xa68] sm:$0xff]
  %v366 = vld [vmem:[%s1 + $0xa70] sm:$0xff]
  %v367 = vld [vmem:[%s1 + $0xa78] sm:$0xff]
  %v368 = vld [vmem:[%s1 + $0xa80] sm:$0xff]
  %v369 = vld [vmem:[%s1 + $0xa88] sm:$0xff]
  %v370 = vld [vmem:[%s1 + $0xa90] sm:$0xff]
  %v371 = vld [vmem:[%s1 + $0xa98] sm:$0xff]
  %v372 = vld [vmem:[%s1 + $0xaa0] sm:$0xff]
  %v373 = vld [vmem:[%s1 + $0xaa8] sm:$0xff]
  %v374 = vld [vmem:[%s1 + $0xab0] sm:$0xff]
  %v375 = vld [vmem:[%s1 + $0xab8] sm:$0xff]
  %v376 = vld [vmem:[%s1 + $0xac0] sm:$0xff]
  %v377 = vld [vmem:[%s1 + $0xac8] sm:$0xff]
  %v378 = vld [vmem:[%s1 + $0xad0] sm:$0xff]
  %v379 = vld [vmem:[%s1 + $0xad8] sm:$0xff]
  %v380 = vld [vmem:[%s1 + $0xae0] sm:$0xff]
  %v381 = vld [vmem:[%s1 + $0xae8] sm:$0xff]
  %v382 = vld [vmem:[%s1 + $0xaf0] sm:$0xff]
  %v383 = vld [vmem:[%s1 + $0xaf8] sm:$0xff]
  %v384 = vld [vmem:[%s1 + $0xb00] sm:$0xff]
  %v385 = vld [vmem:[%s1 + $0xb08] sm:$0xff]
  %v386 = vld [vmem:[%s1 + $0xb10] sm:$0xff]
  %v387 = vld [vmem:[%s1 + $0xb18] sm:$0xff]
  %v388 = vld [vmem:[%s1 + $0xb20] sm:$0xff]
  %v389 = vld [vmem:[%s1 + $0xb28] sm:$0xff]
  %v390 = vld [vmem:[%s1 + $0xb30] sm:$0xff]
  %v391 = vld [vmem:[%s1 + $0xb38] sm:$0xff]
  %v392 = vld [vmem:[%s1 + $0xb40] sm:$0xff]
  %v393 = vld [vmem:[%s1 + $0xb48] sm:$0xff]
  %v394 = vld [vmem:[%s1 + $0xb50] sm:$0xff]
  %v395 = vld [vmem:[%s1 + $0xb58] sm:$0xff]
  %v396 = vld [vmem:[%s1 + $0xb60] sm:$0xff]
  %v397 = vld [vmem:[%s1 + $0xb68] sm:$0xff]
  %v398 = vld [vmem:[%s1 + $0xb70] sm:$0xff]
  %v399 = vld [vmem:[%s1 + $0xb78] sm:$0xff]
  %v400 = vld [vmem:[%s1 + $0xb80] sm:$0xff]
  %v401 = vld [vmem:[%s1 + $0xb88] sm:$0xff]
  %v402 = vld [vmem:[%s1 + $0xb90] sm:$0xff]
  %v403 = vld [vmem:[%s1 + $0xb98] sm:$0xff]
  %v404 = vld [vmem:[%s1 + $0xba0] sm:$0xff]
  %v405 = vld [vmem:[%s1 + $0xba8] sm:$0xff]
  %v406 = vld [vmem:[%s1 + $0xbb0] sm:$0xff]
  %v407 = vld [vmem:[%s1 + $0xbb8] sm:$0xff]
  %v408 = vld [vmem:[%s1 + $0xbc0] sm:$0xff]
  %v409 = vld [vmem:[%s1 + $0xbc8] sm:$0xff]
  %v410 = vld [vmem:[%s1 + $0xbd0] sm:$0xff]
  %v411 = vld [vmem:[%s1 + $0xbd8] sm:$0xff]
  %v412 = vld [vmem:[%s1 + $0xbe0] sm:$0xff]
  %v413 = vld [vmem:[%s1 + $0xbe8] sm:$0xff]
  %v414 = vld [vmem:[%s1 + $0xbf0] sm:$0xff]
  %v415 = vld [vmem:[%s1 + $0xbf8] sm:$0xff]
  %v416 = vld [vmem:[%s1 + $0xc00] sm:$0xff]
  %v417 = vld [vmem:[%s1 + $0xc08] sm:$0xff]
  %v418 = vld [vmem:[%s1 + $0xc10] sm:$0xff]
  %v419 = vld [vmem:[%s1 + $0xc18] sm:$0xff]
  %v420 = vld [vmem:[%s1 + $0xc20] sm:$0xff]
  %v421 = vld [vmem:[%s1 + $0xc28] sm:$0xff]
  %v422 = vld [vmem:[%s1 + $0xc30] sm:$0xff]
  %v423 = vld [vmem:[%s1 + $0xc38] sm:$0xff]
  %v424 = vld [vmem:[%s1 + $0xc40] sm:$0xff]
  %v425 = vld [vmem:[%s1 + $0xc48] sm:$0xff]
  %v426 = vld [vmem:[%s1 + $0xc50] sm:$0xff]
  %v427 = vld [vmem:[%s1 + $0xc58] sm:$0xff]
  %v428 = vld [vmem:[%s1 + $0xc60] sm:$0xff]
  %v429 = vld [vmem:[%s1 + $0xc68] sm:$0xff]
  %v430 = vld [vmem:[%s1 + $0xc70] sm:$0xff]
  %v431 = vld [vmem:[%s1 + $0xc78] sm:$0xff]
  %v432 = vld [vmem:[%s1 + $0xc80] sm:$0xff]
  %v433 = vld [vmem:[%s1 + $0xc88] sm:$0xff]
  %v434 = vld [vmem:[%s1 + $0xc90] sm:$0xff]
  %v435 = vld [vmem:[%s1 + $0xc98] sm:$0xff]
  %v436 = vld [vmem:[%s1 + $0xca0] sm:$0xff]
  %v437 = vld [vmem:[%s1 + $0xca8] sm:$0xff]
  %v438 = vld [vmem:[%s1 + $0xcb0] sm:$0xff]
  %v439 = vld [vmem:[%s1 + $0xcb8] sm:$0xff]
  %v440 = vld [vmem:[%s1 + $0xcc0] sm:$0xff]
  %v441 = vld [vmem:[%s1 + $0xcc8] sm:$0xff]
  %v442 = vld [vmem:[%s1 + $0xcd0] sm:$0xff]
  %v443 = vld [vmem:[%s1 + $0xcd8] sm:$0xff]
  %v444 = vld [vmem:[%s1 + $0xce0] sm:$0xff]
  %v445 = vld [vmem:[%s1 + $0xce8] sm:$0xff]
  %v446 = vld [vmem:[%s1 + $0xcf0] sm:$0xff]
  %v447 = vld [vmem:[%s1 + $0xcf8] sm:$0xff]
  %v448 = vld [vmem:[%s1 + $0xd00] sm:$0xff]
  %v449 = vld [vmem:[%s1 + $0xd08] sm:$0xff]
  %v450 = vld [vmem:[%s1 + $0xd10] sm:$0xff]
  %v451 = vld [vmem:[%s1 + $0xd18] sm:$0xff]
  %v452 = vld [vmem:[%s1 + $0xd20] sm:$0xff]
  %v453 = vld [vmem:[%s1 + $0xd28] sm:$0xff]
  %v454 = vld [vmem:[%s1 + $0xd30] sm:$0xff]
  %v455 = vld [vmem:[%s1 + $0xd38] sm:$0xff]
  %v456 = vld [vmem:[%s1 + $0xd40] sm:$0xff]
  %v457 = vld [vmem:[%s1 + $0xd48] sm:$0xff]
  %v458 = vld [vmem:[%s1 + $0xd50] sm:$0xff]
  %v459 = vld [vmem:[%s1 + $0xd58] sm:$0xff]
  %v460 = vld [vmem:[%s1 + $0xd60] sm:$0xff]
  %v461 = vld [vmem:[%s1 + $0xd68] sm:$0xff]
  %v462 = vld [vmem:[%s1 + $0xd70] sm:$0xff]
  %v463 = vld [vmem:[%s1 + $0xd78] sm:$0xff]
  %v464 = vld [vmem:[%s1 + $0xd80] sm:$0xff]
  %v465 = vld [vmem:[%s1 + $0xd88] sm:$0xff]
  %v466 = vld [vmem:[%s1 + $0xd90] sm:$0xff]
  %v467 = vld [vmem:[%s1 + $0xd98] sm:$0xff]
  %v468 = vld [vmem:[%s1 + $0xda0] sm:$0xff]
  %v469 = vld [vmem:[%s1 + $0xda8] sm:$0xff]
  %v470 = vld [vmem:[%s1 + $0xdb0] sm:$0xff]
  %v471 = vld [vmem:[%s1 + $0xdb8] sm:$0xff]
  %v472 = vld [vmem:[%s1 + $0xdc0] sm:$0xff]
  %v473 = vld [vmem:[%s1 + $0xdc8] sm:$0xff]
  %v474 = vld [vmem:[%s1 + $0xdd0] sm:$0xff]
  %v475 = vld [vmem:[%s1 + $0xdd8] sm:$0xff]
  %v476 = vld [vmem:[%s1 + $0xde0] sm:$0xff]
  %v477 = vld [vmem:[%s1 + $0xde8] sm:$0xff]
  %v478 = vld [vmem:[%s1 + $0xdf0] sm:$0xff]
  %v479 = vld [vmem:[%s1 + $0xdf8] sm:$0xff]
  %v480 = vld [vmem:[%s1 + $0xe00] sm:$0xff]
  %v481 = vld [vmem:[%s1 + $0xe08] sm:$0xff]
  %v482 = vld [vmem:[%s1 + $0xe10] sm:$0xff]
  %v483 = vld [vmem:[%s1 + $0xe18] sm:$0xff]
  %v484 = vld [vmem:[%s1 + $0xe20] sm:$0xff]
  %v485 = vld [vmem:[%s1 + $0xe28] sm:$0xff]
  %v486 = vld [vmem:[%s1 + $0xe30] sm:$0xff]
  %v487 = vld [vmem:[%s1 + $0xe38] sm:$0xff]
  %v488 = vld [vmem:[%s1 + $0xe40] sm:$0xff]
  %v489 = vld [vmem:[%s1 + $0xe48] sm:$0xff]
  %v490 = vld [vmem:[%s1 + $0xe50] sm:$0xff]
  %v491 = vld [vmem:[%s1 + $0xe58] sm:$0xff]
  %v492 = vld [vmem:[%s1 + $0xe60] sm:$0xff]
  %v493 = vld [vmem:[%s1 + $0xe68] sm:$0xff]
  %v494 = vld [vmem:[%s1 + $0xe70] sm:$0xff]
  %v495 = vld [vmem:[%s1 + $0xe78] sm:$0xff]
  %v496 = vld [vmem:[%s1 + $0xe80] sm:$0xff]
  %v497 = vld [vmem:[%s1 + $0xe88] sm:$0xff]
  %v498 = vld [vmem:[%s1 + $0xe90] sm:$0xff]
  %v499 = vld [vmem:[%s1 + $0xe98] sm:$0xff]
  %v500 = vld [vmem:[%s1 + $0xea0] sm:$0xff]
  %v501 = vld [vmem:[%s1 + $0xea8] sm:$0xff]
  %v502 = vld [vmem:[%s1 + $0xeb0] sm:$0xff]
  %v503 = vld [vmem:[%s1 + $0xeb8] sm:$0xff]
  %v504 = vld [vmem:[%s1 + $0xec0] sm:$0xff]
  %v505 = vld [vmem:[%s1 + $0xec8] sm:$0xff]
  %v506 = vld [vmem:[%s1 + $0xed0] sm:$0xff]
  %v507 = vld [vmem:[%s1 + $0xed8] sm:$0xff]
  %v508 = vld [vmem:[%s1 + $0xee0] sm:$0xff]
  %v509 = vld [vmem:[%s1 + $0xee8] sm:$0xff]
  %v510 = vld [vmem:[%s1 + $0xef0] sm:$0xff]
  %v511 = vld [vmem:[%s1 + $0xef8] sm:$0xff]
  %v512 = vld [vmem:[%s1 + $0xf00] sm:$0xff]
  %v513 = vld [vmem:[%s1 + $0xf08] sm:$0xff]
  %v514 = vld [vmem:[%s1 + $0xf10] sm:$0xff]
  %v515 = vld [vmem:[%s1 + $0xf18] sm:$0xff]
  %v516 = vld [vmem:[%s1 + $0xf20] sm:$0xff]
  %v517 = vld [vmem:[%s1 + $0xf28] sm:$0xff]
  %v518 = vld [vmem:[%s1 + $0xf30] sm:$0xff]
  %v519 = vld [vmem:[%s1 + $0xf38] sm:$0xff]
  %v520 = vld [vmem:[%s1 + $0xf40] sm:$0xff]
  %v521 = vld [vmem:[%s1 + $0xf48] sm:$0xff]
  %v522 = vld [vmem:[%s1 + $0xf50] sm:$0xff]
  %v523 = vld [vmem:[%s1 + $0xf58] sm:$0xff]
  %v524 = vld [vmem:[%s1 + $0xf60] sm:$0xff]
  %v525 = vld [vmem:[%s1 + $0xf68] sm:$0xff]
  %v526 = vld [vmem:[%s1 + $0xf70] sm:$0xff]
  %v527 = vld [vmem:[%s1 + $0xf78] sm:$0xff]
  %v528 = vld [vmem:[%s1 + $0xf80] sm:$0xff]
  %v529 = vld [vmem:[%s1 + $0xf88] sm:$0xff]
  %v530 = vld [vmem:[%s1 + $0xf90] sm:$0xff]
  %v531 = vld [vmem:[%s1 + $0xf98] sm:$0xff]
  %v532 = vld [vmem:[%s1 + $0xfa0] sm:$0xff]
  %v533 = vld [vmem:[%s1 + $0xfa8] sm:$0xff]
  %v534 = vld [vmem:[%s1 + $0xfb0] sm:$0xff]
  %v535 = vld [vmem:[%s1 + $0xfb8] sm:$0xff]
  %v536 = vld [vmem:[%s1 + $0xfc0] sm:$0xff]
  %v537 = vld [vmem:[%s1 + $0xfc8] sm:$0xff]
  %v538 = vld [vmem:[%s1 + $0xfd0] sm:$0xff]
  %v539 = vld [vmem:[%s1 + $0xfd8] sm:$0xff]
  %v540 = vld [vmem:[%s1 + $0xfe0] sm:$0xff]
  %v541 = vld [vmem:[%s1 + $0xfe8] sm:$0xff]
  %v542 = vld [vmem:[%s1 + $0xff0] sm:$0xff]
  %v543 = vld [vmem:[%s1 + $0xff8] sm:$0xff]
  %v544 = vld [vmem:[%s1 + $0x1000] sm:$0xff]
  %v545 = vld [vmem:[%s1 + $0x1008] sm:$0xff]
  %v546 = vld [vmem:[%s1 + $0x1010] sm:$0xff]
  %v547 = vld [vmem:[%s1 + $0x1018] sm:$0xff]
  %v548 = vld [vmem:[%s1 + $0x1020] sm:$0xff]
  %v549 = vld [vmem:[%s1 + $0x1028] sm:$0xff]
  %v550 = vld [vmem:[%s1 + $0x1030] sm:$0xff]
  %v551 = vld [vmem:[%s1 + $0x1038] sm:$0xff]
  %v552 = vld [vmem:[%s1 + $0x1040] sm:$0xff]
  %v553 = vld [vmem:[%s1 + $0x1048] sm:$0xff]
  %v554 = vld [vmem:[%s1 + $0x1050] sm:$0xff]
  %v555 = vld [vmem:[%s1 + $0x1058] sm:$0xff]
  %v556 = vld [vmem:[%s1 + $0x1060] sm:$0xff]
  %v557 = vld [vmem:[%s1 + $0x1068] sm:$0xff]
  %v558 = vld [vmem:[%s1 + $0x1070] sm:$0xff]
  %v559 = vld [vmem:[%s1 + $0x1078] sm:$0xff]
  %v560 = vld [vmem:[%s1 + $0x1080] sm:$0xff]
  %v561 = vld [vmem:[%s1 + $0x1088] sm:$0xff]
  %v562 = vld [vmem:[%s1 + $0x1090] sm:$0xff]
  %v563 = vld [vmem:[%s1 + $0x1098] sm:$0xff]
  %v564 = vld [vmem:[%s1 + $0x10a0] sm:$0xff]
  %v565 = vld [vmem:[%s1 + $0x10a8] sm:$0xff]
  %v566 = vld [vmem:[%s1 + $0x10b0] sm:$0xff]
  %v567 = vld [vmem:[%s1 + $0x10b8] sm:$0xff]
  %v568 = vld [vmem:[%s1 + $0x10c0] sm:$0xff]
  %v569 = vld [vmem:[%s1 + $0x10c8] sm:$0xff]
  %v570 = vld [vmem:[%s1 + $0x10d0] sm:$0xff]
  %v571 = vld [vmem:[%s1 + $0x10d8] sm:$0xff]
  %v572 = vld [vmem:[%s1 + $0x10e0] sm:$0xff]
  %v573 = vld [vmem:[%s1 + $0x10e8] sm:$0xff]
  %v574 = vld [vmem:[%s1 + $0x10f0] sm:$0xff]
  %v575 = vld [vmem:[%s1 + $0x10f8] sm:$0xff]
  %v576 = vld [vmem:[%s1 + $0x1100] sm:$0xff]
  %v577 = vld [vmem:[%s1 + $0x1108] sm:$0xff]
  %v578 = vld [vmem:[%s1 + $0x1110] sm:$0xff]
  %v579 = vld [vmem:[%s1 + $0x1118] sm:$0xff]
  %v580 = vld [vmem:[%s1 + $0x1120] sm:$0xff]
  %v581 = vld [vmem:[%s1 + $0x1128] sm:$0xff]
  %v582 = vld [vmem:[%s1 + $0x1130] sm:$0xff]
  %v583 = vld [vmem:[%s1 + $0x1138] sm:$0xff]
  %v584 = vld [vmem:[%s1 + $0x1140] sm:$0xff]
  %v585 = vld [vmem:[%s1 + $0x1148] sm:$0xff]
  %v586 = vld [vmem:[%s1 + $0x1150] sm:$0xff]
  %v587 = vld [vmem:[%s1 + $0x1158] sm:$0xff]
  %v588 = vld [vmem:[%s1 + $0x1160] sm:$0xff]
  %v589 = vld [vmem:[%s1 + $0x1168] sm:$0xff]
  %v590 = vld [vmem:[%s1 + $0x1170] sm:$0xff]
  %v591 = vld [vmem:[%s1 + $0x1178] sm:$0xff]
  %v592 = vld [vmem:[%s1 + $0x1180] sm:$0xff]
  %v593 = vld [vmem:[%s1 + $0x1188] sm:$0xff]
  %v594 = vld [vmem:[%s1 + $0x1190] sm:$0xff]
  %v595 = vld [vmem:[%s1 + $0x1198] sm:$0xff]
  %v596 = vld [vmem:[%s1 + $0x11a0] sm:$0xff]
  %v597 = vld [vmem:[%s1 + $0x11a8] sm:$0xff]
  %v598 = vld [vmem:[%s1 + $0x11b0] sm:$0xff]
  %v599 = vld [vmem:[%s1 + $0x11b8] sm:$0xff]
  %v600 = vld [vmem:[%s1 + $0x11c0] sm:$0xff]
  %v601 = vld [vmem:[%s1 + $0x11c8] sm:$0xff]
  %v602 = vld [vmem:[%s1 + $0x11d0] sm:$0xff]
  %v603 = vld [vmem:[%s1 + $0x11d8] sm:$0xff]
  %v604 = vld [vmem:[%s1 + $0x11e0] sm:$0xff]
  %v605 = vld [vmem:[%s1 + $0x11e8] sm:$0xff]
  %v606 = vld [vmem:[%s1 + $0x11f0] sm:$0xff]
  %v607 = vld [vmem:[%s1 + $0x11f8] sm:$0xff]
  %v608 = vld [vmem:[%s1 + $0x1200] sm:$0xff]
  %v609 = vld [vmem:[%s1 + $0x1208] sm:$0xff]
  %v610 = vld [vmem:[%s1 + $0x1210] sm:$0xff]
  %v611 = vld [vmem:[%s1 + $0x1218] sm:$0xff]
  %v612 = vld [vmem:[%s1 + $0x1220] sm:$0xff]
  %v613 = vld [vmem:[%s1 + $0x1228] sm:$0xff]
  %v614 = vld [vmem:[%s1 + $0x1230] sm:$0xff]
  %v615 = vld [vmem:[%s1 + $0x1238] sm:$0xff]
  %v616 = vld [vmem:[%s1 + $0x1240] sm:$0xff]
  %v617 = vld [vmem:[%s1 + $0x1248] sm:$0xff]
  %v618 = vld [vmem:[%s1 + $0x1250] sm:$0xff]
  %v619 = vld [vmem:[%s1 + $0x1258] sm:$0xff]
  %v620 = vld [vmem:[%s1 + $0x1260] sm:$0xff]
  %v621 = vld [vmem:[%s1 + $0x1268] sm:$0xff]
  %v622 = vld [vmem:[%s1 + $0x1270] sm:$0xff]
  %v623 = vld [vmem:[%s1 + $0x1278] sm:$0xff]
  %v624 = vld [vmem:[%s1 + $0x1280] sm:$0xff]
  %v625 = vld [vmem:[%s1 + $0x1288] sm:$0xff]
  %v626 = vld [vmem:[%s1 + $0x1290] sm:$0xff]
  %v627 = vld [vmem:[%s1 + $0x1298] sm:$0xff]
  %v628 = vld [vmem:[%s1 + $0x12a0] sm:$0xff]
  %v629 = vld [vmem:[%s1 + $0x12a8] sm:$0xff]
  %v630 = vld [vmem:[%s1 + $0x12b0] sm:$0xff]
  %v631 = vld [vmem:[%s1 + $0x12b8] sm:$0xff]
  %v632 = vld [vmem:[%s1 + $0x12c0] sm:$0xff]
  %v633 = vld [vmem:[%s1 + $0x12c8] sm:$0xff]
  %v634 = vld [vmem:[%s1 + $0x12d0] sm:$0xff]
  %v635 = vld [vmem:[%s1 + $0x12d8] sm:$0xff]
  %v636 = vld [vmem:[%s1 + $0x12e0] sm:$0xff]
  %v637 = vld [vmem:[%s1 + $0x12e8] sm:$0xff]
  %v638 = vld [vmem:[%s1 + $0x12f0] sm:$0xff]
  %v639 = vld [vmem:[%s1 + $0x12f8] sm:$0xff]
  %v640 = vld [vmem:[%s1 + $0x1300] sm:$0xff]
  %v641 = vld [vmem:[%s1 + $0x1308] sm:$0xff]
  %v642 = vld [vmem:[%s1 + $0x1310] sm:$0xff]
  %v643 = vld [vmem:[%s1 + $0x1318] sm:$0xff]
  %v644 = vld [vmem:[%s1 + $0x1320] sm:$0xff]
  %v645 = vld [vmem:[%s1 + $0x1328] sm:$0xff]
  %v646 = vld [vmem:[%s1 + $0x1330] sm:$0xff]
  %v647 = vld [vmem:[%s1 + $0x1338] sm:$0xff]
  %v648 = vld [vmem:[%s1 + $0x1340] sm:$0xff]
  %v649 = vld [vmem:[%s1 + $0x1348] sm:$0xff]
  %v650 = vld [vmem:[%s1 + $0x1350] sm:$0xff]
  %v651 = vld [vmem:[%s1 + $0x1358] sm:$0xff]
  %v652 = vld [vmem:[%s1 + $0x1360] sm:$0xff]
  %v653 = vld [vmem:[%s1 + $0x1368] sm:$0xff]
  %v654 = vld [vmem:[%s1 + $0x1370] sm:$0xff]
  %v655 = vld [vmem:[%s1 + $0x1378] sm:$0xff]
  %v656 = vld [vmem:[%s1 + $0x1380] sm:$0xff]
  %v657 = vld [vmem:[%s1 + $0x1388] sm:$0xff]
  %v658 = vld [vmem:[%s1 + $0x1390] sm:$0xff]
  %v659 = vld [vmem:[%s1 + $0x1398] sm:$0xff]
  %v660 = vld [vmem:[%s1 + $0x13a0] sm:$0xff]
  %v661 = vld [vmem:[%s1 + $0x13a8] sm:$0xff]
  %v662 = vld [vmem:[%s1 + $0x13b0] sm:$0xff]
  %v663 = vld [vmem:[%s1 + $0x13b8] sm:$0xff]
  %v664 = vld [vmem:[%s1 + $0x13c0] sm:$0xff]
  %v665 = vld [vmem:[%s1 + $0x13c8] sm:$0xff]
  %v666 = vld [vmem:[%s1 + $0x13d0] sm:$0xff]
  %v667 = vld [vmem:[%s1 + $0x13d8] sm:$0xff]
  %v668 = vld [vmem:[%s1 + $0x13e0] sm:$0xff]
  %v669 = vld [vmem:[%s1 + $0x13e8] sm:$0xff]
  %v670 = vld [vmem:[%s1 + $0x13f0] sm:$0xff]
  %v671 = vld [vmem:[%s1 + $0x13f8] sm:$0xff]
  %v672 = vld [vmem:[%s1 + $0x1400] sm:$0xff]
  %v673 = vld [vmem:[%s1 + $0x1408] sm:$0xff]
  %v674 = vld [vmem:[%s1 + $0x1410] sm:$0xff]
  %v675 = vld [vmem:[%s1 + $0x1418] sm:$0xff]
  %v676 = vld [vmem:[%s1 + $0x1420] sm:$0xff]
  %v677 = vld [vmem:[%s1 + $0x1428] sm:$0xff]
  %v678 = vld [vmem:[%s1 + $0x1430] sm:$0xff]
  %v679 = vld [vmem:[%s1 + $0x1438] sm:$0xff]
  %v680 = vld [vmem:[%s1 + $0x1440] sm:$0xff]
  %v681 = vld [vmem:[%s1 + $0x1448] sm:$0xff]
  %v682 = vld [vmem:[%s1 + $0x1450] sm:$0xff]
  %v683 = vld [vmem:[%s1 + $0x1458] sm:$0xff]
  %v684 = vld [vmem:[%s1 + $0x1460] sm:$0xff]
  %v685 = vld [vmem:[%s1 + $0x1468] sm:$0xff]
  %v686 = vld [vmem:[%s1 + $0x1470] sm:$0xff]
  %v687 = vld [vmem:[%s1 + $0x1478] sm:$0xff]
  %v688 = vld [vmem:[%s1 + $0x1480] sm:$0xff]
  %v689 = vld [vmem:[%s1 + $0x1488] sm:$0xff]
  %v690 = vld [vmem:[%s1 + $0x1490] sm:$0xff]
  %v691 = vld [vmem:[%s1 + $0x1498] sm:$0xff]
  %v692 = vld [vmem:[%s1 + $0x14a0] sm:$0xff]
  %v693 = vld [vmem:[%s1 + $0x14a8] sm:$0xff]
  %v694 = vld [vmem:[%s1 + $0x14b0] sm:$0xff]
  %v695 = vld [vmem:[%s1 + $0x14b8] sm:$0xff]
  %v696 = vld [vmem:[%s1 + $0x14c0] sm:$0xff]
  %v697 = vld [vmem:[%s1 + $0x14c8] sm:$0xff]
  %v698 = vld [vmem:[%s1 + $0x14d0] sm:$0xff]
  %v699 = vld [vmem:[%s1 + $0x14d8] sm:$0xff]
  %v700 = vld [vmem:[%s1 + $0x14e0] sm:$0xff]
  %v701 = vld [vmem:[%s1 + $0x14e8] sm:$0xff]
  %v702 = vld [vmem:[%s1 + $0x14f0] sm:$0xff]
  %v703 = vld [vmem:[%s1 + $0x14f8] sm:$0xff]
  %v704 = vld [vmem:[%s1 + $0x1500] sm:$0xff]
  %v705 = vld [vmem:[%s1 + $0x1508] sm:$0xff]
  %v706 = vld [vmem:[%s1 + $0x1510] sm:$0xff]
  %v707 = vld [vmem:[%s1 + $0x1518] sm:$0xff]
  %v708 = vld [vmem:[%s1 + $0x1520] sm:$0xff]
  %v709 = vld [vmem:[%s1 + $0x1528] sm:$0xff]
  %v710 = vld [vmem:[%s1 + $0x1530] sm:$0xff]
  %v711 = vld [vmem:[%s1 + $0x1538] sm:$0xff]
  %v712 = vld [vmem:[%s1 + $0x1540] sm:$0xff]
  %v713 = vld [vmem:[%s1 + $0x1548] sm:$0xff]
  %v714 = vld [vmem:[%s1 + $0x1550] sm:$0xff]
  %v715 = vld [vmem:[%s1 + $0x1558] sm:$0xff]
  %v716 = vld [vmem:[%s1 + $0x1560] sm:$0xff]
  %v717 = vld [vmem:[%s1 + $0x1568] sm:$0xff]
  %v718 = vld [vmem:[%s1 + $0x1570] sm:$0xff]
  %v719 = vld [vmem:[%s1 + $0x1578] sm:$0xff]
  %v720 = vld [vmem:[%s1 + $0x1580] sm:$0xff]
  %v721 = vld [vmem:[%s1 + $0x1588] sm:$0xff]
  %v722 = vld [vmem:[%s1 + $0x1590] sm:$0xff]
  %v723 = vld [vmem:[%s1 + $0x1598] sm:$0xff]
  %v724 = vld [vmem:[%s1 + $0x15a0] sm:$0xff]
  %v725 = vld [vmem:[%s1 + $0x15a8] sm:$0xff]
  %v726 = vld [vmem:[%s1 + $0x15b0] sm:$0xff]
  %v727 = vld [vmem:[%s1 + $0x15b8] sm:$0xff]
  %v728 = vld [vmem:[%s1 + $0x15c0] sm:$0xff]
  %v729 = vld [vmem:[%s1 + $0x15c8] sm:$0xff]
  %v730 = vld [vmem:[%s1 + $0x15d0] sm:$0xff]
  %v731 = vld [vmem:[%s1 + $0x15d8] sm:$0xff]
  %v732 = vld [vmem:[%s1 + $0x15e0] sm:$0xff]
  %v733 = vld [vmem:[%s1 + $0x15e8] sm:$0xff]
  %v734 = vld [vmem:[%s1 + $0x15f0] sm:$0xff]
  %v735 = vld [vmem:[%s1 + $0x15f8] sm:$0xff]
  %v736 = vld [vmem:[%s1 + $0x1600] sm:$0xff]
  %v737 = vld [vmem:[%s1 + $0x1608] sm:$0xff]
  %v738 = vld [vmem:[%s1 + $0x1610] sm:$0xff]
  %v739 = vld [vmem:[%s1 + $0x1618] sm:$0xff]
  %v740 = vld [vmem:[%s1 + $0x1620] sm:$0xff]
  %v741 = vld [vmem:[%s1 + $0x1628] sm:$0xff]
  %v742 = vld [vmem:[%s1 + $0x1630] sm:$0xff]
  %v743 = vld [vmem:[%s1 + $0x1638] sm:$0xff]
  %v744 = vld [vmem:[%s1 + $0x1640] sm:$0xff]
  %v745 = vld [vmem:[%s1 + $0x1648] sm:$0xff]
  %v746 = vld [vmem:[%s1 + $0x1650] sm:$0xff]
  %v747 = vld [vmem:[%s1 + $0x1658] sm:$0xff]
  %v748 = vld [vmem:[%s1 + $0x1660] sm:$0xff]
  %v749 = vld [vmem:[%s1 + $0x1668] sm:$0xff]
  %v750 = vld [vmem:[%s1 + $0x1670] sm:$0xff]
  %v751 = vld [vmem:[%s1 + $0x1678] sm:$0xff]
  %v752 = vld [vmem:[%s1 + $0x1680] sm:$0xff]
  %v753 = vld [vmem:[%s1 + $0x1688] sm:$0xff]
  %v754 = vld [vmem:[%s1 + $0x1690] sm:$0xff]
  %v755 = vld [vmem:[%s1 + $0x1698] sm:$0xff]
  %v756 = vld [vmem:[%s1 + $0x16a0] sm:$0xff]
  %v757 = vld [vmem:[%s1 + $0x16a8] sm:$0xff]
  %v758 = vld [vmem:[%s1 + $0x16b0] sm:$0xff]
  %v759 = vld [vmem:[%s1 + $0x16b8] sm:$0xff]
  %v760 = vld [vmem:[%s1 + $0x16c0] sm:$0xff]
  %v761 = vld [vmem:[%s1 + $0x16c8] sm:$0xff]
  %v762 = vld [vmem:[%s1 + $0x16d0] sm:$0xff]
  %v763 = vld [vmem:[%s1 + $0x16d8] sm:$0xff]
  %v764 = vld [vmem:[%s1 + $0x16e0] sm:$0xff]
  %v765 = vld [vmem:[%s1 + $0x16e8] sm:$0xff]
  %v766 = vld [vmem:[%s1 + $0x16f0] sm:$0xff]
  %v767 = vld [vmem:[%s1 + $0x16f8] sm:$0xff]
  %v768 = vld [vmem:[%s1 + $0x1700] sm:$0xff]
  %v769 = vld [vmem:[%s1 + $0x1708] sm:$0xff]
  %v770 = vld [vmem:[%s1 + $0x1710] sm:$0xff]
  %v771 = vld [vmem:[%s1 + $0x1718] sm:$0xff]
  %v772 = vld [vmem:[%s1 + $0x1720] sm:$0xff]
  %v773 = vld [vmem:[%s1 + $0x1728] sm:$0xff]
  %v774 = vld [vmem:[%s1 + $0x1730] sm:$0xff]
  %v775 = vld [vmem:[%s1 + $0x1738] sm:$0xff]
  %v776 = vld [vmem:[%s1 + $0x1740] sm:$0xff]
  %v777 = vld [vmem:[%s1 + $0x1748] sm:$0xff]
  %v778 = vld [vmem:[%s1 + $0x1750] sm:$0xff]
  %v779 = vld [vmem:[%s1 + $0x1758] sm:$0xff]
  %v780 = vld [vmem:[%s1 + $0x1760] sm:$0xff]
  %v781 = vld [vmem:[%s1 + $0x1768] sm:$0xff]
  %v782 = vld [vmem:[%s1 + $0x1770] sm:$0xff]
  %v783 = vld [vmem:[%s1 + $0x1778] sm:$0xff]
  %v784 = vld [vmem:[%s1 + $0x1780] sm:$0xff]
  %v785 = vld [vmem:[%s1 + $0x1788] sm:$0xff]
  %v786 = vld [vmem:[%s1 + $0x1790] sm:$0xff]
  %v787 = vld [vmem:[%s1 + $0x1798] sm:$0xff]
  %v788 = vld [vmem:[%s1 + $0x17a0] sm:$0xff]
  %v789 = vld [vmem:[%s1 + $0x17a8] sm:$0xff]
  %v790 = vld [vmem:[%s1 + $0x17b0] sm:$0xff]
  %v791 = vld [vmem:[%s1 + $0x17b8] sm:$0xff]
  %v792 = vld [vmem:[%s1 + $0x17c0] sm:$0xff]
  %v793 = vld [vmem:[%s1 + $0x17c8] sm:$0xff]
  %v794 = vld [vmem:[%s1 + $0x17d0] sm:$0xff]
  %v795 = vld [vmem:[%s1 + $0x17d8] sm:$0xff]
  %v796 = vld [vmem:[%s1 + $0x17e0] sm:$0xff]
  %v797 = vld [vmem:[%s1 + $0x17e8] sm:$0xff]
  %v798 = vld [vmem:[%s1 + $0x17f0] sm:$0xff]
  %v799 = vld [vmem:[%s1 + $0x17f8] sm:$0xff]
  %v800 = vld [vmem:[%s1 + $0x1800] sm:$0xff]
  %v801 = vld [vmem:[%s1 + $0x1808] sm:$0xff]
  %v802 = vld [vmem:[%s1 + $0x1810] sm:$0xff]
  %v803 = vld [vmem:[%s1 + $0x1818] sm:$0xff]
  %v804 = vld [vmem:[%s1 + $0x1820] sm:$0xff]
  %v805 = vld [vmem:[%s1 + $0x1828] sm:$0xff]
  %v806 = vld [vmem:[%s1 + $0x1830] sm:$0xff]
  %v807 = vld [vmem:[%s1 + $0x1838] sm:$0xff]
  %v808 = vld [vmem:[%s1 + $0x1840] sm:$0xff]
  %v809 = vld [vmem:[%s1 + $0x1848] sm:$0xff]
  %v810 = vld [vmem:[%s1 + $0x1850] sm:$0xff]
  %v811 = vld [vmem:[%s1 + $0x1858] sm:$0xff]
  %v812 = vld [vmem:[%s1 + $0x1860] sm:$0xff]
  %v813 = vld [vmem:[%s1 + $0x1868] sm:$0xff]
  %v814 = vld [vmem:[%s1 + $0x1870] sm:$0xff]
  %v815 = vld [vmem:[%s1 + $0x1878] sm:$0xff]
  %v816 = vld [vmem:[%s1 + $0x1880] sm:$0xff]
  %v817 = vld [vmem:[%s1 + $0x1888] sm:$0xff]
  %v818 = vld [vmem:[%s1 + $0x1890] sm:$0xff]
  %v819 = vld [vmem:[%s1 + $0x1898] sm:$0xff]
  %v820 = vld [vmem:[%s1 + $0x18a0] sm:$0xff]
  %v821 = vld [vmem:[%s1 + $0x18a8] sm:$0xff]
  %v822 = vld [vmem:[%s1 + $0x18b0] sm:$0xff]
  %v823 = vld [vmem:[%s1 + $0x18b8] sm:$0xff]
  %v824 = vld [vmem:[%s1 + $0x18c0] sm:$0xff]
  %v825 = vld [vmem:[%s1 + $0x18c8] sm:$0xff]
  %v826 = vld [vmem:[%s1 + $0x18d0] sm:$0xff]
  %v827 = vld [vmem:[%s1 + $0x18d8] sm:$0xff]
  %v828 = vld [vmem:[%s1 + $0x18e0] sm:$0xff]
  %v829 = vld [vmem:[%s1 + $0x18e8] sm:$0xff]
  %v830 = vld [vmem:[%s1 + $0x18f0] sm:$0xff]
  %v831 = vld [vmem:[%s1 + $0x18f8] sm:$0xff]
  %v832 = vld [vmem:[%s1 + $0x1900] sm:$0xff]
  %v833 = vld [vmem:[%s1 + $0x1908] sm:$0xff]
  %v834 = vld [vmem:[%s1 + $0x1910] sm:$0xff]
  %v835 = vld [vmem:[%s1 + $0x1918] sm:$0xff]
  %v836 = vld [vmem:[%s1 + $0x1920] sm:$0xff]
  %v837 = vld [vmem:[%s1 + $0x1928] sm:$0xff]
  %v838 = vld [vmem:[%s1 + $0x1930] sm:$0xff]
  %v839 = vld [vmem:[%s1 + $0x1938] sm:$0xff]
  %v840 = vld [vmem:[%s1 + $0x1940] sm:$0xff]
  %v841 = vld [vmem:[%s1 + $0x1948] sm:$0xff]
  %v842 = vld [vmem:[%s1 + $0x1950] sm:$0xff]
  %v843 = vld [vmem:[%s1 + $0x1958] sm:$0xff]
  %v844 = vld [vmem:[%s1 + $0x1960] sm:$0xff]
  %v845 = vld [vmem:[%s1 + $0x1968] sm:$0xff]
  %v846 = vld [vmem:[%s1 + $0x1970] sm:$0xff]
  %v847 = vld [vmem:[%s1 + $0x1978] sm:$0xff]
  %v848 = vld [vmem:[%s1 + $0x1980] sm:$0xff]
  %v849 = vld [vmem:[%s1 + $0x1988] sm:$0xff]
  %v850 = vld [vmem:[%s1 + $0x1990] sm:$0xff]
  %v851 = vld [vmem:[%s1 + $0x1998] sm:$0xff]
  %v852 = vld [vmem:[%s1 + $0x19a0] sm:$0xff]
  %v853 = vld [vmem:[%s1 + $0x19a8] sm:$0xff]
  %v854 = vld [vmem:[%s1 + $0x19b0] sm:$0xff]
  %v855 = vld [vmem:[%s1 + $0x19b8] sm:$0xff]
  %v856 = vld [vmem:[%s1 + $0x19c0] sm:$0xff]
  %v857 = vld [vmem:[%s1 + $0x19c8] sm:$0xff]
  %v858 = vld [vmem:[%s1 + $0x19d0] sm:$0xff]
  %v859 = vld [vmem:[%s1 + $0x19d8] sm:$0xff]
  %v860 = vld [vmem:[%s1 + $0x19e0] sm:$0xff]
  %v861 = vld [vmem:[%s1 + $0x19e8] sm:$0xff]
  %v862 = vld [vmem:[%s1 + $0x19f0] sm:$0xff]
  %v863 = vld [vmem:[%s1 + $0x19f8] sm:$0xff]
  %v864 = vld [vmem:[%s1 + $0x1a00] sm:$0xff]
  %v865 = vld [vmem:[%s1 + $0x1a08] sm:$0xff]
  %v866 = vld [vmem:[%s1 + $0x1a10] sm:$0xff]
  %v867 = vld [vmem:[%s1 + $0x1a18] sm:$0xff]
  %v868 = vld [vmem:[%s1 + $0x1a20] sm:$0xff]
  %v869 = vld [vmem:[%s1 + $0x1a28] sm:$0xff]
  %v870 = vld [vmem:[%s1 + $0x1a30] sm:$0xff]
  %v871 = vld [vmem:[%s1 + $0x1a38] sm:$0xff]
  %v872 = vld [vmem:[%s1 + $0x1a40] sm:$0xff]
  %v873 = vld [vmem:[%s1 + $0x1a48] sm:$0xff]
  %v874 = vld [vmem:[%s1 + $0x1a50] sm:$0xff]
  %v875 = vld [vmem:[%s1 + $0x1a58] sm:$0xff]
  %v876 = vld [vmem:[%s1 + $0x1a60] sm:$0xff]
  %v877 = vld [vmem:[%s1 + $0x1a68] sm:$0xff]
  %v878 = vld [vmem:[%s1 + $0x1a70] sm:$0xff]
  %v879 = vld [vmem:[%s1 + $0x1a78] sm:$0xff]
  %v880 = vld [vmem:[%s1 + $0x1a80] sm:$0xff]
  %v881 = vld [vmem:[%s1 + $0x1a88] sm:$0xff]
  %v882 = vld [vmem:[%s1 + $0x1a90] sm:$0xff]
  %v883 = vld [vmem:[%s1 + $0x1a98] sm:$0xff]
  %v884 = vld [vmem:[%s1 + $0x1aa0] sm:$0xff]
  %v885 = vld [vmem:[%s1 + $0x1aa8] sm:$0xff]
  %v886 = vld [vmem:[%s1 + $0x1ab0] sm:$0xff]
  %v887 = vld [vmem:[%s1 + $0x1ab8] sm:$0xff]
  %v888 = vld [vmem:[%s1 + $0x1ac0] sm:$0xff]
  %v889 = vld [vmem:[%s1 + $0x1ac8] sm:$0xff]
  %v890 = vld [vmem:[%s1 + $0x1ad0] sm:$0xff]
  %v891 = vld [vmem:[%s1 + $0x1ad8] sm:$0xff]
  %v892 = vld [vmem:[%s1 + $0x1ae0] sm:$0xff]
  %v893 = vld [vmem:[%s1 + $0x1ae8] sm:$0xff]
  %v894 = vld [vmem:[%s1 + $0x1af0] sm:$0xff]
  %v895 = vld [vmem:[%s1 + $0x1af8] sm:$0xff]
  %v896 = vld [vmem:[%s1 + $0x1b00] sm:$0xff]
  %v897 = vld [vmem:[%s1 + $0x1b08] sm:$0xff]
  %v898 = vld [vmem:[%s1 + $0x1b10] sm:$0xff]
  %v899 = vld [vmem:[%s1 + $0x1b18] sm:$0xff]
  %v900 = vld [vmem:[%s1 + $0x1b20] sm:$0xff]
  %v901 = vld [vmem:[%s1 + $0x1b28] sm:$0xff]
  %v902 = vld [vmem:[%s1 + $0x1b30] sm:$0xff]
  %v903 = vld [vmem:[%s1 + $0x1b38] sm:$0xff]
  %v904 = vld [vmem:[%s1 + $0x1b40] sm:$0xff]
  %v905 = vld [vmem:[%s1 + $0x1b48] sm:$0xff]
  %v906 = vld [vmem:[%s1 + $0x1b50] sm:$0xff]
  %v907 = vld [vmem:[%s1 + $0x1b58] sm:$0xff]
  %v908 = vld [vmem:[%s1 + $0x1b60] sm:$0xff]
  %v909 = vld [vmem:[%s1 + $0x1b68] sm:$0xff]
  %v910 = vld [vmem:[%s1 + $0x1b70] sm:$0xff]
  %v911 = vld [vmem:[%s1 + $0x1b78] sm:$0xff]
  %v912 = vld [vmem:[%s1 + $0x1b80] sm:$0xff]
  %v913 = vld [vmem:[%s1 + $0x1b88] sm:$0xff]
  %v914 = vld [vmem:[%s1 + $0x1b90] sm:$0xff]
  %v915 = vld [vmem:[%s1 + $0x1b98] sm:$0xff]
  %v916 = vld [vmem:[%s1 + $0x1ba0] sm:$0xff]
  %v917 = vld [vmem:[%s1 + $0x1ba8] sm:$0xff]
  %v918 = vld [vmem:[%s1 + $0x1bb0] sm:$0xff]
  %v919 = vld [vmem:[%s1 + $0x1bb8] sm:$0xff]
  %v920 = vld [vmem:[%s1 + $0x1bc0] sm:$0xff]
  %v921 = vld [vmem:[%s1 + $0x1bc8] sm:$0xff]
  %v922 = vld [vmem:[%s1 + $0x1bd0] sm:$0xff]
  %v923 = vld [vmem:[%s1 + $0x1bd8] sm:$0xff]
  %v924 = vld [vmem:[%s1 + $0x1be0] sm:$0xff]
  %v925 = vld [vmem:[%s1 + $0x1be8] sm:$0xff]
  %v926 = vld [vmem:[%s1 + $0x1bf0] sm:$0xff]
  %v927 = vld [vmem:[%s1 + $0x1bf8] sm:$0xff]
  %v928 = vld [vmem:[%s1 + $0x1c00] sm:$0xff]
  %v929 = vld [vmem:[%s1 + $0x1c08] sm:$0xff]
  %v930 = vld [vmem:[%s1 + $0x1c10] sm:$0xff]
  %v931 = vld [vmem:[%s1 + $0x1c18] sm:$0xff]
  %v932 = vld [vmem:[%s1 + $0x1c20] sm:$0xff]
  %v933 = vld [vmem:[%s1 + $0x1c28] sm:$0xff]
  %v934 = vld [vmem:[%s1 + $0x1c30] sm:$0xff]
  %v935 = vld [vmem:[%s1 + $0x1c38] sm:$0xff]
  %v936 = vld [vmem:[%s1 + $0x1c40] sm:$0xff]
  %v937 = vld [vmem:[%s1 + $0x1c48] sm:$0xff]
  %v938 = vld [vmem:[%s1 + $0x1c50] sm:$0xff]
  %v939 = vld [vmem:[%s1 + $0x1c58] sm:$0xff]
  %v940 = vld [vmem:[%s1 + $0x1c60] sm:$0xff]
  %v941 = vld [vmem:[%s1 + $0x1c68] sm:$0xff]
  %v942 = vld [vmem:[%s1 + $0x1c70] sm:$0xff]
  %v943 = vld [vmem:[%s1 + $0x1c78] sm:$0xff]
  %v944 = vld [vmem:[%s1 + $0x1c80] sm:$0xff]
  %v945 = vld [vmem:[%s1 + $0x1c88] sm:$0xff]
  %v946 = vld [vmem:[%s1 + $0x1c90] sm:$0xff]
  %v947 = vld [vmem:[%s1 + $0x1c98] sm:$0xff]
  %v948 = vld [vmem:[%s1 + $0x1ca0] sm:$0xff]
  %v949 = vld [vmem:[%s1 + $0x1ca8] sm:$0xff]
  %v950 = vld [vmem:[%s1 + $0x1cb0] sm:$0xff]
  %v951 = vld [vmem:[%s1 + $0x1cb8] sm:$0xff]
  %v952 = vld [vmem:[%s1 + $0x1cc0] sm:$0xff]
  %v953 = vld [vmem:[%s1 + $0x1cc8] sm:$0xff]
  %v954 = vld [vmem:[%s1 + $0x1cd0] sm:$0xff]
  %v955 = vld [vmem:[%s1 + $0x1cd8] sm:$0xff]
  %v956 = vld [vmem:[%s1 + $0x1ce0] sm:$0xff]
  %v957 = vld [vmem:[%s1 + $0x1ce8] sm:$0xff]
  %v958 = vld [vmem:[%s1 + $0x1cf0] sm:$0xff]
  %v959 = vld [vmem:[%s1 + $0x1cf8] sm:$0xff]
  %v960 = vld [vmem:[%s1 + $0x1d00] sm:$0xff]
  %v961 = vld [vmem:[%s1 + $0x1d08] sm:$0xff]
  %v962 = vld [vmem:[%s1 + $0x1d10] sm:$0xff]
  %v963 = vld [vmem:[%s1 + $0x1d18] sm:$0xff]
  %v964 = vld [vmem:[%s1 + $0x1d20] sm:$0xff]
  %v965 = vld [vmem:[%s1 + $0x1d28] sm:$0xff]
  %v966 = vld [vmem:[%s1 + $0x1d30] sm:$0xff]
  %v967 = vld [vmem:[%s1 + $0x1d38] sm:$0xff]
  %v968 = vld [vmem:[%s1 + $0x1d40] sm:$0xff]
  %v969 = vld [vmem:[%s1 + $0x1d48] sm:$0xff]
  %v970 = vld [vmem:[%s1 + $0x1d50] sm:$0xff]
  %v971 = vld [vmem:[%s1 + $0x1d58] sm:$0xff]
  %v972 = vld [vmem:[%s1 + $0x1d60] sm:$0xff]
  %v973 = vld [vmem:[%s1 + $0x1d68] sm:$0xff]
  %v974 = vld [vmem:[%s1 + $0x1d70] sm:$0xff]
  %v975 = vld [vmem:[%s1 + $0x1d78] sm:$0xff]
  %v976 = vld [vmem:[%s1 + $0x1d80] sm:$0xff]
  %v977 = vld [vmem:[%s1 + $0x1d88] sm:$0xff]
  %v978 = vld [vmem:[%s1 + $0x1d90] sm:$0xff]
  %v979 = vld [vmem:[%s1 + $0x1d98] sm:$0xff]
  %v980 = vld [vmem:[%s1 + $0x1da0] sm:$0xff]
  %v981 = vld [vmem:[%s1 + $0x1da8] sm:$0xff]
  %v982 = vld [vmem:[%s1 + $0x1db0] sm:$0xff]
  %v983 = vld [vmem:[%s1 + $0x1db8] sm:$0xff]
  %v984 = vld [vmem:[%s1 + $0x1dc0] sm:$0xff]
  %v985 = vld [vmem:[%s1 + $0x1dc8] sm:$0xff]
  %v986 = vld [vmem:[%s1 + $0x1dd0] sm:$0xff]
  %v987 = vld [vmem:[%s1 + $0x1dd8] sm:$0xff]
  %v988 = vld [vmem:[%s1 + $0x1de0] sm:$0xff]
  %v989 = vld [vmem:[%s1 + $0x1de8] sm:$0xff]
  %v990 = vld [vmem:[%s1 + $0x1df0] sm:$0xff]
  %v991 = vld [vmem:[%s1 + $0x1df8] sm:$0xff]
  %v992 = vld [vmem:[%s1 + $0x1e00] sm:$0xff]
  %v993 = vld [vmem:[%s1 + $0x1e08] sm:$0xff]
  %v994 = vld [vmem:[%s1 + $0x1e10] sm:$0xff]
  %v995 = vld [vmem:[%s1 + $0x1e18] sm:$0xff]
  %v996 = vld [vmem:[%s1 + $0x1e20] sm:$0xff]
  %v997 = vld [vmem:[%s1 + $0x1e28] sm:$0xff]
  %v998 = vld [vmem:[%s1 + $0x1e30] sm:$0xff]
  %v999 = vld [vmem:[%s1 + $0x1e38] sm:$0xff]
  %v1000 = vld [vmem:[%s1 + $0x1e40] sm:$0xff]
  %v1001 = vld [vmem:[%s1 + $0x1e48] sm:$0xff]
  %v1002 = vld [vmem:[%s1 + $0x1e50] sm:$0xff]
  %v1003 = vld [vmem:[%s1 + $0x1e58] sm:$0xff]
  %v1004 = vld [vmem:[%s1 + $0x1e60] sm:$0xff]
  %v1005 = vld [vmem:[%s1 + $0x1e68] sm:$0xff]
  %v1006 = vld [vmem:[%s1 + $0x1e70] sm:$0xff]
  %v1007 = vld [vmem:[%s1 + $0x1e78] sm:$0xff]
  %v1008 = vld [vmem:[%s1 + $0x1e80] sm:$0xff]
  %v1009 = vld [vmem:[%s1 + $0x1e88] sm:$0xff]
  %v1010 = vld [vmem:[%s1 + $0x1e90] sm:$0xff]
  %v1011 = vld [vmem:[%s1 + $0x1e98] sm:$0xff]
  %v1012 = vld [vmem:[%s1 + $0x1ea0] sm:$0xff]
  %v1013 = vld [vmem:[%s1 + $0x1ea8] sm:$0xff]
  %v1014 = vld [vmem:[%s1 + $0x1eb0] sm:$0xff]
  %v1015 = vld [vmem:[%s1 + $0x1eb8] sm:$0xff]
  %v1016 = vld [vmem:[%s1 + $0x1ec0] sm:$0xff]
  %v1017 = vld [vmem:[%s1 + $0x1ec8] sm:$0xff]
  %v1018 = vld [vmem:[%s1 + $0x1ed0] sm:$0xff]
  %v1019 = vld [vmem:[%s1 + $0x1ed8] sm:$0xff]
  %v1020 = vld [vmem:[%s1 + $0x1ee0] sm:$0xff]
  %v1021 = vld [vmem:[%s1 + $0x1ee8] sm:$0xff]
  %v1022 = vld [vmem:[%s1 + $0x1ef0] sm:$0xff]
  %v1023 = vld [vmem:[%s1 + $0x1ef8] sm:$0xff]
  %v1024 = vld [vmem:[%s1 + $0x1f00] sm:$0xff]
  %v1025 = vld [vmem:[%s1 + $0x1f08] sm:$0xff]
  %v1026 = vld [vmem:[%s1 + $0x1f10] sm:$0xff]
  %v1027 = vld [vmem:[%s1 + $0x1f18] sm:$0xff]
  %v1028 = vld [vmem:[%s1 + $0x1f20] sm:$0xff]
  %v1029 = vld [vmem:[%s1 + $0x1f28] sm:$0xff]
  %v1030 = vld [vmem:[%s1 + $0x1f30] sm:$0xff]
  %v1031 = vld [vmem:[%s1 + $0x1f38] sm:$0xff]
  %v1032 = vld [vmem:[%s1 + $0x1f40] sm:$0xff]
  %v1033 = vld [vmem:[%s1 + $0x1f48] sm:$0xff]
  %v1034 = vld [vmem:[%s1 + $0x1f50] sm:$0xff]
  %v1035 = vld [vmem:[%s1 + $0x1f58] sm:$0xff]
  %v1036 = vld [vmem:[%s1 + $0x1f60] sm:$0xff]
  %v1037 = vld [vmem:[%s1 + $0x1f68] sm:$0xff]
  %v1038 = vld [vmem:[%s1 + $0x1f70] sm:$0xff]
  %v1039 = vld [vmem:[%s1 + $0x1f78] sm:$0xff]
  %v1040 = vld [vmem:[%s1 + $0x1f80] sm:$0xff]
  %v1041 = vld [vmem:[%s1 + $0x1f88] sm:$0xff]
  %v1042 = vld [vmem:[%s1 + $0x1f90] sm:$0xff]
  %v1043 = vld [vmem:[%s1 + $0x1f98] sm:$0xff]
  %v1044 = vld [vmem:[%s1 + $0x1fa0] sm:$0xff]
  %v1045 = vld [vmem:[%s1 + $0x1fa8] sm:$0xff]
  %v1046 = vld [vmem:[%s1 + $0x1fb0] sm:$0xff]
  %v1047 = vld [vmem:[%s1 + $0x1fb8] sm:$0xff]
  %v1048 = vld [vmem:[%s1 + $0x1fc0] sm:$0xff]
  %v1049 = vld [vmem:[%s1 + $0x1fc8] sm:$0xff]
  %v1050 = vld [vmem:[%s1 + $0x1fd0] sm:$0xff]
  %v1051 = vld [vmem:[%s1 + $0x1fd8] sm:$0xff]
  %v1052 = vld [vmem:[%s1 + $0x1fe0] sm:$0xff]
  %v1053 = vld [vmem:[%s1 + $0x1fe8] sm:$0xff]
  %v1054 = vld [vmem:[%s1 + $0x1ff0] sm:$0xff]
  %v1055 = vld [vmem:[%s1 + $0x1ff8] sm:$0xff]
  %v1056 = vld [vmem:[%s1 + $0x2000] sm:$0xff]
  %v1057 = vld [vmem:[%s1 + $0x2008] sm:$0xff]
  %v1058 = vld [vmem:[%s1 + $0x2010] sm:$0xff]
  %v1059 = vld [vmem:[%s1 + $0x2018] sm:$0xff]
  %v1060 = vld [vmem:[%s1 + $0x2020] sm:$0xff]
  %v1061 = vld [vmem:[%s1 + $0x2028] sm:$0xff]
  %v1062 = vld [vmem:[%s1 + $0x2030] sm:$0xff]
  %v1063 = vld [vmem:[%s1 + $0x2038] sm:$0xff]
  %v1064 = vld [vmem:[%s1 + $0x2040] sm:$0xff]
  %v1065 = vld [vmem:[%s1 + $0x2048] sm:$0xff]
  %v1066 = vld [vmem:[%s1 + $0x2050] sm:$0xff]
  %v1067 = vld [vmem:[%s1 + $0x2058] sm:$0xff]
  %v1068 = vld [vmem:[%s1 + $0x2060] sm:$0xff]
  %v1069 = vld [vmem:[%s1 + $0x2068] sm:$0xff]
  %v1070 = vld [vmem:[%s1 + $0x2070] sm:$0xff]
  %v1071 = vld [vmem:[%s1 + $0x2078] sm:$0xff]
  %v1072 = vld [vmem:[%s1 + $0x2080] sm:$0xff]
  %v1073 = vld [vmem:[%s1 + $0x2088] sm:$0xff]
  %v1074 = vld [vmem:[%s1 + $0x2090] sm:$0xff]
  %v1075 = vld [vmem:[%s1 + $0x2098] sm:$0xff]
  %v1076 = vld [vmem:[%s1 + $0x20a0] sm:$0xff]
  %v1077 = vld [vmem:[%s1 + $0x20a8] sm:$0xff]
  %v1078 = vld [vmem:[%s1 + $0x20b0] sm:$0xff]
  %v1079 = vld [vmem:[%s1 + $0x20b8] sm:$0xff]
  %v1080 = vld [vmem:[%s1 + $0x20c0] sm:$0xff]
  %v1081 = vld [vmem:[%s1 + $0x20c8] sm:$0xff]
  %v1082 = vld [vmem:[%s1 + $0x20d0] sm:$0xff]
  %v1083 = vld [vmem:[%s1 + $0x20d8] sm:$0xff]
  %v1084 = vld [vmem:[%s1 + $0x20e0] sm:$0xff]
  %v1085 = vld [vmem:[%s1 + $0x20e8] sm:$0xff]
  %v1086 = vld [vmem:[%s1 + $0x20f0] sm:$0xff]
  %v1087 = vld [vmem:[%s1 + $0x20f8] sm:$0xff]
  %v1088 = vld [vmem:[%s1 + $0x2100] sm:$0xff]
  %v1089 = vld [vmem:[%s1 + $0x2108] sm:$0xff]
  %v1090 = vld [vmem:[%s1 + $0x2110] sm:$0xff]
  %v1091 = vld [vmem:[%s1 + $0x2118] sm:$0xff]
  %v1092 = vld [vmem:[%s1 + $0x2120] sm:$0xff]
  %v1093 = vld [vmem:[%s1 + $0x2128] sm:$0xff]
  %v1094 = vld [vmem:[%s1 + $0x2130] sm:$0xff]
  %v1095 = vld [vmem:[%s1 + $0x2138] sm:$0xff]
  %v1096 = vld [vmem:[%s1 + $0x2140] sm:$0xff]
  %v1097 = vld [vmem:[%s1 + $0x2148] sm:$0xff]
  %v1098 = vld [vmem:[%s1 + $0x2150] sm:$0xff]
  %v1099 = vld [vmem:[%s1 + $0x2158] sm:$0xff]
  %v1100 = vld [vmem:[%s1 + $0x2160] sm:$0xff]
  %v1101 = vld [vmem:[%s1 + $0x2168] sm:$0xff]
  %v1102 = vld [vmem:[%s1 + $0x2170] sm:$0xff]
  %v1103 = vld [vmem:[%s1 + $0x2178] sm:$0xff]
  %v1104 = vld [vmem:[%s2] sm:$0xf]
  %v1106 = vperm.slane %v1104, 0
  %v1107 = vperm.slane %v1104, 1
  %v1108 = vperm.slane %v1104, 2
  %v1109 = vperm.slane %v1104, 3
  %v1131 = vunpack.c.l.b16 %v15
  %v1132 = vunpack.c.h.b16 %v15
  %v1133 = vunpack.c.l.b16 %v16
  %v1134 = vunpack.c.h.b16 %v16
  %v1135 = vunpack.c.l.b16 %v17
  %v1136 = vunpack.c.h.b16 %v17
  %v1137 = vunpack.c.l.b16 %v18
  %v1138 = vunpack.c.h.b16 %v18
  %v1139 = vunpack.c.l.b16 %v19
  %v1140 = vunpack.c.h.b16 %v19
  %v1141 = vunpack.c.l.b16 %v20
  %v1142 = vunpack.c.h.b16 %v20
  %v1143 = vunpack.c.l.b16 %v21
  %v1144 = vunpack.c.h.b16 %v21
  %v1145 = vunpack.c.l.b16 %v22
  %v1146 = vunpack.c.h.b16 %v22
  %v1147 = vunpack.c.l.b16 %v23
  %v1148 = vunpack.c.h.b16 %v23
  %v1149 = vunpack.c.l.b16 %v24
  %v1150 = vunpack.c.h.b16 %v24
  %v1151 = vunpack.c.l.b16 %v25
  %v1152 = vunpack.c.h.b16 %v25
  %v1153 = vunpack.c.l.b16 %v26
  %v1154 = vunpack.c.h.b16 %v26
  %v1155 = vunpack.c.l.b16 %v27
  %v1156 = vunpack.c.h.b16 %v27
  %v1157 = vunpack.c.l.b16 %v28
  %v1158 = vunpack.c.h.b16 %v28
  %v1159 = vunpack.c.l.b16 %v29
  %v1160 = vunpack.c.h.b16 %v29
  %v1161 = vunpack.c.l.b16 %v30
  %v1162 = vunpack.c.h.b16 %v30
  %v1163 = vunpack.c.l.b16 %v31
  %v1164 = vunpack.c.h.b16 %v31
  %v1165 = vpack.c.b16 %v1131, %v1131
  %v1166 = vpack.c.b16 %v1132, %v1132
  %v1167 = vpack.c.b16 %v1133, %v1133
  %v1168 = vpack.c.b16 %v1134, %v1134
  %v1169 = vpack.c.b16 %v1135, %v1135
  %v1170 = vpack.c.b16 %v1136, %v1136
  %v1171 = vpack.c.b16 %v1137, %v1137
  %v1172 = vpack.c.b16 %v1138, %v1138
  %v1173 = vpack.c.b16 %v1139, %v1139
  %v1174 = vpack.c.b16 %v1140, %v1140
  %v1175 = vpack.c.b16 %v1141, %v1141
  %v1176 = vpack.c.b16 %v1142, %v1142
  %v1177 = vpack.c.b16 %v1143, %v1143
  %v1178 = vpack.c.b16 %v1144, %v1144
  %v1179 = vpack.c.b16 %v1145, %v1145
  %v1180 = vpack.c.b16 %v1146, %v1146
  %v1181 = vpack.c.b16 %v1147, %v1147
  %v1182 = vpack.c.b16 %v1148, %v1148
  %v1183 = vpack.c.b16 %v1149, %v1149
  %v1184 = vpack.c.b16 %v1150, %v1150
  %v1185 = vpack.c.b16 %v1151, %v1151
  %v1186 = vpack.c.b16 %v1152, %v1152
  %v1187 = vpack.c.b16 %v1153, %v1153
  %v1188 = vpack.c.b16 %v1154, %v1154
  %v1189 = vpack.c.b16 %v1155, %v1155
  %v1190 = vpack.c.b16 %v1156, %v1156
  %v1191 = vpack.c.b16 %v1157, %v1157
  %v1192 = vpack.c.b16 %v1158, %v1158
  %v1193 = vpack.c.b16 %v1159, %v1159
  %v1194 = vpack.c.b16 %v1160, %v1160
  %v1195 = vpack.c.b16 %v1161, %v1161
  %v1196 = vpack.c.b16 %v1162, %v1162
  %v1197 = vpack.c.b16 %v1163, %v1163
  %v1198 = vpack.c.b16 %v1164, %v1164
  %v2304 = vunpack.c.l.b16 %v32
  %v2305 = vunpack.c.h.b16 %v32
  %v2306 = vunpack.c.l.b16 %v33
  %v2307 = vunpack.c.h.b16 %v33
  %v2308 = vunpack.c.l.b16 %v34
  %v2309 = vunpack.c.h.b16 %v34
  %v2310 = vunpack.c.l.b16 %v35
  %v2311 = vunpack.c.h.b16 %v35
  %v2312 = vunpack.c.l.b16 %v36
  %v2313 = vunpack.c.h.b16 %v36
  %v2314 = vunpack.c.l.b16 %v37
  %v2315 = vunpack.c.h.b16 %v37
  %v2316 = vunpack.c.l.b16 %v38
  %v2317 = vunpack.c.h.b16 %v38
  %v2318 = vunpack.c.l.b16 %v39
  %v2319 = vunpack.c.h.b16 %v39
  %v2320 = vunpack.c.l.b16 %v40
  %v2321 = vunpack.c.h.b16 %v40
  %v2322 = vunpack.c.l.b16 %v41
  %v2323 = vunpack.c.h.b16 %v41
  %v2324 = vunpack.c.l.b16 %v42
  %v2325 = vunpack.c.h.b16 %v42
  %v2326 = vunpack.c.l.b16 %v43
  %v2327 = vunpack.c.h.b16 %v43
  %v2328 = vunpack.c.l.b16 %v44
  %v2329 = vunpack.c.h.b16 %v44
  %v2330 = vunpack.c.l.b16 %v45
  %v2331 = vunpack.c.h.b16 %v45
  %v2332 = vunpack.c.l.b16 %v46
  %v2333 = vunpack.c.h.b16 %v46
  %v2334 = vunpack.c.l.b16 %v47
  %v2335 = vunpack.c.h.b16 %v47
  %v2336 = vunpack.c.l.b16 %v48
  %v2337 = vunpack.c.h.b16 %v48
  %v2338 = vunpack.c.l.b16 %v49
  %v2339 = vunpack.c.h.b16 %v49
  %v2340 = vunpack.c.l.b16 %v50
  %v2341 = vunpack.c.h.b16 %v50
  %v2342 = vunpack.c.l.b16 %v51
  %v2343 = vunpack.c.h.b16 %v51
  %v2344 = vunpack.c.l.b16 %v52
  %v2345 = vunpack.c.h.b16 %v52
  %v2346 = vunpack.c.l.b16 %v53
  %v2347 = vunpack.c.h.b16 %v53
  %v2348 = vunpack.c.l.b16 %v54
  %v2349 = vunpack.c.h.b16 %v54
  %v2350 = vunpack.c.l.b16 %v55
  %v2351 = vunpack.c.h.b16 %v55
  %v2352 = vunpack.c.l.b16 %v56
  %v2353 = vunpack.c.h.b16 %v56
  %v2354 = vunpack.c.l.b16 %v57
  %v2355 = vunpack.c.h.b16 %v57
  %v2356 = vunpack.c.l.b16 %v58
  %v2357 = vunpack.c.h.b16 %v58
  %v2358 = vunpack.c.l.b16 %v59
  %v2359 = vunpack.c.h.b16 %v59
  %v2360 = vunpack.c.l.b16 %v60
  %v2361 = vunpack.c.h.b16 %v60
  %v2362 = vunpack.c.l.b16 %v61
  %v2363 = vunpack.c.h.b16 %v61
  %v2364 = vunpack.c.l.b16 %v62
  %v2365 = vunpack.c.h.b16 %v62
  %v2366 = vunpack.c.l.b16 %v63
  %v2367 = vunpack.c.h.b16 %v63
  %v2368 = vunpack.c.l.b16 %v64
  %v2369 = vunpack.c.h.b16 %v64
  %v2370 = vunpack.c.l.b16 %v65
  %v2371 = vunpack.c.h.b16 %v65
  %v2372 = vunpack.c.l.b16 %v66
  %v2373 = vunpack.c.h.b16 %v66
  %v2374 = vunpack.c.l.b16 %v67
  %v2375 = vunpack.c.h.b16 %v67
  %v2376 = vunpack.c.l.b16 %v68
  %v2377 = vunpack.c.h.b16 %v68
  %v2378 = vunpack.c.l.b16 %v69
  %v2379 = vunpack.c.h.b16 %v69
  %v2380 = vunpack.c.l.b16 %v70
  %v2381 = vunpack.c.h.b16 %v70
  %v2382 = vunpack.c.l.b16 %v71
  %v2383 = vunpack.c.h.b16 %v71
  %v2384 = vunpack.c.l.b16 %v72
  %v2385 = vunpack.c.h.b16 %v72
  %v2386 = vunpack.c.l.b16 %v73
  %v2387 = vunpack.c.h.b16 %v73
  %v2388 = vunpack.c.l.b16 %v74
  %v2389 = vunpack.c.h.b16 %v74
  %v2390 = vunpack.c.l.b16 %v75
  %v2391 = vunpack.c.h.b16 %v75
  %v2392 = vunpack.c.l.b16 %v76
  %v2393 = vunpack.c.h.b16 %v76
  %v2394 = vunpack.c.l.b16 %v77
  %v2395 = vunpack.c.h.b16 %v77
  %v2396 = vunpack.c.l.b16 %v78
  %v2397 = vunpack.c.h.b16 %v78
  %v2398 = vunpack.c.l.b16 %v79
  %v2399 = vunpack.c.h.b16 %v79
  %v2400 = vunpack.c.l.b16 %v80
  %v2401 = vunpack.c.h.b16 %v80
  %v2402 = vunpack.c.l.b16 %v81
  %v2403 = vunpack.c.h.b16 %v81
  %v2404 = vunpack.c.l.b16 %v82
  %v2405 = vunpack.c.h.b16 %v82
  %v2406 = vunpack.c.l.b16 %v83
  %v2407 = vunpack.c.h.b16 %v83
  %v2408 = vunpack.c.l.b16 %v84
  %v2409 = vunpack.c.h.b16 %v84
  %v2410 = vunpack.c.l.b16 %v85
  %v2411 = vunpack.c.h.b16 %v85
  %v2412 = vunpack.c.l.b16 %v86
  %v2413 = vunpack.c.h.b16 %v86
  %v2414 = vunpack.c.l.b16 %v87
  %v2415 = vunpack.c.h.b16 %v87
  %v2416 = vunpack.c.l.b16 %v88
  %v2417 = vunpack.c.h.b16 %v88
  %v2418 = vunpack.c.l.b16 %v89
  %v2419 = vunpack.c.h.b16 %v89
  %v2420 = vunpack.c.l.b16 %v90
  %v2421 = vunpack.c.h.b16 %v90
  %v2422 = vunpack.c.l.b16 %v91
  %v2423 = vunpack.c.h.b16 %v91
  %v2424 = vunpack.c.l.b16 %v92
  %v2425 = vunpack.c.h.b16 %v92
  %v2426 = vunpack.c.l.b16 %v93
  %v2427 = vunpack.c.h.b16 %v93
  %v2428 = vunpack.c.l.b16 %v94
  %v2429 = vunpack.c.h.b16 %v94
  %v2430 = vunpack.c.l.b16 %v95
  %v2431 = vunpack.c.h.b16 %v95
  %v2432 = vunpack.c.l.b16 %v96
  %v2433 = vunpack.c.h.b16 %v96
  %v2434 = vunpack.c.l.b16 %v97
  %v2435 = vunpack.c.h.b16 %v97
  %v2436 = vunpack.c.l.b16 %v98
  %v2437 = vunpack.c.h.b16 %v98
  %v2438 = vunpack.c.l.b16 %v99
  %v2439 = vunpack.c.h.b16 %v99
  %v2440 = vunpack.c.l.b16 %v100
  %v2441 = vunpack.c.h.b16 %v100
  %v2442 = vunpack.c.l.b16 %v101
  %v2443 = vunpack.c.h.b16 %v101
  %v2444 = vunpack.c.l.b16 %v102
  %v2445 = vunpack.c.h.b16 %v102
  %v2446 = vunpack.c.l.b16 %v103
  %v2447 = vunpack.c.h.b16 %v103
  %v2448 = vunpack.c.l.b16 %v104
  %v2449 = vunpack.c.h.b16 %v104
  %v2450 = vunpack.c.l.b16 %v105
  %v2451 = vunpack.c.h.b16 %v105
  %v2452 = vunpack.c.l.b16 %v106
  %v2453 = vunpack.c.h.b16 %v106
  %v2454 = vunpack.c.l.b16 %v107
  %v2455 = vunpack.c.h.b16 %v107
  %v2456 = vunpack.c.l.b16 %v108
  %v2457 = vunpack.c.h.b16 %v108
  %v2458 = vunpack.c.l.b16 %v109
  %v2459 = vunpack.c.h.b16 %v109
  %v2460 = vunpack.c.l.b16 %v110
  %v2461 = vunpack.c.h.b16 %v110
  %v2462 = vunpack.c.l.b16 %v111
  %v2463 = vunpack.c.h.b16 %v111
  %v2464 = vunpack.c.l.b16 %v112
  %v2465 = vunpack.c.h.b16 %v112
  %v2466 = vunpack.c.l.b16 %v113
  %v2467 = vunpack.c.h.b16 %v113
  %v2468 = vunpack.c.l.b16 %v114
  %v2469 = vunpack.c.h.b16 %v114
  %v2470 = vunpack.c.l.b16 %v115
  %v2471 = vunpack.c.h.b16 %v115
  %v2472 = vunpack.c.l.b16 %v116
  %v2473 = vunpack.c.h.b16 %v116
  %v2474 = vunpack.c.l.b16 %v117
  %v2475 = vunpack.c.h.b16 %v117
  %v2476 = vunpack.c.l.b16 %v118
  %v2477 = vunpack.c.h.b16 %v118
  %v2478 = vunpack.c.l.b16 %v119
  %v2479 = vunpack.c.h.b16 %v119
  %v2480 = vunpack.c.l.b16 %v120
  %v2481 = vunpack.c.h.b16 %v120
  %v2482 = vunpack.c.l.b16 %v121
  %v2483 = vunpack.c.h.b16 %v121
  %v2484 = vunpack.c.l.b16 %v122
  %v2485 = vunpack.c.h.b16 %v122
  %v2486 = vunpack.c.l.b16 %v123
  %v2487 = vunpack.c.h.b16 %v123
  %v2488 = vunpack.c.l.b16 %v124
  %v2489 = vunpack.c.h.b16 %v124
  %v2490 = vunpack.c.l.b16 %v125
  %v2491 = vunpack.c.h.b16 %v125
  %v2492 = vunpack.c.l.b16 %v126
  %v2493 = vunpack.c.h.b16 %v126
  %v2494 = vunpack.c.l.b16 %v127
  %v2495 = vunpack.c.h.b16 %v127
  %v2496 = vunpack.c.l.b16 %v128
  %v2497 = vunpack.c.h.b16 %v128
  %v2498 = vunpack.c.l.b16 %v129
  %v2499 = vunpack.c.h.b16 %v129
  %v2500 = vunpack.c.l.b16 %v130
  %v2501 = vunpack.c.h.b16 %v130
  %v2502 = vunpack.c.l.b16 %v131
  %v2503 = vunpack.c.h.b16 %v131
  %v2504 = vunpack.c.l.b16 %v132
  %v2505 = vunpack.c.h.b16 %v132
  %v2506 = vunpack.c.l.b16 %v133
  %v2507 = vunpack.c.h.b16 %v133
  %v2508 = vunpack.c.l.b16 %v134
  %v2509 = vunpack.c.h.b16 %v134
  %v2510 = vunpack.c.l.b16 %v135
  %v2511 = vunpack.c.h.b16 %v135
  %v2512 = vunpack.c.l.b16 %v136
  %v2513 = vunpack.c.h.b16 %v136
  %v2514 = vunpack.c.l.b16 %v137
  %v2515 = vunpack.c.h.b16 %v137
  %v2516 = vunpack.c.l.b16 %v138
  %v2517 = vunpack.c.h.b16 %v138
  %v2518 = vunpack.c.l.b16 %v139
  %v2519 = vunpack.c.h.b16 %v139
  %v2520 = vunpack.c.l.b16 %v140
  %v2521 = vunpack.c.h.b16 %v140
  %v2522 = vunpack.c.l.b16 %v141
  %v2523 = vunpack.c.h.b16 %v141
  %v2524 = vunpack.c.l.b16 %v142
  %v2525 = vunpack.c.h.b16 %v142
  %v2526 = vunpack.c.l.b16 %v143
  %v2527 = vunpack.c.h.b16 %v143
  %v2528 = vunpack.c.l.b16 %v144
  %v2529 = vunpack.c.h.b16 %v144
  %v2530 = vunpack.c.l.b16 %v145
  %v2531 = vunpack.c.h.b16 %v145
  %v2532 = vunpack.c.l.b16 %v146
  %v2533 = vunpack.c.h.b16 %v146
  %v2534 = vunpack.c.l.b16 %v147
  %v2535 = vunpack.c.h.b16 %v147
  %v2536 = vunpack.c.l.b16 %v148
  %v2537 = vunpack.c.h.b16 %v148
  %v2538 = vunpack.c.l.b16 %v149
  %v2539 = vunpack.c.h.b16 %v149
  %v2540 = vunpack.c.l.b16 %v150
  %v2541 = vunpack.c.h.b16 %v150
  %v2542 = vunpack.c.l.b16 %v151
  %v2543 = vunpack.c.h.b16 %v151
  %v2544 = vunpack.c.l.b16 %v152
  %v2545 = vunpack.c.h.b16 %v152
  %v2546 = vunpack.c.l.b16 %v153
  %v2547 = vunpack.c.h.b16 %v153
  %v2548 = vunpack.c.l.b16 %v154
  %v2549 = vunpack.c.h.b16 %v154
  %v2550 = vunpack.c.l.b16 %v155
  %v2551 = vunpack.c.h.b16 %v155
  %v2552 = vunpack.c.l.b16 %v156
  %v2553 = vunpack.c.h.b16 %v156
  %v2554 = vunpack.c.l.b16 %v157
  %v2555 = vunpack.c.h.b16 %v157
  %v2556 = vunpack.c.l.b16 %v158
  %v2557 = vunpack.c.h.b16 %v158
  %v2558 = vunpack.c.l.b16 %v159
  %v2559 = vunpack.c.h.b16 %v159
  %v2560 = vunpack.c.l.b16 %v160
  %v2561 = vunpack.c.h.b16 %v160
  %v2562 = vunpack.c.l.b16 %v161
  %v2563 = vunpack.c.h.b16 %v161
  %v2564 = vunpack.c.l.b16 %v162
  %v2565 = vunpack.c.h.b16 %v162
  %v2566 = vunpack.c.l.b16 %v163
  %v2567 = vunpack.c.h.b16 %v163
  %v2568 = vunpack.c.l.b16 %v164
  %v2569 = vunpack.c.h.b16 %v164
  %v2570 = vunpack.c.l.b16 %v165
  %v2571 = vunpack.c.h.b16 %v165
  %v2572 = vunpack.c.l.b16 %v166
  %v2573 = vunpack.c.h.b16 %v166
  %v2574 = vunpack.c.l.b16 %v167
  %v2575 = vunpack.c.h.b16 %v167
  %v2576 = vunpack.c.l.b16 %v168
  %v2577 = vunpack.c.h.b16 %v168
  %v2578 = vunpack.c.l.b16 %v169
  %v2579 = vunpack.c.h.b16 %v169
  %v2580 = vunpack.c.l.b16 %v170
  %v2581 = vunpack.c.h.b16 %v170
  %v2582 = vunpack.c.l.b16 %v171
  %v2583 = vunpack.c.h.b16 %v171
  %v2584 = vunpack.c.l.b16 %v172
  %v2585 = vunpack.c.h.b16 %v172
  %v2586 = vunpack.c.l.b16 %v173
  %v2587 = vunpack.c.h.b16 %v173
  %v2588 = vunpack.c.l.b16 %v174
  %v2589 = vunpack.c.h.b16 %v174
  %v2590 = vunpack.c.l.b16 %v175
  %v2591 = vunpack.c.h.b16 %v175
  %v2592 = vunpack.c.l.b16 %v176
  %v2593 = vunpack.c.h.b16 %v176
  %v2594 = vunpack.c.l.b16 %v177
  %v2595 = vunpack.c.h.b16 %v177
  %v2596 = vunpack.c.l.b16 %v178
  %v2597 = vunpack.c.h.b16 %v178
  %v2598 = vunpack.c.l.b16 %v179
  %v2599 = vunpack.c.h.b16 %v179
  %v2600 = vunpack.c.l.b16 %v180
  %v2601 = vunpack.c.h.b16 %v180
  %v2602 = vunpack.c.l.b16 %v181
  %v2603 = vunpack.c.h.b16 %v181
  %v2604 = vunpack.c.l.b16 %v182
  %v2605 = vunpack.c.h.b16 %v182
  %v2606 = vunpack.c.l.b16 %v183
  %v2607 = vunpack.c.h.b16 %v183
  %v2608 = vunpack.c.l.b16 %v184
  %v2609 = vunpack.c.h.b16 %v184
  %v2610 = vunpack.c.l.b16 %v185
  %v2611 = vunpack.c.h.b16 %v185
  %v2612 = vunpack.c.l.b16 %v186
  %v2613 = vunpack.c.h.b16 %v186
  %v2614 = vunpack.c.l.b16 %v187
  %v2615 = vunpack.c.h.b16 %v187
  %v2616 = vunpack.c.l.b16 %v188
  %v2617 = vunpack.c.h.b16 %v188
  %v2618 = vunpack.c.l.b16 %v189
  %v2619 = vunpack.c.h.b16 %v189
  %v2620 = vunpack.c.l.b16 %v190
  %v2621 = vunpack.c.h.b16 %v190
  %v2622 = vunpack.c.l.b16 %v191
  %v2623 = vunpack.c.h.b16 %v191
  %v2624 = vunpack.c.l.b16 %v192
  %v2625 = vunpack.c.h.b16 %v192
  %v2626 = vunpack.c.l.b16 %v193
  %v2627 = vunpack.c.h.b16 %v193
  %v2628 = vunpack.c.l.b16 %v194
  %v2629 = vunpack.c.h.b16 %v194
  %v2630 = vunpack.c.l.b16 %v195
  %v2631 = vunpack.c.h.b16 %v195
  %v2632 = vunpack.c.l.b16 %v196
  %v2633 = vunpack.c.h.b16 %v196
  %v2634 = vunpack.c.l.b16 %v197
  %v2635 = vunpack.c.h.b16 %v197
  %v2636 = vunpack.c.l.b16 %v198
  %v2637 = vunpack.c.h.b16 %v198
  %v2638 = vunpack.c.l.b16 %v199
  %v2639 = vunpack.c.h.b16 %v199
  %v2640 = vunpack.c.l.b16 %v200
  %v2641 = vunpack.c.h.b16 %v200
  %v2642 = vunpack.c.l.b16 %v201
  %v2643 = vunpack.c.h.b16 %v201
  %v2644 = vunpack.c.l.b16 %v202
  %v2645 = vunpack.c.h.b16 %v202
  %v2646 = vunpack.c.l.b16 %v203
  %v2647 = vunpack.c.h.b16 %v203
  %v2648 = vunpack.c.l.b16 %v204
  %v2649 = vunpack.c.h.b16 %v204
  %v2650 = vunpack.c.l.b16 %v205
  %v2651 = vunpack.c.h.b16 %v205
  %v2652 = vunpack.c.l.b16 %v206
  %v2653 = vunpack.c.h.b16 %v206
  %v2654 = vunpack.c.l.b16 %v207
  %v2655 = vunpack.c.h.b16 %v207
  %v2656 = vunpack.c.l.b16 %v208
  %v2657 = vunpack.c.h.b16 %v208
  %v2658 = vunpack.c.l.b16 %v209
  %v2659 = vunpack.c.h.b16 %v209
  %v2660 = vunpack.c.l.b16 %v210
  %v2661 = vunpack.c.h.b16 %v210
  %v2662 = vunpack.c.l.b16 %v211
  %v2663 = vunpack.c.h.b16 %v211
  %v2664 = vunpack.c.l.b16 %v212
  %v2665 = vunpack.c.h.b16 %v212
  %v2666 = vunpack.c.l.b16 %v213
  %v2667 = vunpack.c.h.b16 %v213
  %v2668 = vunpack.c.l.b16 %v214
  %v2669 = vunpack.c.h.b16 %v214
  %v2670 = vunpack.c.l.b16 %v215
  %v2671 = vunpack.c.h.b16 %v215
  %v2672 = vunpack.c.l.b16 %v216
  %v2673 = vunpack.c.h.b16 %v216
  %v2674 = vunpack.c.l.b16 %v217
  %v2675 = vunpack.c.h.b16 %v217
  %v2676 = vunpack.c.l.b16 %v218
  %v2677 = vunpack.c.h.b16 %v218
  %v2678 = vunpack.c.l.b16 %v219
  %v2679 = vunpack.c.h.b16 %v219
  %v2680 = vunpack.c.l.b16 %v220
  %v2681 = vunpack.c.h.b16 %v220
  %v2682 = vunpack.c.l.b16 %v221
  %v2683 = vunpack.c.h.b16 %v221
  %v2684 = vunpack.c.l.b16 %v222
  %v2685 = vunpack.c.h.b16 %v222
  %v2686 = vunpack.c.l.b16 %v223
  %v2687 = vunpack.c.h.b16 %v223
  %v2688 = vunpack.c.l.b16 %v224
  %v2689 = vunpack.c.h.b16 %v224
  %v2690 = vunpack.c.l.b16 %v225
  %v2691 = vunpack.c.h.b16 %v225
  %v2692 = vunpack.c.l.b16 %v226
  %v2693 = vunpack.c.h.b16 %v226
  %v2694 = vunpack.c.l.b16 %v227
  %v2695 = vunpack.c.h.b16 %v227
  %v2696 = vunpack.c.l.b16 %v228
  %v2697 = vunpack.c.h.b16 %v228
  %v2698 = vunpack.c.l.b16 %v229
  %v2699 = vunpack.c.h.b16 %v229
  %v2700 = vunpack.c.l.b16 %v230
  %v2701 = vunpack.c.h.b16 %v230
  %v2702 = vunpack.c.l.b16 %v231
  %v2703 = vunpack.c.h.b16 %v231
  %v2704 = vunpack.c.l.b16 %v232
  %v2705 = vunpack.c.h.b16 %v232
  %v2706 = vunpack.c.l.b16 %v233
  %v2707 = vunpack.c.h.b16 %v233
  %v2708 = vunpack.c.l.b16 %v234
  %v2709 = vunpack.c.h.b16 %v234
  %v2710 = vunpack.c.l.b16 %v235
  %v2711 = vunpack.c.h.b16 %v235
  %v2712 = vunpack.c.l.b16 %v236
  %v2713 = vunpack.c.h.b16 %v236
  %v2714 = vunpack.c.l.b16 %v237
  %v2715 = vunpack.c.h.b16 %v237
  %v2716 = vunpack.c.l.b16 %v238
  %v2717 = vunpack.c.h.b16 %v238
  %v2718 = vunpack.c.l.b16 %v239
  %v2719 = vunpack.c.h.b16 %v239
  %v2720 = vunpack.c.l.b16 %v240
  %v2721 = vunpack.c.h.b16 %v240
  %v2722 = vunpack.c.l.b16 %v241
  %v2723 = vunpack.c.h.b16 %v241
  %v2724 = vunpack.c.l.b16 %v242
  %v2725 = vunpack.c.h.b16 %v242
  %v2726 = vunpack.c.l.b16 %v243
  %v2727 = vunpack.c.h.b16 %v243
  %v2728 = vunpack.c.l.b16 %v244
  %v2729 = vunpack.c.h.b16 %v244
  %v2730 = vunpack.c.l.b16 %v245
  %v2731 = vunpack.c.h.b16 %v245
  %v2732 = vunpack.c.l.b16 %v246
  %v2733 = vunpack.c.h.b16 %v246
  %v2734 = vunpack.c.l.b16 %v247
  %v2735 = vunpack.c.h.b16 %v247
  %v2736 = vunpack.c.l.b16 %v248
  %v2737 = vunpack.c.h.b16 %v248
  %v2738 = vunpack.c.l.b16 %v249
  %v2739 = vunpack.c.h.b16 %v249
  %v2740 = vunpack.c.l.b16 %v250
  %v2741 = vunpack.c.h.b16 %v250
  %v2742 = vunpack.c.l.b16 %v251
  %v2743 = vunpack.c.h.b16 %v251
  %v2744 = vunpack.c.l.b16 %v252
  %v2745 = vunpack.c.h.b16 %v252
  %v2746 = vunpack.c.l.b16 %v253
  %v2747 = vunpack.c.h.b16 %v253
  %v2748 = vunpack.c.l.b16 %v254
  %v2749 = vunpack.c.h.b16 %v254
  %v2750 = vunpack.c.l.b16 %v255
  %v2751 = vunpack.c.h.b16 %v255
  %v2752 = vunpack.c.l.b16 %v256
  %v2753 = vunpack.c.h.b16 %v256
  %v2754 = vunpack.c.l.b16 %v257
  %v2755 = vunpack.c.h.b16 %v257
  %v2756 = vunpack.c.l.b16 %v258
  %v2757 = vunpack.c.h.b16 %v258
  %v2758 = vunpack.c.l.b16 %v259
  %v2759 = vunpack.c.h.b16 %v259
  %v2760 = vunpack.c.l.b16 %v260
  %v2761 = vunpack.c.h.b16 %v260
  %v2762 = vunpack.c.l.b16 %v261
  %v2763 = vunpack.c.h.b16 %v261
  %v2764 = vunpack.c.l.b16 %v262
  %v2765 = vunpack.c.h.b16 %v262
  %v2766 = vunpack.c.l.b16 %v263
  %v2767 = vunpack.c.h.b16 %v263
  %v2768 = vunpack.c.l.b16 %v264
  %v2769 = vunpack.c.h.b16 %v264
  %v2770 = vunpack.c.l.b16 %v265
  %v2771 = vunpack.c.h.b16 %v265
  %v2772 = vunpack.c.l.b16 %v266
  %v2773 = vunpack.c.h.b16 %v266
  %v2774 = vunpack.c.l.b16 %v267
  %v2775 = vunpack.c.h.b16 %v267
  %v2776 = vunpack.c.l.b16 %v268
  %v2777 = vunpack.c.h.b16 %v268
  %v2778 = vunpack.c.l.b16 %v269
  %v2779 = vunpack.c.h.b16 %v269
  %v2780 = vunpack.c.l.b16 %v270
  %v2781 = vunpack.c.h.b16 %v270
  %v2782 = vunpack.c.l.b16 %v271
  %v2783 = vunpack.c.h.b16 %v271
  %v2784 = vunpack.c.l.b16 %v272
  %v2785 = vunpack.c.h.b16 %v272
  %v2786 = vunpack.c.l.b16 %v273
  %v2787 = vunpack.c.h.b16 %v273
  %v2788 = vunpack.c.l.b16 %v274
  %v2789 = vunpack.c.h.b16 %v274
  %v2790 = vunpack.c.l.b16 %v275
  %v2791 = vunpack.c.h.b16 %v275
  %v2792 = vunpack.c.l.b16 %v276
  %v2793 = vunpack.c.h.b16 %v276
  %v2794 = vunpack.c.l.b16 %v277
  %v2795 = vunpack.c.h.b16 %v277
  %v2796 = vunpack.c.l.b16 %v278
  %v2797 = vunpack.c.h.b16 %v278
  %v2798 = vunpack.c.l.b16 %v279
  %v2799 = vunpack.c.h.b16 %v279
  %v2800 = vunpack.c.l.b16 %v280
  %v2801 = vunpack.c.h.b16 %v280
  %v2802 = vunpack.c.l.b16 %v281
  %v2803 = vunpack.c.h.b16 %v281
  %v2804 = vunpack.c.l.b16 %v282
  %v2805 = vunpack.c.h.b16 %v282
  %v2806 = vunpack.c.l.b16 %v283
  %v2807 = vunpack.c.h.b16 %v283
  %v2808 = vunpack.c.l.b16 %v284
  %v2809 = vunpack.c.h.b16 %v284
  %v2810 = vunpack.c.l.b16 %v285
  %v2811 = vunpack.c.h.b16 %v285
  %v2812 = vunpack.c.l.b16 %v286
  %v2813 = vunpack.c.h.b16 %v286
  %v2814 = vunpack.c.l.b16 %v287
  %v2815 = vunpack.c.h.b16 %v287
  %v2816 = vunpack.c.l.b16 %v288
  %v2817 = vunpack.c.h.b16 %v288
  %v2818 = vunpack.c.l.b16 %v289
  %v2819 = vunpack.c.h.b16 %v289
  %v2820 = vunpack.c.l.b16 %v290
  %v2821 = vunpack.c.h.b16 %v290
  %v2822 = vunpack.c.l.b16 %v291
  %v2823 = vunpack.c.h.b16 %v291
  %v2824 = vunpack.c.l.b16 %v292
  %v2825 = vunpack.c.h.b16 %v292
  %v2826 = vunpack.c.l.b16 %v293
  %v2827 = vunpack.c.h.b16 %v293
  %v2828 = vunpack.c.l.b16 %v294
  %v2829 = vunpack.c.h.b16 %v294
  %v2830 = vunpack.c.l.b16 %v295
  %v2831 = vunpack.c.h.b16 %v295
  %v2832 = vunpack.c.l.b16 %v296
  %v2833 = vunpack.c.h.b16 %v296
  %v2834 = vunpack.c.l.b16 %v297
  %v2835 = vunpack.c.h.b16 %v297
  %v2836 = vunpack.c.l.b16 %v298
  %v2837 = vunpack.c.h.b16 %v298
  %v2838 = vunpack.c.l.b16 %v299
  %v2839 = vunpack.c.h.b16 %v299
  %v2840 = vunpack.c.l.b16 %v300
  %v2841 = vunpack.c.h.b16 %v300
  %v2842 = vunpack.c.l.b16 %v301
  %v2843 = vunpack.c.h.b16 %v301
  %v2844 = vunpack.c.l.b16 %v302
  %v2845 = vunpack.c.h.b16 %v302
  %v2846 = vunpack.c.l.b16 %v303
  %v2847 = vunpack.c.h.b16 %v303
  %v2848 = vunpack.c.l.b16 %v304
  %v2849 = vunpack.c.h.b16 %v304
  %v2850 = vunpack.c.l.b16 %v305
  %v2851 = vunpack.c.h.b16 %v305
  %v2852 = vunpack.c.l.b16 %v306
  %v2853 = vunpack.c.h.b16 %v306
  %v2854 = vunpack.c.l.b16 %v307
  %v2855 = vunpack.c.h.b16 %v307
  %v2856 = vunpack.c.l.b16 %v308
  %v2857 = vunpack.c.h.b16 %v308
  %v2858 = vunpack.c.l.b16 %v309
  %v2859 = vunpack.c.h.b16 %v309
  %v2860 = vunpack.c.l.b16 %v310
  %v2861 = vunpack.c.h.b16 %v310
  %v2862 = vunpack.c.l.b16 %v311
  %v2863 = vunpack.c.h.b16 %v311
  %v2864 = vunpack.c.l.b16 %v312
  %v2865 = vunpack.c.h.b16 %v312
  %v2866 = vunpack.c.l.b16 %v313
  %v2867 = vunpack.c.h.b16 %v313
  %v2868 = vunpack.c.l.b16 %v314
  %v2869 = vunpack.c.h.b16 %v314
  %v2870 = vunpack.c.l.b16 %v315
  %v2871 = vunpack.c.h.b16 %v315
  %v2872 = vunpack.c.l.b16 %v316
  %v2873 = vunpack.c.h.b16 %v316
  %v2874 = vunpack.c.l.b16 %v317
  %v2875 = vunpack.c.h.b16 %v317
  %v2876 = vunpack.c.l.b16 %v318
  %v2877 = vunpack.c.h.b16 %v318
  %v2878 = vunpack.c.l.b16 %v319
  %v2879 = vunpack.c.h.b16 %v319
  %v2880 = vunpack.c.l.b16 %v320
  %v2881 = vunpack.c.h.b16 %v320
  %v2882 = vunpack.c.l.b16 %v321
  %v2883 = vunpack.c.h.b16 %v321
  %v2884 = vunpack.c.l.b16 %v322
  %v2885 = vunpack.c.h.b16 %v322
  %v2886 = vunpack.c.l.b16 %v323
  %v2887 = vunpack.c.h.b16 %v323
  %v2888 = vunpack.c.l.b16 %v324
  %v2889 = vunpack.c.h.b16 %v324
  %v2890 = vunpack.c.l.b16 %v325
  %v2891 = vunpack.c.h.b16 %v325
  %v2892 = vunpack.c.l.b16 %v326
  %v2893 = vunpack.c.h.b16 %v326
  %v2894 = vunpack.c.l.b16 %v327
  %v2895 = vunpack.c.h.b16 %v327
  %v2896 = vunpack.c.l.b16 %v328
  %v2897 = vunpack.c.h.b16 %v328
  %v2898 = vunpack.c.l.b16 %v329
  %v2899 = vunpack.c.h.b16 %v329
  %v2900 = vunpack.c.l.b16 %v330
  %v2901 = vunpack.c.h.b16 %v330
  %v2902 = vunpack.c.l.b16 %v331
  %v2903 = vunpack.c.h.b16 %v331
  %v2904 = vunpack.c.l.b16 %v332
  %v2905 = vunpack.c.h.b16 %v332
  %v2906 = vunpack.c.l.b16 %v333
  %v2907 = vunpack.c.h.b16 %v333
  %v2908 = vunpack.c.l.b16 %v334
  %v2909 = vunpack.c.h.b16 %v334
  %v2910 = vunpack.c.l.b16 %v335
  %v2911 = vunpack.c.h.b16 %v335
  %v2912 = vunpack.c.l.b16 %v336
  %v2913 = vunpack.c.h.b16 %v336
  %v2914 = vunpack.c.l.b16 %v337
  %v2915 = vunpack.c.h.b16 %v337
  %v2916 = vunpack.c.l.b16 %v338
  %v2917 = vunpack.c.h.b16 %v338
  %v2918 = vunpack.c.l.b16 %v339
  %v2919 = vunpack.c.h.b16 %v339
  %v2920 = vunpack.c.l.b16 %v340
  %v2921 = vunpack.c.h.b16 %v340
  %v2922 = vunpack.c.l.b16 %v341
  %v2923 = vunpack.c.h.b16 %v341
  %v2924 = vunpack.c.l.b16 %v342
  %v2925 = vunpack.c.h.b16 %v342
  %v2926 = vunpack.c.l.b16 %v343
  %v2927 = vunpack.c.h.b16 %v343
  %v2928 = vunpack.c.l.b16 %v344
  %v2929 = vunpack.c.h.b16 %v344
  %v2930 = vunpack.c.l.b16 %v345
  %v2931 = vunpack.c.h.b16 %v345
  %v2932 = vunpack.c.l.b16 %v346
  %v2933 = vunpack.c.h.b16 %v346
  %v2934 = vunpack.c.l.b16 %v347
  %v2935 = vunpack.c.h.b16 %v347
  %v2936 = vunpack.c.l.b16 %v348
  %v2937 = vunpack.c.h.b16 %v348
  %v2938 = vunpack.c.l.b16 %v349
  %v2939 = vunpack.c.h.b16 %v349
  %v2940 = vunpack.c.l.b16 %v350
  %v2941 = vunpack.c.h.b16 %v350
  %v2942 = vunpack.c.l.b16 %v351
  %v2943 = vunpack.c.h.b16 %v351
  %v2944 = vunpack.c.l.b16 %v352
  %v2945 = vunpack.c.h.b16 %v352
  %v2946 = vunpack.c.l.b16 %v353
  %v2947 = vunpack.c.h.b16 %v353
  %v2948 = vunpack.c.l.b16 %v354
  %v2949 = vunpack.c.h.b16 %v354
  %v2950 = vunpack.c.l.b16 %v355
  %v2951 = vunpack.c.h.b16 %v355
  %v2952 = vunpack.c.l.b16 %v356
  %v2953 = vunpack.c.h.b16 %v356
  %v2954 = vunpack.c.l.b16 %v357
  %v2955 = vunpack.c.h.b16 %v357
  %v2956 = vunpack.c.l.b16 %v358
  %v2957 = vunpack.c.h.b16 %v358
  %v2958 = vunpack.c.l.b16 %v359
  %v2959 = vunpack.c.h.b16 %v359
  %v2960 = vunpack.c.l.b16 %v360
  %v2961 = vunpack.c.h.b16 %v360
  %v2962 = vunpack.c.l.b16 %v361
  %v2963 = vunpack.c.h.b16 %v361
  %v2964 = vunpack.c.l.b16 %v362
  %v2965 = vunpack.c.h.b16 %v362
  %v2966 = vunpack.c.l.b16 %v363
  %v2967 = vunpack.c.h.b16 %v363
  %v2968 = vunpack.c.l.b16 %v364
  %v2969 = vunpack.c.h.b16 %v364
  %v2970 = vunpack.c.l.b16 %v365
  %v2971 = vunpack.c.h.b16 %v365
  %v2972 = vunpack.c.l.b16 %v366
  %v2973 = vunpack.c.h.b16 %v366
  %v2974 = vunpack.c.l.b16 %v367
  %v2975 = vunpack.c.h.b16 %v367
  %v2976 = vunpack.c.l.b16 %v368
  %v2977 = vunpack.c.h.b16 %v368
  %v2978 = vunpack.c.l.b16 %v369
  %v2979 = vunpack.c.h.b16 %v369
  %v2980 = vunpack.c.l.b16 %v370
  %v2981 = vunpack.c.h.b16 %v370
  %v2982 = vunpack.c.l.b16 %v371
  %v2983 = vunpack.c.h.b16 %v371
  %v2984 = vunpack.c.l.b16 %v372
  %v2985 = vunpack.c.h.b16 %v372
  %v2986 = vunpack.c.l.b16 %v373
  %v2987 = vunpack.c.h.b16 %v373
  %v2988 = vunpack.c.l.b16 %v374
  %v2989 = vunpack.c.h.b16 %v374
  %v2990 = vunpack.c.l.b16 %v375
  %v2991 = vunpack.c.h.b16 %v375
  %v2992 = vunpack.c.l.b16 %v376
  %v2993 = vunpack.c.h.b16 %v376
  %v2994 = vunpack.c.l.b16 %v377
  %v2995 = vunpack.c.h.b16 %v377
  %v2996 = vunpack.c.l.b16 %v378
  %v2997 = vunpack.c.h.b16 %v378
  %v2998 = vunpack.c.l.b16 %v379
  %v2999 = vunpack.c.h.b16 %v379
  %v3000 = vunpack.c.l.b16 %v380
  %v3001 = vunpack.c.h.b16 %v380
  %v3002 = vunpack.c.l.b16 %v381
  %v3003 = vunpack.c.h.b16 %v381
  %v3004 = vunpack.c.l.b16 %v382
  %v3005 = vunpack.c.h.b16 %v382
  %v3006 = vunpack.c.l.b16 %v383
  %v3007 = vunpack.c.h.b16 %v383
  %v3008 = vunpack.c.l.b16 %v384
  %v3009 = vunpack.c.h.b16 %v384
  %v3010 = vunpack.c.l.b16 %v385
  %v3011 = vunpack.c.h.b16 %v385
  %v3012 = vunpack.c.l.b16 %v386
  %v3013 = vunpack.c.h.b16 %v386
  %v3014 = vunpack.c.l.b16 %v387
  %v3015 = vunpack.c.h.b16 %v387
  %v3016 = vunpack.c.l.b16 %v388
  %v3017 = vunpack.c.h.b16 %v388
  %v3018 = vunpack.c.l.b16 %v389
  %v3019 = vunpack.c.h.b16 %v389
  %v3020 = vunpack.c.l.b16 %v390
  %v3021 = vunpack.c.h.b16 %v390
  %v3022 = vunpack.c.l.b16 %v391
  %v3023 = vunpack.c.h.b16 %v391
  %v3024 = vunpack.c.l.b16 %v392
  %v3025 = vunpack.c.h.b16 %v392
  %v3026 = vunpack.c.l.b16 %v393
  %v3027 = vunpack.c.h.b16 %v393
  %v3028 = vunpack.c.l.b16 %v394
  %v3029 = vunpack.c.h.b16 %v394
  %v3030 = vunpack.c.l.b16 %v395
  %v3031 = vunpack.c.h.b16 %v395
  %v3032 = vunpack.c.l.b16 %v396
  %v3033 = vunpack.c.h.b16 %v396
  %v3034 = vunpack.c.l.b16 %v397
  %v3035 = vunpack.c.h.b16 %v397
  %v3036 = vunpack.c.l.b16 %v398
  %v3037 = vunpack.c.h.b16 %v398
  %v3038 = vunpack.c.l.b16 %v399
  %v3039 = vunpack.c.h.b16 %v399
  %v3040 = vunpack.c.l.b16 %v400
  %v3041 = vunpack.c.h.b16 %v400
  %v3042 = vunpack.c.l.b16 %v401
  %v3043 = vunpack.c.h.b16 %v401
  %v3044 = vunpack.c.l.b16 %v402
  %v3045 = vunpack.c.h.b16 %v402
  %v3046 = vunpack.c.l.b16 %v403
  %v3047 = vunpack.c.h.b16 %v403
  %v3048 = vunpack.c.l.b16 %v404
  %v3049 = vunpack.c.h.b16 %v404
  %v3050 = vunpack.c.l.b16 %v405
  %v3051 = vunpack.c.h.b16 %v405
  %v3052 = vunpack.c.l.b16 %v406
  %v3053 = vunpack.c.h.b16 %v406
  %v3054 = vunpack.c.l.b16 %v407
  %v3055 = vunpack.c.h.b16 %v407
  %v3056 = vunpack.c.l.b16 %v408
  %v3057 = vunpack.c.h.b16 %v408
  %v3058 = vunpack.c.l.b16 %v409
  %v3059 = vunpack.c.h.b16 %v409
  %v3060 = vunpack.c.l.b16 %v410
  %v3061 = vunpack.c.h.b16 %v410
  %v3062 = vunpack.c.l.b16 %v411
  %v3063 = vunpack.c.h.b16 %v411
  %v3064 = vunpack.c.l.b16 %v412
  %v3065 = vunpack.c.h.b16 %v412
  %v3066 = vunpack.c.l.b16 %v413
  %v3067 = vunpack.c.h.b16 %v413
  %v3068 = vunpack.c.l.b16 %v414
  %v3069 = vunpack.c.h.b16 %v414
  %v3070 = vunpack.c.l.b16 %v415
  %v3071 = vunpack.c.h.b16 %v415
  %v3072 = vunpack.c.l.b16 %v416
  %v3073 = vunpack.c.h.b16 %v416
  %v3074 = vunpack.c.l.b16 %v417
  %v3075 = vunpack.c.h.b16 %v417
  %v3076 = vunpack.c.l.b16 %v418
  %v3077 = vunpack.c.h.b16 %v418
  %v3078 = vunpack.c.l.b16 %v419
  %v3079 = vunpack.c.h.b16 %v419
  %v3080 = vunpack.c.l.b16 %v420
  %v3081 = vunpack.c.h.b16 %v420
  %v3082 = vunpack.c.l.b16 %v421
  %v3083 = vunpack.c.h.b16 %v421
  %v3084 = vunpack.c.l.b16 %v422
  %v3085 = vunpack.c.h.b16 %v422
  %v3086 = vunpack.c.l.b16 %v423
  %v3087 = vunpack.c.h.b16 %v423
  %v3088 = vunpack.c.l.b16 %v424
  %v3089 = vunpack.c.h.b16 %v424
  %v3090 = vunpack.c.l.b16 %v425
  %v3091 = vunpack.c.h.b16 %v425
  %v3092 = vunpack.c.l.b16 %v426
  %v3093 = vunpack.c.h.b16 %v426
  %v3094 = vunpack.c.l.b16 %v427
  %v3095 = vunpack.c.h.b16 %v427
  %v3096 = vunpack.c.l.b16 %v428
  %v3097 = vunpack.c.h.b16 %v428
  %v3098 = vunpack.c.l.b16 %v429
  %v3099 = vunpack.c.h.b16 %v429
  %v3100 = vunpack.c.l.b16 %v430
  %v3101 = vunpack.c.h.b16 %v430
  %v3102 = vunpack.c.l.b16 %v431
  %v3103 = vunpack.c.h.b16 %v431
  %v3104 = vunpack.c.l.b16 %v432
  %v3105 = vunpack.c.h.b16 %v432
  %v3106 = vunpack.c.l.b16 %v433
  %v3107 = vunpack.c.h.b16 %v433
  %v3108 = vunpack.c.l.b16 %v434
  %v3109 = vunpack.c.h.b16 %v434
  %v3110 = vunpack.c.l.b16 %v435
  %v3111 = vunpack.c.h.b16 %v435
  %v3112 = vunpack.c.l.b16 %v436
  %v3113 = vunpack.c.h.b16 %v436
  %v3114 = vunpack.c.l.b16 %v437
  %v3115 = vunpack.c.h.b16 %v437
  %v3116 = vunpack.c.l.b16 %v438
  %v3117 = vunpack.c.h.b16 %v438
  %v3118 = vunpack.c.l.b16 %v439
  %v3119 = vunpack.c.h.b16 %v439
  %v3120 = vunpack.c.l.b16 %v440
  %v3121 = vunpack.c.h.b16 %v440
  %v3122 = vunpack.c.l.b16 %v441
  %v3123 = vunpack.c.h.b16 %v441
  %v3124 = vunpack.c.l.b16 %v442
  %v3125 = vunpack.c.h.b16 %v442
  %v3126 = vunpack.c.l.b16 %v443
  %v3127 = vunpack.c.h.b16 %v443
  %v3128 = vunpack.c.l.b16 %v444
  %v3129 = vunpack.c.h.b16 %v444
  %v3130 = vunpack.c.l.b16 %v445
  %v3131 = vunpack.c.h.b16 %v445
  %v3132 = vunpack.c.l.b16 %v446
  %v3133 = vunpack.c.h.b16 %v446
  %v3134 = vunpack.c.l.b16 %v447
  %v3135 = vunpack.c.h.b16 %v447
  %v3136 = vunpack.c.l.b16 %v448
  %v3137 = vunpack.c.h.b16 %v448
  %v3138 = vunpack.c.l.b16 %v449
  %v3139 = vunpack.c.h.b16 %v449
  %v3140 = vunpack.c.l.b16 %v450
  %v3141 = vunpack.c.h.b16 %v450
  %v3142 = vunpack.c.l.b16 %v451
  %v3143 = vunpack.c.h.b16 %v451
  %v3144 = vunpack.c.l.b16 %v452
  %v3145 = vunpack.c.h.b16 %v452
  %v3146 = vunpack.c.l.b16 %v453
  %v3147 = vunpack.c.h.b16 %v453
  %v3148 = vunpack.c.l.b16 %v454
  %v3149 = vunpack.c.h.b16 %v454
  %v3150 = vunpack.c.l.b16 %v455
  %v3151 = vunpack.c.h.b16 %v455
  %v3152 = vunpack.c.l.b16 %v456
  %v3153 = vunpack.c.h.b16 %v456
  %v3154 = vunpack.c.l.b16 %v457
  %v3155 = vunpack.c.h.b16 %v457
  %v3156 = vunpack.c.l.b16 %v458
  %v3157 = vunpack.c.h.b16 %v458
  %v3158 = vunpack.c.l.b16 %v459
  %v3159 = vunpack.c.h.b16 %v459
  %v3160 = vunpack.c.l.b16 %v460
  %v3161 = vunpack.c.h.b16 %v460
  %v3162 = vunpack.c.l.b16 %v461
  %v3163 = vunpack.c.h.b16 %v461
  %v3164 = vunpack.c.l.b16 %v462
  %v3165 = vunpack.c.h.b16 %v462
  %v3166 = vunpack.c.l.b16 %v463
  %v3167 = vunpack.c.h.b16 %v463
  %v3168 = vunpack.c.l.b16 %v464
  %v3169 = vunpack.c.h.b16 %v464
  %v3170 = vunpack.c.l.b16 %v465
  %v3171 = vunpack.c.h.b16 %v465
  %v3172 = vunpack.c.l.b16 %v466
  %v3173 = vunpack.c.h.b16 %v466
  %v3174 = vunpack.c.l.b16 %v467
  %v3175 = vunpack.c.h.b16 %v467
  %v3176 = vunpack.c.l.b16 %v468
  %v3177 = vunpack.c.h.b16 %v468
  %v3178 = vunpack.c.l.b16 %v469
  %v3179 = vunpack.c.h.b16 %v469
  %v3180 = vunpack.c.l.b16 %v470
  %v3181 = vunpack.c.h.b16 %v470
  %v3182 = vunpack.c.l.b16 %v471
  %v3183 = vunpack.c.h.b16 %v471
  %v3184 = vunpack.c.l.b16 %v472
  %v3185 = vunpack.c.h.b16 %v472
  %v3186 = vunpack.c.l.b16 %v473
  %v3187 = vunpack.c.h.b16 %v473
  %v3188 = vunpack.c.l.b16 %v474
  %v3189 = vunpack.c.h.b16 %v474
  %v3190 = vunpack.c.l.b16 %v475
  %v3191 = vunpack.c.h.b16 %v475
  %v3192 = vunpack.c.l.b16 %v476
  %v3193 = vunpack.c.h.b16 %v476
  %v3194 = vunpack.c.l.b16 %v477
  %v3195 = vunpack.c.h.b16 %v477
  %v3196 = vunpack.c.l.b16 %v478
  %v3197 = vunpack.c.h.b16 %v478
  %v3198 = vunpack.c.l.b16 %v479
  %v3199 = vunpack.c.h.b16 %v479
  %v3200 = vunpack.c.l.b16 %v480
  %v3201 = vunpack.c.h.b16 %v480
  %v3202 = vunpack.c.l.b16 %v481
  %v3203 = vunpack.c.h.b16 %v481
  %v3204 = vunpack.c.l.b16 %v482
  %v3205 = vunpack.c.h.b16 %v482
  %v3206 = vunpack.c.l.b16 %v483
  %v3207 = vunpack.c.h.b16 %v483
  %v3208 = vunpack.c.l.b16 %v484
  %v3209 = vunpack.c.h.b16 %v484
  %v3210 = vunpack.c.l.b16 %v485
  %v3211 = vunpack.c.h.b16 %v485
  %v3212 = vunpack.c.l.b16 %v486
  %v3213 = vunpack.c.h.b16 %v486
  %v3214 = vunpack.c.l.b16 %v487
  %v3215 = vunpack.c.h.b16 %v487
  %v3216 = vunpack.c.l.b16 %v488
  %v3217 = vunpack.c.h.b16 %v488
  %v3218 = vunpack.c.l.b16 %v489
  %v3219 = vunpack.c.h.b16 %v489
  %v3220 = vunpack.c.l.b16 %v490
  %v3221 = vunpack.c.h.b16 %v490
  %v3222 = vunpack.c.l.b16 %v491
  %v3223 = vunpack.c.h.b16 %v491
  %v3224 = vunpack.c.l.b16 %v492
  %v3225 = vunpack.c.h.b16 %v492
  %v3226 = vunpack.c.l.b16 %v493
  %v3227 = vunpack.c.h.b16 %v493
  %v3228 = vunpack.c.l.b16 %v494
  %v3229 = vunpack.c.h.b16 %v494
  %v3230 = vunpack.c.l.b16 %v495
  %v3231 = vunpack.c.h.b16 %v495
  %v3232 = vunpack.c.l.b16 %v496
  %v3233 = vunpack.c.h.b16 %v496
  %v3234 = vunpack.c.l.b16 %v497
  %v3235 = vunpack.c.h.b16 %v497
  %v3236 = vunpack.c.l.b16 %v498
  %v3237 = vunpack.c.h.b16 %v498
  %v3238 = vunpack.c.l.b16 %v499
  %v3239 = vunpack.c.h.b16 %v499
  %v3240 = vunpack.c.l.b16 %v500
  %v3241 = vunpack.c.h.b16 %v500
  %v3242 = vunpack.c.l.b16 %v501
  %v3243 = vunpack.c.h.b16 %v501
  %v3244 = vunpack.c.l.b16 %v502
  %v3245 = vunpack.c.h.b16 %v502
  %v3246 = vunpack.c.l.b16 %v503
  %v3247 = vunpack.c.h.b16 %v503
  %v3248 = vunpack.c.l.b16 %v504
  %v3249 = vunpack.c.h.b16 %v504
  %v3250 = vunpack.c.l.b16 %v505
  %v3251 = vunpack.c.h.b16 %v505
  %v3252 = vunpack.c.l.b16 %v506
  %v3253 = vunpack.c.h.b16 %v506
  %v3254 = vunpack.c.l.b16 %v507
  %v3255 = vunpack.c.h.b16 %v507
  %v3256 = vunpack.c.l.b16 %v508
  %v3257 = vunpack.c.h.b16 %v508
  %v3258 = vunpack.c.l.b16 %v509
  %v3259 = vunpack.c.h.b16 %v509
  %v3260 = vunpack.c.l.b16 %v510
  %v3261 = vunpack.c.h.b16 %v510
  %v3262 = vunpack.c.l.b16 %v511
  %v3263 = vunpack.c.h.b16 %v511
  %v3264 = vunpack.c.l.b16 %v512
  %v3265 = vunpack.c.h.b16 %v512
  %v3266 = vunpack.c.l.b16 %v513
  %v3267 = vunpack.c.h.b16 %v513
  %v3268 = vunpack.c.l.b16 %v514
  %v3269 = vunpack.c.h.b16 %v514
  %v3270 = vunpack.c.l.b16 %v515
  %v3271 = vunpack.c.h.b16 %v515
  %v3272 = vunpack.c.l.b16 %v516
  %v3273 = vunpack.c.h.b16 %v516
  %v3274 = vunpack.c.l.b16 %v517
  %v3275 = vunpack.c.h.b16 %v517
  %v3276 = vunpack.c.l.b16 %v518
  %v3277 = vunpack.c.h.b16 %v518
  %v3278 = vunpack.c.l.b16 %v519
  %v3279 = vunpack.c.h.b16 %v519
  %v3280 = vunpack.c.l.b16 %v520
  %v3281 = vunpack.c.h.b16 %v520
  %v3282 = vunpack.c.l.b16 %v521
  %v3283 = vunpack.c.h.b16 %v521
  %v3284 = vunpack.c.l.b16 %v522
  %v3285 = vunpack.c.h.b16 %v522
  %v3286 = vunpack.c.l.b16 %v523
  %v3287 = vunpack.c.h.b16 %v523
  %v3288 = vunpack.c.l.b16 %v524
  %v3289 = vunpack.c.h.b16 %v524
  %v3290 = vunpack.c.l.b16 %v525
  %v3291 = vunpack.c.h.b16 %v525
  %v3292 = vunpack.c.l.b16 %v526
  %v3293 = vunpack.c.h.b16 %v526
  %v3294 = vunpack.c.l.b16 %v527
  %v3295 = vunpack.c.h.b16 %v527
  %v3296 = vunpack.c.l.b16 %v528
  %v3297 = vunpack.c.h.b16 %v528
  %v3298 = vunpack.c.l.b16 %v529
  %v3299 = vunpack.c.h.b16 %v529
  %v3300 = vunpack.c.l.b16 %v530
  %v3301 = vunpack.c.h.b16 %v530
  %v3302 = vunpack.c.l.b16 %v531
  %v3303 = vunpack.c.h.b16 %v531
  %v3304 = vunpack.c.l.b16 %v532
  %v3305 = vunpack.c.h.b16 %v532
  %v3306 = vunpack.c.l.b16 %v533
  %v3307 = vunpack.c.h.b16 %v533
  %v3308 = vunpack.c.l.b16 %v534
  %v3309 = vunpack.c.h.b16 %v534
  %v3310 = vunpack.c.l.b16 %v535
  %v3311 = vunpack.c.h.b16 %v535
  %v3312 = vunpack.c.l.b16 %v536
  %v3313 = vunpack.c.h.b16 %v536
  %v3314 = vunpack.c.l.b16 %v537
  %v3315 = vunpack.c.h.b16 %v537
  %v3316 = vunpack.c.l.b16 %v538
  %v3317 = vunpack.c.h.b16 %v538
  %v3318 = vunpack.c.l.b16 %v539
  %v3319 = vunpack.c.h.b16 %v539
  %v3320 = vunpack.c.l.b16 %v540
  %v3321 = vunpack.c.h.b16 %v540
  %v3322 = vunpack.c.l.b16 %v541
  %v3323 = vunpack.c.h.b16 %v541
  %v3324 = vunpack.c.l.b16 %v542
  %v3325 = vunpack.c.h.b16 %v542
  %v3326 = vunpack.c.l.b16 %v543
  %v3327 = vunpack.c.h.b16 %v543
  %v3328 = vunpack.c.l.b16 %v544
  %v3329 = vunpack.c.h.b16 %v544
  %v3330 = vunpack.c.l.b16 %v545
  %v3331 = vunpack.c.h.b16 %v545
  %v3332 = vunpack.c.l.b16 %v546
  %v3333 = vunpack.c.h.b16 %v546
  %v3334 = vunpack.c.l.b16 %v547
  %v3335 = vunpack.c.h.b16 %v547
  %v3336 = vunpack.c.l.b16 %v548
  %v3337 = vunpack.c.h.b16 %v548
  %v3338 = vunpack.c.l.b16 %v549
  %v3339 = vunpack.c.h.b16 %v549
  %v3340 = vunpack.c.l.b16 %v550
  %v3341 = vunpack.c.h.b16 %v550
  %v3342 = vunpack.c.l.b16 %v551
  %v3343 = vunpack.c.h.b16 %v551
  %v3344 = vunpack.c.l.b16 %v552
  %v3345 = vunpack.c.h.b16 %v552
  %v3346 = vunpack.c.l.b16 %v553
  %v3347 = vunpack.c.h.b16 %v553
  %v3348 = vunpack.c.l.b16 %v554
  %v3349 = vunpack.c.h.b16 %v554
  %v3350 = vunpack.c.l.b16 %v555
  %v3351 = vunpack.c.h.b16 %v555
  %v3352 = vunpack.c.l.b16 %v556
  %v3353 = vunpack.c.h.b16 %v556
  %v3354 = vunpack.c.l.b16 %v557
  %v3355 = vunpack.c.h.b16 %v557
  %v3356 = vunpack.c.l.b16 %v558
  %v3357 = vunpack.c.h.b16 %v558
  %v3358 = vunpack.c.l.b16 %v559
  %v3359 = vunpack.c.h.b16 %v559
  %v3360 = vunpack.c.l.b16 %v560
  %v3361 = vunpack.c.h.b16 %v560
  %v3362 = vunpack.c.l.b16 %v561
  %v3363 = vunpack.c.h.b16 %v561
  %v3364 = vunpack.c.l.b16 %v562
  %v3365 = vunpack.c.h.b16 %v562
  %v3366 = vunpack.c.l.b16 %v563
  %v3367 = vunpack.c.h.b16 %v563
  %v3368 = vunpack.c.l.b16 %v564
  %v3369 = vunpack.c.h.b16 %v564
  %v3370 = vunpack.c.l.b16 %v565
  %v3371 = vunpack.c.h.b16 %v565
  %v3372 = vunpack.c.l.b16 %v566
  %v3373 = vunpack.c.h.b16 %v566
  %v3374 = vunpack.c.l.b16 %v567
  %v3375 = vunpack.c.h.b16 %v567
  %v3376 = vunpack.c.l.b16 %v568
  %v3377 = vunpack.c.h.b16 %v568
  %v3378 = vunpack.c.l.b16 %v569
  %v3379 = vunpack.c.h.b16 %v569
  %v3380 = vunpack.c.l.b16 %v570
  %v3381 = vunpack.c.h.b16 %v570
  %v3382 = vunpack.c.l.b16 %v571
  %v3383 = vunpack.c.h.b16 %v571
  %v3384 = vunpack.c.l.b16 %v572
  %v3385 = vunpack.c.h.b16 %v572
  %v3386 = vunpack.c.l.b16 %v573
  %v3387 = vunpack.c.h.b16 %v573
  %v3388 = vunpack.c.l.b16 %v574
  %v3389 = vunpack.c.h.b16 %v574
  %v3390 = vunpack.c.l.b16 %v575
  %v3391 = vunpack.c.h.b16 %v575
  %v3392 = vunpack.c.l.b16 %v576
  %v3393 = vunpack.c.h.b16 %v576
  %v3394 = vunpack.c.l.b16 %v577
  %v3395 = vunpack.c.h.b16 %v577
  %v3396 = vunpack.c.l.b16 %v578
  %v3397 = vunpack.c.h.b16 %v578
  %v3398 = vunpack.c.l.b16 %v579
  %v3399 = vunpack.c.h.b16 %v579
  %v3400 = vunpack.c.l.b16 %v580
  %v3401 = vunpack.c.h.b16 %v580
  %v3402 = vunpack.c.l.b16 %v581
  %v3403 = vunpack.c.h.b16 %v581
  %v3404 = vunpack.c.l.b16 %v582
  %v3405 = vunpack.c.h.b16 %v582
  %v3406 = vunpack.c.l.b16 %v583
  %v3407 = vunpack.c.h.b16 %v583
  %v3408 = vunpack.c.l.b16 %v584
  %v3409 = vunpack.c.h.b16 %v584
  %v3410 = vunpack.c.l.b16 %v585
  %v3411 = vunpack.c.h.b16 %v585
  %v3412 = vunpack.c.l.b16 %v586
  %v3413 = vunpack.c.h.b16 %v586
  %v3414 = vunpack.c.l.b16 %v587
  %v3415 = vunpack.c.h.b16 %v587
  %v3416 = vunpack.c.l.b16 %v588
  %v3417 = vunpack.c.h.b16 %v588
  %v3418 = vunpack.c.l.b16 %v589
  %v3419 = vunpack.c.h.b16 %v589
  %v3420 = vunpack.c.l.b16 %v590
  %v3421 = vunpack.c.h.b16 %v590
  %v3422 = vunpack.c.l.b16 %v591
  %v3423 = vunpack.c.h.b16 %v591
  %v3424 = vunpack.c.l.b16 %v592
  %v3425 = vunpack.c.h.b16 %v592
  %v3426 = vunpack.c.l.b16 %v593
  %v3427 = vunpack.c.h.b16 %v593
  %v3428 = vunpack.c.l.b16 %v594
  %v3429 = vunpack.c.h.b16 %v594
  %v3430 = vunpack.c.l.b16 %v595
  %v3431 = vunpack.c.h.b16 %v595
  %v3432 = vunpack.c.l.b16 %v596
  %v3433 = vunpack.c.h.b16 %v596
  %v3434 = vunpack.c.l.b16 %v597
  %v3435 = vunpack.c.h.b16 %v597
  %v3436 = vunpack.c.l.b16 %v598
  %v3437 = vunpack.c.h.b16 %v598
  %v3438 = vunpack.c.l.b16 %v599
  %v3439 = vunpack.c.h.b16 %v599
  %v3440 = vunpack.c.l.b16 %v600
  %v3441 = vunpack.c.h.b16 %v600
  %v3442 = vunpack.c.l.b16 %v601
  %v3443 = vunpack.c.h.b16 %v601
  %v3444 = vunpack.c.l.b16 %v602
  %v3445 = vunpack.c.h.b16 %v602
  %v3446 = vunpack.c.l.b16 %v603
  %v3447 = vunpack.c.h.b16 %v603
  %v3448 = vunpack.c.l.b16 %v604
  %v3449 = vunpack.c.h.b16 %v604
  %v3450 = vunpack.c.l.b16 %v605
  %v3451 = vunpack.c.h.b16 %v605
  %v3452 = vunpack.c.l.b16 %v606
  %v3453 = vunpack.c.h.b16 %v606
  %v3454 = vunpack.c.l.b16 %v607
  %v3455 = vunpack.c.h.b16 %v607
  %v3456 = vunpack.c.l.b16 %v608
  %v3457 = vunpack.c.h.b16 %v608
  %v3458 = vunpack.c.l.b16 %v609
  %v3459 = vunpack.c.h.b16 %v609
  %v3460 = vunpack.c.l.b16 %v610
  %v3461 = vunpack.c.h.b16 %v610
  %v3462 = vunpack.c.l.b16 %v611
  %v3463 = vunpack.c.h.b16 %v611
  %v3464 = vunpack.c.l.b16 %v612
  %v3465 = vunpack.c.h.b16 %v612
  %v3466 = vunpack.c.l.b16 %v613
  %v3467 = vunpack.c.h.b16 %v613
  %v3468 = vunpack.c.l.b16 %v614
  %v3469 = vunpack.c.h.b16 %v614
  %v3470 = vunpack.c.l.b16 %v615
  %v3471 = vunpack.c.h.b16 %v615
  %v3472 = vunpack.c.l.b16 %v616
  %v3473 = vunpack.c.h.b16 %v616
  %v3474 = vunpack.c.l.b16 %v617
  %v3475 = vunpack.c.h.b16 %v617
  %v3476 = vunpack.c.l.b16 %v618
  %v3477 = vunpack.c.h.b16 %v618
  %v3478 = vunpack.c.l.b16 %v619
  %v3479 = vunpack.c.h.b16 %v619
  %v3480 = vunpack.c.l.b16 %v620
  %v3481 = vunpack.c.h.b16 %v620
  %v3482 = vunpack.c.l.b16 %v621
  %v3483 = vunpack.c.h.b16 %v621
  %v3484 = vunpack.c.l.b16 %v622
  %v3485 = vunpack.c.h.b16 %v622
  %v3486 = vunpack.c.l.b16 %v623
  %v3487 = vunpack.c.h.b16 %v623
  %v3488 = vunpack.c.l.b16 %v624
  %v3489 = vunpack.c.h.b16 %v624
  %v3490 = vunpack.c.l.b16 %v625
  %v3491 = vunpack.c.h.b16 %v625
  %v3492 = vunpack.c.l.b16 %v626
  %v3493 = vunpack.c.h.b16 %v626
  %v3494 = vunpack.c.l.b16 %v627
  %v3495 = vunpack.c.h.b16 %v627
  %v3496 = vunpack.c.l.b16 %v628
  %v3497 = vunpack.c.h.b16 %v628
  %v3498 = vunpack.c.l.b16 %v629
  %v3499 = vunpack.c.h.b16 %v629
  %v3500 = vunpack.c.l.b16 %v630
  %v3501 = vunpack.c.h.b16 %v630
  %v3502 = vunpack.c.l.b16 %v631
  %v3503 = vunpack.c.h.b16 %v631
  %v3504 = vunpack.c.l.b16 %v632
  %v3505 = vunpack.c.h.b16 %v632
  %v3506 = vunpack.c.l.b16 %v633
  %v3507 = vunpack.c.h.b16 %v633
  %v3508 = vunpack.c.l.b16 %v634
  %v3509 = vunpack.c.h.b16 %v634
  %v3510 = vunpack.c.l.b16 %v635
  %v3511 = vunpack.c.h.b16 %v635
  %v3512 = vunpack.c.l.b16 %v636
  %v3513 = vunpack.c.h.b16 %v636
  %v3514 = vunpack.c.l.b16 %v637
  %v3515 = vunpack.c.h.b16 %v637
  %v3516 = vunpack.c.l.b16 %v638
  %v3517 = vunpack.c.h.b16 %v638
  %v3518 = vunpack.c.l.b16 %v639
  %v3519 = vunpack.c.h.b16 %v639
  %v3520 = vunpack.c.l.b16 %v640
  %v3521 = vunpack.c.h.b16 %v640
  %v3522 = vunpack.c.l.b16 %v641
  %v3523 = vunpack.c.h.b16 %v641
  %v3524 = vunpack.c.l.b16 %v642
  %v3525 = vunpack.c.h.b16 %v642
  %v3526 = vunpack.c.l.b16 %v643
  %v3527 = vunpack.c.h.b16 %v643
  %v3528 = vunpack.c.l.b16 %v644
  %v3529 = vunpack.c.h.b16 %v644
  %v3530 = vunpack.c.l.b16 %v645
  %v3531 = vunpack.c.h.b16 %v645
  %v3532 = vunpack.c.l.b16 %v646
  %v3533 = vunpack.c.h.b16 %v646
  %v3534 = vunpack.c.l.b16 %v647
  %v3535 = vunpack.c.h.b16 %v647
  %v3536 = vunpack.c.l.b16 %v648
  %v3537 = vunpack.c.h.b16 %v648
  %v3538 = vunpack.c.l.b16 %v649
  %v3539 = vunpack.c.h.b16 %v649
  %v3540 = vunpack.c.l.b16 %v650
  %v3541 = vunpack.c.h.b16 %v650
  %v3542 = vunpack.c.l.b16 %v651
  %v3543 = vunpack.c.h.b16 %v651
  %v3544 = vunpack.c.l.b16 %v652
  %v3545 = vunpack.c.h.b16 %v652
  %v3546 = vunpack.c.l.b16 %v653
  %v3547 = vunpack.c.h.b16 %v653
  %v3548 = vunpack.c.l.b16 %v654
  %v3549 = vunpack.c.h.b16 %v654
  %v3550 = vunpack.c.l.b16 %v655
  %v3551 = vunpack.c.h.b16 %v655
  %v3552 = vunpack.c.l.b16 %v656
  %v3553 = vunpack.c.h.b16 %v656
  %v3554 = vunpack.c.l.b16 %v657
  %v3555 = vunpack.c.h.b16 %v657
  %v3556 = vunpack.c.l.b16 %v658
  %v3557 = vunpack.c.h.b16 %v658
  %v3558 = vunpack.c.l.b16 %v659
  %v3559 = vunpack.c.h.b16 %v659
  %v3560 = vunpack.c.l.b16 %v660
  %v3561 = vunpack.c.h.b16 %v660
  %v3562 = vunpack.c.l.b16 %v661
  %v3563 = vunpack.c.h.b16 %v661
  %v3564 = vunpack.c.l.b16 %v662
  %v3565 = vunpack.c.h.b16 %v662
  %v3566 = vunpack.c.l.b16 %v663
  %v3567 = vunpack.c.h.b16 %v663
  %v3568 = vunpack.c.l.b16 %v664
  %v3569 = vunpack.c.h.b16 %v664
  %v3570 = vunpack.c.l.b16 %v665
  %v3571 = vunpack.c.h.b16 %v665
  %v3572 = vunpack.c.l.b16 %v666
  %v3573 = vunpack.c.h.b16 %v666
  %v3574 = vunpack.c.l.b16 %v667
  %v3575 = vunpack.c.h.b16 %v667
  %v3576 = vunpack.c.l.b16 %v668
  %v3577 = vunpack.c.h.b16 %v668
  %v3578 = vunpack.c.l.b16 %v669
  %v3579 = vunpack.c.h.b16 %v669
  %v3580 = vunpack.c.l.b16 %v670
  %v3581 = vunpack.c.h.b16 %v670
  %v3582 = vunpack.c.l.b16 %v671
  %v3583 = vunpack.c.h.b16 %v671
  %v3584 = vunpack.c.l.b16 %v672
  %v3585 = vunpack.c.h.b16 %v672
  %v3586 = vunpack.c.l.b16 %v673
  %v3587 = vunpack.c.h.b16 %v673
  %v3588 = vunpack.c.l.b16 %v674
  %v3589 = vunpack.c.h.b16 %v674
  %v3590 = vunpack.c.l.b16 %v675
  %v3591 = vunpack.c.h.b16 %v675
  %v3592 = vunpack.c.l.b16 %v676
  %v3593 = vunpack.c.h.b16 %v676
  %v3594 = vunpack.c.l.b16 %v677
  %v3595 = vunpack.c.h.b16 %v677
  %v3596 = vunpack.c.l.b16 %v678
  %v3597 = vunpack.c.h.b16 %v678
  %v3598 = vunpack.c.l.b16 %v679
  %v3599 = vunpack.c.h.b16 %v679
  %v3600 = vunpack.c.l.b16 %v680
  %v3601 = vunpack.c.h.b16 %v680
  %v3602 = vunpack.c.l.b16 %v681
  %v3603 = vunpack.c.h.b16 %v681
  %v3604 = vunpack.c.l.b16 %v682
  %v3605 = vunpack.c.h.b16 %v682
  %v3606 = vunpack.c.l.b16 %v683
  %v3607 = vunpack.c.h.b16 %v683
  %v3608 = vunpack.c.l.b16 %v684
  %v3609 = vunpack.c.h.b16 %v684
  %v3610 = vunpack.c.l.b16 %v685
  %v3611 = vunpack.c.h.b16 %v685
  %v3612 = vunpack.c.l.b16 %v686
  %v3613 = vunpack.c.h.b16 %v686
  %v3614 = vunpack.c.l.b16 %v687
  %v3615 = vunpack.c.h.b16 %v687
  %v3616 = vunpack.c.l.b16 %v688
  %v3617 = vunpack.c.h.b16 %v688
  %v3618 = vunpack.c.l.b16 %v689
  %v3619 = vunpack.c.h.b16 %v689
  %v3620 = vunpack.c.l.b16 %v690
  %v3621 = vunpack.c.h.b16 %v690
  %v3622 = vunpack.c.l.b16 %v691
  %v3623 = vunpack.c.h.b16 %v691
  %v3624 = vunpack.c.l.b16 %v692
  %v3625 = vunpack.c.h.b16 %v692
  %v3626 = vunpack.c.l.b16 %v693
  %v3627 = vunpack.c.h.b16 %v693
  %v3628 = vunpack.c.l.b16 %v694
  %v3629 = vunpack.c.h.b16 %v694
  %v3630 = vunpack.c.l.b16 %v695
  %v3631 = vunpack.c.h.b16 %v695
  %v3632 = vunpack.c.l.b16 %v696
  %v3633 = vunpack.c.h.b16 %v696
  %v3634 = vunpack.c.l.b16 %v697
  %v3635 = vunpack.c.h.b16 %v697
  %v3636 = vunpack.c.l.b16 %v698
  %v3637 = vunpack.c.h.b16 %v698
  %v3638 = vunpack.c.l.b16 %v699
  %v3639 = vunpack.c.h.b16 %v699
  %v3640 = vunpack.c.l.b16 %v700
  %v3641 = vunpack.c.h.b16 %v700
  %v3642 = vunpack.c.l.b16 %v701
  %v3643 = vunpack.c.h.b16 %v701
  %v3644 = vunpack.c.l.b16 %v702
  %v3645 = vunpack.c.h.b16 %v702
  %v3646 = vunpack.c.l.b16 %v703
  %v3647 = vunpack.c.h.b16 %v703
  %v3648 = vunpack.c.l.b16 %v704
  %v3649 = vunpack.c.h.b16 %v704
  %v3650 = vunpack.c.l.b16 %v705
  %v3651 = vunpack.c.h.b16 %v705
  %v3652 = vunpack.c.l.b16 %v706
  %v3653 = vunpack.c.h.b16 %v706
  %v3654 = vunpack.c.l.b16 %v707
  %v3655 = vunpack.c.h.b16 %v707
  %v3656 = vunpack.c.l.b16 %v708
  %v3657 = vunpack.c.h.b16 %v708
  %v3658 = vunpack.c.l.b16 %v709
  %v3659 = vunpack.c.h.b16 %v709
  %v3660 = vunpack.c.l.b16 %v710
  %v3661 = vunpack.c.h.b16 %v710
  %v3662 = vunpack.c.l.b16 %v711
  %v3663 = vunpack.c.h.b16 %v711
  %v3664 = vunpack.c.l.b16 %v712
  %v3665 = vunpack.c.h.b16 %v712
  %v3666 = vunpack.c.l.b16 %v713
  %v3667 = vunpack.c.h.b16 %v713
  %v3668 = vunpack.c.l.b16 %v714
  %v3669 = vunpack.c.h.b16 %v714
  %v3670 = vunpack.c.l.b16 %v715
  %v3671 = vunpack.c.h.b16 %v715
  %v3672 = vunpack.c.l.b16 %v716
  %v3673 = vunpack.c.h.b16 %v716
  %v3674 = vunpack.c.l.b16 %v717
  %v3675 = vunpack.c.h.b16 %v717
  %v3676 = vunpack.c.l.b16 %v718
  %v3677 = vunpack.c.h.b16 %v718
  %v3678 = vunpack.c.l.b16 %v719
  %v3679 = vunpack.c.h.b16 %v719
  %v3680 = vunpack.c.l.b16 %v720
  %v3681 = vunpack.c.h.b16 %v720
  %v3682 = vunpack.c.l.b16 %v721
  %v3683 = vunpack.c.h.b16 %v721
  %v3684 = vunpack.c.l.b16 %v722
  %v3685 = vunpack.c.h.b16 %v722
  %v3686 = vunpack.c.l.b16 %v723
  %v3687 = vunpack.c.h.b16 %v723
  %v3688 = vunpack.c.l.b16 %v724
  %v3689 = vunpack.c.h.b16 %v724
  %v3690 = vunpack.c.l.b16 %v725
  %v3691 = vunpack.c.h.b16 %v725
  %v3692 = vunpack.c.l.b16 %v726
  %v3693 = vunpack.c.h.b16 %v726
  %v3694 = vunpack.c.l.b16 %v727
  %v3695 = vunpack.c.h.b16 %v727
  %v3696 = vunpack.c.l.b16 %v728
  %v3697 = vunpack.c.h.b16 %v728
  %v3698 = vunpack.c.l.b16 %v729
  %v3699 = vunpack.c.h.b16 %v729
  %v3700 = vunpack.c.l.b16 %v730
  %v3701 = vunpack.c.h.b16 %v730
  %v3702 = vunpack.c.l.b16 %v731
  %v3703 = vunpack.c.h.b16 %v731
  %v3704 = vunpack.c.l.b16 %v732
  %v3705 = vunpack.c.h.b16 %v732
  %v3706 = vunpack.c.l.b16 %v733
  %v3707 = vunpack.c.h.b16 %v733
  %v3708 = vunpack.c.l.b16 %v734
  %v3709 = vunpack.c.h.b16 %v734
  %v3710 = vunpack.c.l.b16 %v735
  %v3711 = vunpack.c.h.b16 %v735
  %v3712 = vunpack.c.l.b16 %v736
  %v3713 = vunpack.c.h.b16 %v736
  %v3714 = vunpack.c.l.b16 %v737
  %v3715 = vunpack.c.h.b16 %v737
  %v3716 = vunpack.c.l.b16 %v738
  %v3717 = vunpack.c.h.b16 %v738
  %v3718 = vunpack.c.l.b16 %v739
  %v3719 = vunpack.c.h.b16 %v739
  %v3720 = vunpack.c.l.b16 %v740
  %v3721 = vunpack.c.h.b16 %v740
  %v3722 = vunpack.c.l.b16 %v741
  %v3723 = vunpack.c.h.b16 %v741
  %v3724 = vunpack.c.l.b16 %v742
  %v3725 = vunpack.c.h.b16 %v742
  %v3726 = vunpack.c.l.b16 %v743
  %v3727 = vunpack.c.h.b16 %v743
  %v3728 = vunpack.c.l.b16 %v744
  %v3729 = vunpack.c.h.b16 %v744
  %v3730 = vunpack.c.l.b16 %v745
  %v3731 = vunpack.c.h.b16 %v745
  %v3732 = vunpack.c.l.b16 %v746
  %v3733 = vunpack.c.h.b16 %v746
  %v3734 = vunpack.c.l.b16 %v747
  %v3735 = vunpack.c.h.b16 %v747
  %v3736 = vunpack.c.l.b16 %v748
  %v3737 = vunpack.c.h.b16 %v748
  %v3738 = vunpack.c.l.b16 %v749
  %v3739 = vunpack.c.h.b16 %v749
  %v3740 = vunpack.c.l.b16 %v750
  %v3741 = vunpack.c.h.b16 %v750
  %v3742 = vunpack.c.l.b16 %v751
  %v3743 = vunpack.c.h.b16 %v751
  %v3744 = vunpack.c.l.b16 %v752
  %v3745 = vunpack.c.h.b16 %v752
  %v3746 = vunpack.c.l.b16 %v753
  %v3747 = vunpack.c.h.b16 %v753
  %v3748 = vunpack.c.l.b16 %v754
  %v3749 = vunpack.c.h.b16 %v754
  %v3750 = vunpack.c.l.b16 %v755
  %v3751 = vunpack.c.h.b16 %v755
  %v3752 = vunpack.c.l.b16 %v756
  %v3753 = vunpack.c.h.b16 %v756
  %v3754 = vunpack.c.l.b16 %v757
  %v3755 = vunpack.c.h.b16 %v757
  %v3756 = vunpack.c.l.b16 %v758
  %v3757 = vunpack.c.h.b16 %v758
  %v3758 = vunpack.c.l.b16 %v759
  %v3759 = vunpack.c.h.b16 %v759
  %v3760 = vunpack.c.l.b16 %v760
  %v3761 = vunpack.c.h.b16 %v760
  %v3762 = vunpack.c.l.b16 %v761
  %v3763 = vunpack.c.h.b16 %v761
  %v3764 = vunpack.c.l.b16 %v762
  %v3765 = vunpack.c.h.b16 %v762
  %v3766 = vunpack.c.l.b16 %v763
  %v3767 = vunpack.c.h.b16 %v763
  %v3768 = vunpack.c.l.b16 %v764
  %v3769 = vunpack.c.h.b16 %v764
  %v3770 = vunpack.c.l.b16 %v765
  %v3771 = vunpack.c.h.b16 %v765
  %v3772 = vunpack.c.l.b16 %v766
  %v3773 = vunpack.c.h.b16 %v766
  %v3774 = vunpack.c.l.b16 %v767
  %v3775 = vunpack.c.h.b16 %v767
  %v3776 = vunpack.c.l.b16 %v768
  %v3777 = vunpack.c.h.b16 %v768
  %v3778 = vunpack.c.l.b16 %v769
  %v3779 = vunpack.c.h.b16 %v769
  %v3780 = vunpack.c.l.b16 %v770
  %v3781 = vunpack.c.h.b16 %v770
  %v3782 = vunpack.c.l.b16 %v771
  %v3783 = vunpack.c.h.b16 %v771
  %v3784 = vunpack.c.l.b16 %v772
  %v3785 = vunpack.c.h.b16 %v772
  %v3786 = vunpack.c.l.b16 %v773
  %v3787 = vunpack.c.h.b16 %v773
  %v3788 = vunpack.c.l.b16 %v774
  %v3789 = vunpack.c.h.b16 %v774
  %v3790 = vunpack.c.l.b16 %v775
  %v3791 = vunpack.c.h.b16 %v775
  %v3792 = vunpack.c.l.b16 %v776
  %v3793 = vunpack.c.h.b16 %v776
  %v3794 = vunpack.c.l.b16 %v777
  %v3795 = vunpack.c.h.b16 %v777
  %v3796 = vunpack.c.l.b16 %v778
  %v3797 = vunpack.c.h.b16 %v778
  %v3798 = vunpack.c.l.b16 %v779
  %v3799 = vunpack.c.h.b16 %v779
  %v3800 = vunpack.c.l.b16 %v780
  %v3801 = vunpack.c.h.b16 %v780
  %v3802 = vunpack.c.l.b16 %v781
  %v3803 = vunpack.c.h.b16 %v781
  %v3804 = vunpack.c.l.b16 %v782
  %v3805 = vunpack.c.h.b16 %v782
  %v3806 = vunpack.c.l.b16 %v783
  %v3807 = vunpack.c.h.b16 %v783
  %v3808 = vunpack.c.l.b16 %v784
  %v3809 = vunpack.c.h.b16 %v784
  %v3810 = vunpack.c.l.b16 %v785
  %v3811 = vunpack.c.h.b16 %v785
  %v3812 = vunpack.c.l.b16 %v786
  %v3813 = vunpack.c.h.b16 %v786
  %v3814 = vunpack.c.l.b16 %v787
  %v3815 = vunpack.c.h.b16 %v787
  %v3816 = vunpack.c.l.b16 %v788
  %v3817 = vunpack.c.h.b16 %v788
  %v3818 = vunpack.c.l.b16 %v789
  %v3819 = vunpack.c.h.b16 %v789
  %v3820 = vunpack.c.l.b16 %v790
  %v3821 = vunpack.c.h.b16 %v790
  %v3822 = vunpack.c.l.b16 %v791
  %v3823 = vunpack.c.h.b16 %v791
  %v3824 = vunpack.c.l.b16 %v792
  %v3825 = vunpack.c.h.b16 %v792
  %v3826 = vunpack.c.l.b16 %v793
  %v3827 = vunpack.c.h.b16 %v793
  %v3828 = vunpack.c.l.b16 %v794
  %v3829 = vunpack.c.h.b16 %v794
  %v3830 = vunpack.c.l.b16 %v795
  %v3831 = vunpack.c.h.b16 %v795
  %v3832 = vunpack.c.l.b16 %v796
  %v3833 = vunpack.c.h.b16 %v796
  %v3834 = vunpack.c.l.b16 %v797
  %v3835 = vunpack.c.h.b16 %v797
  %v3836 = vunpack.c.l.b16 %v798
  %v3837 = vunpack.c.h.b16 %v798
  %v3838 = vunpack.c.l.b16 %v799
  %v3839 = vunpack.c.h.b16 %v799
  %v3840 = vunpack.c.l.b16 %v800
  %v3841 = vunpack.c.h.b16 %v800
  %v3842 = vunpack.c.l.b16 %v801
  %v3843 = vunpack.c.h.b16 %v801
  %v3844 = vunpack.c.l.b16 %v802
  %v3845 = vunpack.c.h.b16 %v802
  %v3846 = vunpack.c.l.b16 %v803
  %v3847 = vunpack.c.h.b16 %v803
  %v3848 = vunpack.c.l.b16 %v804
  %v3849 = vunpack.c.h.b16 %v804
  %v3850 = vunpack.c.l.b16 %v805
  %v3851 = vunpack.c.h.b16 %v805
  %v3852 = vunpack.c.l.b16 %v806
  %v3853 = vunpack.c.h.b16 %v806
  %v3854 = vunpack.c.l.b16 %v807
  %v3855 = vunpack.c.h.b16 %v807
  %v3856 = vunpack.c.l.b16 %v808
  %v3857 = vunpack.c.h.b16 %v808
  %v3858 = vunpack.c.l.b16 %v809
  %v3859 = vunpack.c.h.b16 %v809
  %v3860 = vunpack.c.l.b16 %v810
  %v3861 = vunpack.c.h.b16 %v810
  %v3862 = vunpack.c.l.b16 %v811
  %v3863 = vunpack.c.h.b16 %v811
  %v3864 = vunpack.c.l.b16 %v812
  %v3865 = vunpack.c.h.b16 %v812
  %v3866 = vunpack.c.l.b16 %v813
  %v3867 = vunpack.c.h.b16 %v813
  %v3868 = vunpack.c.l.b16 %v814
  %v3869 = vunpack.c.h.b16 %v814
  %v3870 = vunpack.c.l.b16 %v815
  %v3871 = vunpack.c.h.b16 %v815
  %v3872 = vunpack.c.l.b16 %v816
  %v3873 = vunpack.c.h.b16 %v816
  %v3874 = vunpack.c.l.b16 %v817
  %v3875 = vunpack.c.h.b16 %v817
  %v3876 = vunpack.c.l.b16 %v818
  %v3877 = vunpack.c.h.b16 %v818
  %v3878 = vunpack.c.l.b16 %v819
  %v3879 = vunpack.c.h.b16 %v819
  %v3880 = vunpack.c.l.b16 %v820
  %v3881 = vunpack.c.h.b16 %v820
  %v3882 = vunpack.c.l.b16 %v821
  %v3883 = vunpack.c.h.b16 %v821
  %v3884 = vunpack.c.l.b16 %v822
  %v3885 = vunpack.c.h.b16 %v822
  %v3886 = vunpack.c.l.b16 %v823
  %v3887 = vunpack.c.h.b16 %v823
  %v3888 = vunpack.c.l.b16 %v824
  %v3889 = vunpack.c.h.b16 %v824
  %v3890 = vunpack.c.l.b16 %v825
  %v3891 = vunpack.c.h.b16 %v825
  %v3892 = vunpack.c.l.b16 %v826
  %v3893 = vunpack.c.h.b16 %v826
  %v3894 = vunpack.c.l.b16 %v827
  %v3895 = vunpack.c.h.b16 %v827
  %v3896 = vunpack.c.l.b16 %v828
  %v3897 = vunpack.c.h.b16 %v828
  %v3898 = vunpack.c.l.b16 %v829
  %v3899 = vunpack.c.h.b16 %v829
  %v3900 = vunpack.c.l.b16 %v830
  %v3901 = vunpack.c.h.b16 %v830
  %v3902 = vunpack.c.l.b16 %v831
  %v3903 = vunpack.c.h.b16 %v831
  %v3904 = vunpack.c.l.b16 %v832
  %v3905 = vunpack.c.h.b16 %v832
  %v3906 = vunpack.c.l.b16 %v833
  %v3907 = vunpack.c.h.b16 %v833
  %v3908 = vunpack.c.l.b16 %v834
  %v3909 = vunpack.c.h.b16 %v834
  %v3910 = vunpack.c.l.b16 %v835
  %v3911 = vunpack.c.h.b16 %v835
  %v3912 = vunpack.c.l.b16 %v836
  %v3913 = vunpack.c.h.b16 %v836
  %v3914 = vunpack.c.l.b16 %v837
  %v3915 = vunpack.c.h.b16 %v837
  %v3916 = vunpack.c.l.b16 %v838
  %v3917 = vunpack.c.h.b16 %v838
  %v3918 = vunpack.c.l.b16 %v839
  %v3919 = vunpack.c.h.b16 %v839
  %v3920 = vunpack.c.l.b16 %v840
  %v3921 = vunpack.c.h.b16 %v840
  %v3922 = vunpack.c.l.b16 %v841
  %v3923 = vunpack.c.h.b16 %v841
  %v3924 = vunpack.c.l.b16 %v842
  %v3925 = vunpack.c.h.b16 %v842
  %v3926 = vunpack.c.l.b16 %v843
  %v3927 = vunpack.c.h.b16 %v843
  %v3928 = vunpack.c.l.b16 %v844
  %v3929 = vunpack.c.h.b16 %v844
  %v3930 = vunpack.c.l.b16 %v845
  %v3931 = vunpack.c.h.b16 %v845
  %v3932 = vunpack.c.l.b16 %v846
  %v3933 = vunpack.c.h.b16 %v846
  %v3934 = vunpack.c.l.b16 %v847
  %v3935 = vunpack.c.h.b16 %v847
  %v3936 = vunpack.c.l.b16 %v848
  %v3937 = vunpack.c.h.b16 %v848
  %v3938 = vunpack.c.l.b16 %v849
  %v3939 = vunpack.c.h.b16 %v849
  %v3940 = vunpack.c.l.b16 %v850
  %v3941 = vunpack.c.h.b16 %v850
  %v3942 = vunpack.c.l.b16 %v851
  %v3943 = vunpack.c.h.b16 %v851
  %v3944 = vunpack.c.l.b16 %v852
  %v3945 = vunpack.c.h.b16 %v852
  %v3946 = vunpack.c.l.b16 %v853
  %v3947 = vunpack.c.h.b16 %v853
  %v3948 = vunpack.c.l.b16 %v854
  %v3949 = vunpack.c.h.b16 %v854
  %v3950 = vunpack.c.l.b16 %v855
  %v3951 = vunpack.c.h.b16 %v855
  %v3952 = vunpack.c.l.b16 %v856
  %v3953 = vunpack.c.h.b16 %v856
  %v3954 = vunpack.c.l.b16 %v857
  %v3955 = vunpack.c.h.b16 %v857
  %v3956 = vunpack.c.l.b16 %v858
  %v3957 = vunpack.c.h.b16 %v858
  %v3958 = vunpack.c.l.b16 %v859
  %v3959 = vunpack.c.h.b16 %v859
  %v3960 = vunpack.c.l.b16 %v860
  %v3961 = vunpack.c.h.b16 %v860
  %v3962 = vunpack.c.l.b16 %v861
  %v3963 = vunpack.c.h.b16 %v861
  %v3964 = vunpack.c.l.b16 %v862
  %v3965 = vunpack.c.h.b16 %v862
  %v3966 = vunpack.c.l.b16 %v863
  %v3967 = vunpack.c.h.b16 %v863
  %v3968 = vunpack.c.l.b16 %v864
  %v3969 = vunpack.c.h.b16 %v864
  %v3970 = vunpack.c.l.b16 %v865
  %v3971 = vunpack.c.h.b16 %v865
  %v3972 = vunpack.c.l.b16 %v866
  %v3973 = vunpack.c.h.b16 %v866
  %v3974 = vunpack.c.l.b16 %v867
  %v3975 = vunpack.c.h.b16 %v867
  %v3976 = vunpack.c.l.b16 %v868
  %v3977 = vunpack.c.h.b16 %v868
  %v3978 = vunpack.c.l.b16 %v869
  %v3979 = vunpack.c.h.b16 %v869
  %v3980 = vunpack.c.l.b16 %v870
  %v3981 = vunpack.c.h.b16 %v870
  %v3982 = vunpack.c.l.b16 %v871
  %v3983 = vunpack.c.h.b16 %v871
  %v3984 = vunpack.c.l.b16 %v872
  %v3985 = vunpack.c.h.b16 %v872
  %v3986 = vunpack.c.l.b16 %v873
  %v3987 = vunpack.c.h.b16 %v873
  %v3988 = vunpack.c.l.b16 %v874
  %v3989 = vunpack.c.h.b16 %v874
  %v3990 = vunpack.c.l.b16 %v875
  %v3991 = vunpack.c.h.b16 %v875
  %v3992 = vunpack.c.l.b16 %v876
  %v3993 = vunpack.c.h.b16 %v876
  %v3994 = vunpack.c.l.b16 %v877
  %v3995 = vunpack.c.h.b16 %v877
  %v3996 = vunpack.c.l.b16 %v878
  %v3997 = vunpack.c.h.b16 %v878
  %v3998 = vunpack.c.l.b16 %v879
  %v3999 = vunpack.c.h.b16 %v879
  %v4000 = vunpack.c.l.b16 %v880
  %v4001 = vunpack.c.h.b16 %v880
  %v4002 = vunpack.c.l.b16 %v881
  %v4003 = vunpack.c.h.b16 %v881
  %v4004 = vunpack.c.l.b16 %v882
  %v4005 = vunpack.c.h.b16 %v882
  %v4006 = vunpack.c.l.b16 %v883
  %v4007 = vunpack.c.h.b16 %v883
  %v4008 = vunpack.c.l.b16 %v884
  %v4009 = vunpack.c.h.b16 %v884
  %v4010 = vunpack.c.l.b16 %v885
  %v4011 = vunpack.c.h.b16 %v885
  %v4012 = vunpack.c.l.b16 %v886
  %v4013 = vunpack.c.h.b16 %v886
  %v4014 = vunpack.c.l.b16 %v887
  %v4015 = vunpack.c.h.b16 %v887
  %v4016 = vunpack.c.l.b16 %v888
  %v4017 = vunpack.c.h.b16 %v888
  %v4018 = vunpack.c.l.b16 %v889
  %v4019 = vunpack.c.h.b16 %v889
  %v4020 = vunpack.c.l.b16 %v890
  %v4021 = vunpack.c.h.b16 %v890
  %v4022 = vunpack.c.l.b16 %v891
  %v4023 = vunpack.c.h.b16 %v891
  %v4024 = vunpack.c.l.b16 %v892
  %v4025 = vunpack.c.h.b16 %v892
  %v4026 = vunpack.c.l.b16 %v893
  %v4027 = vunpack.c.h.b16 %v893
  %v4028 = vunpack.c.l.b16 %v894
  %v4029 = vunpack.c.h.b16 %v894
  %v4030 = vunpack.c.l.b16 %v895
  %v4031 = vunpack.c.h.b16 %v895
  %v4032 = vunpack.c.l.b16 %v896
  %v4033 = vunpack.c.h.b16 %v896
  %v4034 = vunpack.c.l.b16 %v897
  %v4035 = vunpack.c.h.b16 %v897
  %v4036 = vunpack.c.l.b16 %v898
  %v4037 = vunpack.c.h.b16 %v898
  %v4038 = vunpack.c.l.b16 %v899
  %v4039 = vunpack.c.h.b16 %v899
  %v4040 = vunpack.c.l.b16 %v900
  %v4041 = vunpack.c.h.b16 %v900
  %v4042 = vunpack.c.l.b16 %v901
  %v4043 = vunpack.c.h.b16 %v901
  %v4044 = vunpack.c.l.b16 %v902
  %v4045 = vunpack.c.h.b16 %v902
  %v4046 = vunpack.c.l.b16 %v903
  %v4047 = vunpack.c.h.b16 %v903
  %v4048 = vunpack.c.l.b16 %v904
  %v4049 = vunpack.c.h.b16 %v904
  %v4050 = vunpack.c.l.b16 %v905
  %v4051 = vunpack.c.h.b16 %v905
  %v4052 = vunpack.c.l.b16 %v906
  %v4053 = vunpack.c.h.b16 %v906
  %v4054 = vunpack.c.l.b16 %v907
  %v4055 = vunpack.c.h.b16 %v907
  %v4056 = vunpack.c.l.b16 %v908
  %v4057 = vunpack.c.h.b16 %v908
  %v4058 = vunpack.c.l.b16 %v909
  %v4059 = vunpack.c.h.b16 %v909
  %v4060 = vunpack.c.l.b16 %v910
  %v4061 = vunpack.c.h.b16 %v910
  %v4062 = vunpack.c.l.b16 %v911
  %v4063 = vunpack.c.h.b16 %v911
  %v4064 = vunpack.c.l.b16 %v912
  %v4065 = vunpack.c.h.b16 %v912
  %v4066 = vunpack.c.l.b16 %v913
  %v4067 = vunpack.c.h.b16 %v913
  %v4068 = vunpack.c.l.b16 %v914
  %v4069 = vunpack.c.h.b16 %v914
  %v4070 = vunpack.c.l.b16 %v915
  %v4071 = vunpack.c.h.b16 %v915
  %v4072 = vunpack.c.l.b16 %v916
  %v4073 = vunpack.c.h.b16 %v916
  %v4074 = vunpack.c.l.b16 %v917
  %v4075 = vunpack.c.h.b16 %v917
  %v4076 = vunpack.c.l.b16 %v918
  %v4077 = vunpack.c.h.b16 %v918
  %v4078 = vunpack.c.l.b16 %v919
  %v4079 = vunpack.c.h.b16 %v919
  %v4080 = vunpack.c.l.b16 %v920
  %v4081 = vunpack.c.h.b16 %v920
  %v4082 = vunpack.c.l.b16 %v921
  %v4083 = vunpack.c.h.b16 %v921
  %v4084 = vunpack.c.l.b16 %v922
  %v4085 = vunpack.c.h.b16 %v922
  %v4086 = vunpack.c.l.b16 %v923
  %v4087 = vunpack.c.h.b16 %v923
  %v4088 = vunpack.c.l.b16 %v924
  %v4089 = vunpack.c.h.b16 %v924
  %v4090 = vunpack.c.l.b16 %v925
  %v4091 = vunpack.c.h.b16 %v925
  %v4092 = vunpack.c.l.b16 %v926
  %v4093 = vunpack.c.h.b16 %v926
  %v4094 = vunpack.c.l.b16 %v927
  %v4095 = vunpack.c.h.b16 %v927
  %v4096 = vunpack.c.l.b16 %v928
  %v4097 = vunpack.c.h.b16 %v928
  %v4098 = vunpack.c.l.b16 %v929
  %v4099 = vunpack.c.h.b16 %v929
  %v4100 = vunpack.c.l.b16 %v930
  %v4101 = vunpack.c.h.b16 %v930
  %v4102 = vunpack.c.l.b16 %v931
  %v4103 = vunpack.c.h.b16 %v931
  %v4104 = vunpack.c.l.b16 %v932
  %v4105 = vunpack.c.h.b16 %v932
  %v4106 = vunpack.c.l.b16 %v933
  %v4107 = vunpack.c.h.b16 %v933
  %v4108 = vunpack.c.l.b16 %v934
  %v4109 = vunpack.c.h.b16 %v934
  %v4110 = vunpack.c.l.b16 %v935
  %v4111 = vunpack.c.h.b16 %v935
  %v4112 = vunpack.c.l.b16 %v936
  %v4113 = vunpack.c.h.b16 %v936
  %v4114 = vunpack.c.l.b16 %v937
  %v4115 = vunpack.c.h.b16 %v937
  %v4116 = vunpack.c.l.b16 %v938
  %v4117 = vunpack.c.h.b16 %v938
  %v4118 = vunpack.c.l.b16 %v939
  %v4119 = vunpack.c.h.b16 %v939
  %v4120 = vunpack.c.l.b16 %v940
  %v4121 = vunpack.c.h.b16 %v940
  %v4122 = vunpack.c.l.b16 %v941
  %v4123 = vunpack.c.h.b16 %v941
  %v4124 = vunpack.c.l.b16 %v942
  %v4125 = vunpack.c.h.b16 %v942
  %v4126 = vunpack.c.l.b16 %v943
  %v4127 = vunpack.c.h.b16 %v943
  %v4128 = vunpack.c.l.b16 %v944
  %v4129 = vunpack.c.h.b16 %v944
  %v4130 = vunpack.c.l.b16 %v945
  %v4131 = vunpack.c.h.b16 %v945
  %v4132 = vunpack.c.l.b16 %v946
  %v4133 = vunpack.c.h.b16 %v946
  %v4134 = vunpack.c.l.b16 %v947
  %v4135 = vunpack.c.h.b16 %v947
  %v4136 = vunpack.c.l.b16 %v948
  %v4137 = vunpack.c.h.b16 %v948
  %v4138 = vunpack.c.l.b16 %v949
  %v4139 = vunpack.c.h.b16 %v949
  %v4140 = vunpack.c.l.b16 %v950
  %v4141 = vunpack.c.h.b16 %v950
  %v4142 = vunpack.c.l.b16 %v951
  %v4143 = vunpack.c.h.b16 %v951
  %v4144 = vunpack.c.l.b16 %v952
  %v4145 = vunpack.c.h.b16 %v952
  %v4146 = vunpack.c.l.b16 %v953
  %v4147 = vunpack.c.h.b16 %v953
  %v4148 = vunpack.c.l.b16 %v954
  %v4149 = vunpack.c.h.b16 %v954
  %v4150 = vunpack.c.l.b16 %v955
  %v4151 = vunpack.c.h.b16 %v955
  %v4152 = vunpack.c.l.b16 %v956
  %v4153 = vunpack.c.h.b16 %v956
  %v4154 = vunpack.c.l.b16 %v957
  %v4155 = vunpack.c.h.b16 %v957
  %v4156 = vunpack.c.l.b16 %v958
  %v4157 = vunpack.c.h.b16 %v958
  %v4158 = vunpack.c.l.b16 %v959
  %v4159 = vunpack.c.h.b16 %v959
  %v4160 = vunpack.c.l.b16 %v960
  %v4161 = vunpack.c.h.b16 %v960
  %v4162 = vunpack.c.l.b16 %v961
  %v4163 = vunpack.c.h.b16 %v961
  %v4164 = vunpack.c.l.b16 %v962
  %v4165 = vunpack.c.h.b16 %v962
  %v4166 = vunpack.c.l.b16 %v963
  %v4167 = vunpack.c.h.b16 %v963
  %v4168 = vunpack.c.l.b16 %v964
  %v4169 = vunpack.c.h.b16 %v964
  %v4170 = vunpack.c.l.b16 %v965
  %v4171 = vunpack.c.h.b16 %v965
  %v4172 = vunpack.c.l.b16 %v966
  %v4173 = vunpack.c.h.b16 %v966
  %v4174 = vunpack.c.l.b16 %v967
  %v4175 = vunpack.c.h.b16 %v967
  %v4176 = vunpack.c.l.b16 %v968
  %v4177 = vunpack.c.h.b16 %v968
  %v4178 = vunpack.c.l.b16 %v969
  %v4179 = vunpack.c.h.b16 %v969
  %v4180 = vunpack.c.l.b16 %v970
  %v4181 = vunpack.c.h.b16 %v970
  %v4182 = vunpack.c.l.b16 %v971
  %v4183 = vunpack.c.h.b16 %v971
  %v4184 = vunpack.c.l.b16 %v972
  %v4185 = vunpack.c.h.b16 %v972
  %v4186 = vunpack.c.l.b16 %v973
  %v4187 = vunpack.c.h.b16 %v973
  %v4188 = vunpack.c.l.b16 %v974
  %v4189 = vunpack.c.h.b16 %v974
  %v4190 = vunpack.c.l.b16 %v975
  %v4191 = vunpack.c.h.b16 %v975
  %v4192 = vunpack.c.l.b16 %v976
  %v4193 = vunpack.c.h.b16 %v976
  %v4194 = vunpack.c.l.b16 %v977
  %v4195 = vunpack.c.h.b16 %v977
  %v4196 = vunpack.c.l.b16 %v978
  %v4197 = vunpack.c.h.b16 %v978
  %v4198 = vunpack.c.l.b16 %v979
  %v4199 = vunpack.c.h.b16 %v979
  %v4200 = vunpack.c.l.b16 %v980
  %v4201 = vunpack.c.h.b16 %v980
  %v4202 = vunpack.c.l.b16 %v981
  %v4203 = vunpack.c.h.b16 %v981
  %v4204 = vunpack.c.l.b16 %v982
  %v4205 = vunpack.c.h.b16 %v982
  %v4206 = vunpack.c.l.b16 %v983
  %v4207 = vunpack.c.h.b16 %v983
  %v4208 = vunpack.c.l.b16 %v984
  %v4209 = vunpack.c.h.b16 %v984
  %v4210 = vunpack.c.l.b16 %v985
  %v4211 = vunpack.c.h.b16 %v985
  %v4212 = vunpack.c.l.b16 %v986
  %v4213 = vunpack.c.h.b16 %v986
  %v4214 = vunpack.c.l.b16 %v987
  %v4215 = vunpack.c.h.b16 %v987
  %v4216 = vunpack.c.l.b16 %v988
  %v4217 = vunpack.c.h.b16 %v988
  %v4218 = vunpack.c.l.b16 %v989
  %v4219 = vunpack.c.h.b16 %v989
  %v4220 = vunpack.c.l.b16 %v990
  %v4221 = vunpack.c.h.b16 %v990
  %v4222 = vunpack.c.l.b16 %v991
  %v4223 = vunpack.c.h.b16 %v991
  %v4224 = vunpack.c.l.b16 %v992
  %v4225 = vunpack.c.h.b16 %v992
  %v4226 = vunpack.c.l.b16 %v993
  %v4227 = vunpack.c.h.b16 %v993
  %v4228 = vunpack.c.l.b16 %v994
  %v4229 = vunpack.c.h.b16 %v994
  %v4230 = vunpack.c.l.b16 %v995
  %v4231 = vunpack.c.h.b16 %v995
  %v4232 = vunpack.c.l.b16 %v996
  %v4233 = vunpack.c.h.b16 %v996
  %v4234 = vunpack.c.l.b16 %v997
  %v4235 = vunpack.c.h.b16 %v997
  %v4236 = vunpack.c.l.b16 %v998
  %v4237 = vunpack.c.h.b16 %v998
  %v4238 = vunpack.c.l.b16 %v999
  %v4239 = vunpack.c.h.b16 %v999
  %v4240 = vunpack.c.l.b16 %v1000
  %v4241 = vunpack.c.h.b16 %v1000
  %v4242 = vunpack.c.l.b16 %v1001
  %v4243 = vunpack.c.h.b16 %v1001
  %v4244 = vunpack.c.l.b16 %v1002
  %v4245 = vunpack.c.h.b16 %v1002
  %v4246 = vunpack.c.l.b16 %v1003
  %v4247 = vunpack.c.h.b16 %v1003
  %v4248 = vunpack.c.l.b16 %v1004
  %v4249 = vunpack.c.h.b16 %v1004
  %v4250 = vunpack.c.l.b16 %v1005
  %v4251 = vunpack.c.h.b16 %v1005
  %v4252 = vunpack.c.l.b16 %v1006
  %v4253 = vunpack.c.h.b16 %v1006
  %v4254 = vunpack.c.l.b16 %v1007
  %v4255 = vunpack.c.h.b16 %v1007
  %v4256 = vunpack.c.l.b16 %v1008
  %v4257 = vunpack.c.h.b16 %v1008
  %v4258 = vunpack.c.l.b16 %v1009
  %v4259 = vunpack.c.h.b16 %v1009
  %v4260 = vunpack.c.l.b16 %v1010
  %v4261 = vunpack.c.h.b16 %v1010
  %v4262 = vunpack.c.l.b16 %v1011
  %v4263 = vunpack.c.h.b16 %v1011
  %v4264 = vunpack.c.l.b16 %v1012
  %v4265 = vunpack.c.h.b16 %v1012
  %v4266 = vunpack.c.l.b16 %v1013
  %v4267 = vunpack.c.h.b16 %v1013
  %v4268 = vunpack.c.l.b16 %v1014
  %v4269 = vunpack.c.h.b16 %v1014
  %v4270 = vunpack.c.l.b16 %v1015
  %v4271 = vunpack.c.h.b16 %v1015
  %v4272 = vunpack.c.l.b16 %v1016
  %v4273 = vunpack.c.h.b16 %v1016
  %v4274 = vunpack.c.l.b16 %v1017
  %v4275 = vunpack.c.h.b16 %v1017
  %v4276 = vunpack.c.l.b16 %v1018
  %v4277 = vunpack.c.h.b16 %v1018
  %v4278 = vunpack.c.l.b16 %v1019
  %v4279 = vunpack.c.h.b16 %v1019
  %v4280 = vunpack.c.l.b16 %v1020
  %v4281 = vunpack.c.h.b16 %v1020
  %v4282 = vunpack.c.l.b16 %v1021
  %v4283 = vunpack.c.h.b16 %v1021
  %v4284 = vunpack.c.l.b16 %v1022
  %v4285 = vunpack.c.h.b16 %v1022
  %v4286 = vunpack.c.l.b16 %v1023
  %v4287 = vunpack.c.h.b16 %v1023
  %v4288 = vunpack.c.l.b16 %v1024
  %v4289 = vunpack.c.h.b16 %v1024
  %v4290 = vunpack.c.l.b16 %v1025
  %v4291 = vunpack.c.h.b16 %v1025
  %v4292 = vunpack.c.l.b16 %v1026
  %v4293 = vunpack.c.h.b16 %v1026
  %v4294 = vunpack.c.l.b16 %v1027
  %v4295 = vunpack.c.h.b16 %v1027
  %v4296 = vunpack.c.l.b16 %v1028
  %v4297 = vunpack.c.h.b16 %v1028
  %v4298 = vunpack.c.l.b16 %v1029
  %v4299 = vunpack.c.h.b16 %v1029
  %v4300 = vunpack.c.l.b16 %v1030
  %v4301 = vunpack.c.h.b16 %v1030
  %v4302 = vunpack.c.l.b16 %v1031
  %v4303 = vunpack.c.h.b16 %v1031
  %v4304 = vunpack.c.l.b16 %v1032
  %v4305 = vunpack.c.h.b16 %v1032
  %v4306 = vunpack.c.l.b16 %v1033
  %v4307 = vunpack.c.h.b16 %v1033
  %v4308 = vunpack.c.l.b16 %v1034
  %v4309 = vunpack.c.h.b16 %v1034
  %v4310 = vunpack.c.l.b16 %v1035
  %v4311 = vunpack.c.h.b16 %v1035
  %v4312 = vunpack.c.l.b16 %v1036
  %v4313 = vunpack.c.h.b16 %v1036
  %v4314 = vunpack.c.l.b16 %v1037
  %v4315 = vunpack.c.h.b16 %v1037
  %v4316 = vunpack.c.l.b16 %v1038
  %v4317 = vunpack.c.h.b16 %v1038
  %v4318 = vunpack.c.l.b16 %v1039
  %v4319 = vunpack.c.h.b16 %v1039
  %v4320 = vunpack.c.l.b16 %v1040
  %v4321 = vunpack.c.h.b16 %v1040
  %v4322 = vunpack.c.l.b16 %v1041
  %v4323 = vunpack.c.h.b16 %v1041
  %v4324 = vunpack.c.l.b16 %v1042
  %v4325 = vunpack.c.h.b16 %v1042
  %v4326 = vunpack.c.l.b16 %v1043
  %v4327 = vunpack.c.h.b16 %v1043
  %v4328 = vunpack.c.l.b16 %v1044
  %v4329 = vunpack.c.h.b16 %v1044
  %v4330 = vunpack.c.l.b16 %v1045
  %v4331 = vunpack.c.h.b16 %v1045
  %v4332 = vunpack.c.l.b16 %v1046
  %v4333 = vunpack.c.h.b16 %v1046
  %v4334 = vunpack.c.l.b16 %v1047
  %v4335 = vunpack.c.h.b16 %v1047
  %v4336 = vunpack.c.l.b16 %v1048
  %v4337 = vunpack.c.h.b16 %v1048
  %v4338 = vunpack.c.l.b16 %v1049
  %v4339 = vunpack.c.h.b16 %v1049
  %v4340 = vunpack.c.l.b16 %v1050
  %v4341 = vunpack.c.h.b16 %v1050
  %v4342 = vunpack.c.l.b16 %v1051
  %v4343 = vunpack.c.h.b16 %v1051
  %v4344 = vunpack.c.l.b16 %v1052
  %v4345 = vunpack.c.h.b16 %v1052
  %v4346 = vunpack.c.l.b16 %v1053
  %v4347 = vunpack.c.h.b16 %v1053
  %v4348 = vunpack.c.l.b16 %v1054
  %v4349 = vunpack.c.h.b16 %v1054
  %v4350 = vunpack.c.l.b16 %v1055
  %v4351 = vunpack.c.h.b16 %v1055
  %v4352 = vunpack.c.l.b16 %v1056
  %v4353 = vunpack.c.h.b16 %v1056
  %v4354 = vunpack.c.l.b16 %v1057
  %v4355 = vunpack.c.h.b16 %v1057
  %v4356 = vunpack.c.l.b16 %v1058
  %v4357 = vunpack.c.h.b16 %v1058
  %v4358 = vunpack.c.l.b16 %v1059
  %v4359 = vunpack.c.h.b16 %v1059
  %v4360 = vunpack.c.l.b16 %v1060
  %v4361 = vunpack.c.h.b16 %v1060
  %v4362 = vunpack.c.l.b16 %v1061
  %v4363 = vunpack.c.h.b16 %v1061
  %v4364 = vunpack.c.l.b16 %v1062
  %v4365 = vunpack.c.h.b16 %v1062
  %v4366 = vunpack.c.l.b16 %v1063
  %v4367 = vunpack.c.h.b16 %v1063
  %v4368 = vunpack.c.l.b16 %v1064
  %v4369 = vunpack.c.h.b16 %v1064
  %v4370 = vunpack.c.l.b16 %v1065
  %v4371 = vunpack.c.h.b16 %v1065
  %v4372 = vunpack.c.l.b16 %v1066
  %v4373 = vunpack.c.h.b16 %v1066
  %v4374 = vunpack.c.l.b16 %v1067
  %v4375 = vunpack.c.h.b16 %v1067
  %v4376 = vunpack.c.l.b16 %v1068
  %v4377 = vunpack.c.h.b16 %v1068
  %v4378 = vunpack.c.l.b16 %v1069
  %v4379 = vunpack.c.h.b16 %v1069
  %v4380 = vunpack.c.l.b16 %v1070
  %v4381 = vunpack.c.h.b16 %v1070
  %v4382 = vunpack.c.l.b16 %v1071
  %v4383 = vunpack.c.h.b16 %v1071
  %v4384 = vunpack.c.l.b16 %v1072
  %v4385 = vunpack.c.h.b16 %v1072
  %v4386 = vunpack.c.l.b16 %v1073
  %v4387 = vunpack.c.h.b16 %v1073
  %v4388 = vunpack.c.l.b16 %v1074
  %v4389 = vunpack.c.h.b16 %v1074
  %v4390 = vunpack.c.l.b16 %v1075
  %v4391 = vunpack.c.h.b16 %v1075
  %v4392 = vunpack.c.l.b16 %v1076
  %v4393 = vunpack.c.h.b16 %v1076
  %v4394 = vunpack.c.l.b16 %v1077
  %v4395 = vunpack.c.h.b16 %v1077
  %v4396 = vunpack.c.l.b16 %v1078
  %v4397 = vunpack.c.h.b16 %v1078
  %v4398 = vunpack.c.l.b16 %v1079
  %v4399 = vunpack.c.h.b16 %v1079
  %v4400 = vunpack.c.l.b16 %v1080
  %v4401 = vunpack.c.h.b16 %v1080
  %v4402 = vunpack.c.l.b16 %v1081
  %v4403 = vunpack.c.h.b16 %v1081
  %v4404 = vunpack.c.l.b16 %v1082
  %v4405 = vunpack.c.h.b16 %v1082
  %v4406 = vunpack.c.l.b16 %v1083
  %v4407 = vunpack.c.h.b16 %v1083
  %v4408 = vunpack.c.l.b16 %v1084
  %v4409 = vunpack.c.h.b16 %v1084
  %v4410 = vunpack.c.l.b16 %v1085
  %v4411 = vunpack.c.h.b16 %v1085
  %v4412 = vunpack.c.l.b16 %v1086
  %v4413 = vunpack.c.h.b16 %v1086
  %v4414 = vunpack.c.l.b16 %v1087
  %v4415 = vunpack.c.h.b16 %v1087
  %v4416 = vunpack.c.l.b16 %v1088
  %v4417 = vunpack.c.h.b16 %v1088
  %v4418 = vunpack.c.l.b16 %v1089
  %v4419 = vunpack.c.h.b16 %v1089
  %v4420 = vunpack.c.l.b16 %v1090
  %v4421 = vunpack.c.h.b16 %v1090
  %v4422 = vunpack.c.l.b16 %v1091
  %v4423 = vunpack.c.h.b16 %v1091
  %v4424 = vunpack.c.l.b16 %v1092
  %v4425 = vunpack.c.h.b16 %v1092
  %v4426 = vunpack.c.l.b16 %v1093
  %v4427 = vunpack.c.h.b16 %v1093
  %v4428 = vunpack.c.l.b16 %v1094
  %v4429 = vunpack.c.h.b16 %v1094
  %v4430 = vunpack.c.l.b16 %v1095
  %v4431 = vunpack.c.h.b16 %v1095
  %v4432 = vunpack.c.l.b16 %v1096
  %v4433 = vunpack.c.h.b16 %v1096
  %v4434 = vunpack.c.l.b16 %v1097
  %v4435 = vunpack.c.h.b16 %v1097
  %v4436 = vunpack.c.l.b16 %v1098
  %v4437 = vunpack.c.h.b16 %v1098
  %v4438 = vunpack.c.l.b16 %v1099
  %v4439 = vunpack.c.h.b16 %v1099
  %v4440 = vunpack.c.l.b16 %v1100
  %v4441 = vunpack.c.h.b16 %v1100
  %v4442 = vunpack.c.l.b16 %v1101
  %v4443 = vunpack.c.h.b16 %v1101
  %v4444 = vunpack.c.l.b16 %v1102
  %v4445 = vunpack.c.h.b16 %v1102
  %v4446 = vunpack.c.l.b16 %v1103
  %v4447 = vunpack.c.h.b16 %v1103
  %v4448 = vpack.c.b16 %v2308, %v2304
  %v4449 = vpack.c.b16 %v2309, %v2305
  %v4450 = vpack.c.b16 %v2310, %v2306
  %v4451 = vpack.c.b16 %v2311, %v2307
  %v4452 = vpack.c.b16 %v2316, %v2312
  %v4453 = vpack.c.b16 %v2317, %v2313
  %v4454 = vpack.c.b16 %v2318, %v2314
  %v4455 = vpack.c.b16 %v2319, %v2315
  %v4456 = vpack.c.b16 %v2324, %v2320
  %v4457 = vpack.c.b16 %v2325, %v2321
  %v4458 = vpack.c.b16 %v2326, %v2322
  %v4459 = vpack.c.b16 %v2327, %v2323
  %v4460 = vpack.c.b16 %v2332, %v2328
  %v4461 = vpack.c.b16 %v2333, %v2329
  %v4462 = vpack.c.b16 %v2334, %v2330
  %v4463 = vpack.c.b16 %v2335, %v2331
  %v4464 = vpack.c.b16 %v2340, %v2336
  %v4465 = vpack.c.b16 %v2341, %v2337
  %v4466 = vpack.c.b16 %v2342, %v2338
  %v4467 = vpack.c.b16 %v2343, %v2339
  %v4468 = vpack.c.b16 %v2348, %v2344
  %v4469 = vpack.c.b16 %v2349, %v2345
  %v4470 = vpack.c.b16 %v2350, %v2346
  %v4471 = vpack.c.b16 %v2351, %v2347
  %v4472 = vpack.c.b16 %v2356, %v2352
  %v4473 = vpack.c.b16 %v2357, %v2353
  %v4474 = vpack.c.b16 %v2358, %v2354
  %v4475 = vpack.c.b16 %v2359, %v2355
  %v4476 = vpack.c.b16 %v2364, %v2360
  %v4477 = vpack.c.b16 %v2365, %v2361
  %v4478 = vpack.c.b16 %v2366, %v2362
  %v4479 = vpack.c.b16 %v2367, %v2363
  %v4480 = vpack.c.b16 %v2372, %v2368
  %v4481 = vpack.c.b16 %v2373, %v2369
  %v4482 = vpack.c.b16 %v2374, %v2370
  %v4483 = vpack.c.b16 %v2375, %v2371
  %v4484 = vpack.c.b16 %v2380, %v2376
  %v4485 = vpack.c.b16 %v2381, %v2377
  %v4486 = vpack.c.b16 %v2382, %v2378
  %v4487 = vpack.c.b16 %v2383, %v2379
  %v4488 = vpack.c.b16 %v2388, %v2384
  %v4489 = vpack.c.b16 %v2389, %v2385
  %v4490 = vpack.c.b16 %v2390, %v2386
  %v4491 = vpack.c.b16 %v2391, %v2387
  %v4492 = vpack.c.b16 %v2396, %v2392
  %v4493 = vpack.c.b16 %v2397, %v2393
  %v4494 = vpack.c.b16 %v2398, %v2394
  %v4495 = vpack.c.b16 %v2399, %v2395
  %v4496 = vpack.c.b16 %v2404, %v2400
  %v4497 = vpack.c.b16 %v2405, %v2401
  %v4498 = vpack.c.b16 %v2406, %v2402
  %v4499 = vpack.c.b16 %v2407, %v2403
  %v4500 = vpack.c.b16 %v2412, %v2408
  %v4501 = vpack.c.b16 %v2413, %v2409
  %v4502 = vpack.c.b16 %v2414, %v2410
  %v4503 = vpack.c.b16 %v2415, %v2411
  %v4504 = vpack.c.b16 %v2420, %v2416
  %v4505 = vpack.c.b16 %v2421, %v2417
  %v4506 = vpack.c.b16 %v2422, %v2418
  %v4507 = vpack.c.b16 %v2423, %v2419
  %v4508 = vpack.c.b16 %v2428, %v2424
  %v4509 = vpack.c.b16 %v2429, %v2425
  %v4510 = vpack.c.b16 %v2430, %v2426
  %v4511 = vpack.c.b16 %v2431, %v2427
  %v4512 = vpack.c.b16 %v2436, %v2432
  %v4513 = vpack.c.b16 %v2437, %v2433
  %v4514 = vpack.c.b16 %v2438, %v2434
  %v4515 = vpack.c.b16 %v2439, %v2435
  %v4516 = vpack.c.b16 %v2444, %v2440
  %v4517 = vpack.c.b16 %v2445, %v2441
  %v4518 = vpack.c.b16 %v2446, %v2442
  %v4519 = vpack.c.b16 %v2447, %v2443
  %v4520 = vpack.c.b16 %v2452, %v2448
  %v4521 = vpack.c.b16 %v2453, %v2449
  %v4522 = vpack.c.b16 %v2454, %v2450
  %v4523 = vpack.c.b16 %v2455, %v2451
  %v4524 = vpack.c.b16 %v2460, %v2456
  %v4525 = vpack.c.b16 %v2461, %v2457
  %v4526 = vpack.c.b16 %v2462, %v2458
  %v4527 = vpack.c.b16 %v2463, %v2459
  %v4528 = vpack.c.b16 %v2468, %v2464
  %v4529 = vpack.c.b16 %v2469, %v2465
  %v4530 = vpack.c.b16 %v2470, %v2466
  %v4531 = vpack.c.b16 %v2471, %v2467
  %v4532 = vpack.c.b16 %v2476, %v2472
  %v4533 = vpack.c.b16 %v2477, %v2473
  %v4534 = vpack.c.b16 %v2478, %v2474
  %v4535 = vpack.c.b16 %v2479, %v2475
  %v4536 = vpack.c.b16 %v2484, %v2480
  %v4537 = vpack.c.b16 %v2485, %v2481
  %v4538 = vpack.c.b16 %v2486, %v2482
  %v4539 = vpack.c.b16 %v2487, %v2483
  %v4540 = vpack.c.b16 %v2492, %v2488
  %v4541 = vpack.c.b16 %v2493, %v2489
  %v4542 = vpack.c.b16 %v2494, %v2490
  %v4543 = vpack.c.b16 %v2495, %v2491
  %v4544 = vpack.c.b16 %v2500, %v2496
  %v4545 = vpack.c.b16 %v2501, %v2497
  %v4546 = vpack.c.b16 %v2502, %v2498
  %v4547 = vpack.c.b16 %v2503, %v2499
  %v4548 = vpack.c.b16 %v2508, %v2504
  %v4549 = vpack.c.b16 %v2509, %v2505
  %v4550 = vpack.c.b16 %v2510, %v2506
  %v4551 = vpack.c.b16 %v2511, %v2507
  %v4552 = vpack.c.b16 %v2516, %v2512
  %v4553 = vpack.c.b16 %v2517, %v2513
  %v4554 = vpack.c.b16 %v2518, %v2514
  %v4555 = vpack.c.b16 %v2519, %v2515
  %v4556 = vpack.c.b16 %v2524, %v2520
  %v4557 = vpack.c.b16 %v2525, %v2521
  %v4558 = vpack.c.b16 %v2526, %v2522
  %v4559 = vpack.c.b16 %v2527, %v2523
  %v4560 = vpack.c.b16 %v2532, %v2528
  %v4561 = vpack.c.b16 %v2533, %v2529
  %v4562 = vpack.c.b16 %v2534, %v2530
  %v4563 = vpack.c.b16 %v2535, %v2531
  %v4564 = vpack.c.b16 %v2540, %v2536
  %v4565 = vpack.c.b16 %v2541, %v2537
  %v4566 = vpack.c.b16 %v2542, %v2538
  %v4567 = vpack.c.b16 %v2543, %v2539
  %v4568 = vpack.c.b16 %v2548, %v2544
  %v4569 = vpack.c.b16 %v2549, %v2545
  %v4570 = vpack.c.b16 %v2550, %v2546
  %v4571 = vpack.c.b16 %v2551, %v2547
  %v4572 = vpack.c.b16 %v2556, %v2552
  %v4573 = vpack.c.b16 %v2557, %v2553
  %v4574 = vpack.c.b16 %v2558, %v2554
  %v4575 = vpack.c.b16 %v2559, %v2555
  %v4576 = vpack.c.b16 %v2564, %v2560
  %v4577 = vpack.c.b16 %v2565, %v2561
  %v4578 = vpack.c.b16 %v2566, %v2562
  %v4579 = vpack.c.b16 %v2567, %v2563
  %v4580 = vpack.c.b16 %v2572, %v2568
  %v4581 = vpack.c.b16 %v2573, %v2569
  %v4582 = vpack.c.b16 %v2574, %v2570
  %v4583 = vpack.c.b16 %v2575, %v2571
  %v4584 = vpack.c.b16 %v2580, %v2576
  %v4585 = vpack.c.b16 %v2581, %v2577
  %v4586 = vpack.c.b16 %v2582, %v2578
  %v4587 = vpack.c.b16 %v2583, %v2579
  %v4588 = vpack.c.b16 %v2588, %v2584
  %v4589 = vpack.c.b16 %v2589, %v2585
  %v4590 = vpack.c.b16 %v2590, %v2586
  %v4591 = vpack.c.b16 %v2591, %v2587
  %v4592 = vpack.c.b16 %v2596, %v2592
  %v4593 = vpack.c.b16 %v2597, %v2593
  %v4594 = vpack.c.b16 %v2598, %v2594
  %v4595 = vpack.c.b16 %v2599, %v2595
  %v4596 = vpack.c.b16 %v2604, %v2600
  %v4597 = vpack.c.b16 %v2605, %v2601
  %v4598 = vpack.c.b16 %v2606, %v2602
  %v4599 = vpack.c.b16 %v2607, %v2603
  %v4600 = vpack.c.b16 %v2612, %v2608
  %v4601 = vpack.c.b16 %v2613, %v2609
  %v4602 = vpack.c.b16 %v2614, %v2610
  %v4603 = vpack.c.b16 %v2615, %v2611
  %v4604 = vpack.c.b16 %v2620, %v2616
  %v4605 = vpack.c.b16 %v2621, %v2617
  %v4606 = vpack.c.b16 %v2622, %v2618
  %v4607 = vpack.c.b16 %v2623, %v2619
  %v4608 = vpack.c.b16 %v2628, %v2624
  %v4609 = vpack.c.b16 %v2629, %v2625
  %v4610 = vpack.c.b16 %v2630, %v2626
  %v4611 = vpack.c.b16 %v2631, %v2627
  %v4612 = vpack.c.b16 %v2636, %v2632
  %v4613 = vpack.c.b16 %v2637, %v2633
  %v4614 = vpack.c.b16 %v2638, %v2634
  %v4615 = vpack.c.b16 %v2639, %v2635
  %v4616 = vpack.c.b16 %v2644, %v2640
  %v4617 = vpack.c.b16 %v2645, %v2641
  %v4618 = vpack.c.b16 %v2646, %v2642
  %v4619 = vpack.c.b16 %v2647, %v2643
  %v4620 = vpack.c.b16 %v2652, %v2648
  %v4621 = vpack.c.b16 %v2653, %v2649
  %v4622 = vpack.c.b16 %v2654, %v2650
  %v4623 = vpack.c.b16 %v2655, %v2651
  %v4624 = vpack.c.b16 %v2660, %v2656
  %v4625 = vpack.c.b16 %v2661, %v2657
  %v4626 = vpack.c.b16 %v2662, %v2658
  %v4627 = vpack.c.b16 %v2663, %v2659
  %v4628 = vpack.c.b16 %v2668, %v2664
  %v4629 = vpack.c.b16 %v2669, %v2665
  %v4630 = vpack.c.b16 %v2670, %v2666
  %v4631 = vpack.c.b16 %v2671, %v2667
  %v4632 = vpack.c.b16 %v2676, %v2672
  %v4633 = vpack.c.b16 %v2677, %v2673
  %v4634 = vpack.c.b16 %v2678, %v2674
  %v4635 = vpack.c.b16 %v2679, %v2675
  %v4636 = vpack.c.b16 %v2684, %v2680
  %v4637 = vpack.c.b16 %v2685, %v2681
  %v4638 = vpack.c.b16 %v2686, %v2682
  %v4639 = vpack.c.b16 %v2687, %v2683
  %v4640 = vpack.c.b16 %v2692, %v2688
  %v4641 = vpack.c.b16 %v2693, %v2689
  %v4642 = vpack.c.b16 %v2694, %v2690
  %v4643 = vpack.c.b16 %v2695, %v2691
  %v4644 = vpack.c.b16 %v2700, %v2696
  %v4645 = vpack.c.b16 %v2701, %v2697
  %v4646 = vpack.c.b16 %v2702, %v2698
  %v4647 = vpack.c.b16 %v2703, %v2699
  %v4648 = vpack.c.b16 %v2708, %v2704
  %v4649 = vpack.c.b16 %v2709, %v2705
  %v4650 = vpack.c.b16 %v2710, %v2706
  %v4651 = vpack.c.b16 %v2711, %v2707
  %v4652 = vpack.c.b16 %v2716, %v2712
  %v4653 = vpack.c.b16 %v2717, %v2713
  %v4654 = vpack.c.b16 %v2718, %v2714
  %v4655 = vpack.c.b16 %v2719, %v2715
  %v4656 = vpack.c.b16 %v2724, %v2720
  %v4657 = vpack.c.b16 %v2725, %v2721
  %v4658 = vpack.c.b16 %v2726, %v2722
  %v4659 = vpack.c.b16 %v2727, %v2723
  %v4660 = vpack.c.b16 %v2732, %v2728
  %v4661 = vpack.c.b16 %v2733, %v2729
  %v4662 = vpack.c.b16 %v2734, %v2730
  %v4663 = vpack.c.b16 %v2735, %v2731
  %v4664 = vpack.c.b16 %v2740, %v2736
  %v4665 = vpack.c.b16 %v2741, %v2737
  %v4666 = vpack.c.b16 %v2742, %v2738
  %v4667 = vpack.c.b16 %v2743, %v2739
  %v4668 = vpack.c.b16 %v2748, %v2744
  %v4669 = vpack.c.b16 %v2749, %v2745
  %v4670 = vpack.c.b16 %v2750, %v2746
  %v4671 = vpack.c.b16 %v2751, %v2747
  %v4672 = vpack.c.b16 %v2756, %v2752
  %v4673 = vpack.c.b16 %v2757, %v2753
  %v4674 = vpack.c.b16 %v2758, %v2754
  %v4675 = vpack.c.b16 %v2759, %v2755
  %v4676 = vpack.c.b16 %v2764, %v2760
  %v4677 = vpack.c.b16 %v2765, %v2761
  %v4678 = vpack.c.b16 %v2766, %v2762
  %v4679 = vpack.c.b16 %v2767, %v2763
  %v4680 = vpack.c.b16 %v2772, %v2768
  %v4681 = vpack.c.b16 %v2773, %v2769
  %v4682 = vpack.c.b16 %v2774, %v2770
  %v4683 = vpack.c.b16 %v2775, %v2771
  %v4684 = vpack.c.b16 %v2780, %v2776
  %v4685 = vpack.c.b16 %v2781, %v2777
  %v4686 = vpack.c.b16 %v2782, %v2778
  %v4687 = vpack.c.b16 %v2783, %v2779
  %v4688 = vpack.c.b16 %v2788, %v2784
  %v4689 = vpack.c.b16 %v2789, %v2785
  %v4690 = vpack.c.b16 %v2790, %v2786
  %v4691 = vpack.c.b16 %v2791, %v2787
  %v4692 = vpack.c.b16 %v2796, %v2792
  %v4693 = vpack.c.b16 %v2797, %v2793
  %v4694 = vpack.c.b16 %v2798, %v2794
  %v4695 = vpack.c.b16 %v2799, %v2795
  %v4696 = vpack.c.b16 %v2804, %v2800
  %v4697 = vpack.c.b16 %v2805, %v2801
  %v4698 = vpack.c.b16 %v2806, %v2802
  %v4699 = vpack.c.b16 %v2807, %v2803
  %v4700 = vpack.c.b16 %v2812, %v2808
  %v4701 = vpack.c.b16 %v2813, %v2809
  %v4702 = vpack.c.b16 %v2814, %v2810
  %v4703 = vpack.c.b16 %v2815, %v2811
  %v4704 = vpack.c.b16 %v2820, %v2816
  %v4705 = vpack.c.b16 %v2821, %v2817
  %v4706 = vpack.c.b16 %v2822, %v2818
  %v4707 = vpack.c.b16 %v2823, %v2819
  %v4708 = vpack.c.b16 %v2828, %v2824
  %v4709 = vpack.c.b16 %v2829, %v2825
  %v4710 = vpack.c.b16 %v2830, %v2826
  %v4711 = vpack.c.b16 %v2831, %v2827
  %v4712 = vpack.c.b16 %v2836, %v2832
  %v4713 = vpack.c.b16 %v2837, %v2833
  %v4714 = vpack.c.b16 %v2838, %v2834
  %v4715 = vpack.c.b16 %v2839, %v2835
  %v4716 = vpack.c.b16 %v2844, %v2840
  %v4717 = vpack.c.b16 %v2845, %v2841
  %v4718 = vpack.c.b16 %v2846, %v2842
  %v4719 = vpack.c.b16 %v2847, %v2843
  %v4720 = vpack.c.b16 %v2852, %v2848
  %v4721 = vpack.c.b16 %v2853, %v2849
  %v4722 = vpack.c.b16 %v2854, %v2850
  %v4723 = vpack.c.b16 %v2855, %v2851
  %v4724 = vpack.c.b16 %v2860, %v2856
  %v4725 = vpack.c.b16 %v2861, %v2857
  %v4726 = vpack.c.b16 %v2862, %v2858
  %v4727 = vpack.c.b16 %v2863, %v2859
  %v4728 = vpack.c.b16 %v2868, %v2864
  %v4729 = vpack.c.b16 %v2869, %v2865
  %v4730 = vpack.c.b16 %v2870, %v2866
  %v4731 = vpack.c.b16 %v2871, %v2867
  %v4732 = vpack.c.b16 %v2876, %v2872
  %v4733 = vpack.c.b16 %v2877, %v2873
  %v4734 = vpack.c.b16 %v2878, %v2874
  %v4735 = vpack.c.b16 %v2879, %v2875
  %v4736 = vpack.c.b16 %v2884, %v2880
  %v4737 = vpack.c.b16 %v2885, %v2881
  %v4738 = vpack.c.b16 %v2886, %v2882
  %v4739 = vpack.c.b16 %v2887, %v2883
  %v4740 = vpack.c.b16 %v2892, %v2888
  %v4741 = vpack.c.b16 %v2893, %v2889
  %v4742 = vpack.c.b16 %v2894, %v2890
  %v4743 = vpack.c.b16 %v2895, %v2891
  %v4744 = vpack.c.b16 %v2900, %v2896
  %v4745 = vpack.c.b16 %v2901, %v2897
  %v4746 = vpack.c.b16 %v2902, %v2898
  %v4747 = vpack.c.b16 %v2903, %v2899
  %v4748 = vpack.c.b16 %v2908, %v2904
  %v4749 = vpack.c.b16 %v2909, %v2905
  %v4750 = vpack.c.b16 %v2910, %v2906
  %v4751 = vpack.c.b16 %v2911, %v2907
  %v4752 = vpack.c.b16 %v2916, %v2912
  %v4753 = vpack.c.b16 %v2917, %v2913
  %v4754 = vpack.c.b16 %v2918, %v2914
  %v4755 = vpack.c.b16 %v2919, %v2915
  %v4756 = vpack.c.b16 %v2924, %v2920
  %v4757 = vpack.c.b16 %v2925, %v2921
  %v4758 = vpack.c.b16 %v2926, %v2922
  %v4759 = vpack.c.b16 %v2927, %v2923
  %v4760 = vpack.c.b16 %v2932, %v2928
  %v4761 = vpack.c.b16 %v2933, %v2929
  %v4762 = vpack.c.b16 %v2934, %v2930
  %v4763 = vpack.c.b16 %v2935, %v2931
  %v4764 = vpack.c.b16 %v2940, %v2936
  %v4765 = vpack.c.b16 %v2941, %v2937
  %v4766 = vpack.c.b16 %v2942, %v2938
  %v4767 = vpack.c.b16 %v2943, %v2939
  %v4768 = vpack.c.b16 %v2948, %v2944
  %v4769 = vpack.c.b16 %v2949, %v2945
  %v4770 = vpack.c.b16 %v2950, %v2946
  %v4771 = vpack.c.b16 %v2951, %v2947
  %v4772 = vpack.c.b16 %v2956, %v2952
  %v4773 = vpack.c.b16 %v2957, %v2953
  %v4774 = vpack.c.b16 %v2958, %v2954
  %v4775 = vpack.c.b16 %v2959, %v2955
  %v4776 = vpack.c.b16 %v2964, %v2960
  %v4777 = vpack.c.b16 %v2965, %v2961
  %v4778 = vpack.c.b16 %v2966, %v2962
  %v4779 = vpack.c.b16 %v2967, %v2963
  %v4780 = vpack.c.b16 %v2972, %v2968
  %v4781 = vpack.c.b16 %v2973, %v2969
  %v4782 = vpack.c.b16 %v2974, %v2970
  %v4783 = vpack.c.b16 %v2975, %v2971
  %v4784 = vpack.c.b16 %v2980, %v2976
  %v4785 = vpack.c.b16 %v2981, %v2977
  %v4786 = vpack.c.b16 %v2982, %v2978
  %v4787 = vpack.c.b16 %v2983, %v2979
  %v4788 = vpack.c.b16 %v2988, %v2984
  %v4789 = vpack.c.b16 %v2989, %v2985
  %v4790 = vpack.c.b16 %v2990, %v2986
  %v4791 = vpack.c.b16 %v2991, %v2987
  %v4792 = vpack.c.b16 %v2996, %v2992
  %v4793 = vpack.c.b16 %v2997, %v2993
  %v4794 = vpack.c.b16 %v2998, %v2994
  %v4795 = vpack.c.b16 %v2999, %v2995
  %v4796 = vpack.c.b16 %v3004, %v3000
  %v4797 = vpack.c.b16 %v3005, %v3001
  %v4798 = vpack.c.b16 %v3006, %v3002
  %v4799 = vpack.c.b16 %v3007, %v3003
  %v4800 = vpack.c.b16 %v3012, %v3008
  %v4801 = vpack.c.b16 %v3013, %v3009
  %v4802 = vpack.c.b16 %v3014, %v3010
  %v4803 = vpack.c.b16 %v3015, %v3011
  %v4804 = vpack.c.b16 %v3020, %v3016
  %v4805 = vpack.c.b16 %v3021, %v3017
  %v4806 = vpack.c.b16 %v3022, %v3018
  %v4807 = vpack.c.b16 %v3023, %v3019
  %v4808 = vpack.c.b16 %v3028, %v3024
  %v4809 = vpack.c.b16 %v3029, %v3025
  %v4810 = vpack.c.b16 %v3030, %v3026
  %v4811 = vpack.c.b16 %v3031, %v3027
  %v4812 = vpack.c.b16 %v3036, %v3032
  %v4813 = vpack.c.b16 %v3037, %v3033
  %v4814 = vpack.c.b16 %v3038, %v3034
  %v4815 = vpack.c.b16 %v3039, %v3035
  %v4816 = vpack.c.b16 %v3044, %v3040
  %v4817 = vpack.c.b16 %v3045, %v3041
  %v4818 = vpack.c.b16 %v3046, %v3042
  %v4819 = vpack.c.b16 %v3047, %v3043
  %v4820 = vpack.c.b16 %v3052, %v3048
  %v4821 = vpack.c.b16 %v3053, %v3049
  %v4822 = vpack.c.b16 %v3054, %v3050
  %v4823 = vpack.c.b16 %v3055, %v3051
  %v4824 = vpack.c.b16 %v3060, %v3056
  %v4825 = vpack.c.b16 %v3061, %v3057
  %v4826 = vpack.c.b16 %v3062, %v3058
  %v4827 = vpack.c.b16 %v3063, %v3059
  %v4828 = vpack.c.b16 %v3068, %v3064
  %v4829 = vpack.c.b16 %v3069, %v3065
  %v4830 = vpack.c.b16 %v3070, %v3066
  %v4831 = vpack.c.b16 %v3071, %v3067
  %v4832 = vpack.c.b16 %v3076, %v3072
  %v4833 = vpack.c.b16 %v3077, %v3073
  %v4834 = vpack.c.b16 %v3078, %v3074
  %v4835 = vpack.c.b16 %v3079, %v3075
  %v4836 = vpack.c.b16 %v3084, %v3080
  %v4837 = vpack.c.b16 %v3085, %v3081
  %v4838 = vpack.c.b16 %v3086, %v3082
  %v4839 = vpack.c.b16 %v3087, %v3083
  %v4840 = vpack.c.b16 %v3092, %v3088
  %v4841 = vpack.c.b16 %v3093, %v3089
  %v4842 = vpack.c.b16 %v3094, %v3090
  %v4843 = vpack.c.b16 %v3095, %v3091
  %v4844 = vpack.c.b16 %v3100, %v3096
  %v4845 = vpack.c.b16 %v3101, %v3097
  %v4846 = vpack.c.b16 %v3102, %v3098
  %v4847 = vpack.c.b16 %v3103, %v3099
  %v4848 = vpack.c.b16 %v3108, %v3104
  %v4849 = vpack.c.b16 %v3109, %v3105
  %v4850 = vpack.c.b16 %v3110, %v3106
  %v4851 = vpack.c.b16 %v3111, %v3107
  %v4852 = vpack.c.b16 %v3116, %v3112
  %v4853 = vpack.c.b16 %v3117, %v3113
  %v4854 = vpack.c.b16 %v3118, %v3114
  %v4855 = vpack.c.b16 %v3119, %v3115
  %v4856 = vpack.c.b16 %v3124, %v3120
  %v4857 = vpack.c.b16 %v3125, %v3121
  %v4858 = vpack.c.b16 %v3126, %v3122
  %v4859 = vpack.c.b16 %v3127, %v3123
  %v4860 = vpack.c.b16 %v3132, %v3128
  %v4861 = vpack.c.b16 %v3133, %v3129
  %v4862 = vpack.c.b16 %v3134, %v3130
  %v4863 = vpack.c.b16 %v3135, %v3131
  %v4864 = vpack.c.b16 %v3140, %v3136
  %v4865 = vpack.c.b16 %v3141, %v3137
  %v4866 = vpack.c.b16 %v3142, %v3138
  %v4867 = vpack.c.b16 %v3143, %v3139
  %v4868 = vpack.c.b16 %v3148, %v3144
  %v4869 = vpack.c.b16 %v3149, %v3145
  %v4870 = vpack.c.b16 %v3150, %v3146
  %v4871 = vpack.c.b16 %v3151, %v3147
  %v4872 = vpack.c.b16 %v3156, %v3152
  %v4873 = vpack.c.b16 %v3157, %v3153
  %v4874 = vpack.c.b16 %v3158, %v3154
  %v4875 = vpack.c.b16 %v3159, %v3155
  %v4876 = vpack.c.b16 %v3164, %v3160
  %v4877 = vpack.c.b16 %v3165, %v3161
  %v4878 = vpack.c.b16 %v3166, %v3162
  %v4879 = vpack.c.b16 %v3167, %v3163
  %v4880 = vpack.c.b16 %v3172, %v3168
  %v4881 = vpack.c.b16 %v3173, %v3169
  %v4882 = vpack.c.b16 %v3174, %v3170
  %v4883 = vpack.c.b16 %v3175, %v3171
  %v4884 = vpack.c.b16 %v3180, %v3176
  %v4885 = vpack.c.b16 %v3181, %v3177
  %v4886 = vpack.c.b16 %v3182, %v3178
  %v4887 = vpack.c.b16 %v3183, %v3179
  %v4888 = vpack.c.b16 %v3188, %v3184
  %v4889 = vpack.c.b16 %v3189, %v3185
  %v4890 = vpack.c.b16 %v3190, %v3186
  %v4891 = vpack.c.b16 %v3191, %v3187
  %v4892 = vpack.c.b16 %v3196, %v3192
  %v4893 = vpack.c.b16 %v3197, %v3193
  %v4894 = vpack.c.b16 %v3198, %v3194
  %v4895 = vpack.c.b16 %v3199, %v3195
  %v4896 = vpack.c.b16 %v3204, %v3200
  %v4897 = vpack.c.b16 %v3205, %v3201
  %v4898 = vpack.c.b16 %v3206, %v3202
  %v4899 = vpack.c.b16 %v3207, %v3203
  %v4900 = vpack.c.b16 %v3212, %v3208
  %v4901 = vpack.c.b16 %v3213, %v3209
  %v4902 = vpack.c.b16 %v3214, %v3210
  %v4903 = vpack.c.b16 %v3215, %v3211
  %v4904 = vpack.c.b16 %v3220, %v3216
  %v4905 = vpack.c.b16 %v3221, %v3217
  %v4906 = vpack.c.b16 %v3222, %v3218
  %v4907 = vpack.c.b16 %v3223, %v3219
  %v4908 = vpack.c.b16 %v3228, %v3224
  %v4909 = vpack.c.b16 %v3229, %v3225
  %v4910 = vpack.c.b16 %v3230, %v3226
  %v4911 = vpack.c.b16 %v3231, %v3227
  %v4912 = vpack.c.b16 %v3236, %v3232
  %v4913 = vpack.c.b16 %v3237, %v3233
  %v4914 = vpack.c.b16 %v3238, %v3234
  %v4915 = vpack.c.b16 %v3239, %v3235
  %v4916 = vpack.c.b16 %v3244, %v3240
  %v4917 = vpack.c.b16 %v3245, %v3241
  %v4918 = vpack.c.b16 %v3246, %v3242
  %v4919 = vpack.c.b16 %v3247, %v3243
  %v4920 = vpack.c.b16 %v3252, %v3248
  %v4921 = vpack.c.b16 %v3253, %v3249
  %v4922 = vpack.c.b16 %v3254, %v3250
  %v4923 = vpack.c.b16 %v3255, %v3251
  %v4924 = vpack.c.b16 %v3260, %v3256
  %v4925 = vpack.c.b16 %v3261, %v3257
  %v4926 = vpack.c.b16 %v3262, %v3258
  %v4927 = vpack.c.b16 %v3263, %v3259
  %v4928 = vpack.c.b16 %v3268, %v3264
  %v4929 = vpack.c.b16 %v3269, %v3265
  %v4930 = vpack.c.b16 %v3270, %v3266
  %v4931 = vpack.c.b16 %v3271, %v3267
  %v4932 = vpack.c.b16 %v3276, %v3272
  %v4933 = vpack.c.b16 %v3277, %v3273
  %v4934 = vpack.c.b16 %v3278, %v3274
  %v4935 = vpack.c.b16 %v3279, %v3275
  %v4936 = vpack.c.b16 %v3284, %v3280
  %v4937 = vpack.c.b16 %v3285, %v3281
  %v4938 = vpack.c.b16 %v3286, %v3282
  %v4939 = vpack.c.b16 %v3287, %v3283
  %v4940 = vpack.c.b16 %v3292, %v3288
  %v4941 = vpack.c.b16 %v3293, %v3289
  %v4942 = vpack.c.b16 %v3294, %v3290
  %v4943 = vpack.c.b16 %v3295, %v3291
  %v4944 = vpack.c.b16 %v3300, %v3296
  %v4945 = vpack.c.b16 %v3301, %v3297
  %v4946 = vpack.c.b16 %v3302, %v3298
  %v4947 = vpack.c.b16 %v3303, %v3299
  %v4948 = vpack.c.b16 %v3308, %v3304
  %v4949 = vpack.c.b16 %v3309, %v3305
  %v4950 = vpack.c.b16 %v3310, %v3306
  %v4951 = vpack.c.b16 %v3311, %v3307
  %v4952 = vpack.c.b16 %v3316, %v3312
  %v4953 = vpack.c.b16 %v3317, %v3313
  %v4954 = vpack.c.b16 %v3318, %v3314
  %v4955 = vpack.c.b16 %v3319, %v3315
  %v4956 = vpack.c.b16 %v3324, %v3320
  %v4957 = vpack.c.b16 %v3325, %v3321
  %v4958 = vpack.c.b16 %v3326, %v3322
  %v4959 = vpack.c.b16 %v3327, %v3323
  %v4960 = vpack.c.b16 %v3332, %v3328
  %v4961 = vpack.c.b16 %v3333, %v3329
  %v4962 = vpack.c.b16 %v3334, %v3330
  %v4963 = vpack.c.b16 %v3335, %v3331
  %v4964 = vpack.c.b16 %v3340, %v3336
  %v4965 = vpack.c.b16 %v3341, %v3337
  %v4966 = vpack.c.b16 %v3342, %v3338
  %v4967 = vpack.c.b16 %v3343, %v3339
  %v4968 = vpack.c.b16 %v3348, %v3344
  %v4969 = vpack.c.b16 %v3349, %v3345
  %v4970 = vpack.c.b16 %v3350, %v3346
  %v4971 = vpack.c.b16 %v3351, %v3347
  %v4972 = vpack.c.b16 %v3356, %v3352
  %v4973 = vpack.c.b16 %v3357, %v3353
  %v4974 = vpack.c.b16 %v3358, %v3354
  %v4975 = vpack.c.b16 %v3359, %v3355
  %v4976 = vpack.c.b16 %v3364, %v3360
  %v4977 = vpack.c.b16 %v3365, %v3361
  %v4978 = vpack.c.b16 %v3366, %v3362
  %v4979 = vpack.c.b16 %v3367, %v3363
  %v4980 = vpack.c.b16 %v3372, %v3368
  %v4981 = vpack.c.b16 %v3373, %v3369
  %v4982 = vpack.c.b16 %v3374, %v3370
  %v4983 = vpack.c.b16 %v3375, %v3371
  %v4984 = vpack.c.b16 %v3380, %v3376
  %v4985 = vpack.c.b16 %v3381, %v3377
  %v4986 = vpack.c.b16 %v3382, %v3378
  %v4987 = vpack.c.b16 %v3383, %v3379
  %v4988 = vpack.c.b16 %v3388, %v3384
  %v4989 = vpack.c.b16 %v3389, %v3385
  %v4990 = vpack.c.b16 %v3390, %v3386
  %v4991 = vpack.c.b16 %v3391, %v3387
  %v4992 = vpack.c.b16 %v3396, %v3392
  %v4993 = vpack.c.b16 %v3397, %v3393
  %v4994 = vpack.c.b16 %v3398, %v3394
  %v4995 = vpack.c.b16 %v3399, %v3395
  %v4996 = vpack.c.b16 %v3404, %v3400
  %v4997 = vpack.c.b16 %v3405, %v3401
  %v4998 = vpack.c.b16 %v3406, %v3402
  %v4999 = vpack.c.b16 %v3407, %v3403
  %v5000 = vpack.c.b16 %v3412, %v3408
  %v5001 = vpack.c.b16 %v3413, %v3409
  %v5002 = vpack.c.b16 %v3414, %v3410
  %v5003 = vpack.c.b16 %v3415, %v3411
  %v5004 = vpack.c.b16 %v3420, %v3416
  %v5005 = vpack.c.b16 %v3421, %v3417
  %v5006 = vpack.c.b16 %v3422, %v3418
  %v5007 = vpack.c.b16 %v3423, %v3419
  %v5008 = vpack.c.b16 %v3428, %v3424
  %v5009 = vpack.c.b16 %v3429, %v3425
  %v5010 = vpack.c.b16 %v3430, %v3426
  %v5011 = vpack.c.b16 %v3431, %v3427
  %v5012 = vpack.c.b16 %v3436, %v3432
  %v5013 = vpack.c.b16 %v3437, %v3433
  %v5014 = vpack.c.b16 %v3438, %v3434
  %v5015 = vpack.c.b16 %v3439, %v3435
  %v5016 = vpack.c.b16 %v3444, %v3440
  %v5017 = vpack.c.b16 %v3445, %v3441
  %v5018 = vpack.c.b16 %v3446, %v3442
  %v5019 = vpack.c.b16 %v3447, %v3443
  %v5020 = vpack.c.b16 %v3452, %v3448
  %v5021 = vpack.c.b16 %v3453, %v3449
  %v5022 = vpack.c.b16 %v3454, %v3450
  %v5023 = vpack.c.b16 %v3455, %v3451
  %v5024 = vpack.c.b16 %v3460, %v3456
  %v5025 = vpack.c.b16 %v3461, %v3457
  %v5026 = vpack.c.b16 %v3462, %v3458
  %v5027 = vpack.c.b16 %v3463, %v3459
  %v5028 = vpack.c.b16 %v3468, %v3464
  %v5029 = vpack.c.b16 %v3469, %v3465
  %v5030 = vpack.c.b16 %v3470, %v3466
  %v5031 = vpack.c.b16 %v3471, %v3467
  %v5032 = vpack.c.b16 %v3476, %v3472
  %v5033 = vpack.c.b16 %v3477, %v3473
  %v5034 = vpack.c.b16 %v3478, %v3474
  %v5035 = vpack.c.b16 %v3479, %v3475
  %v5036 = vpack.c.b16 %v3484, %v3480
  %v5037 = vpack.c.b16 %v3485, %v3481
  %v5038 = vpack.c.b16 %v3486, %v3482
  %v5039 = vpack.c.b16 %v3487, %v3483
  %v5040 = vpack.c.b16 %v3492, %v3488
  %v5041 = vpack.c.b16 %v3493, %v3489
  %v5042 = vpack.c.b16 %v3494, %v3490
  %v5043 = vpack.c.b16 %v3495, %v3491
  %v5044 = vpack.c.b16 %v3500, %v3496
  %v5045 = vpack.c.b16 %v3501, %v3497
  %v5046 = vpack.c.b16 %v3502, %v3498
  %v5047 = vpack.c.b16 %v3503, %v3499
  %v5048 = vpack.c.b16 %v3508, %v3504
  %v5049 = vpack.c.b16 %v3509, %v3505
  %v5050 = vpack.c.b16 %v3510, %v3506
  %v5051 = vpack.c.b16 %v3511, %v3507
  %v5052 = vpack.c.b16 %v3516, %v3512
  %v5053 = vpack.c.b16 %v3517, %v3513
  %v5054 = vpack.c.b16 %v3518, %v3514
  %v5055 = vpack.c.b16 %v3519, %v3515
  %v5056 = vpack.c.b16 %v3524, %v3520
  %v5057 = vpack.c.b16 %v3525, %v3521
  %v5058 = vpack.c.b16 %v3526, %v3522
  %v5059 = vpack.c.b16 %v3527, %v3523
  %v5060 = vpack.c.b16 %v3532, %v3528
  %v5061 = vpack.c.b16 %v3533, %v3529
  %v5062 = vpack.c.b16 %v3534, %v3530
  %v5063 = vpack.c.b16 %v3535, %v3531
  %v5064 = vpack.c.b16 %v3540, %v3536
  %v5065 = vpack.c.b16 %v3541, %v3537
  %v5066 = vpack.c.b16 %v3542, %v3538
  %v5067 = vpack.c.b16 %v3543, %v3539
  %v5068 = vpack.c.b16 %v3548, %v3544
  %v5069 = vpack.c.b16 %v3549, %v3545
  %v5070 = vpack.c.b16 %v3550, %v3546
  %v5071 = vpack.c.b16 %v3551, %v3547
  %v5072 = vpack.c.b16 %v3556, %v3552
  %v5073 = vpack.c.b16 %v3557, %v3553
  %v5074 = vpack.c.b16 %v3558, %v3554
  %v5075 = vpack.c.b16 %v3559, %v3555
  %v5076 = vpack.c.b16 %v3564, %v3560
  %v5077 = vpack.c.b16 %v3565, %v3561
  %v5078 = vpack.c.b16 %v3566, %v3562
  %v5079 = vpack.c.b16 %v3567, %v3563
  %v5080 = vpack.c.b16 %v3572, %v3568
  %v5081 = vpack.c.b16 %v3573, %v3569
  %v5082 = vpack.c.b16 %v3574, %v3570
  %v5083 = vpack.c.b16 %v3575, %v3571
  %v5084 = vpack.c.b16 %v3580, %v3576
  %v5085 = vpack.c.b16 %v3581, %v3577
  %v5086 = vpack.c.b16 %v3582, %v3578
  %v5087 = vpack.c.b16 %v3583, %v3579
  %v5088 = vpack.c.b16 %v3588, %v3584
  %v5089 = vpack.c.b16 %v3589, %v3585
  %v5090 = vpack.c.b16 %v3590, %v3586
  %v5091 = vpack.c.b16 %v3591, %v3587
  %v5092 = vpack.c.b16 %v3596, %v3592
  %v5093 = vpack.c.b16 %v3597, %v3593
  %v5094 = vpack.c.b16 %v3598, %v3594
  %v5095 = vpack.c.b16 %v3599, %v3595
  %v5096 = vpack.c.b16 %v3604, %v3600
  %v5097 = vpack.c.b16 %v3605, %v3601
  %v5098 = vpack.c.b16 %v3606, %v3602
  %v5099 = vpack.c.b16 %v3607, %v3603
  %v5100 = vpack.c.b16 %v3612, %v3608
  %v5101 = vpack.c.b16 %v3613, %v3609
  %v5102 = vpack.c.b16 %v3614, %v3610
  %v5103 = vpack.c.b16 %v3615, %v3611
  %v5104 = vpack.c.b16 %v3620, %v3616
  %v5105 = vpack.c.b16 %v3621, %v3617
  %v5106 = vpack.c.b16 %v3622, %v3618
  %v5107 = vpack.c.b16 %v3623, %v3619
  %v5108 = vpack.c.b16 %v3628, %v3624
  %v5109 = vpack.c.b16 %v3629, %v3625
  %v5110 = vpack.c.b16 %v3630, %v3626
  %v5111 = vpack.c.b16 %v3631, %v3627
  %v5112 = vpack.c.b16 %v3636, %v3632
  %v5113 = vpack.c.b16 %v3637, %v3633
  %v5114 = vpack.c.b16 %v3638, %v3634
  %v5115 = vpack.c.b16 %v3639, %v3635
  %v5116 = vpack.c.b16 %v3644, %v3640
  %v5117 = vpack.c.b16 %v3645, %v3641
  %v5118 = vpack.c.b16 %v3646, %v3642
  %v5119 = vpack.c.b16 %v3647, %v3643
  %v5120 = vpack.c.b16 %v3652, %v3648
  %v5121 = vpack.c.b16 %v3653, %v3649
  %v5122 = vpack.c.b16 %v3654, %v3650
  %v5123 = vpack.c.b16 %v3655, %v3651
  %v5124 = vpack.c.b16 %v3660, %v3656
  %v5125 = vpack.c.b16 %v3661, %v3657
  %v5126 = vpack.c.b16 %v3662, %v3658
  %v5127 = vpack.c.b16 %v3663, %v3659
  %v5128 = vpack.c.b16 %v3668, %v3664
  %v5129 = vpack.c.b16 %v3669, %v3665
  %v5130 = vpack.c.b16 %v3670, %v3666
  %v5131 = vpack.c.b16 %v3671, %v3667
  %v5132 = vpack.c.b16 %v3676, %v3672
  %v5133 = vpack.c.b16 %v3677, %v3673
  %v5134 = vpack.c.b16 %v3678, %v3674
  %v5135 = vpack.c.b16 %v3679, %v3675
  %v5136 = vpack.c.b16 %v3684, %v3680
  %v5137 = vpack.c.b16 %v3685, %v3681
  %v5138 = vpack.c.b16 %v3686, %v3682
  %v5139 = vpack.c.b16 %v3687, %v3683
  %v5140 = vpack.c.b16 %v3692, %v3688
  %v5141 = vpack.c.b16 %v3693, %v3689
  %v5142 = vpack.c.b16 %v3694, %v3690
  %v5143 = vpack.c.b16 %v3695, %v3691
  %v5144 = vpack.c.b16 %v3700, %v3696
  %v5145 = vpack.c.b16 %v3701, %v3697
  %v5146 = vpack.c.b16 %v3702, %v3698
  %v5147 = vpack.c.b16 %v3703, %v3699
  %v5148 = vpack.c.b16 %v3708, %v3704
  %v5149 = vpack.c.b16 %v3709, %v3705
  %v5150 = vpack.c.b16 %v3710, %v3706
  %v5151 = vpack.c.b16 %v3711, %v3707
  %v5152 = vpack.c.b16 %v3716, %v3712
  %v5153 = vpack.c.b16 %v3717, %v3713
  %v5154 = vpack.c.b16 %v3718, %v3714
  %v5155 = vpack.c.b16 %v3719, %v3715
  %v5156 = vpack.c.b16 %v3724, %v3720
  %v5157 = vpack.c.b16 %v3725, %v3721
  %v5158 = vpack.c.b16 %v3726, %v3722
  %v5159 = vpack.c.b16 %v3727, %v3723
  %v5160 = vpack.c.b16 %v3732, %v3728
  %v5161 = vpack.c.b16 %v3733, %v3729
  %v5162 = vpack.c.b16 %v3734, %v3730
  %v5163 = vpack.c.b16 %v3735, %v3731
  %v5164 = vpack.c.b16 %v3740, %v3736
  %v5165 = vpack.c.b16 %v3741, %v3737
  %v5166 = vpack.c.b16 %v3742, %v3738
  %v5167 = vpack.c.b16 %v3743, %v3739
  %v5168 = vpack.c.b16 %v3748, %v3744
  %v5169 = vpack.c.b16 %v3749, %v3745
  %v5170 = vpack.c.b16 %v3750, %v3746
  %v5171 = vpack.c.b16 %v3751, %v3747
  %v5172 = vpack.c.b16 %v3756, %v3752
  %v5173 = vpack.c.b16 %v3757, %v3753
  %v5174 = vpack.c.b16 %v3758, %v3754
  %v5175 = vpack.c.b16 %v3759, %v3755
  %v5176 = vpack.c.b16 %v3764, %v3760
  %v5177 = vpack.c.b16 %v3765, %v3761
  %v5178 = vpack.c.b16 %v3766, %v3762
  %v5179 = vpack.c.b16 %v3767, %v3763
  %v5180 = vpack.c.b16 %v3772, %v3768
  %v5181 = vpack.c.b16 %v3773, %v3769
  %v5182 = vpack.c.b16 %v3774, %v3770
  %v5183 = vpack.c.b16 %v3775, %v3771
  %v5184 = vpack.c.b16 %v3780, %v3776
  %v5185 = vpack.c.b16 %v3781, %v3777
  %v5186 = vpack.c.b16 %v3782, %v3778
  %v5187 = vpack.c.b16 %v3783, %v3779
  %v5188 = vpack.c.b16 %v3788, %v3784
  %v5189 = vpack.c.b16 %v3789, %v3785
  %v5190 = vpack.c.b16 %v3790, %v3786
  %v5191 = vpack.c.b16 %v3791, %v3787
  %v5192 = vpack.c.b16 %v3796, %v3792
  %v5193 = vpack.c.b16 %v3797, %v3793
  %v5194 = vpack.c.b16 %v3798, %v3794
  %v5195 = vpack.c.b16 %v3799, %v3795
  %v5196 = vpack.c.b16 %v3804, %v3800
  %v5197 = vpack.c.b16 %v3805, %v3801
  %v5198 = vpack.c.b16 %v3806, %v3802
  %v5199 = vpack.c.b16 %v3807, %v3803
  %v5200 = vpack.c.b16 %v3812, %v3808
  %v5201 = vpack.c.b16 %v3813, %v3809
  %v5202 = vpack.c.b16 %v3814, %v3810
  %v5203 = vpack.c.b16 %v3815, %v3811
  %v5204 = vpack.c.b16 %v3820, %v3816
  %v5205 = vpack.c.b16 %v3821, %v3817
  %v5206 = vpack.c.b16 %v3822, %v3818
  %v5207 = vpack.c.b16 %v3823, %v3819
  %v5208 = vpack.c.b16 %v3828, %v3824
  %v5209 = vpack.c.b16 %v3829, %v3825
  %v5210 = vpack.c.b16 %v3830, %v3826
  %v5211 = vpack.c.b16 %v3831, %v3827
  %v5212 = vpack.c.b16 %v3836, %v3832
  %v5213 = vpack.c.b16 %v3837, %v3833
  %v5214 = vpack.c.b16 %v3838, %v3834
  %v5215 = vpack.c.b16 %v3839, %v3835
  %v5216 = vpack.c.b16 %v3844, %v3840
  %v5217 = vpack.c.b16 %v3845, %v3841
  %v5218 = vpack.c.b16 %v3846, %v3842
  %v5219 = vpack.c.b16 %v3847, %v3843
  %v5220 = vpack.c.b16 %v3852, %v3848
  %v5221 = vpack.c.b16 %v3853, %v3849
  %v5222 = vpack.c.b16 %v3854, %v3850
  %v5223 = vpack.c.b16 %v3855, %v3851
  %v5224 = vpack.c.b16 %v3860, %v3856
  %v5225 = vpack.c.b16 %v3861, %v3857
  %v5226 = vpack.c.b16 %v3862, %v3858
  %v5227 = vpack.c.b16 %v3863, %v3859
  %v5228 = vpack.c.b16 %v3868, %v3864
  %v5229 = vpack.c.b16 %v3869, %v3865
  %v5230 = vpack.c.b16 %v3870, %v3866
  %v5231 = vpack.c.b16 %v3871, %v3867
  %v5232 = vpack.c.b16 %v3876, %v3872
  %v5233 = vpack.c.b16 %v3877, %v3873
  %v5234 = vpack.c.b16 %v3878, %v3874
  %v5235 = vpack.c.b16 %v3879, %v3875
  %v5236 = vpack.c.b16 %v3884, %v3880
  %v5237 = vpack.c.b16 %v3885, %v3881
  %v5238 = vpack.c.b16 %v3886, %v3882
  %v5239 = vpack.c.b16 %v3887, %v3883
  %v5240 = vpack.c.b16 %v3892, %v3888
  %v5241 = vpack.c.b16 %v3893, %v3889
  %v5242 = vpack.c.b16 %v3894, %v3890
  %v5243 = vpack.c.b16 %v3895, %v3891
  %v5244 = vpack.c.b16 %v3900, %v3896
  %v5245 = vpack.c.b16 %v3901, %v3897
  %v5246 = vpack.c.b16 %v3902, %v3898
  %v5247 = vpack.c.b16 %v3903, %v3899
  %v5248 = vpack.c.b16 %v3908, %v3904
  %v5249 = vpack.c.b16 %v3909, %v3905
  %v5250 = vpack.c.b16 %v3910, %v3906
  %v5251 = vpack.c.b16 %v3911, %v3907
  %v5252 = vpack.c.b16 %v3916, %v3912
  %v5253 = vpack.c.b16 %v3917, %v3913
  %v5254 = vpack.c.b16 %v3918, %v3914
  %v5255 = vpack.c.b16 %v3919, %v3915
  %v5256 = vpack.c.b16 %v3924, %v3920
  %v5257 = vpack.c.b16 %v3925, %v3921
  %v5258 = vpack.c.b16 %v3926, %v3922
  %v5259 = vpack.c.b16 %v3927, %v3923
  %v5260 = vpack.c.b16 %v3932, %v3928
  %v5261 = vpack.c.b16 %v3933, %v3929
  %v5262 = vpack.c.b16 %v3934, %v3930
  %v5263 = vpack.c.b16 %v3935, %v3931
  %v5264 = vpack.c.b16 %v3940, %v3936
  %v5265 = vpack.c.b16 %v3941, %v3937
  %v5266 = vpack.c.b16 %v3942, %v3938
  %v5267 = vpack.c.b16 %v3943, %v3939
  %v5268 = vpack.c.b16 %v3948, %v3944
  %v5269 = vpack.c.b16 %v3949, %v3945
  %v5270 = vpack.c.b16 %v3950, %v3946
  %v5271 = vpack.c.b16 %v3951, %v3947
  %v5272 = vpack.c.b16 %v3956, %v3952
  %v5273 = vpack.c.b16 %v3957, %v3953
  %v5274 = vpack.c.b16 %v3958, %v3954
  %v5275 = vpack.c.b16 %v3959, %v3955
  %v5276 = vpack.c.b16 %v3964, %v3960
  %v5277 = vpack.c.b16 %v3965, %v3961
  %v5278 = vpack.c.b16 %v3966, %v3962
  %v5279 = vpack.c.b16 %v3967, %v3963
  %v5280 = vpack.c.b16 %v3972, %v3968
  %v5281 = vpack.c.b16 %v3973, %v3969
  %v5282 = vpack.c.b16 %v3974, %v3970
  %v5283 = vpack.c.b16 %v3975, %v3971
  %v5284 = vpack.c.b16 %v3980, %v3976
  %v5285 = vpack.c.b16 %v3981, %v3977
  %v5286 = vpack.c.b16 %v3982, %v3978
  %v5287 = vpack.c.b16 %v3983, %v3979
  %v5288 = vpack.c.b16 %v3988, %v3984
  %v5289 = vpack.c.b16 %v3989, %v3985
  %v5290 = vpack.c.b16 %v3990, %v3986
  %v5291 = vpack.c.b16 %v3991, %v3987
  %v5292 = vpack.c.b16 %v3996, %v3992
  %v5293 = vpack.c.b16 %v3997, %v3993
  %v5294 = vpack.c.b16 %v3998, %v3994
  %v5295 = vpack.c.b16 %v3999, %v3995
  %v5296 = vpack.c.b16 %v4004, %v4000
  %v5297 = vpack.c.b16 %v4005, %v4001
  %v5298 = vpack.c.b16 %v4006, %v4002
  %v5299 = vpack.c.b16 %v4007, %v4003
  %v5300 = vpack.c.b16 %v4012, %v4008
  %v5301 = vpack.c.b16 %v4013, %v4009
  %v5302 = vpack.c.b16 %v4014, %v4010
  %v5303 = vpack.c.b16 %v4015, %v4011
  %v5304 = vpack.c.b16 %v4020, %v4016
  %v5305 = vpack.c.b16 %v4021, %v4017
  %v5306 = vpack.c.b16 %v4022, %v4018
  %v5307 = vpack.c.b16 %v4023, %v4019
  %v5308 = vpack.c.b16 %v4028, %v4024
  %v5309 = vpack.c.b16 %v4029, %v4025
  %v5310 = vpack.c.b16 %v4030, %v4026
  %v5311 = vpack.c.b16 %v4031, %v4027
  %v5312 = vpack.c.b16 %v4036, %v4032
  %v5313 = vpack.c.b16 %v4037, %v4033
  %v5314 = vpack.c.b16 %v4038, %v4034
  %v5315 = vpack.c.b16 %v4039, %v4035
  %v5316 = vpack.c.b16 %v4044, %v4040
  %v5317 = vpack.c.b16 %v4045, %v4041
  %v5318 = vpack.c.b16 %v4046, %v4042
  %v5319 = vpack.c.b16 %v4047, %v4043
  %v5320 = vpack.c.b16 %v4052, %v4048
  %v5321 = vpack.c.b16 %v4053, %v4049
  %v5322 = vpack.c.b16 %v4054, %v4050
  %v5323 = vpack.c.b16 %v4055, %v4051
  %v5324 = vpack.c.b16 %v4060, %v4056
  %v5325 = vpack.c.b16 %v4061, %v4057
  %v5326 = vpack.c.b16 %v4062, %v4058
  %v5327 = vpack.c.b16 %v4063, %v4059
  %v5328 = vpack.c.b16 %v4068, %v4064
  %v5329 = vpack.c.b16 %v4069, %v4065
  %v5330 = vpack.c.b16 %v4070, %v4066
  %v5331 = vpack.c.b16 %v4071, %v4067
  %v5332 = vpack.c.b16 %v4076, %v4072
  %v5333 = vpack.c.b16 %v4077, %v4073
  %v5334 = vpack.c.b16 %v4078, %v4074
  %v5335 = vpack.c.b16 %v4079, %v4075
  %v5336 = vpack.c.b16 %v4084, %v4080
  %v5337 = vpack.c.b16 %v4085, %v4081
  %v5338 = vpack.c.b16 %v4086, %v4082
  %v5339 = vpack.c.b16 %v4087, %v4083
  %v5340 = vpack.c.b16 %v4092, %v4088
  %v5341 = vpack.c.b16 %v4093, %v4089
  %v5342 = vpack.c.b16 %v4094, %v4090
  %v5343 = vpack.c.b16 %v4095, %v4091
  %v5344 = vpack.c.b16 %v4100, %v4096
  %v5345 = vpack.c.b16 %v4101, %v4097
  %v5346 = vpack.c.b16 %v4102, %v4098
  %v5347 = vpack.c.b16 %v4103, %v4099
  %v5348 = vpack.c.b16 %v4108, %v4104
  %v5349 = vpack.c.b16 %v4109, %v4105
  %v5350 = vpack.c.b16 %v4110, %v4106
  %v5351 = vpack.c.b16 %v4111, %v4107
  %v5352 = vpack.c.b16 %v4116, %v4112
  %v5353 = vpack.c.b16 %v4117, %v4113
  %v5354 = vpack.c.b16 %v4118, %v4114
  %v5355 = vpack.c.b16 %v4119, %v4115
  %v5356 = vpack.c.b16 %v4124, %v4120
  %v5357 = vpack.c.b16 %v4125, %v4121
  %v5358 = vpack.c.b16 %v4126, %v4122
  %v5359 = vpack.c.b16 %v4127, %v4123
  %v5360 = vpack.c.b16 %v4132, %v4128
  %v5361 = vpack.c.b16 %v4133, %v4129
  %v5362 = vpack.c.b16 %v4134, %v4130
  %v5363 = vpack.c.b16 %v4135, %v4131
  %v5364 = vpack.c.b16 %v4140, %v4136
  %v5365 = vpack.c.b16 %v4141, %v4137
  %v5366 = vpack.c.b16 %v4142, %v4138
  %v5367 = vpack.c.b16 %v4143, %v4139
  %v5368 = vpack.c.b16 %v4148, %v4144
  %v5369 = vpack.c.b16 %v4149, %v4145
  %v5370 = vpack.c.b16 %v4150, %v4146
  %v5371 = vpack.c.b16 %v4151, %v4147
  %v5372 = vpack.c.b16 %v4156, %v4152
  %v5373 = vpack.c.b16 %v4157, %v4153
  %v5374 = vpack.c.b16 %v4158, %v4154
  %v5375 = vpack.c.b16 %v4159, %v4155
  %v5376 = vpack.c.b16 %v4164, %v4160
  %v5377 = vpack.c.b16 %v4165, %v4161
  %v5378 = vpack.c.b16 %v4166, %v4162
  %v5379 = vpack.c.b16 %v4167, %v4163
  %v5380 = vpack.c.b16 %v4172, %v4168
  %v5381 = vpack.c.b16 %v4173, %v4169
  %v5382 = vpack.c.b16 %v4174, %v4170
  %v5383 = vpack.c.b16 %v4175, %v4171
  %v5384 = vpack.c.b16 %v4180, %v4176
  %v5385 = vpack.c.b16 %v4181, %v4177
  %v5386 = vpack.c.b16 %v4182, %v4178
  %v5387 = vpack.c.b16 %v4183, %v4179
  %v5388 = vpack.c.b16 %v4188, %v4184
  %v5389 = vpack.c.b16 %v4189, %v4185
  %v5390 = vpack.c.b16 %v4190, %v4186
  %v5391 = vpack.c.b16 %v4191, %v4187
  %v5392 = vpack.c.b16 %v4196, %v4192
  %v5393 = vpack.c.b16 %v4197, %v4193
  %v5394 = vpack.c.b16 %v4198, %v4194
  %v5395 = vpack.c.b16 %v4199, %v4195
  %v5396 = vpack.c.b16 %v4204, %v4200
  %v5397 = vpack.c.b16 %v4205, %v4201
  %v5398 = vpack.c.b16 %v4206, %v4202
  %v5399 = vpack.c.b16 %v4207, %v4203
  %v5400 = vpack.c.b16 %v4212, %v4208
  %v5401 = vpack.c.b16 %v4213, %v4209
  %v5402 = vpack.c.b16 %v4214, %v4210
  %v5403 = vpack.c.b16 %v4215, %v4211
  %v5404 = vpack.c.b16 %v4220, %v4216
  %v5405 = vpack.c.b16 %v4221, %v4217
  %v5406 = vpack.c.b16 %v4222, %v4218
  %v5407 = vpack.c.b16 %v4223, %v4219
  %v5408 = vpack.c.b16 %v4228, %v4224
  %v5409 = vpack.c.b16 %v4229, %v4225
  %v5410 = vpack.c.b16 %v4230, %v4226
  %v5411 = vpack.c.b16 %v4231, %v4227
  %v5412 = vpack.c.b16 %v4236, %v4232
  %v5413 = vpack.c.b16 %v4237, %v4233
  %v5414 = vpack.c.b16 %v4238, %v4234
  %v5415 = vpack.c.b16 %v4239, %v4235
  %v5416 = vpack.c.b16 %v4244, %v4240
  %v5417 = vpack.c.b16 %v4245, %v4241
  %v5418 = vpack.c.b16 %v4246, %v4242
  %v5419 = vpack.c.b16 %v4247, %v4243
  %v5420 = vpack.c.b16 %v4252, %v4248
  %v5421 = vpack.c.b16 %v4253, %v4249
  %v5422 = vpack.c.b16 %v4254, %v4250
  %v5423 = vpack.c.b16 %v4255, %v4251
  %v5424 = vpack.c.b16 %v4260, %v4256
  %v5425 = vpack.c.b16 %v4261, %v4257
  %v5426 = vpack.c.b16 %v4262, %v4258
  %v5427 = vpack.c.b16 %v4263, %v4259
  %v5428 = vpack.c.b16 %v4268, %v4264
  %v5429 = vpack.c.b16 %v4269, %v4265
  %v5430 = vpack.c.b16 %v4270, %v4266
  %v5431 = vpack.c.b16 %v4271, %v4267
  %v5432 = vpack.c.b16 %v4276, %v4272
  %v5433 = vpack.c.b16 %v4277, %v4273
  %v5434 = vpack.c.b16 %v4278, %v4274
  %v5435 = vpack.c.b16 %v4279, %v4275
  %v5436 = vpack.c.b16 %v4284, %v4280
  %v5437 = vpack.c.b16 %v4285, %v4281
  %v5438 = vpack.c.b16 %v4286, %v4282
  %v5439 = vpack.c.b16 %v4287, %v4283
  %v5440 = vpack.c.b16 %v4292, %v4288
  %v5441 = vpack.c.b16 %v4293, %v4289
  %v5442 = vpack.c.b16 %v4294, %v4290
  %v5443 = vpack.c.b16 %v4295, %v4291
  %v5444 = vpack.c.b16 %v4300, %v4296
  %v5445 = vpack.c.b16 %v4301, %v4297
  %v5446 = vpack.c.b16 %v4302, %v4298
  %v5447 = vpack.c.b16 %v4303, %v4299
  %v5448 = vpack.c.b16 %v4308, %v4304
  %v5449 = vpack.c.b16 %v4309, %v4305
  %v5450 = vpack.c.b16 %v4310, %v4306
  %v5451 = vpack.c.b16 %v4311, %v4307
  %v5452 = vpack.c.b16 %v4316, %v4312
  %v5453 = vpack.c.b16 %v4317, %v4313
  %v5454 = vpack.c.b16 %v4318, %v4314
  %v5455 = vpack.c.b16 %v4319, %v4315
  %v5456 = vpack.c.b16 %v4324, %v4320
  %v5457 = vpack.c.b16 %v4325, %v4321
  %v5458 = vpack.c.b16 %v4326, %v4322
  %v5459 = vpack.c.b16 %v4327, %v4323
  %v5460 = vpack.c.b16 %v4332, %v4328
  %v5461 = vpack.c.b16 %v4333, %v4329
  %v5462 = vpack.c.b16 %v4334, %v4330
  %v5463 = vpack.c.b16 %v4335, %v4331
  %v5464 = vpack.c.b16 %v4340, %v4336
  %v5465 = vpack.c.b16 %v4341, %v4337
  %v5466 = vpack.c.b16 %v4342, %v4338
  %v5467 = vpack.c.b16 %v4343, %v4339
  %v5468 = vpack.c.b16 %v4348, %v4344
  %v5469 = vpack.c.b16 %v4349, %v4345
  %v5470 = vpack.c.b16 %v4350, %v4346
  %v5471 = vpack.c.b16 %v4351, %v4347
  %v5472 = vpack.c.b16 %v4356, %v4352
  %v5473 = vpack.c.b16 %v4357, %v4353
  %v5474 = vpack.c.b16 %v4358, %v4354
  %v5475 = vpack.c.b16 %v4359, %v4355
  %v5476 = vpack.c.b16 %v4364, %v4360
  %v5477 = vpack.c.b16 %v4365, %v4361
  %v5478 = vpack.c.b16 %v4366, %v4362
  %v5479 = vpack.c.b16 %v4367, %v4363
  %v5480 = vpack.c.b16 %v4372, %v4368
  %v5481 = vpack.c.b16 %v4373, %v4369
  %v5482 = vpack.c.b16 %v4374, %v4370
  %v5483 = vpack.c.b16 %v4375, %v4371
  %v5484 = vpack.c.b16 %v4380, %v4376
  %v5485 = vpack.c.b16 %v4381, %v4377
  %v5486 = vpack.c.b16 %v4382, %v4378
  %v5487 = vpack.c.b16 %v4383, %v4379
  %v5488 = vpack.c.b16 %v4388, %v4384
  %v5489 = vpack.c.b16 %v4389, %v4385
  %v5490 = vpack.c.b16 %v4390, %v4386
  %v5491 = vpack.c.b16 %v4391, %v4387
  %v5492 = vpack.c.b16 %v4396, %v4392
  %v5493 = vpack.c.b16 %v4397, %v4393
  %v5494 = vpack.c.b16 %v4398, %v4394
  %v5495 = vpack.c.b16 %v4399, %v4395
  %v5496 = vpack.c.b16 %v4404, %v4400
  %v5497 = vpack.c.b16 %v4405, %v4401
  %v5498 = vpack.c.b16 %v4406, %v4402
  %v5499 = vpack.c.b16 %v4407, %v4403
  %v5500 = vpack.c.b16 %v4412, %v4408
  %v5501 = vpack.c.b16 %v4413, %v4409
  %v5502 = vpack.c.b16 %v4414, %v4410
  %v5503 = vpack.c.b16 %v4415, %v4411
  %v5504 = vpack.c.b16 %v4420, %v4416
  %v5505 = vpack.c.b16 %v4421, %v4417
  %v5506 = vpack.c.b16 %v4422, %v4418
  %v5507 = vpack.c.b16 %v4423, %v4419
  %v5508 = vpack.c.b16 %v4428, %v4424
  %v5509 = vpack.c.b16 %v4429, %v4425
  %v5510 = vpack.c.b16 %v4430, %v4426
  %v5511 = vpack.c.b16 %v4431, %v4427
  %v5512 = vpack.c.b16 %v4436, %v4432
  %v5513 = vpack.c.b16 %v4437, %v4433
  %v5514 = vpack.c.b16 %v4438, %v4434
  %v5515 = vpack.c.b16 %v4439, %v4435
  %v5516 = vpack.c.b16 %v4444, %v4440
  %v5517 = vpack.c.b16 %v4445, %v4441
  %v5518 = vpack.c.b16 %v4446, %v4442
  %v5519 = vpack.c.b16 %v4447, %v4443
  %vm6592 = vcmask 523264
  %v6594 = vsel %vm6592, %v1198, 0
  %6596 = vmatpush.bf16.msra.mxu0 %v4476
  %6597 = vmatpush.bf16.msra.mxu0 %v4472
  %6598 = vmatpush.bf16.msra.mxu0 %v4468
  %6599 = vmatpush.bf16.msra.mxu0 %v4464
  %6600 = vmatpush.bf16.msra.mxu0 %v4460
  %6601 = vmatpush.bf16.msra.mxu0 %v4456
  %6602 = vmatpush.bf16.msra.mxu0 %v4452
  %6603 = vmatpush.bf16.msra.mxu0 %v4448
  %6604 = vmatmul.bf16.gmra.mxu0 %v1165
  %v6605 = vpop.f32.mrf.mxu0
  %v6606 = vadd.f32 %v1106, %v6605
  %v6607 = vpop.f32.mrf.mxu0
  %6608 = vdwg.mxu0
  %6609 = vmatpush.bf16.msra.mxu0 %v4508
  %6610 = vmatpush.bf16.msra.mxu0 %v4504
  %6611 = vmatpush.bf16.msra.mxu0 %v4500
  %6612 = vmatpush.bf16.msra.mxu0 %v4496
  %6613 = vmatpush.bf16.msra.mxu0 %v4492
  %6614 = vmatpush.bf16.msra.mxu0 %v4488
  %6615 = vmatpush.bf16.msra.mxu0 %v4484
  %6616 = vmatpush.bf16.msra.mxu0 %v4480
  %6617 = vmatmul.bf16.gmra.mxu0 %v1166
  %v6618 = vpop.f32.mrf.mxu0
  %v6619 = vadd.f32 %v6606, %v6618
  %v6620 = vpop.f32.mrf.mxu0
  %6621 = vdwg.mxu0
  %6622 = vmatpush.bf16.msra.mxu0 %v4540
  %6623 = vmatpush.bf16.msra.mxu0 %v4536
  %6624 = vmatpush.bf16.msra.mxu0 %v4532
  %6625 = vmatpush.bf16.msra.mxu0 %v4528
  %6626 = vmatpush.bf16.msra.mxu0 %v4524
  %6627 = vmatpush.bf16.msra.mxu0 %v4520
  %6628 = vmatpush.bf16.msra.mxu0 %v4516
  %6629 = vmatpush.bf16.msra.mxu0 %v4512
  %6630 = vmatmul.bf16.gmra.mxu0 %v1167
  %v6631 = vpop.f32.mrf.mxu0
  %v6632 = vadd.f32 %v6619, %v6631
  %v6633 = vpop.f32.mrf.mxu0
  %6634 = vdwg.mxu0
  %6635 = vmatpush.bf16.msra.mxu0 %v4572
  %6636 = vmatpush.bf16.msra.mxu0 %v4568
  %6637 = vmatpush.bf16.msra.mxu0 %v4564
  %6638 = vmatpush.bf16.msra.mxu0 %v4560
  %6639 = vmatpush.bf16.msra.mxu0 %v4556
  %6640 = vmatpush.bf16.msra.mxu0 %v4552
  %6641 = vmatpush.bf16.msra.mxu0 %v4548
  %6642 = vmatpush.bf16.msra.mxu0 %v4544
  %6643 = vmatmul.bf16.gmra.mxu0 %v1168
  %v6644 = vpop.f32.mrf.mxu0
  %v6645 = vadd.f32 %v6632, %v6644
  %v6646 = vpop.f32.mrf.mxu0
  %6647 = vdwg.mxu0
  %6648 = vmatpush.bf16.msra.mxu0 %v4604
  %6649 = vmatpush.bf16.msra.mxu0 %v4600
  %6650 = vmatpush.bf16.msra.mxu0 %v4596
  %6651 = vmatpush.bf16.msra.mxu0 %v4592
  %6652 = vmatpush.bf16.msra.mxu0 %v4588
  %6653 = vmatpush.bf16.msra.mxu0 %v4584
  %6654 = vmatpush.bf16.msra.mxu0 %v4580
  %6655 = vmatpush.bf16.msra.mxu0 %v4576
  %6656 = vmatmul.bf16.gmra.mxu0 %v1169
  %v6657 = vpop.f32.mrf.mxu0
  %v6658 = vadd.f32 %v6645, %v6657
  %v6659 = vpop.f32.mrf.mxu0
  %6660 = vdwg.mxu0
  %6661 = vmatpush.bf16.msra.mxu0 %v4636
  %6662 = vmatpush.bf16.msra.mxu0 %v4632
  %6663 = vmatpush.bf16.msra.mxu0 %v4628
  %6664 = vmatpush.bf16.msra.mxu0 %v4624
  %6665 = vmatpush.bf16.msra.mxu0 %v4620
  %6666 = vmatpush.bf16.msra.mxu0 %v4616
  %6667 = vmatpush.bf16.msra.mxu0 %v4612
  %6668 = vmatpush.bf16.msra.mxu0 %v4608
  %6669 = vmatmul.bf16.gmra.mxu0 %v1170
  %v6670 = vpop.f32.mrf.mxu0
  %v6671 = vadd.f32 %v6658, %v6670
  %v6672 = vpop.f32.mrf.mxu0
  %6673 = vdwg.mxu0
  %6674 = vmatpush.bf16.msra.mxu0 %v4668
  %6675 = vmatpush.bf16.msra.mxu0 %v4664
  %6676 = vmatpush.bf16.msra.mxu0 %v4660
  %6677 = vmatpush.bf16.msra.mxu0 %v4656
  %6678 = vmatpush.bf16.msra.mxu0 %v4652
  %6679 = vmatpush.bf16.msra.mxu0 %v4648
  %6680 = vmatpush.bf16.msra.mxu0 %v4644
  %6681 = vmatpush.bf16.msra.mxu0 %v4640
  %6682 = vmatmul.bf16.gmra.mxu0 %v1171
  %v6683 = vpop.f32.mrf.mxu0
  %v6684 = vadd.f32 %v6671, %v6683
  %v6685 = vpop.f32.mrf.mxu0
  %6686 = vdwg.mxu0
  %6687 = vmatpush.bf16.msra.mxu0 %v4700
  %6688 = vmatpush.bf16.msra.mxu0 %v4696
  %6689 = vmatpush.bf16.msra.mxu0 %v4692
  %6690 = vmatpush.bf16.msra.mxu0 %v4688
  %6691 = vmatpush.bf16.msra.mxu0 %v4684
  %6692 = vmatpush.bf16.msra.mxu0 %v4680
  %6693 = vmatpush.bf16.msra.mxu0 %v4676
  %6694 = vmatpush.bf16.msra.mxu0 %v4672
  %6695 = vmatmul.bf16.gmra.mxu0 %v1172
  %v6696 = vpop.f32.mrf.mxu0
  %v6697 = vadd.f32 %v6684, %v6696
  %v6698 = vpop.f32.mrf.mxu0
  %6699 = vdwg.mxu0
  %6700 = vmatpush.bf16.msra.mxu0 %v4732
  %6701 = vmatpush.bf16.msra.mxu0 %v4728
  %6702 = vmatpush.bf16.msra.mxu0 %v4724
  %6703 = vmatpush.bf16.msra.mxu0 %v4720
  %6704 = vmatpush.bf16.msra.mxu0 %v4716
  %6705 = vmatpush.bf16.msra.mxu0 %v4712
  %6706 = vmatpush.bf16.msra.mxu0 %v4708
  %6707 = vmatpush.bf16.msra.mxu0 %v4704
  %6708 = vmatmul.bf16.gmra.mxu0 %v1173
  %v6709 = vpop.f32.mrf.mxu0
  %v6710 = vadd.f32 %v6697, %v6709
  %v6711 = vpop.f32.mrf.mxu0
  %6712 = vdwg.mxu0
  %6713 = vmatpush.bf16.msra.mxu0 %v4764
  %6714 = vmatpush.bf16.msra.mxu0 %v4760
  %6715 = vmatpush.bf16.msra.mxu0 %v4756
  %6716 = vmatpush.bf16.msra.mxu0 %v4752
  %6717 = vmatpush.bf16.msra.mxu0 %v4748
  %6718 = vmatpush.bf16.msra.mxu0 %v4744
  %6719 = vmatpush.bf16.msra.mxu0 %v4740
  %6720 = vmatpush.bf16.msra.mxu0 %v4736
  %6721 = vmatmul.bf16.gmra.mxu0 %v1174
  %v6722 = vpop.f32.mrf.mxu0
  %v6723 = vadd.f32 %v6710, %v6722
  %v6724 = vpop.f32.mrf.mxu0
  %6725 = vdwg.mxu0
  %6726 = vmatpush.bf16.msra.mxu0 %v4796
  %6727 = vmatpush.bf16.msra.mxu0 %v4792
  %6728 = vmatpush.bf16.msra.mxu0 %v4788
  %6729 = vmatpush.bf16.msra.mxu0 %v4784
  %6730 = vmatpush.bf16.msra.mxu0 %v4780
  %6731 = vmatpush.bf16.msra.mxu0 %v4776
  %6732 = vmatpush.bf16.msra.mxu0 %v4772
  %6733 = vmatpush.bf16.msra.mxu0 %v4768
  %6734 = vmatmul.bf16.gmra.mxu0 %v1175
  %v6735 = vpop.f32.mrf.mxu0
  %v6736 = vadd.f32 %v6723, %v6735
  %v6737 = vpop.f32.mrf.mxu0
  %6738 = vdwg.mxu0
  %6739 = vmatpush.bf16.msra.mxu0 %v4828
  %6740 = vmatpush.bf16.msra.mxu0 %v4824
  %6741 = vmatpush.bf16.msra.mxu0 %v4820
  %6742 = vmatpush.bf16.msra.mxu0 %v4816
  %6743 = vmatpush.bf16.msra.mxu0 %v4812
  %6744 = vmatpush.bf16.msra.mxu0 %v4808
  %6745 = vmatpush.bf16.msra.mxu0 %v4804
  %6746 = vmatpush.bf16.msra.mxu0 %v4800
  %6747 = vmatmul.bf16.gmra.mxu0 %v1176
  %v6748 = vpop.f32.mrf.mxu0
  %v6749 = vadd.f32 %v6736, %v6748
  %v6750 = vpop.f32.mrf.mxu0
  %6751 = vdwg.mxu0
  %6752 = vmatpush.bf16.msra.mxu0 %v4860
  %6753 = vmatpush.bf16.msra.mxu0 %v4856
  %6754 = vmatpush.bf16.msra.mxu0 %v4852
  %6755 = vmatpush.bf16.msra.mxu0 %v4848
  %6756 = vmatpush.bf16.msra.mxu0 %v4844
  %6757 = vmatpush.bf16.msra.mxu0 %v4840
  %6758 = vmatpush.bf16.msra.mxu0 %v4836
  %6759 = vmatpush.bf16.msra.mxu0 %v4832
  %6760 = vmatmul.bf16.gmra.mxu0 %v1177
  %v6761 = vpop.f32.mrf.mxu0
  %v6762 = vadd.f32 %v6749, %v6761
  %v6763 = vpop.f32.mrf.mxu0
  %6764 = vdwg.mxu0
  %6765 = vmatpush.bf16.msra.mxu0 %v4892
  %6766 = vmatpush.bf16.msra.mxu0 %v4888
  %6767 = vmatpush.bf16.msra.mxu0 %v4884
  %6768 = vmatpush.bf16.msra.mxu0 %v4880
  %6769 = vmatpush.bf16.msra.mxu0 %v4876
  %6770 = vmatpush.bf16.msra.mxu0 %v4872
  %6771 = vmatpush.bf16.msra.mxu0 %v4868
  %6772 = vmatpush.bf16.msra.mxu0 %v4864
  %6773 = vmatmul.bf16.gmra.mxu0 %v1178
  %v6774 = vpop.f32.mrf.mxu0
  %v6775 = vadd.f32 %v6762, %v6774
  %v6776 = vpop.f32.mrf.mxu0
  %6777 = vdwg.mxu0
  %6778 = vmatpush.bf16.msra.mxu0 %v4924
  %6779 = vmatpush.bf16.msra.mxu0 %v4920
  %6780 = vmatpush.bf16.msra.mxu0 %v4916
  %6781 = vmatpush.bf16.msra.mxu0 %v4912
  %6782 = vmatpush.bf16.msra.mxu0 %v4908
  %6783 = vmatpush.bf16.msra.mxu0 %v4904
  %6784 = vmatpush.bf16.msra.mxu0 %v4900
  %6785 = vmatpush.bf16.msra.mxu0 %v4896
  %6786 = vmatmul.bf16.gmra.mxu0 %v1179
  %v6787 = vpop.f32.mrf.mxu0
  %v6788 = vadd.f32 %v6775, %v6787
  %v6789 = vpop.f32.mrf.mxu0
  %6790 = vdwg.mxu0
  %6791 = vmatpush.bf16.msra.mxu0 %v4956
  %6792 = vmatpush.bf16.msra.mxu0 %v4952
  %6793 = vmatpush.bf16.msra.mxu0 %v4948
  %6794 = vmatpush.bf16.msra.mxu0 %v4944
  %6795 = vmatpush.bf16.msra.mxu0 %v4940
  %6796 = vmatpush.bf16.msra.mxu0 %v4936
  %6797 = vmatpush.bf16.msra.mxu0 %v4932
  %6798 = vmatpush.bf16.msra.mxu0 %v4928
  %6799 = vmatmul.bf16.gmra.mxu0 %v1180
  %v6800 = vpop.f32.mrf.mxu0
  %v6801 = vadd.f32 %v6788, %v6800
  %v6802 = vpop.f32.mrf.mxu0
  %6803 = vdwg.mxu0
  %6804 = vmatpush.bf16.msra.mxu0 %v4988
  %6805 = vmatpush.bf16.msra.mxu0 %v4984
  %6806 = vmatpush.bf16.msra.mxu0 %v4980
  %6807 = vmatpush.bf16.msra.mxu0 %v4976
  %6808 = vmatpush.bf16.msra.mxu0 %v4972
  %6809 = vmatpush.bf16.msra.mxu0 %v4968
  %6810 = vmatpush.bf16.msra.mxu0 %v4964
  %6811 = vmatpush.bf16.msra.mxu0 %v4960
  %6812 = vmatmul.bf16.gmra.mxu0 %v1181
  %v6813 = vpop.f32.mrf.mxu0
  %v6814 = vadd.f32 %v6801, %v6813
  %v6815 = vpop.f32.mrf.mxu0
  %6816 = vdwg.mxu0
  %6817 = vmatpush.bf16.msra.mxu0 %v5020
  %6818 = vmatpush.bf16.msra.mxu0 %v5016
  %6819 = vmatpush.bf16.msra.mxu0 %v5012
  %6820 = vmatpush.bf16.msra.mxu0 %v5008
  %6821 = vmatpush.bf16.msra.mxu0 %v5004
  %6822 = vmatpush.bf16.msra.mxu0 %v5000
  %6823 = vmatpush.bf16.msra.mxu0 %v4996
  %6824 = vmatpush.bf16.msra.mxu0 %v4992
  %6825 = vmatmul.bf16.gmra.mxu0 %v1182
  %v6826 = vpop.f32.mrf.mxu0
  %v6827 = vadd.f32 %v6814, %v6826
  %v6828 = vpop.f32.mrf.mxu0
  %6829 = vdwg.mxu0
  %6830 = vmatpush.bf16.msra.mxu0 %v5052
  %6831 = vmatpush.bf16.msra.mxu0 %v5048
  %6832 = vmatpush.bf16.msra.mxu0 %v5044
  %6833 = vmatpush.bf16.msra.mxu0 %v5040
  %6834 = vmatpush.bf16.msra.mxu0 %v5036
  %6835 = vmatpush.bf16.msra.mxu0 %v5032
  %6836 = vmatpush.bf16.msra.mxu0 %v5028
  %6837 = vmatpush.bf16.msra.mxu0 %v5024
  %6838 = vmatmul.bf16.gmra.mxu0 %v1183
  %v6839 = vpop.f32.mrf.mxu0
  %v6840 = vadd.f32 %v6827, %v6839
  %v6841 = vpop.f32.mrf.mxu0
  %6842 = vdwg.mxu0
  %6843 = vmatpush.bf16.msra.mxu0 %v5084
  %6844 = vmatpush.bf16.msra.mxu0 %v5080
  %6845 = vmatpush.bf16.msra.mxu0 %v5076
  %6846 = vmatpush.bf16.msra.mxu0 %v5072
  %6847 = vmatpush.bf16.msra.mxu0 %v5068
  %6848 = vmatpush.bf16.msra.mxu0 %v5064
  %6849 = vmatpush.bf16.msra.mxu0 %v5060
  %6850 = vmatpush.bf16.msra.mxu0 %v5056
  %6851 = vmatmul.bf16.gmra.mxu0 %v1184
  %v6852 = vpop.f32.mrf.mxu0
  %v6853 = vadd.f32 %v6840, %v6852
  %v6854 = vpop.f32.mrf.mxu0
  %6855 = vdwg.mxu0
  %6856 = vmatpush.bf16.msra.mxu0 %v5116
  %6857 = vmatpush.bf16.msra.mxu0 %v5112
  %6858 = vmatpush.bf16.msra.mxu0 %v5108
  %6859 = vmatpush.bf16.msra.mxu0 %v5104
  %6860 = vmatpush.bf16.msra.mxu0 %v5100
  %6861 = vmatpush.bf16.msra.mxu0 %v5096
  %6862 = vmatpush.bf16.msra.mxu0 %v5092
  %6863 = vmatpush.bf16.msra.mxu0 %v5088
  %6864 = vmatmul.bf16.gmra.mxu0 %v1185
  %v6865 = vpop.f32.mrf.mxu0
  %v6866 = vadd.f32 %v6853, %v6865
  %v6867 = vpop.f32.mrf.mxu0
  %6868 = vdwg.mxu0
  %6869 = vmatpush.bf16.msra.mxu0 %v5148
  %6870 = vmatpush.bf16.msra.mxu0 %v5144
  %6871 = vmatpush.bf16.msra.mxu0 %v5140
  %6872 = vmatpush.bf16.msra.mxu0 %v5136
  %6873 = vmatpush.bf16.msra.mxu0 %v5132
  %6874 = vmatpush.bf16.msra.mxu0 %v5128
  %6875 = vmatpush.bf16.msra.mxu0 %v5124
  %6876 = vmatpush.bf16.msra.mxu0 %v5120
  %6877 = vmatmul.bf16.gmra.mxu0 %v1186
  %v6878 = vpop.f32.mrf.mxu0
  %v6879 = vadd.f32 %v6866, %v6878
  %v6880 = vpop.f32.mrf.mxu0
  %6881 = vdwg.mxu0
  %6882 = vmatpush.bf16.msra.mxu0 %v5180
  %6883 = vmatpush.bf16.msra.mxu0 %v5176
  %6884 = vmatpush.bf16.msra.mxu0 %v5172
  %6885 = vmatpush.bf16.msra.mxu0 %v5168
  %6886 = vmatpush.bf16.msra.mxu0 %v5164
  %6887 = vmatpush.bf16.msra.mxu0 %v5160
  %6888 = vmatpush.bf16.msra.mxu0 %v5156
  %6889 = vmatpush.bf16.msra.mxu0 %v5152
  %6890 = vmatmul.bf16.gmra.mxu0 %v1187
  %v6891 = vpop.f32.mrf.mxu0
  %v6892 = vadd.f32 %v6879, %v6891
  %v6893 = vpop.f32.mrf.mxu0
  %6894 = vdwg.mxu0
  %6895 = vmatpush.bf16.msra.mxu0 %v5212
  %6896 = vmatpush.bf16.msra.mxu0 %v5208
  %6897 = vmatpush.bf16.msra.mxu0 %v5204
  %6898 = vmatpush.bf16.msra.mxu0 %v5200
  %6899 = vmatpush.bf16.msra.mxu0 %v5196
  %6900 = vmatpush.bf16.msra.mxu0 %v5192
  %6901 = vmatpush.bf16.msra.mxu0 %v5188
  %6902 = vmatpush.bf16.msra.mxu0 %v5184
  %6903 = vmatmul.bf16.gmra.mxu0 %v1188
  %v6904 = vpop.f32.mrf.mxu0
  %v6905 = vadd.f32 %v6892, %v6904
  %v6906 = vpop.f32.mrf.mxu0
  %6907 = vdwg.mxu0
  %6908 = vmatpush.bf16.msra.mxu0 %v5244
  %6909 = vmatpush.bf16.msra.mxu0 %v5240
  %6910 = vmatpush.bf16.msra.mxu0 %v5236
  %6911 = vmatpush.bf16.msra.mxu0 %v5232
  %6912 = vmatpush.bf16.msra.mxu0 %v5228
  %6913 = vmatpush.bf16.msra.mxu0 %v5224
  %6914 = vmatpush.bf16.msra.mxu0 %v5220
  %6915 = vmatpush.bf16.msra.mxu0 %v5216
  %6916 = vmatmul.bf16.gmra.mxu0 %v1189
  %v6917 = vpop.f32.mrf.mxu0
  %v6918 = vadd.f32 %v6905, %v6917
  %v6919 = vpop.f32.mrf.mxu0
  %6920 = vdwg.mxu0
  %6921 = vmatpush.bf16.msra.mxu0 %v5276
  %6922 = vmatpush.bf16.msra.mxu0 %v5272
  %6923 = vmatpush.bf16.msra.mxu0 %v5268
  %6924 = vmatpush.bf16.msra.mxu0 %v5264
  %6925 = vmatpush.bf16.msra.mxu0 %v5260
  %6926 = vmatpush.bf16.msra.mxu0 %v5256
  %6927 = vmatpush.bf16.msra.mxu0 %v5252
  %6928 = vmatpush.bf16.msra.mxu0 %v5248
  %6929 = vmatmul.bf16.gmra.mxu0 %v1190
  %v6930 = vpop.f32.mrf.mxu0
  %v6931 = vadd.f32 %v6918, %v6930
  %v6932 = vpop.f32.mrf.mxu0
  %6933 = vdwg.mxu0
  %6934 = vmatpush.bf16.msra.mxu0 %v5308
  %6935 = vmatpush.bf16.msra.mxu0 %v5304
  %6936 = vmatpush.bf16.msra.mxu0 %v5300
  %6937 = vmatpush.bf16.msra.mxu0 %v5296
  %6938 = vmatpush.bf16.msra.mxu0 %v5292
  %6939 = vmatpush.bf16.msra.mxu0 %v5288
  %6940 = vmatpush.bf16.msra.mxu0 %v5284
  %6941 = vmatpush.bf16.msra.mxu0 %v5280
  %6942 = vmatmul.bf16.gmra.mxu0 %v1191
  %v6943 = vpop.f32.mrf.mxu0
  %v6944 = vadd.f32 %v6931, %v6943
  %v6945 = vpop.f32.mrf.mxu0
  %6946 = vdwg.mxu0
  %6947 = vmatpush.bf16.msra.mxu0 %v5340
  %6948 = vmatpush.bf16.msra.mxu0 %v5336
  %6949 = vmatpush.bf16.msra.mxu0 %v5332
  %6950 = vmatpush.bf16.msra.mxu0 %v5328
  %6951 = vmatpush.bf16.msra.mxu0 %v5324
  %6952 = vmatpush.bf16.msra.mxu0 %v5320
  %6953 = vmatpush.bf16.msra.mxu0 %v5316
  %6954 = vmatpush.bf16.msra.mxu0 %v5312
  %6955 = vmatmul.bf16.gmra.mxu0 %v1192
  %v6956 = vpop.f32.mrf.mxu0
  %v6957 = vadd.f32 %v6944, %v6956
  %v6958 = vpop.f32.mrf.mxu0
  %6959 = vdwg.mxu0
  %6960 = vmatpush.bf16.msra.mxu0 %v5372
  %6961 = vmatpush.bf16.msra.mxu0 %v5368
  %6962 = vmatpush.bf16.msra.mxu0 %v5364
  %6963 = vmatpush.bf16.msra.mxu0 %v5360
  %6964 = vmatpush.bf16.msra.mxu0 %v5356
  %6965 = vmatpush.bf16.msra.mxu0 %v5352
  %6966 = vmatpush.bf16.msra.mxu0 %v5348
  %6967 = vmatpush.bf16.msra.mxu0 %v5344
  %6968 = vmatmul.bf16.gmra.mxu0 %v1193
  %v6969 = vpop.f32.mrf.mxu0
  %v6970 = vadd.f32 %v6957, %v6969
  %v6971 = vpop.f32.mrf.mxu0
  %6972 = vdwg.mxu0
  %6973 = vmatpush.bf16.msra.mxu0 %v5404
  %6974 = vmatpush.bf16.msra.mxu0 %v5400
  %6975 = vmatpush.bf16.msra.mxu0 %v5396
  %6976 = vmatpush.bf16.msra.mxu0 %v5392
  %6977 = vmatpush.bf16.msra.mxu0 %v5388
  %6978 = vmatpush.bf16.msra.mxu0 %v5384
  %6979 = vmatpush.bf16.msra.mxu0 %v5380
  %6980 = vmatpush.bf16.msra.mxu0 %v5376
  %6981 = vmatmul.bf16.gmra.mxu0 %v1194
  %v6982 = vpop.f32.mrf.mxu0
  %v6983 = vadd.f32 %v6970, %v6982
  %v6984 = vpop.f32.mrf.mxu0
  %6985 = vdwg.mxu0
  %6986 = vmatpush.bf16.msra.mxu0 %v5436
  %6987 = vmatpush.bf16.msra.mxu0 %v5432
  %6988 = vmatpush.bf16.msra.mxu0 %v5428
  %6989 = vmatpush.bf16.msra.mxu0 %v5424
  %6990 = vmatpush.bf16.msra.mxu0 %v5420
  %6991 = vmatpush.bf16.msra.mxu0 %v5416
  %6992 = vmatpush.bf16.msra.mxu0 %v5412
  %6993 = vmatpush.bf16.msra.mxu0 %v5408
  %6994 = vmatmul.bf16.gmra.mxu0 %v1195
  %v6995 = vpop.f32.mrf.mxu0
  %v6996 = vadd.f32 %v6983, %v6995
  %v6997 = vpop.f32.mrf.mxu0
  %6998 = vdwg.mxu0
  %6999 = vmatpush.bf16.msra.mxu0 %v5468
  %7000 = vmatpush.bf16.msra.mxu0 %v5464
  %7001 = vmatpush.bf16.msra.mxu0 %v5460
  %7002 = vmatpush.bf16.msra.mxu0 %v5456
  %7003 = vmatpush.bf16.msra.mxu0 %v5452
  %7004 = vmatpush.bf16.msra.mxu0 %v5448
  %7005 = vmatpush.bf16.msra.mxu0 %v5444
  %7006 = vmatpush.bf16.msra.mxu0 %v5440
  %7007 = vmatmul.bf16.gmra.mxu0 %v1196
  %v7008 = vpop.f32.mrf.mxu0
  %v7009 = vadd.f32 %v6996, %v7008
  %v7010 = vpop.f32.mrf.mxu0
  %7011 = vdwg.mxu0
  %7012 = vmatpush.bf16.msra.mxu0 %v5500
  %7013 = vmatpush.bf16.msra.mxu0 %v5496
  %7014 = vmatpush.bf16.msra.mxu0 %v5492
  %7015 = vmatpush.bf16.msra.mxu0 %v5488
  %7016 = vmatpush.bf16.msra.mxu0 %v5484
  %7017 = vmatpush.bf16.msra.mxu0 %v5480
  %7018 = vmatpush.bf16.msra.mxu0 %v5476
  %7019 = vmatpush.bf16.msra.mxu0 %v5472
  %7020 = vmatmul.bf16.gmra.mxu0 %v1197
  %v7021 = vpop.f32.mrf.mxu0
  %v7022 = vadd.f32 %v7009, %v7021
  %v7023 = vpop.f32.mrf.mxu0
  %7024 = vdwg.mxu0
  %7025 = vmatpush.bf16.msra.mxu0 0
  %7026 = vmatpush.bf16.msra.mxu0 0
  %7027 = vmatpush.bf16.msra.mxu0 0
  %7028 = vmatpush.bf16.msra.mxu0 0
  %7029 = vmatpush.bf16.msra.mxu0 %v5516
  %7030 = vmatpush.bf16.msra.mxu0 %v5512
  %7031 = vmatpush.bf16.msra.mxu0 %v5508
  %7032 = vmatpush.bf16.msra.mxu0 %v5504
  %7033 = vmatmul.bf16.gmra.mxu0 %v6594
  %v7034 = vpop.f32.mrf.mxu0
  %v7035 = vadd.f32 %v7022, %v7034
  %v7036 = vpop.f32.mrf.mxu0
  %7037 = vdwg.mxu0
  %7038 = vmatpush.bf16.msra.mxu0 %v4477
  %7039 = vmatpush.bf16.msra.mxu0 %v4473
  %7040 = vmatpush.bf16.msra.mxu0 %v4469
  %7041 = vmatpush.bf16.msra.mxu0 %v4465
  %7042 = vmatpush.bf16.msra.mxu0 %v4461
  %7043 = vmatpush.bf16.msra.mxu0 %v4457
  %7044 = vmatpush.bf16.msra.mxu0 %v4453
  %7045 = vmatpush.bf16.msra.mxu0 %v4449
  %7046 = vmatmul.bf16.gmra.mxu0 %v1165
  %v7047 = vpop.f32.mrf.mxu0
  %v7048 = vadd.f32 %v1107, %v7047
  %v7049 = vpop.f32.mrf.mxu0
  %7050 = vdwg.mxu0
  %7051 = vmatpush.bf16.msra.mxu0 %v4509
  %7052 = vmatpush.bf16.msra.mxu0 %v4505
  %7053 = vmatpush.bf16.msra.mxu0 %v4501
  %7054 = vmatpush.bf16.msra.mxu0 %v4497
  %7055 = vmatpush.bf16.msra.mxu0 %v4493
  %7056 = vmatpush.bf16.msra.mxu0 %v4489
  %7057 = vmatpush.bf16.msra.mxu0 %v4485
  %7058 = vmatpush.bf16.msra.mxu0 %v4481
  %7059 = vmatmul.bf16.gmra.mxu0 %v1166
  %v7060 = vpop.f32.mrf.mxu0
  %v7061 = vadd.f32 %v7048, %v7060
  %v7062 = vpop.f32.mrf.mxu0
  %7063 = vdwg.mxu0
  %7064 = vmatpush.bf16.msra.mxu0 %v4541
  %7065 = vmatpush.bf16.msra.mxu0 %v4537
  %7066 = vmatpush.bf16.msra.mxu0 %v4533
  %7067 = vmatpush.bf16.msra.mxu0 %v4529
  %7068 = vmatpush.bf16.msra.mxu0 %v4525
  %7069 = vmatpush.bf16.msra.mxu0 %v4521
  %7070 = vmatpush.bf16.msra.mxu0 %v4517
  %7071 = vmatpush.bf16.msra.mxu0 %v4513
  %7072 = vmatmul.bf16.gmra.mxu0 %v1167
  %v7073 = vpop.f32.mrf.mxu0
  %v7074 = vadd.f32 %v7061, %v7073
  %v7075 = vpop.f32.mrf.mxu0
  %7076 = vdwg.mxu0
  %7077 = vmatpush.bf16.msra.mxu0 %v4573
  %7078 = vmatpush.bf16.msra.mxu0 %v4569
  %7079 = vmatpush.bf16.msra.mxu0 %v4565
  %7080 = vmatpush.bf16.msra.mxu0 %v4561
  %7081 = vmatpush.bf16.msra.mxu0 %v4557
  %7082 = vmatpush.bf16.msra.mxu0 %v4553
  %7083 = vmatpush.bf16.msra.mxu0 %v4549
  %7084 = vmatpush.bf16.msra.mxu0 %v4545
  %7085 = vmatmul.bf16.gmra.mxu0 %v1168
  %v7086 = vpop.f32.mrf.mxu0
  %v7087 = vadd.f32 %v7074, %v7086
  %v7088 = vpop.f32.mrf.mxu0
  %7089 = vdwg.mxu0
  %7090 = vmatpush.bf16.msra.mxu0 %v4605
  %7091 = vmatpush.bf16.msra.mxu0 %v4601
  %7092 = vmatpush.bf16.msra.mxu0 %v4597
  %7093 = vmatpush.bf16.msra.mxu0 %v4593
  %7094 = vmatpush.bf16.msra.mxu0 %v4589
  %7095 = vmatpush.bf16.msra.mxu0 %v4585
  %7096 = vmatpush.bf16.msra.mxu0 %v4581
  %7097 = vmatpush.bf16.msra.mxu0 %v4577
  %7098 = vmatmul.bf16.gmra.mxu0 %v1169
  %v7099 = vpop.f32.mrf.mxu0
  %v7100 = vadd.f32 %v7087, %v7099
  %v7101 = vpop.f32.mrf.mxu0
  %7102 = vdwg.mxu0
  %7103 = vmatpush.bf16.msra.mxu0 %v4637
  %7104 = vmatpush.bf16.msra.mxu0 %v4633
  %7105 = vmatpush.bf16.msra.mxu0 %v4629
  %7106 = vmatpush.bf16.msra.mxu0 %v4625
  %7107 = vmatpush.bf16.msra.mxu0 %v4621
  %7108 = vmatpush.bf16.msra.mxu0 %v4617
  %7109 = vmatpush.bf16.msra.mxu0 %v4613
  %7110 = vmatpush.bf16.msra.mxu0 %v4609
  %7111 = vmatmul.bf16.gmra.mxu0 %v1170
  %v7112 = vpop.f32.mrf.mxu0
  %v7113 = vadd.f32 %v7100, %v7112
  %v7114 = vpop.f32.mrf.mxu0
  %7115 = vdwg.mxu0
  %7116 = vmatpush.bf16.msra.mxu0 %v4669
  %7117 = vmatpush.bf16.msra.mxu0 %v4665
  %7118 = vmatpush.bf16.msra.mxu0 %v4661
  %7119 = vmatpush.bf16.msra.mxu0 %v4657
  %7120 = vmatpush.bf16.msra.mxu0 %v4653
  %7121 = vmatpush.bf16.msra.mxu0 %v4649
  %7122 = vmatpush.bf16.msra.mxu0 %v4645
  %7123 = vmatpush.bf16.msra.mxu0 %v4641
  %7124 = vmatmul.bf16.gmra.mxu0 %v1171
  %v7125 = vpop.f32.mrf.mxu0
  %v7126 = vadd.f32 %v7113, %v7125
  %v7127 = vpop.f32.mrf.mxu0
  %7128 = vdwg.mxu0
  %7129 = vmatpush.bf16.msra.mxu0 %v4701
  %7130 = vmatpush.bf16.msra.mxu0 %v4697
  %7131 = vmatpush.bf16.msra.mxu0 %v4693
  %7132 = vmatpush.bf16.msra.mxu0 %v4689
  %7133 = vmatpush.bf16.msra.mxu0 %v4685
  %7134 = vmatpush.bf16.msra.mxu0 %v4681
  %7135 = vmatpush.bf16.msra.mxu0 %v4677
  %7136 = vmatpush.bf16.msra.mxu0 %v4673
  %7137 = vmatmul.bf16.gmra.mxu0 %v1172
  %v7138 = vpop.f32.mrf.mxu0
  %v7139 = vadd.f32 %v7126, %v7138
  %v7140 = vpop.f32.mrf.mxu0
  %7141 = vdwg.mxu0
  %7142 = vmatpush.bf16.msra.mxu0 %v4733
  %7143 = vmatpush.bf16.msra.mxu0 %v4729
  %7144 = vmatpush.bf16.msra.mxu0 %v4725
  %7145 = vmatpush.bf16.msra.mxu0 %v4721
  %7146 = vmatpush.bf16.msra.mxu0 %v4717
  %7147 = vmatpush.bf16.msra.mxu0 %v4713
  %7148 = vmatpush.bf16.msra.mxu0 %v4709
  %7149 = vmatpush.bf16.msra.mxu0 %v4705
  %7150 = vmatmul.bf16.gmra.mxu0 %v1173
  %v7151 = vpop.f32.mrf.mxu0
  %v7152 = vadd.f32 %v7139, %v7151
  %v7153 = vpop.f32.mrf.mxu0
  %7154 = vdwg.mxu0
  %7155 = vmatpush.bf16.msra.mxu0 %v4765
  %7156 = vmatpush.bf16.msra.mxu0 %v4761
  %7157 = vmatpush.bf16.msra.mxu0 %v4757
  %7158 = vmatpush.bf16.msra.mxu0 %v4753
  %7159 = vmatpush.bf16.msra.mxu0 %v4749
  %7160 = vmatpush.bf16.msra.mxu0 %v4745
  %7161 = vmatpush.bf16.msra.mxu0 %v4741
  %7162 = vmatpush.bf16.msra.mxu0 %v4737
  %7163 = vmatmul.bf16.gmra.mxu0 %v1174
  %v7164 = vpop.f32.mrf.mxu0
  %v7165 = vadd.f32 %v7152, %v7164
  %v7166 = vpop.f32.mrf.mxu0
  %7167 = vdwg.mxu0
  %7168 = vmatpush.bf16.msra.mxu0 %v4797
  %7169 = vmatpush.bf16.msra.mxu0 %v4793
  %7170 = vmatpush.bf16.msra.mxu0 %v4789
  %7171 = vmatpush.bf16.msra.mxu0 %v4785
  %7172 = vmatpush.bf16.msra.mxu0 %v4781
  %7173 = vmatpush.bf16.msra.mxu0 %v4777
  %7174 = vmatpush.bf16.msra.mxu0 %v4773
  %7175 = vmatpush.bf16.msra.mxu0 %v4769
  %7176 = vmatmul.bf16.gmra.mxu0 %v1175
  %v7177 = vpop.f32.mrf.mxu0
  %v7178 = vadd.f32 %v7165, %v7177
  %v7179 = vpop.f32.mrf.mxu0
  %7180 = vdwg.mxu0
  %7181 = vmatpush.bf16.msra.mxu0 %v4829
  %7182 = vmatpush.bf16.msra.mxu0 %v4825
  %7183 = vmatpush.bf16.msra.mxu0 %v4821
  %7184 = vmatpush.bf16.msra.mxu0 %v4817
  %7185 = vmatpush.bf16.msra.mxu0 %v4813
  %7186 = vmatpush.bf16.msra.mxu0 %v4809
  %7187 = vmatpush.bf16.msra.mxu0 %v4805
  %7188 = vmatpush.bf16.msra.mxu0 %v4801
  %7189 = vmatmul.bf16.gmra.mxu0 %v1176
  %v7190 = vpop.f32.mrf.mxu0
  %v7191 = vadd.f32 %v7178, %v7190
  %v7192 = vpop.f32.mrf.mxu0
  %7193 = vdwg.mxu0
  %7194 = vmatpush.bf16.msra.mxu0 %v4861
  %7195 = vmatpush.bf16.msra.mxu0 %v4857
  %7196 = vmatpush.bf16.msra.mxu0 %v4853
  %7197 = vmatpush.bf16.msra.mxu0 %v4849
  %7198 = vmatpush.bf16.msra.mxu0 %v4845
  %7199 = vmatpush.bf16.msra.mxu0 %v4841
  %7200 = vmatpush.bf16.msra.mxu0 %v4837
  %7201 = vmatpush.bf16.msra.mxu0 %v4833
  %7202 = vmatmul.bf16.gmra.mxu0 %v1177
  %v7203 = vpop.f32.mrf.mxu0
  %v7204 = vadd.f32 %v7191, %v7203
  %v7205 = vpop.f32.mrf.mxu0
  %7206 = vdwg.mxu0
  %7207 = vmatpush.bf16.msra.mxu0 %v4893
  %7208 = vmatpush.bf16.msra.mxu0 %v4889
  %7209 = vmatpush.bf16.msra.mxu0 %v4885
  %7210 = vmatpush.bf16.msra.mxu0 %v4881
  %7211 = vmatpush.bf16.msra.mxu0 %v4877
  %7212 = vmatpush.bf16.msra.mxu0 %v4873
  %7213 = vmatpush.bf16.msra.mxu0 %v4869
  %7214 = vmatpush.bf16.msra.mxu0 %v4865
  %7215 = vmatmul.bf16.gmra.mxu0 %v1178
  %v7216 = vpop.f32.mrf.mxu0
  %v7217 = vadd.f32 %v7204, %v7216
  %v7218 = vpop.f32.mrf.mxu0
  %7219 = vdwg.mxu0
  %7220 = vmatpush.bf16.msra.mxu0 %v4925
  %7221 = vmatpush.bf16.msra.mxu0 %v4921
  %7222 = vmatpush.bf16.msra.mxu0 %v4917
  %7223 = vmatpush.bf16.msra.mxu0 %v4913
  %7224 = vmatpush.bf16.msra.mxu0 %v4909
  %7225 = vmatpush.bf16.msra.mxu0 %v4905
  %7226 = vmatpush.bf16.msra.mxu0 %v4901
  %7227 = vmatpush.bf16.msra.mxu0 %v4897
  %7228 = vmatmul.bf16.gmra.mxu0 %v1179
  %v7229 = vpop.f32.mrf.mxu0
  %v7230 = vadd.f32 %v7217, %v7229
  %v7231 = vpop.f32.mrf.mxu0
  %7232 = vdwg.mxu0
  %7233 = vmatpush.bf16.msra.mxu0 %v4957
  %7234 = vmatpush.bf16.msra.mxu0 %v4953
  %7235 = vmatpush.bf16.msra.mxu0 %v4949
  %7236 = vmatpush.bf16.msra.mxu0 %v4945
  %7237 = vmatpush.bf16.msra.mxu0 %v4941
  %7238 = vmatpush.bf16.msra.mxu0 %v4937
  %7239 = vmatpush.bf16.msra.mxu0 %v4933
  %7240 = vmatpush.bf16.msra.mxu0 %v4929
  %7241 = vmatmul.bf16.gmra.mxu0 %v1180
  %v7242 = vpop.f32.mrf.mxu0
  %v7243 = vadd.f32 %v7230, %v7242
  %v7244 = vpop.f32.mrf.mxu0
  %7245 = vdwg.mxu0
  %7246 = vmatpush.bf16.msra.mxu0 %v4989
  %7247 = vmatpush.bf16.msra.mxu0 %v4985
  %7248 = vmatpush.bf16.msra.mxu0 %v4981
  %7249 = vmatpush.bf16.msra.mxu0 %v4977
  %7250 = vmatpush.bf16.msra.mxu0 %v4973
  %7251 = vmatpush.bf16.msra.mxu0 %v4969
  %7252 = vmatpush.bf16.msra.mxu0 %v4965
  %7253 = vmatpush.bf16.msra.mxu0 %v4961
  %7254 = vmatmul.bf16.gmra.mxu0 %v1181
  %v7255 = vpop.f32.mrf.mxu0
  %v7256 = vadd.f32 %v7243, %v7255
  %v7257 = vpop.f32.mrf.mxu0
  %7258 = vdwg.mxu0
  %7259 = vmatpush.bf16.msra.mxu0 %v5021
  %7260 = vmatpush.bf16.msra.mxu0 %v5017
  %7261 = vmatpush.bf16.msra.mxu0 %v5013
  %7262 = vmatpush.bf16.msra.mxu0 %v5009
  %7263 = vmatpush.bf16.msra.mxu0 %v5005
  %7264 = vmatpush.bf16.msra.mxu0 %v5001
  %7265 = vmatpush.bf16.msra.mxu0 %v4997
  %7266 = vmatpush.bf16.msra.mxu0 %v4993
  %7267 = vmatmul.bf16.gmra.mxu0 %v1182
  %v7268 = vpop.f32.mrf.mxu0
  %v7269 = vadd.f32 %v7256, %v7268
  %v7270 = vpop.f32.mrf.mxu0
  %7271 = vdwg.mxu0
  %7272 = vmatpush.bf16.msra.mxu0 %v5053
  %7273 = vmatpush.bf16.msra.mxu0 %v5049
  %7274 = vmatpush.bf16.msra.mxu0 %v5045
  %7275 = vmatpush.bf16.msra.mxu0 %v5041
  %7276 = vmatpush.bf16.msra.mxu0 %v5037
  %7277 = vmatpush.bf16.msra.mxu0 %v5033
  %7278 = vmatpush.bf16.msra.mxu0 %v5029
  %7279 = vmatpush.bf16.msra.mxu0 %v5025
  %7280 = vmatmul.bf16.gmra.mxu0 %v1183
  %v7281 = vpop.f32.mrf.mxu0
  %v7282 = vadd.f32 %v7269, %v7281
  %v7283 = vpop.f32.mrf.mxu0
  %7284 = vdwg.mxu0
  %7285 = vmatpush.bf16.msra.mxu0 %v5085
  %7286 = vmatpush.bf16.msra.mxu0 %v5081
  %7287 = vmatpush.bf16.msra.mxu0 %v5077
  %7288 = vmatpush.bf16.msra.mxu0 %v5073
  %7289 = vmatpush.bf16.msra.mxu0 %v5069
  %7290 = vmatpush.bf16.msra.mxu0 %v5065
  %7291 = vmatpush.bf16.msra.mxu0 %v5061
  %7292 = vmatpush.bf16.msra.mxu0 %v5057
  %7293 = vmatmul.bf16.gmra.mxu0 %v1184
  %v7294 = vpop.f32.mrf.mxu0
  %v7295 = vadd.f32 %v7282, %v7294
  %v7296 = vpop.f32.mrf.mxu0
  %7297 = vdwg.mxu0
  %7298 = vmatpush.bf16.msra.mxu0 %v5117
  %7299 = vmatpush.bf16.msra.mxu0 %v5113
  %7300 = vmatpush.bf16.msra.mxu0 %v5109
  %7301 = vmatpush.bf16.msra.mxu0 %v5105
  %7302 = vmatpush.bf16.msra.mxu0 %v5101
  %7303 = vmatpush.bf16.msra.mxu0 %v5097
  %7304 = vmatpush.bf16.msra.mxu0 %v5093
  %7305 = vmatpush.bf16.msra.mxu0 %v5089
  %7306 = vmatmul.bf16.gmra.mxu0 %v1185
  %v7307 = vpop.f32.mrf.mxu0
  %v7308 = vadd.f32 %v7295, %v7307
  %v7309 = vpop.f32.mrf.mxu0
  %7310 = vdwg.mxu0
  %7311 = vmatpush.bf16.msra.mxu0 %v5149
  %7312 = vmatpush.bf16.msra.mxu0 %v5145
  %7313 = vmatpush.bf16.msra.mxu0 %v5141
  %7314 = vmatpush.bf16.msra.mxu0 %v5137
  %7315 = vmatpush.bf16.msra.mxu0 %v5133
  %7316 = vmatpush.bf16.msra.mxu0 %v5129
  %7317 = vmatpush.bf16.msra.mxu0 %v5125
  %7318 = vmatpush.bf16.msra.mxu0 %v5121
  %7319 = vmatmul.bf16.gmra.mxu0 %v1186
  %v7320 = vpop.f32.mrf.mxu0
  %v7321 = vadd.f32 %v7308, %v7320
  %v7322 = vpop.f32.mrf.mxu0
  %7323 = vdwg.mxu0
  %7324 = vmatpush.bf16.msra.mxu0 %v5181
  %7325 = vmatpush.bf16.msra.mxu0 %v5177
  %7326 = vmatpush.bf16.msra.mxu0 %v5173
  %7327 = vmatpush.bf16.msra.mxu0 %v5169
  %7328 = vmatpush.bf16.msra.mxu0 %v5165
  %7329 = vmatpush.bf16.msra.mxu0 %v5161
  %7330 = vmatpush.bf16.msra.mxu0 %v5157
  %7331 = vmatpush.bf16.msra.mxu0 %v5153
  %7332 = vmatmul.bf16.gmra.mxu0 %v1187
  %v7333 = vpop.f32.mrf.mxu0
  %v7334 = vadd.f32 %v7321, %v7333
  %v7335 = vpop.f32.mrf.mxu0
  %7336 = vdwg.mxu0
  %7337 = vmatpush.bf16.msra.mxu0 %v5213
  %7338 = vmatpush.bf16.msra.mxu0 %v5209
  %7339 = vmatpush.bf16.msra.mxu0 %v5205
  %7340 = vmatpush.bf16.msra.mxu0 %v5201
  %7341 = vmatpush.bf16.msra.mxu0 %v5197
  %7342 = vmatpush.bf16.msra.mxu0 %v5193
  %7343 = vmatpush.bf16.msra.mxu0 %v5189
  %7344 = vmatpush.bf16.msra.mxu0 %v5185
  %7345 = vmatmul.bf16.gmra.mxu0 %v1188
  %v7346 = vpop.f32.mrf.mxu0
  %v7347 = vadd.f32 %v7334, %v7346
  %v7348 = vpop.f32.mrf.mxu0
  %7349 = vdwg.mxu0
  %7350 = vmatpush.bf16.msra.mxu0 %v5245
  %7351 = vmatpush.bf16.msra.mxu0 %v5241
  %7352 = vmatpush.bf16.msra.mxu0 %v5237
  %7353 = vmatpush.bf16.msra.mxu0 %v5233
  %7354 = vmatpush.bf16.msra.mxu0 %v5229
  %7355 = vmatpush.bf16.msra.mxu0 %v5225
  %7356 = vmatpush.bf16.msra.mxu0 %v5221
  %7357 = vmatpush.bf16.msra.mxu0 %v5217
  %7358 = vmatmul.bf16.gmra.mxu0 %v1189
  %v7359 = vpop.f32.mrf.mxu0
  %v7360 = vadd.f32 %v7347, %v7359
  %v7361 = vpop.f32.mrf.mxu0
  %7362 = vdwg.mxu0
  %7363 = vmatpush.bf16.msra.mxu0 %v5277
  %7364 = vmatpush.bf16.msra.mxu0 %v5273
  %7365 = vmatpush.bf16.msra.mxu0 %v5269
  %7366 = vmatpush.bf16.msra.mxu0 %v5265
  %7367 = vmatpush.bf16.msra.mxu0 %v5261
  %7368 = vmatpush.bf16.msra.mxu0 %v5257
  %7369 = vmatpush.bf16.msra.mxu0 %v5253
  %7370 = vmatpush.bf16.msra.mxu0 %v5249
  %7371 = vmatmul.bf16.gmra.mxu0 %v1190
  %v7372 = vpop.f32.mrf.mxu0
  %v7373 = vadd.f32 %v7360, %v7372
  %v7374 = vpop.f32.mrf.mxu0
  %7375 = vdwg.mxu0
  %7376 = vmatpush.bf16.msra.mxu0 %v5309
  %7377 = vmatpush.bf16.msra.mxu0 %v5305
  %7378 = vmatpush.bf16.msra.mxu0 %v5301
  %7379 = vmatpush.bf16.msra.mxu0 %v5297
  %7380 = vmatpush.bf16.msra.mxu0 %v5293
  %7381 = vmatpush.bf16.msra.mxu0 %v5289
  %7382 = vmatpush.bf16.msra.mxu0 %v5285
  %7383 = vmatpush.bf16.msra.mxu0 %v5281
  %7384 = vmatmul.bf16.gmra.mxu0 %v1191
  %v7385 = vpop.f32.mrf.mxu0
  %v7386 = vadd.f32 %v7373, %v7385
  %v7387 = vpop.f32.mrf.mxu0
  %7388 = vdwg.mxu0
  %7389 = vmatpush.bf16.msra.mxu0 %v5341
  %7390 = vmatpush.bf16.msra.mxu0 %v5337
  %7391 = vmatpush.bf16.msra.mxu0 %v5333
  %7392 = vmatpush.bf16.msra.mxu0 %v5329
  %7393 = vmatpush.bf16.msra.mxu0 %v5325
  %7394 = vmatpush.bf16.msra.mxu0 %v5321
  %7395 = vmatpush.bf16.msra.mxu0 %v5317
  %7396 = vmatpush.bf16.msra.mxu0 %v5313
  %7397 = vmatmul.bf16.gmra.mxu0 %v1192
  %v7398 = vpop.f32.mrf.mxu0
  %v7399 = vadd.f32 %v7386, %v7398
  %v7400 = vpop.f32.mrf.mxu0
  %7401 = vdwg.mxu0
  %7402 = vmatpush.bf16.msra.mxu0 %v5373
  %7403 = vmatpush.bf16.msra.mxu0 %v5369
  %7404 = vmatpush.bf16.msra.mxu0 %v5365
  %7405 = vmatpush.bf16.msra.mxu0 %v5361
  %7406 = vmatpush.bf16.msra.mxu0 %v5357
  %7407 = vmatpush.bf16.msra.mxu0 %v5353
  %7408 = vmatpush.bf16.msra.mxu0 %v5349
  %7409 = vmatpush.bf16.msra.mxu0 %v5345
  %7410 = vmatmul.bf16.gmra.mxu0 %v1193
  %v7411 = vpop.f32.mrf.mxu0
  %v7412 = vadd.f32 %v7399, %v7411
  %v7413 = vpop.f32.mrf.mxu0
  %7414 = vdwg.mxu0
  %7415 = vmatpush.bf16.msra.mxu0 %v5405
  %7416 = vmatpush.bf16.msra.mxu0 %v5401
  %7417 = vmatpush.bf16.msra.mxu0 %v5397
  %7418 = vmatpush.bf16.msra.mxu0 %v5393
  %7419 = vmatpush.bf16.msra.mxu0 %v5389
  %7420 = vmatpush.bf16.msra.mxu0 %v5385
  %7421 = vmatpush.bf16.msra.mxu0 %v5381
  %7422 = vmatpush.bf16.msra.mxu0 %v5377
  %7423 = vmatmul.bf16.gmra.mxu0 %v1194
  %v7424 = vpop.f32.mrf.mxu0
  %v7425 = vadd.f32 %v7412, %v7424
  %v7426 = vpop.f32.mrf.mxu0
  %7427 = vdwg.mxu0
  %7428 = vmatpush.bf16.msra.mxu0 %v5437
  %7429 = vmatpush.bf16.msra.mxu0 %v5433
  %7430 = vmatpush.bf16.msra.mxu0 %v5429
  %7431 = vmatpush.bf16.msra.mxu0 %v5425
  %7432 = vmatpush.bf16.msra.mxu0 %v5421
  %7433 = vmatpush.bf16.msra.mxu0 %v5417
  %7434 = vmatpush.bf16.msra.mxu0 %v5413
  %7435 = vmatpush.bf16.msra.mxu0 %v5409
  %7436 = vmatmul.bf16.gmra.mxu0 %v1195
  %v7437 = vpop.f32.mrf.mxu0
  %v7438 = vadd.f32 %v7425, %v7437
  %v7439 = vpop.f32.mrf.mxu0
  %7440 = vdwg.mxu0
  %7441 = vmatpush.bf16.msra.mxu0 %v5469
  %7442 = vmatpush.bf16.msra.mxu0 %v5465
  %7443 = vmatpush.bf16.msra.mxu0 %v5461
  %7444 = vmatpush.bf16.msra.mxu0 %v5457
  %7445 = vmatpush.bf16.msra.mxu0 %v5453
  %7446 = vmatpush.bf16.msra.mxu0 %v5449
  %7447 = vmatpush.bf16.msra.mxu0 %v5445
  %7448 = vmatpush.bf16.msra.mxu0 %v5441
  %7449 = vmatmul.bf16.gmra.mxu0 %v1196
  %v7450 = vpop.f32.mrf.mxu0
  %v7451 = vadd.f32 %v7438, %v7450
  %v7452 = vpop.f32.mrf.mxu0
  %7453 = vdwg.mxu0
  %7454 = vmatpush.bf16.msra.mxu0 %v5501
  %7455 = vmatpush.bf16.msra.mxu0 %v5497
  %7456 = vmatpush.bf16.msra.mxu0 %v5493
  %7457 = vmatpush.bf16.msra.mxu0 %v5489
  %7458 = vmatpush.bf16.msra.mxu0 %v5485
  %7459 = vmatpush.bf16.msra.mxu0 %v5481
  %7460 = vmatpush.bf16.msra.mxu0 %v5477
  %7461 = vmatpush.bf16.msra.mxu0 %v5473
  %7462 = vmatmul.bf16.gmra.mxu0 %v1197
  %v7463 = vpop.f32.mrf.mxu0
  %v7464 = vadd.f32 %v7451, %v7463
  %v7465 = vpop.f32.mrf.mxu0
  %7466 = vdwg.mxu0
  %7467 = vmatpush.bf16.msra.mxu0 0
  %7468 = vmatpush.bf16.msra.mxu0 0
  %7469 = vmatpush.bf16.msra.mxu0 0
  %7470 = vmatpush.bf16.msra.mxu0 0
  %7471 = vmatpush.bf16.msra.mxu0 %v5517
  %7472 = vmatpush.bf16.msra.mxu0 %v5513
  %7473 = vmatpush.bf16.msra.mxu0 %v5509
  %7474 = vmatpush.bf16.msra.mxu0 %v5505
  %7475 = vmatmul.bf16.gmra.mxu0 %v6594
  %v7476 = vpop.f32.mrf.mxu0
  %v7477 = vadd.f32 %v7464, %v7476
  %v7478 = vpop.f32.mrf.mxu0
  %7479 = vdwg.mxu0
  %7480 = vmatpush.bf16.msra.mxu0 %v4478
  %7481 = vmatpush.bf16.msra.mxu0 %v4474
  %7482 = vmatpush.bf16.msra.mxu0 %v4470
  %7483 = vmatpush.bf16.msra.mxu0 %v4466
  %7484 = vmatpush.bf16.msra.mxu0 %v4462
  %7485 = vmatpush.bf16.msra.mxu0 %v4458
  %7486 = vmatpush.bf16.msra.mxu0 %v4454
  %7487 = vmatpush.bf16.msra.mxu0 %v4450
  %7488 = vmatmul.bf16.gmra.mxu0 %v1165
  %v7489 = vpop.f32.mrf.mxu0
  %v7490 = vadd.f32 %v1108, %v7489
  %v7491 = vpop.f32.mrf.mxu0
  %7492 = vdwg.mxu0
  %7493 = vmatpush.bf16.msra.mxu0 %v4510
  %7494 = vmatpush.bf16.msra.mxu0 %v4506
  %7495 = vmatpush.bf16.msra.mxu0 %v4502
  %7496 = vmatpush.bf16.msra.mxu0 %v4498
  %7497 = vmatpush.bf16.msra.mxu0 %v4494
  %7498 = vmatpush.bf16.msra.mxu0 %v4490
  %7499 = vmatpush.bf16.msra.mxu0 %v4486
  %7500 = vmatpush.bf16.msra.mxu0 %v4482
  %7501 = vmatmul.bf16.gmra.mxu0 %v1166
  %v7502 = vpop.f32.mrf.mxu0
  %v7503 = vadd.f32 %v7490, %v7502
  %v7504 = vpop.f32.mrf.mxu0
  %7505 = vdwg.mxu0
  %7506 = vmatpush.bf16.msra.mxu0 %v4542
  %7507 = vmatpush.bf16.msra.mxu0 %v4538
  %7508 = vmatpush.bf16.msra.mxu0 %v4534
  %7509 = vmatpush.bf16.msra.mxu0 %v4530
  %7510 = vmatpush.bf16.msra.mxu0 %v4526
  %7511 = vmatpush.bf16.msra.mxu0 %v4522
  %7512 = vmatpush.bf16.msra.mxu0 %v4518
  %7513 = vmatpush.bf16.msra.mxu0 %v4514
  %7514 = vmatmul.bf16.gmra.mxu0 %v1167
  %v7515 = vpop.f32.mrf.mxu0
  %v7516 = vadd.f32 %v7503, %v7515
  %v7517 = vpop.f32.mrf.mxu0
  %7518 = vdwg.mxu0
  %7519 = vmatpush.bf16.msra.mxu0 %v4574
  %7520 = vmatpush.bf16.msra.mxu0 %v4570
  %7521 = vmatpush.bf16.msra.mxu0 %v4566
  %7522 = vmatpush.bf16.msra.mxu0 %v4562
  %7523 = vmatpush.bf16.msra.mxu0 %v4558
  %7524 = vmatpush.bf16.msra.mxu0 %v4554
  %7525 = vmatpush.bf16.msra.mxu0 %v4550
  %7526 = vmatpush.bf16.msra.mxu0 %v4546
  %7527 = vmatmul.bf16.gmra.mxu0 %v1168
  %v7528 = vpop.f32.mrf.mxu0
  %v7529 = vadd.f32 %v7516, %v7528
  %v7530 = vpop.f32.mrf.mxu0
  %7531 = vdwg.mxu0
  %7532 = vmatpush.bf16.msra.mxu0 %v4606
  %7533 = vmatpush.bf16.msra.mxu0 %v4602
  %7534 = vmatpush.bf16.msra.mxu0 %v4598
  %7535 = vmatpush.bf16.msra.mxu0 %v4594
  %7536 = vmatpush.bf16.msra.mxu0 %v4590
  %7537 = vmatpush.bf16.msra.mxu0 %v4586
  %7538 = vmatpush.bf16.msra.mxu0 %v4582
  %7539 = vmatpush.bf16.msra.mxu0 %v4578
  %7540 = vmatmul.bf16.gmra.mxu0 %v1169
  %v7541 = vpop.f32.mrf.mxu0
  %v7542 = vadd.f32 %v7529, %v7541
  %v7543 = vpop.f32.mrf.mxu0
  %7544 = vdwg.mxu0
  %7545 = vmatpush.bf16.msra.mxu0 %v4638
  %7546 = vmatpush.bf16.msra.mxu0 %v4634
  %7547 = vmatpush.bf16.msra.mxu0 %v4630
  %7548 = vmatpush.bf16.msra.mxu0 %v4626
  %7549 = vmatpush.bf16.msra.mxu0 %v4622
  %7550 = vmatpush.bf16.msra.mxu0 %v4618
  %7551 = vmatpush.bf16.msra.mxu0 %v4614
  %7552 = vmatpush.bf16.msra.mxu0 %v4610
  %7553 = vmatmul.bf16.gmra.mxu0 %v1170
  %v7554 = vpop.f32.mrf.mxu0
  %v7555 = vadd.f32 %v7542, %v7554
  %v7556 = vpop.f32.mrf.mxu0
  %7557 = vdwg.mxu0
  %7558 = vmatpush.bf16.msra.mxu0 %v4670
  %7559 = vmatpush.bf16.msra.mxu0 %v4666
  %7560 = vmatpush.bf16.msra.mxu0 %v4662
  %7561 = vmatpush.bf16.msra.mxu0 %v4658
  %7562 = vmatpush.bf16.msra.mxu0 %v4654
  %7563 = vmatpush.bf16.msra.mxu0 %v4650
  %7564 = vmatpush.bf16.msra.mxu0 %v4646
  %7565 = vmatpush.bf16.msra.mxu0 %v4642
  %7566 = vmatmul.bf16.gmra.mxu0 %v1171
  %v7567 = vpop.f32.mrf.mxu0
  %v7568 = vadd.f32 %v7555, %v7567
  %v7569 = vpop.f32.mrf.mxu0
  %7570 = vdwg.mxu0
  %7571 = vmatpush.bf16.msra.mxu0 %v4702
  %7572 = vmatpush.bf16.msra.mxu0 %v4698
  %7573 = vmatpush.bf16.msra.mxu0 %v4694
  %7574 = vmatpush.bf16.msra.mxu0 %v4690
  %7575 = vmatpush.bf16.msra.mxu0 %v4686
  %7576 = vmatpush.bf16.msra.mxu0 %v4682
  %7577 = vmatpush.bf16.msra.mxu0 %v4678
  %7578 = vmatpush.bf16.msra.mxu0 %v4674
  %7579 = vmatmul.bf16.gmra.mxu0 %v1172
  %v7580 = vpop.f32.mrf.mxu0
  %v7581 = vadd.f32 %v7568, %v7580
  %v7582 = vpop.f32.mrf.mxu0
  %7583 = vdwg.mxu0
  %7584 = vmatpush.bf16.msra.mxu0 %v4734
  %7585 = vmatpush.bf16.msra.mxu0 %v4730
  %7586 = vmatpush.bf16.msra.mxu0 %v4726
  %7587 = vmatpush.bf16.msra.mxu0 %v4722
  %7588 = vmatpush.bf16.msra.mxu0 %v4718
  %7589 = vmatpush.bf16.msra.mxu0 %v4714
  %7590 = vmatpush.bf16.msra.mxu0 %v4710
  %7591 = vmatpush.bf16.msra.mxu0 %v4706
  %7592 = vmatmul.bf16.gmra.mxu0 %v1173
  %v7593 = vpop.f32.mrf.mxu0
  %v7594 = vadd.f32 %v7581, %v7593
  %v7595 = vpop.f32.mrf.mxu0
  %7596 = vdwg.mxu0
  %7597 = vmatpush.bf16.msra.mxu0 %v4766
  %7598 = vmatpush.bf16.msra.mxu0 %v4762
  %7599 = vmatpush.bf16.msra.mxu0 %v4758
  %7600 = vmatpush.bf16.msra.mxu0 %v4754
  %7601 = vmatpush.bf16.msra.mxu0 %v4750
  %7602 = vmatpush.bf16.msra.mxu0 %v4746
  %7603 = vmatpush.bf16.msra.mxu0 %v4742
  %7604 = vmatpush.bf16.msra.mxu0 %v4738
  %7605 = vmatmul.bf16.gmra.mxu0 %v1174
  %v7606 = vpop.f32.mrf.mxu0
  %v7607 = vadd.f32 %v7594, %v7606
  %v7608 = vpop.f32.mrf.mxu0
  %7609 = vdwg.mxu0
  %7610 = vmatpush.bf16.msra.mxu0 %v4798
  %7611 = vmatpush.bf16.msra.mxu0 %v4794
  %7612 = vmatpush.bf16.msra.mxu0 %v4790
  %7613 = vmatpush.bf16.msra.mxu0 %v4786
  %7614 = vmatpush.bf16.msra.mxu0 %v4782
  %7615 = vmatpush.bf16.msra.mxu0 %v4778
  %7616 = vmatpush.bf16.msra.mxu0 %v4774
  %7617 = vmatpush.bf16.msra.mxu0 %v4770
  %7618 = vmatmul.bf16.gmra.mxu0 %v1175
  %v7619 = vpop.f32.mrf.mxu0
  %v7620 = vadd.f32 %v7607, %v7619
  %v7621 = vpop.f32.mrf.mxu0
  %7622 = vdwg.mxu0
  %7623 = vmatpush.bf16.msra.mxu0 %v4830
  %7624 = vmatpush.bf16.msra.mxu0 %v4826
  %7625 = vmatpush.bf16.msra.mxu0 %v4822
  %7626 = vmatpush.bf16.msra.mxu0 %v4818
  %7627 = vmatpush.bf16.msra.mxu0 %v4814
  %7628 = vmatpush.bf16.msra.mxu0 %v4810
  %7629 = vmatpush.bf16.msra.mxu0 %v4806
  %7630 = vmatpush.bf16.msra.mxu0 %v4802
  %7631 = vmatmul.bf16.gmra.mxu0 %v1176
  %v7632 = vpop.f32.mrf.mxu0
  %v7633 = vadd.f32 %v7620, %v7632
  %v7634 = vpop.f32.mrf.mxu0
  %7635 = vdwg.mxu0
  %7636 = vmatpush.bf16.msra.mxu0 %v4862
  %7637 = vmatpush.bf16.msra.mxu0 %v4858
  %7638 = vmatpush.bf16.msra.mxu0 %v4854
  %7639 = vmatpush.bf16.msra.mxu0 %v4850
  %7640 = vmatpush.bf16.msra.mxu0 %v4846
  %7641 = vmatpush.bf16.msra.mxu0 %v4842
  %7642 = vmatpush.bf16.msra.mxu0 %v4838
  %7643 = vmatpush.bf16.msra.mxu0 %v4834
  %7644 = vmatmul.bf16.gmra.mxu0 %v1177
  %v7645 = vpop.f32.mrf.mxu0
  %v7646 = vadd.f32 %v7633, %v7645
  %v7647 = vpop.f32.mrf.mxu0
  %7648 = vdwg.mxu0
  %7649 = vmatpush.bf16.msra.mxu0 %v4894
  %7650 = vmatpush.bf16.msra.mxu0 %v4890
  %7651 = vmatpush.bf16.msra.mxu0 %v4886
  %7652 = vmatpush.bf16.msra.mxu0 %v4882
  %7653 = vmatpush.bf16.msra.mxu0 %v4878
  %7654 = vmatpush.bf16.msra.mxu0 %v4874
  %7655 = vmatpush.bf16.msra.mxu0 %v4870
  %7656 = vmatpush.bf16.msra.mxu0 %v4866
  %7657 = vmatmul.bf16.gmra.mxu0 %v1178
  %v7658 = vpop.f32.mrf.mxu0
  %v7659 = vadd.f32 %v7646, %v7658
  %v7660 = vpop.f32.mrf.mxu0
  %7661 = vdwg.mxu0
  %7662 = vmatpush.bf16.msra.mxu0 %v4926
  %7663 = vmatpush.bf16.msra.mxu0 %v4922
  %7664 = vmatpush.bf16.msra.mxu0 %v4918
  %7665 = vmatpush.bf16.msra.mxu0 %v4914
  %7666 = vmatpush.bf16.msra.mxu0 %v4910
  %7667 = vmatpush.bf16.msra.mxu0 %v4906
  %7668 = vmatpush.bf16.msra.mxu0 %v4902
  %7669 = vmatpush.bf16.msra.mxu0 %v4898
  %7670 = vmatmul.bf16.gmra.mxu0 %v1179
  %v7671 = vpop.f32.mrf.mxu0
  %v7672 = vadd.f32 %v7659, %v7671
  %v7673 = vpop.f32.mrf.mxu0
  %7674 = vdwg.mxu0
  %7675 = vmatpush.bf16.msra.mxu0 %v4958
  %7676 = vmatpush.bf16.msra.mxu0 %v4954
  %7677 = vmatpush.bf16.msra.mxu0 %v4950
  %7678 = vmatpush.bf16.msra.mxu0 %v4946
  %7679 = vmatpush.bf16.msra.mxu0 %v4942
  %7680 = vmatpush.bf16.msra.mxu0 %v4938
  %7681 = vmatpush.bf16.msra.mxu0 %v4934
  %7682 = vmatpush.bf16.msra.mxu0 %v4930
  %7683 = vmatmul.bf16.gmra.mxu0 %v1180
  %v7684 = vpop.f32.mrf.mxu0
  %v7685 = vadd.f32 %v7672, %v7684
  %v7686 = vpop.f32.mrf.mxu0
  %7687 = vdwg.mxu0
  %7688 = vmatpush.bf16.msra.mxu0 %v4990
  %7689 = vmatpush.bf16.msra.mxu0 %v4986
  %7690 = vmatpush.bf16.msra.mxu0 %v4982
  %7691 = vmatpush.bf16.msra.mxu0 %v4978
  %7692 = vmatpush.bf16.msra.mxu0 %v4974
  %7693 = vmatpush.bf16.msra.mxu0 %v4970
  %7694 = vmatpush.bf16.msra.mxu0 %v4966
  %7695 = vmatpush.bf16.msra.mxu0 %v4962
  %7696 = vmatmul.bf16.gmra.mxu0 %v1181
  %v7697 = vpop.f32.mrf.mxu0
  %v7698 = vadd.f32 %v7685, %v7697
  %v7699 = vpop.f32.mrf.mxu0
  %7700 = vdwg.mxu0
  %7701 = vmatpush.bf16.msra.mxu0 %v5022
  %7702 = vmatpush.bf16.msra.mxu0 %v5018
  %7703 = vmatpush.bf16.msra.mxu0 %v5014
  %7704 = vmatpush.bf16.msra.mxu0 %v5010
  %7705 = vmatpush.bf16.msra.mxu0 %v5006
  %7706 = vmatpush.bf16.msra.mxu0 %v5002
  %7707 = vmatpush.bf16.msra.mxu0 %v4998
  %7708 = vmatpush.bf16.msra.mxu0 %v4994
  %7709 = vmatmul.bf16.gmra.mxu0 %v1182
  %v7710 = vpop.f32.mrf.mxu0
  %v7711 = vadd.f32 %v7698, %v7710
  %v7712 = vpop.f32.mrf.mxu0
  %7713 = vdwg.mxu0
  %7714 = vmatpush.bf16.msra.mxu0 %v5054
  %7715 = vmatpush.bf16.msra.mxu0 %v5050
  %7716 = vmatpush.bf16.msra.mxu0 %v5046
  %7717 = vmatpush.bf16.msra.mxu0 %v5042
  %7718 = vmatpush.bf16.msra.mxu0 %v5038
  %7719 = vmatpush.bf16.msra.mxu0 %v5034
  %7720 = vmatpush.bf16.msra.mxu0 %v5030
  %7721 = vmatpush.bf16.msra.mxu0 %v5026
  %7722 = vmatmul.bf16.gmra.mxu0 %v1183
  %v7723 = vpop.f32.mrf.mxu0
  %v7724 = vadd.f32 %v7711, %v7723
  %v7725 = vpop.f32.mrf.mxu0
  %7726 = vdwg.mxu0
  %7727 = vmatpush.bf16.msra.mxu0 %v5086
  %7728 = vmatpush.bf16.msra.mxu0 %v5082
  %7729 = vmatpush.bf16.msra.mxu0 %v5078
  %7730 = vmatpush.bf16.msra.mxu0 %v5074
  %7731 = vmatpush.bf16.msra.mxu0 %v5070
  %7732 = vmatpush.bf16.msra.mxu0 %v5066
  %7733 = vmatpush.bf16.msra.mxu0 %v5062
  %7734 = vmatpush.bf16.msra.mxu0 %v5058
  %7735 = vmatmul.bf16.gmra.mxu0 %v1184
  %v7736 = vpop.f32.mrf.mxu0
  %v7737 = vadd.f32 %v7724, %v7736
  %v7738 = vpop.f32.mrf.mxu0
  %7739 = vdwg.mxu0
  %7740 = vmatpush.bf16.msra.mxu0 %v5118
  %7741 = vmatpush.bf16.msra.mxu0 %v5114
  %7742 = vmatpush.bf16.msra.mxu0 %v5110
  %7743 = vmatpush.bf16.msra.mxu0 %v5106
  %7744 = vmatpush.bf16.msra.mxu0 %v5102
  %7745 = vmatpush.bf16.msra.mxu0 %v5098
  %7746 = vmatpush.bf16.msra.mxu0 %v5094
  %7747 = vmatpush.bf16.msra.mxu0 %v5090
  %7748 = vmatmul.bf16.gmra.mxu0 %v1185
  %v7749 = vpop.f32.mrf.mxu0
  %v7750 = vadd.f32 %v7737, %v7749
  %v7751 = vpop.f32.mrf.mxu0
  %7752 = vdwg.mxu0
  %7753 = vmatpush.bf16.msra.mxu0 %v5150
  %7754 = vmatpush.bf16.msra.mxu0 %v5146
  %7755 = vmatpush.bf16.msra.mxu0 %v5142
  %7756 = vmatpush.bf16.msra.mxu0 %v5138
  %7757 = vmatpush.bf16.msra.mxu0 %v5134
  %7758 = vmatpush.bf16.msra.mxu0 %v5130
  %7759 = vmatpush.bf16.msra.mxu0 %v5126
  %7760 = vmatpush.bf16.msra.mxu0 %v5122
  %7761 = vmatmul.bf16.gmra.mxu0 %v1186
  %v7762 = vpop.f32.mrf.mxu0
  %v7763 = vadd.f32 %v7750, %v7762
  %v7764 = vpop.f32.mrf.mxu0
  %7765 = vdwg.mxu0
  %7766 = vmatpush.bf16.msra.mxu0 %v5182
  %7767 = vmatpush.bf16.msra.mxu0 %v5178
  %7768 = vmatpush.bf16.msra.mxu0 %v5174
  %7769 = vmatpush.bf16.msra.mxu0 %v5170
  %7770 = vmatpush.bf16.msra.mxu0 %v5166
  %7771 = vmatpush.bf16.msra.mxu0 %v5162
  %7772 = vmatpush.bf16.msra.mxu0 %v5158
  %7773 = vmatpush.bf16.msra.mxu0 %v5154
  %7774 = vmatmul.bf16.gmra.mxu0 %v1187
  %v7775 = vpop.f32.mrf.mxu0
  %v7776 = vadd.f32 %v7763, %v7775
  %v7777 = vpop.f32.mrf.mxu0
  %7778 = vdwg.mxu0
  %7779 = vmatpush.bf16.msra.mxu0 %v5214
  %7780 = vmatpush.bf16.msra.mxu0 %v5210
  %7781 = vmatpush.bf16.msra.mxu0 %v5206
  %7782 = vmatpush.bf16.msra.mxu0 %v5202
  %7783 = vmatpush.bf16.msra.mxu0 %v5198
  %7784 = vmatpush.bf16.msra.mxu0 %v5194
  %7785 = vmatpush.bf16.msra.mxu0 %v5190
  %7786 = vmatpush.bf16.msra.mxu0 %v5186
  %7787 = vmatmul.bf16.gmra.mxu0 %v1188
  %v7788 = vpop.f32.mrf.mxu0
  %v7789 = vadd.f32 %v7776, %v7788
  %v7790 = vpop.f32.mrf.mxu0
  %7791 = vdwg.mxu0
  %7792 = vmatpush.bf16.msra.mxu0 %v5246
  %7793 = vmatpush.bf16.msra.mxu0 %v5242
  %7794 = vmatpush.bf16.msra.mxu0 %v5238
  %7795 = vmatpush.bf16.msra.mxu0 %v5234
  %7796 = vmatpush.bf16.msra.mxu0 %v5230
  %7797 = vmatpush.bf16.msra.mxu0 %v5226
  %7798 = vmatpush.bf16.msra.mxu0 %v5222
  %7799 = vmatpush.bf16.msra.mxu0 %v5218
  %7800 = vmatmul.bf16.gmra.mxu0 %v1189
  %v7801 = vpop.f32.mrf.mxu0
  %v7802 = vadd.f32 %v7789, %v7801
  %v7803 = vpop.f32.mrf.mxu0
  %7804 = vdwg.mxu0
  %7805 = vmatpush.bf16.msra.mxu0 %v5278
  %7806 = vmatpush.bf16.msra.mxu0 %v5274
  %7807 = vmatpush.bf16.msra.mxu0 %v5270
  %7808 = vmatpush.bf16.msra.mxu0 %v5266
  %7809 = vmatpush.bf16.msra.mxu0 %v5262
  %7810 = vmatpush.bf16.msra.mxu0 %v5258
  %7811 = vmatpush.bf16.msra.mxu0 %v5254
  %7812 = vmatpush.bf16.msra.mxu0 %v5250
  %7813 = vmatmul.bf16.gmra.mxu0 %v1190
  %v7814 = vpop.f32.mrf.mxu0
  %v7815 = vadd.f32 %v7802, %v7814
  %v7816 = vpop.f32.mrf.mxu0
  %7817 = vdwg.mxu0
  %7818 = vmatpush.bf16.msra.mxu0 %v5310
  %7819 = vmatpush.bf16.msra.mxu0 %v5306
  %7820 = vmatpush.bf16.msra.mxu0 %v5302
  %7821 = vmatpush.bf16.msra.mxu0 %v5298
  %7822 = vmatpush.bf16.msra.mxu0 %v5294
  %7823 = vmatpush.bf16.msra.mxu0 %v5290
  %7824 = vmatpush.bf16.msra.mxu0 %v5286
  %7825 = vmatpush.bf16.msra.mxu0 %v5282
  %7826 = vmatmul.bf16.gmra.mxu0 %v1191
  %v7827 = vpop.f32.mrf.mxu0
  %v7828 = vadd.f32 %v7815, %v7827
  %v7829 = vpop.f32.mrf.mxu0
  %7830 = vdwg.mxu0
  %7831 = vmatpush.bf16.msra.mxu0 %v5342
  %7832 = vmatpush.bf16.msra.mxu0 %v5338
  %7833 = vmatpush.bf16.msra.mxu0 %v5334
  %7834 = vmatpush.bf16.msra.mxu0 %v5330
  %7835 = vmatpush.bf16.msra.mxu0 %v5326
  %7836 = vmatpush.bf16.msra.mxu0 %v5322
  %7837 = vmatpush.bf16.msra.mxu0 %v5318
  %7838 = vmatpush.bf16.msra.mxu0 %v5314
  %7839 = vmatmul.bf16.gmra.mxu0 %v1192
  %v7840 = vpop.f32.mrf.mxu0
  %v7841 = vadd.f32 %v7828, %v7840
  %v7842 = vpop.f32.mrf.mxu0
  %7843 = vdwg.mxu0
  %7844 = vmatpush.bf16.msra.mxu0 %v5374
  %7845 = vmatpush.bf16.msra.mxu0 %v5370
  %7846 = vmatpush.bf16.msra.mxu0 %v5366
  %7847 = vmatpush.bf16.msra.mxu0 %v5362
  %7848 = vmatpush.bf16.msra.mxu0 %v5358
  %7849 = vmatpush.bf16.msra.mxu0 %v5354
  %7850 = vmatpush.bf16.msra.mxu0 %v5350
  %7851 = vmatpush.bf16.msra.mxu0 %v5346
  %7852 = vmatmul.bf16.gmra.mxu0 %v1193
  %v7853 = vpop.f32.mrf.mxu0
  %v7854 = vadd.f32 %v7841, %v7853
  %v7855 = vpop.f32.mrf.mxu0
  %7856 = vdwg.mxu0
  %7857 = vmatpush.bf16.msra.mxu0 %v5406
  %7858 = vmatpush.bf16.msra.mxu0 %v5402
  %7859 = vmatpush.bf16.msra.mxu0 %v5398
  %7860 = vmatpush.bf16.msra.mxu0 %v5394
  %7861 = vmatpush.bf16.msra.mxu0 %v5390
  %7862 = vmatpush.bf16.msra.mxu0 %v5386
  %7863 = vmatpush.bf16.msra.mxu0 %v5382
  %7864 = vmatpush.bf16.msra.mxu0 %v5378
  %7865 = vmatmul.bf16.gmra.mxu0 %v1194
  %v7866 = vpop.f32.mrf.mxu0
  %v7867 = vadd.f32 %v7854, %v7866
  %v7868 = vpop.f32.mrf.mxu0
  %7869 = vdwg.mxu0
  %7870 = vmatpush.bf16.msra.mxu0 %v5438
  %7871 = vmatpush.bf16.msra.mxu0 %v5434
  %7872 = vmatpush.bf16.msra.mxu0 %v5430
  %7873 = vmatpush.bf16.msra.mxu0 %v5426
  %7874 = vmatpush.bf16.msra.mxu0 %v5422
  %7875 = vmatpush.bf16.msra.mxu0 %v5418
  %7876 = vmatpush.bf16.msra.mxu0 %v5414
  %7877 = vmatpush.bf16.msra.mxu0 %v5410
  %7878 = vmatmul.bf16.gmra.mxu0 %v1195
  %v7879 = vpop.f32.mrf.mxu0
  %v7880 = vadd.f32 %v7867, %v7879
  %v7881 = vpop.f32.mrf.mxu0
  %7882 = vdwg.mxu0
  %7883 = vmatpush.bf16.msra.mxu0 %v5470
  %7884 = vmatpush.bf16.msra.mxu0 %v5466
  %7885 = vmatpush.bf16.msra.mxu0 %v5462
  %7886 = vmatpush.bf16.msra.mxu0 %v5458
  %7887 = vmatpush.bf16.msra.mxu0 %v5454
  %7888 = vmatpush.bf16.msra.mxu0 %v5450
  %7889 = vmatpush.bf16.msra.mxu0 %v5446
  %7890 = vmatpush.bf16.msra.mxu0 %v5442
  %7891 = vmatmul.bf16.gmra.mxu0 %v1196
  %v7892 = vpop.f32.mrf.mxu0
  %v7893 = vadd.f32 %v7880, %v7892
  %v7894 = vpop.f32.mrf.mxu0
  %7895 = vdwg.mxu0
  %7896 = vmatpush.bf16.msra.mxu0 %v5502
  %7897 = vmatpush.bf16.msra.mxu0 %v5498
  %7898 = vmatpush.bf16.msra.mxu0 %v5494
  %7899 = vmatpush.bf16.msra.mxu0 %v5490
  %7900 = vmatpush.bf16.msra.mxu0 %v5486
  %7901 = vmatpush.bf16.msra.mxu0 %v5482
  %7902 = vmatpush.bf16.msra.mxu0 %v5478
  %7903 = vmatpush.bf16.msra.mxu0 %v5474
  %7904 = vmatmul.bf16.gmra.mxu0 %v1197
  %v7905 = vpop.f32.mrf.mxu0
  %v7906 = vadd.f32 %v7893, %v7905
  %v7907 = vpop.f32.mrf.mxu0
  %7908 = vdwg.mxu0
  %7909 = vmatpush.bf16.msra.mxu0 0
  %7910 = vmatpush.bf16.msra.mxu0 0
  %7911 = vmatpush.bf16.msra.mxu0 0
  %7912 = vmatpush.bf16.msra.mxu0 0
  %7913 = vmatpush.bf16.msra.mxu0 %v5518
  %7914 = vmatpush.bf16.msra.mxu0 %v5514
  %7915 = vmatpush.bf16.msra.mxu0 %v5510
  %7916 = vmatpush.bf16.msra.mxu0 %v5506
  %7917 = vmatmul.bf16.gmra.mxu0 %v6594
  %v7918 = vpop.f32.mrf.mxu0
  %v7919 = vadd.f32 %v7906, %v7918
  %v7920 = vpop.f32.mrf.mxu0
  %7921 = vdwg.mxu0
  %7922 = vmatpush.bf16.msra.mxu0 %v4479
  %7923 = vmatpush.bf16.msra.mxu0 %v4475
  %7924 = vmatpush.bf16.msra.mxu0 %v4471
  %7925 = vmatpush.bf16.msra.mxu0 %v4467
  %7926 = vmatpush.bf16.msra.mxu0 %v4463
  %7927 = vmatpush.bf16.msra.mxu0 %v4459
  %7928 = vmatpush.bf16.msra.mxu0 %v4455
  %7929 = vmatpush.bf16.msra.mxu0 %v4451
  %7930 = vmatmul.bf16.gmra.mxu0 %v1165
  %v7931 = vpop.f32.mrf.mxu0
  %v7932 = vadd.f32 %v1109, %v7931
  %v7933 = vpop.f32.mrf.mxu0
  %7934 = vdwg.mxu0
  %7935 = vmatpush.bf16.msra.mxu0 %v4511
  %7936 = vmatpush.bf16.msra.mxu0 %v4507
  %7937 = vmatpush.bf16.msra.mxu0 %v4503
  %7938 = vmatpush.bf16.msra.mxu0 %v4499
  %7939 = vmatpush.bf16.msra.mxu0 %v4495
  %7940 = vmatpush.bf16.msra.mxu0 %v4491
  %7941 = vmatpush.bf16.msra.mxu0 %v4487
  %7942 = vmatpush.bf16.msra.mxu0 %v4483
  %7943 = vmatmul.bf16.gmra.mxu0 %v1166
  %v7944 = vpop.f32.mrf.mxu0
  %v7945 = vadd.f32 %v7932, %v7944
  %v7946 = vpop.f32.mrf.mxu0
  %7947 = vdwg.mxu0
  %7948 = vmatpush.bf16.msra.mxu0 %v4543
  %7949 = vmatpush.bf16.msra.mxu0 %v4539
  %7950 = vmatpush.bf16.msra.mxu0 %v4535
  %7951 = vmatpush.bf16.msra.mxu0 %v4531
  %7952 = vmatpush.bf16.msra.mxu0 %v4527
  %7953 = vmatpush.bf16.msra.mxu0 %v4523
  %7954 = vmatpush.bf16.msra.mxu0 %v4519
  %7955 = vmatpush.bf16.msra.mxu0 %v4515
  %7956 = vmatmul.bf16.gmra.mxu0 %v1167
  %v7957 = vpop.f32.mrf.mxu0
  %v7958 = vadd.f32 %v7945, %v7957
  %v7959 = vpop.f32.mrf.mxu0
  %7960 = vdwg.mxu0
  %7961 = vmatpush.bf16.msra.mxu0 %v4575
  %7962 = vmatpush.bf16.msra.mxu0 %v4571
  %7963 = vmatpush.bf16.msra.mxu0 %v4567
  %7964 = vmatpush.bf16.msra.mxu0 %v4563
  %7965 = vmatpush.bf16.msra.mxu0 %v4559
  %7966 = vmatpush.bf16.msra.mxu0 %v4555
  %7967 = vmatpush.bf16.msra.mxu0 %v4551
  %7968 = vmatpush.bf16.msra.mxu0 %v4547
  %7969 = vmatmul.bf16.gmra.mxu0 %v1168
  %v7970 = vpop.f32.mrf.mxu0
  %v7971 = vadd.f32 %v7958, %v7970
  %v7972 = vpop.f32.mrf.mxu0
  %7973 = vdwg.mxu0
  %7974 = vmatpush.bf16.msra.mxu0 %v4607
  %7975 = vmatpush.bf16.msra.mxu0 %v4603
  %7976 = vmatpush.bf16.msra.mxu0 %v4599
  %7977 = vmatpush.bf16.msra.mxu0 %v4595
  %7978 = vmatpush.bf16.msra.mxu0 %v4591
  %7979 = vmatpush.bf16.msra.mxu0 %v4587
  %7980 = vmatpush.bf16.msra.mxu0 %v4583
  %7981 = vmatpush.bf16.msra.mxu0 %v4579
  %7982 = vmatmul.bf16.gmra.mxu0 %v1169
  %v7983 = vpop.f32.mrf.mxu0
  %v7984 = vadd.f32 %v7971, %v7983
  %v7985 = vpop.f32.mrf.mxu0
  %7986 = vdwg.mxu0
  %7987 = vmatpush.bf16.msra.mxu0 %v4639
  %7988 = vmatpush.bf16.msra.mxu0 %v4635
  %7989 = vmatpush.bf16.msra.mxu0 %v4631
  %7990 = vmatpush.bf16.msra.mxu0 %v4627
  %7991 = vmatpush.bf16.msra.mxu0 %v4623
  %7992 = vmatpush.bf16.msra.mxu0 %v4619
  %7993 = vmatpush.bf16.msra.mxu0 %v4615
  %7994 = vmatpush.bf16.msra.mxu0 %v4611
  %7995 = vmatmul.bf16.gmra.mxu0 %v1170
  %v7996 = vpop.f32.mrf.mxu0
  %v7997 = vadd.f32 %v7984, %v7996
  %v7998 = vpop.f32.mrf.mxu0
  %7999 = vdwg.mxu0
  %8000 = vmatpush.bf16.msra.mxu0 %v4671
  %8001 = vmatpush.bf16.msra.mxu0 %v4667
  %8002 = vmatpush.bf16.msra.mxu0 %v4663
  %8003 = vmatpush.bf16.msra.mxu0 %v4659
  %8004 = vmatpush.bf16.msra.mxu0 %v4655
  %8005 = vmatpush.bf16.msra.mxu0 %v4651
  %8006 = vmatpush.bf16.msra.mxu0 %v4647
  %8007 = vmatpush.bf16.msra.mxu0 %v4643
  %8008 = vmatmul.bf16.gmra.mxu0 %v1171
  %v8009 = vpop.f32.mrf.mxu0
  %v8010 = vadd.f32 %v7997, %v8009
  %v8011 = vpop.f32.mrf.mxu0
  %8012 = vdwg.mxu0
  %8013 = vmatpush.bf16.msra.mxu0 %v4703
  %8014 = vmatpush.bf16.msra.mxu0 %v4699
  %8015 = vmatpush.bf16.msra.mxu0 %v4695
  %8016 = vmatpush.bf16.msra.mxu0 %v4691
  %8017 = vmatpush.bf16.msra.mxu0 %v4687
  %8018 = vmatpush.bf16.msra.mxu0 %v4683
  %8019 = vmatpush.bf16.msra.mxu0 %v4679
  %8020 = vmatpush.bf16.msra.mxu0 %v4675
  %8021 = vmatmul.bf16.gmra.mxu0 %v1172
  %v8022 = vpop.f32.mrf.mxu0
  %v8023 = vadd.f32 %v8010, %v8022
  %v8024 = vpop.f32.mrf.mxu0
  %8025 = vdwg.mxu0
  %8026 = vmatpush.bf16.msra.mxu0 %v4735
  %8027 = vmatpush.bf16.msra.mxu0 %v4731
  %8028 = vmatpush.bf16.msra.mxu0 %v4727
  %8029 = vmatpush.bf16.msra.mxu0 %v4723
  %8030 = vmatpush.bf16.msra.mxu0 %v4719
  %8031 = vmatpush.bf16.msra.mxu0 %v4715
  %8032 = vmatpush.bf16.msra.mxu0 %v4711
  %8033 = vmatpush.bf16.msra.mxu0 %v4707
  %8034 = vmatmul.bf16.gmra.mxu0 %v1173
  %v8035 = vpop.f32.mrf.mxu0
  %v8036 = vadd.f32 %v8023, %v8035
  %v8037 = vpop.f32.mrf.mxu0
  %8038 = vdwg.mxu0
  %8039 = vmatpush.bf16.msra.mxu0 %v4767
  %8040 = vmatpush.bf16.msra.mxu0 %v4763
  %8041 = vmatpush.bf16.msra.mxu0 %v4759
  %8042 = vmatpush.bf16.msra.mxu0 %v4755
  %8043 = vmatpush.bf16.msra.mxu0 %v4751
  %8044 = vmatpush.bf16.msra.mxu0 %v4747
  %8045 = vmatpush.bf16.msra.mxu0 %v4743
  %8046 = vmatpush.bf16.msra.mxu0 %v4739
  %8047 = vmatmul.bf16.gmra.mxu0 %v1174
  %v8048 = vpop.f32.mrf.mxu0
  %v8049 = vadd.f32 %v8036, %v8048
  %v8050 = vpop.f32.mrf.mxu0
  %8051 = vdwg.mxu0
  %8052 = vmatpush.bf16.msra.mxu0 %v4799
  %8053 = vmatpush.bf16.msra.mxu0 %v4795
  %8054 = vmatpush.bf16.msra.mxu0 %v4791
  %8055 = vmatpush.bf16.msra.mxu0 %v4787
  %8056 = vmatpush.bf16.msra.mxu0 %v4783
  %8057 = vmatpush.bf16.msra.mxu0 %v4779
  %8058 = vmatpush.bf16.msra.mxu0 %v4775
  %8059 = vmatpush.bf16.msra.mxu0 %v4771
  %8060 = vmatmul.bf16.gmra.mxu0 %v1175
  %v8061 = vpop.f32.mrf.mxu0
  %v8062 = vadd.f32 %v8049, %v8061
  %v8063 = vpop.f32.mrf.mxu0
  %8064 = vdwg.mxu0
  %8065 = vmatpush.bf16.msra.mxu0 %v4831
  %8066 = vmatpush.bf16.msra.mxu0 %v4827
  %8067 = vmatpush.bf16.msra.mxu0 %v4823
  %8068 = vmatpush.bf16.msra.mxu0 %v4819
  %8069 = vmatpush.bf16.msra.mxu0 %v4815
  %8070 = vmatpush.bf16.msra.mxu0 %v4811
  %8071 = vmatpush.bf16.msra.mxu0 %v4807
  %8072 = vmatpush.bf16.msra.mxu0 %v4803
  %8073 = vmatmul.bf16.gmra.mxu0 %v1176
  %v8074 = vpop.f32.mrf.mxu0
  %v8075 = vadd.f32 %v8062, %v8074
  %v8076 = vpop.f32.mrf.mxu0
  %8077 = vdwg.mxu0
  %8078 = vmatpush.bf16.msra.mxu0 %v4863
  %8079 = vmatpush.bf16.msra.mxu0 %v4859
  %8080 = vmatpush.bf16.msra.mxu0 %v4855
  %8081 = vmatpush.bf16.msra.mxu0 %v4851
  %8082 = vmatpush.bf16.msra.mxu0 %v4847
  %8083 = vmatpush.bf16.msra.mxu0 %v4843
  %8084 = vmatpush.bf16.msra.mxu0 %v4839
  %8085 = vmatpush.bf16.msra.mxu0 %v4835
  %8086 = vmatmul.bf16.gmra.mxu0 %v1177
  %v8087 = vpop.f32.mrf.mxu0
  %v8088 = vadd.f32 %v8075, %v8087
  %v8089 = vpop.f32.mrf.mxu0
  %8090 = vdwg.mxu0
  %8091 = vmatpush.bf16.msra.mxu0 %v4895
  %8092 = vmatpush.bf16.msra.mxu0 %v4891
  %8093 = vmatpush.bf16.msra.mxu0 %v4887
  %8094 = vmatpush.bf16.msra.mxu0 %v4883
  %8095 = vmatpush.bf16.msra.mxu0 %v4879
  %8096 = vmatpush.bf16.msra.mxu0 %v4875
  %8097 = vmatpush.bf16.msra.mxu0 %v4871
  %8098 = vmatpush.bf16.msra.mxu0 %v4867
  %8099 = vmatmul.bf16.gmra.mxu0 %v1178
  %v8100 = vpop.f32.mrf.mxu0
  %v8101 = vadd.f32 %v8088, %v8100
  %v8102 = vpop.f32.mrf.mxu0
  %8103 = vdwg.mxu0
  %8104 = vmatpush.bf16.msra.mxu0 %v4927
  %8105 = vmatpush.bf16.msra.mxu0 %v4923
  %8106 = vmatpush.bf16.msra.mxu0 %v4919
  %8107 = vmatpush.bf16.msra.mxu0 %v4915
  %8108 = vmatpush.bf16.msra.mxu0 %v4911
  %8109 = vmatpush.bf16.msra.mxu0 %v4907
  %8110 = vmatpush.bf16.msra.mxu0 %v4903
  %8111 = vmatpush.bf16.msra.mxu0 %v4899
  %8112 = vmatmul.bf16.gmra.mxu0 %v1179
  %v8113 = vpop.f32.mrf.mxu0
  %v8114 = vadd.f32 %v8101, %v8113
  %v8115 = vpop.f32.mrf.mxu0
  %8116 = vdwg.mxu0
  %8117 = vmatpush.bf16.msra.mxu0 %v4959
  %8118 = vmatpush.bf16.msra.mxu0 %v4955
  %8119 = vmatpush.bf16.msra.mxu0 %v4951
  %8120 = vmatpush.bf16.msra.mxu0 %v4947
  %8121 = vmatpush.bf16.msra.mxu0 %v4943
  %8122 = vmatpush.bf16.msra.mxu0 %v4939
  %8123 = vmatpush.bf16.msra.mxu0 %v4935
  %8124 = vmatpush.bf16.msra.mxu0 %v4931
  %8125 = vmatmul.bf16.gmra.mxu0 %v1180
  %v8126 = vpop.f32.mrf.mxu0
  %v8127 = vadd.f32 %v8114, %v8126
  %v8128 = vpop.f32.mrf.mxu0
  %8129 = vdwg.mxu0
  %8130 = vmatpush.bf16.msra.mxu0 %v4991
  %8131 = vmatpush.bf16.msra.mxu0 %v4987
  %8132 = vmatpush.bf16.msra.mxu0 %v4983
  %8133 = vmatpush.bf16.msra.mxu0 %v4979
  %8134 = vmatpush.bf16.msra.mxu0 %v4975
  %8135 = vmatpush.bf16.msra.mxu0 %v4971
  %8136 = vmatpush.bf16.msra.mxu0 %v4967
  %8137 = vmatpush.bf16.msra.mxu0 %v4963
  %8138 = vmatmul.bf16.gmra.mxu0 %v1181
  %v8139 = vpop.f32.mrf.mxu0
  %v8140 = vadd.f32 %v8127, %v8139
  %v8141 = vpop.f32.mrf.mxu0
  %8142 = vdwg.mxu0
  %8143 = vmatpush.bf16.msra.mxu0 %v5023
  %8144 = vmatpush.bf16.msra.mxu0 %v5019
  %8145 = vmatpush.bf16.msra.mxu0 %v5015
  %8146 = vmatpush.bf16.msra.mxu0 %v5011
  %8147 = vmatpush.bf16.msra.mxu0 %v5007
  %8148 = vmatpush.bf16.msra.mxu0 %v5003
  %8149 = vmatpush.bf16.msra.mxu0 %v4999
  %8150 = vmatpush.bf16.msra.mxu0 %v4995
  %8151 = vmatmul.bf16.gmra.mxu0 %v1182
  %v8152 = vpop.f32.mrf.mxu0
  %v8153 = vadd.f32 %v8140, %v8152
  %v8154 = vpop.f32.mrf.mxu0
  %8155 = vdwg.mxu0
  %8156 = vmatpush.bf16.msra.mxu0 %v5055
  %8157 = vmatpush.bf16.msra.mxu0 %v5051
  %8158 = vmatpush.bf16.msra.mxu0 %v5047
  %8159 = vmatpush.bf16.msra.mxu0 %v5043
  %8160 = vmatpush.bf16.msra.mxu0 %v5039
  %8161 = vmatpush.bf16.msra.mxu0 %v5035
  %8162 = vmatpush.bf16.msra.mxu0 %v5031
  %8163 = vmatpush.bf16.msra.mxu0 %v5027
  %8164 = vmatmul.bf16.gmra.mxu0 %v1183
  %v8165 = vpop.f32.mrf.mxu0
  %v8166 = vadd.f32 %v8153, %v8165
  %v8167 = vpop.f32.mrf.mxu0
  %8168 = vdwg.mxu0
  %8169 = vmatpush.bf16.msra.mxu0 %v5087
  %8170 = vmatpush.bf16.msra.mxu0 %v5083
  %8171 = vmatpush.bf16.msra.mxu0 %v5079
  %8172 = vmatpush.bf16.msra.mxu0 %v5075
  %8173 = vmatpush.bf16.msra.mxu0 %v5071
  %8174 = vmatpush.bf16.msra.mxu0 %v5067
  %8175 = vmatpush.bf16.msra.mxu0 %v5063
  %8176 = vmatpush.bf16.msra.mxu0 %v5059
  %8177 = vmatmul.bf16.gmra.mxu0 %v1184
  %v8178 = vpop.f32.mrf.mxu0
  %v8179 = vadd.f32 %v8166, %v8178
  %v8180 = vpop.f32.mrf.mxu0
  %8181 = vdwg.mxu0
  %8182 = vmatpush.bf16.msra.mxu0 %v5119
  %8183 = vmatpush.bf16.msra.mxu0 %v5115
  %8184 = vmatpush.bf16.msra.mxu0 %v5111
  %8185 = vmatpush.bf16.msra.mxu0 %v5107
  %8186 = vmatpush.bf16.msra.mxu0 %v5103
  %8187 = vmatpush.bf16.msra.mxu0 %v5099
  %8188 = vmatpush.bf16.msra.mxu0 %v5095
  %8189 = vmatpush.bf16.msra.mxu0 %v5091
  %8190 = vmatmul.bf16.gmra.mxu0 %v1185
  %v8191 = vpop.f32.mrf.mxu0
  %v8192 = vadd.f32 %v8179, %v8191
  %v8193 = vpop.f32.mrf.mxu0
  %8194 = vdwg.mxu0
  %8195 = vmatpush.bf16.msra.mxu0 %v5151
  %8196 = vmatpush.bf16.msra.mxu0 %v5147
  %8197 = vmatpush.bf16.msra.mxu0 %v5143
  %8198 = vmatpush.bf16.msra.mxu0 %v5139
  %8199 = vmatpush.bf16.msra.mxu0 %v5135
  %8200 = vmatpush.bf16.msra.mxu0 %v5131
  %8201 = vmatpush.bf16.msra.mxu0 %v5127
  %8202 = vmatpush.bf16.msra.mxu0 %v5123
  %8203 = vmatmul.bf16.gmra.mxu0 %v1186
  %v8204 = vpop.f32.mrf.mxu0
  %v8205 = vadd.f32 %v8192, %v8204
  %v8206 = vpop.f32.mrf.mxu0
  %8207 = vdwg.mxu0
  %8208 = vmatpush.bf16.msra.mxu0 %v5183
  %8209 = vmatpush.bf16.msra.mxu0 %v5179
  %8210 = vmatpush.bf16.msra.mxu0 %v5175
  %8211 = vmatpush.bf16.msra.mxu0 %v5171
  %8212 = vmatpush.bf16.msra.mxu0 %v5167
  %8213 = vmatpush.bf16.msra.mxu0 %v5163
  %8214 = vmatpush.bf16.msra.mxu0 %v5159
  %8215 = vmatpush.bf16.msra.mxu0 %v5155
  %8216 = vmatmul.bf16.gmra.mxu0 %v1187
  %v8217 = vpop.f32.mrf.mxu0
  %v8218 = vadd.f32 %v8205, %v8217
  %v8219 = vpop.f32.mrf.mxu0
  %8220 = vdwg.mxu0
  %8221 = vmatpush.bf16.msra.mxu0 %v5215
  %8222 = vmatpush.bf16.msra.mxu0 %v5211
  %8223 = vmatpush.bf16.msra.mxu0 %v5207
  %8224 = vmatpush.bf16.msra.mxu0 %v5203
  %8225 = vmatpush.bf16.msra.mxu0 %v5199
  %8226 = vmatpush.bf16.msra.mxu0 %v5195
  %8227 = vmatpush.bf16.msra.mxu0 %v5191
  %8228 = vmatpush.bf16.msra.mxu0 %v5187
  %8229 = vmatmul.bf16.gmra.mxu0 %v1188
  %v8230 = vpop.f32.mrf.mxu0
  %v8231 = vadd.f32 %v8218, %v8230
  %v8232 = vpop.f32.mrf.mxu0
  %8233 = vdwg.mxu0
  %8234 = vmatpush.bf16.msra.mxu0 %v5247
  %8235 = vmatpush.bf16.msra.mxu0 %v5243
  %8236 = vmatpush.bf16.msra.mxu0 %v5239
  %8237 = vmatpush.bf16.msra.mxu0 %v5235
  %8238 = vmatpush.bf16.msra.mxu0 %v5231
  %8239 = vmatpush.bf16.msra.mxu0 %v5227
  %8240 = vmatpush.bf16.msra.mxu0 %v5223
  %8241 = vmatpush.bf16.msra.mxu0 %v5219
  %8242 = vmatmul.bf16.gmra.mxu0 %v1189
  %v8243 = vpop.f32.mrf.mxu0
  %v8244 = vadd.f32 %v8231, %v8243
  %v8245 = vpop.f32.mrf.mxu0
  %8246 = vdwg.mxu0
  %8247 = vmatpush.bf16.msra.mxu0 %v5279
  %8248 = vmatpush.bf16.msra.mxu0 %v5275
  %8249 = vmatpush.bf16.msra.mxu0 %v5271
  %8250 = vmatpush.bf16.msra.mxu0 %v5267
  %8251 = vmatpush.bf16.msra.mxu0 %v5263
  %8252 = vmatpush.bf16.msra.mxu0 %v5259
  %8253 = vmatpush.bf16.msra.mxu0 %v5255
  %8254 = vmatpush.bf16.msra.mxu0 %v5251
  %8255 = vmatmul.bf16.gmra.mxu0 %v1190
  %v8256 = vpop.f32.mrf.mxu0
  %v8257 = vadd.f32 %v8244, %v8256
  %v8258 = vpop.f32.mrf.mxu0
  %8259 = vdwg.mxu0
  %8260 = vmatpush.bf16.msra.mxu0 %v5311
  %8261 = vmatpush.bf16.msra.mxu0 %v5307
  %8262 = vmatpush.bf16.msra.mxu0 %v5303
  %8263 = vmatpush.bf16.msra.mxu0 %v5299
  %8264 = vmatpush.bf16.msra.mxu0 %v5295
  %8265 = vmatpush.bf16.msra.mxu0 %v5291
  %8266 = vmatpush.bf16.msra.mxu0 %v5287
  %8267 = vmatpush.bf16.msra.mxu0 %v5283
  %8268 = vmatmul.bf16.gmra.mxu0 %v1191
  %v8269 = vpop.f32.mrf.mxu0
  %v8270 = vadd.f32 %v8257, %v8269
  %v8271 = vpop.f32.mrf.mxu0
  %8272 = vdwg.mxu0
  %8273 = vmatpush.bf16.msra.mxu0 %v5343
  %8274 = vmatpush.bf16.msra.mxu0 %v5339
  %8275 = vmatpush.bf16.msra.mxu0 %v5335
  %8276 = vmatpush.bf16.msra.mxu0 %v5331
  %8277 = vmatpush.bf16.msra.mxu0 %v5327
  %8278 = vmatpush.bf16.msra.mxu0 %v5323
  %8279 = vmatpush.bf16.msra.mxu0 %v5319
  %8280 = vmatpush.bf16.msra.mxu0 %v5315
  %8281 = vmatmul.bf16.gmra.mxu0 %v1192
  %v8282 = vpop.f32.mrf.mxu0
  %v8283 = vadd.f32 %v8270, %v8282
  %v8284 = vpop.f32.mrf.mxu0
  %8285 = vdwg.mxu0
  %8286 = vmatpush.bf16.msra.mxu0 %v5375
  %8287 = vmatpush.bf16.msra.mxu0 %v5371
  %8288 = vmatpush.bf16.msra.mxu0 %v5367
  %8289 = vmatpush.bf16.msra.mxu0 %v5363
  %8290 = vmatpush.bf16.msra.mxu0 %v5359
  %8291 = vmatpush.bf16.msra.mxu0 %v5355
  %8292 = vmatpush.bf16.msra.mxu0 %v5351
  %8293 = vmatpush.bf16.msra.mxu0 %v5347
  %8294 = vmatmul.bf16.gmra.mxu0 %v1193
  %v8295 = vpop.f32.mrf.mxu0
  %v8296 = vadd.f32 %v8283, %v8295
  %v8297 = vpop.f32.mrf.mxu0
  %8298 = vdwg.mxu0
  %8299 = vmatpush.bf16.msra.mxu0 %v5407
  %8300 = vmatpush.bf16.msra.mxu0 %v5403
  %8301 = vmatpush.bf16.msra.mxu0 %v5399
  %8302 = vmatpush.bf16.msra.mxu0 %v5395
  %8303 = vmatpush.bf16.msra.mxu0 %v5391
  %8304 = vmatpush.bf16.msra.mxu0 %v5387
  %8305 = vmatpush.bf16.msra.mxu0 %v5383
  %8306 = vmatpush.bf16.msra.mxu0 %v5379
  %8307 = vmatmul.bf16.gmra.mxu0 %v1194
  %v8308 = vpop.f32.mrf.mxu0
  %v8309 = vadd.f32 %v8296, %v8308
  %v8310 = vpop.f32.mrf.mxu0
  %8311 = vdwg.mxu0
  %8312 = vmatpush.bf16.msra.mxu0 %v5439
  %8313 = vmatpush.bf16.msra.mxu0 %v5435
  %8314 = vmatpush.bf16.msra.mxu0 %v5431
  %8315 = vmatpush.bf16.msra.mxu0 %v5427
  %8316 = vmatpush.bf16.msra.mxu0 %v5423
  %8317 = vmatpush.bf16.msra.mxu0 %v5419
  %8318 = vmatpush.bf16.msra.mxu0 %v5415
  %8319 = vmatpush.bf16.msra.mxu0 %v5411
  %8320 = vmatmul.bf16.gmra.mxu0 %v1195
  %v8321 = vpop.f32.mrf.mxu0
  %v8322 = vadd.f32 %v8309, %v8321
  %v8323 = vpop.f32.mrf.mxu0
  %8324 = vdwg.mxu0
  %8325 = vmatpush.bf16.msra.mxu0 %v5471
  %8326 = vmatpush.bf16.msra.mxu0 %v5467
  %8327 = vmatpush.bf16.msra.mxu0 %v5463
  %8328 = vmatpush.bf16.msra.mxu0 %v5459
  %8329 = vmatpush.bf16.msra.mxu0 %v5455
  %8330 = vmatpush.bf16.msra.mxu0 %v5451
  %8331 = vmatpush.bf16.msra.mxu0 %v5447
  %8332 = vmatpush.bf16.msra.mxu0 %v5443
  %8333 = vmatmul.bf16.gmra.mxu0 %v1196
  %v8334 = vpop.f32.mrf.mxu0
  %v8335 = vadd.f32 %v8322, %v8334
  %v8336 = vpop.f32.mrf.mxu0
  %8337 = vdwg.mxu0
  %8338 = vmatpush.bf16.msra.mxu0 %v5503
  %8339 = vmatpush.bf16.msra.mxu0 %v5499
  %8340 = vmatpush.bf16.msra.mxu0 %v5495
  %8341 = vmatpush.bf16.msra.mxu0 %v5491
  %8342 = vmatpush.bf16.msra.mxu0 %v5487
  %8343 = vmatpush.bf16.msra.mxu0 %v5483
  %8344 = vmatpush.bf16.msra.mxu0 %v5479
  %8345 = vmatpush.bf16.msra.mxu0 %v5475
  %8346 = vmatmul.bf16.gmra.mxu0 %v1197
  %v8347 = vpop.f32.mrf.mxu0
  %v8348 = vadd.f32 %v8335, %v8347
  %v8349 = vpop.f32.mrf.mxu0
  %8350 = vdwg.mxu0
  %8351 = vmatpush.bf16.msra.mxu0 0
  %8352 = vmatpush.bf16.msra.mxu0 0
  %8353 = vmatpush.bf16.msra.mxu0 0
  %8354 = vmatpush.bf16.msra.mxu0 0
  %8355 = vmatpush.bf16.msra.mxu0 %v5519
  %8356 = vmatpush.bf16.msra.mxu0 %v5515
  %8357 = vmatpush.bf16.msra.mxu0 %v5511
  %8358 = vmatpush.bf16.msra.mxu0 %v5507
  %8359 = vmatmul.bf16.gmra.mxu0 %v6594
  %v8360 = vpop.f32.mrf.mxu0
  %v8361 = vadd.f32 %v8348, %v8360
  %v8362 = vpop.f32.mrf.mxu0
  %8363 = vdwg.mxu0
  %8364 = vst [vmem:[%s3] sm:$0xff] %v7035
  %8365 = vst [vmem:[%s3 + $0x8] sm:$0xff] %v7477
  %8366 = vst [vmem:[%s3 + $0x10] sm:$0xff] %v7919
  %8367 = vst [vmem:[%s3 + $0x18] sm:$0xff] %v8361
  // Predicated region
  $region14: #{cnn_forward.3} parent=0 // pred_check
    _
  $region15: #{cnn_forward.3} parent=0 // pred_check_branch
    %8369 = sbr.rel (0) target = $region17
  $region16: #{cnn_forward.3} parent=0 // pred_region
    _
  $region17: #{cnn_forward.3} parent=0 // pred_fallthru
    _
  // Predicated region
  $region18: #{cnn_forward.3} parent=0 // pred_check
    _
  $region19: #{cnn_forward.3} parent=0 // pred_check_branch
    %8371 = sbr.rel (0) target = $region21
  $region20: #{cnn_forward.3} parent=0 // pred_region
    _
  $region21: #{cnn_forward.3} parent=0 // pred_fallthru
    _

</llo_original>
